<compile_context>
chip_gen: v7x
topology: tpu7x:2x2x1
jax: 0.10.0
libtpu: 0.0.40
codegen_flags: <defaults>
</compile_context>

<pallas_src>
import functools

import jax
import jax.numpy as jnp
from jax.experimental import pallas as pl
from jax.experimental.pallas import tpu as pltpu


# ---------------------------------------------------------------------------
# Pallas kernels
# ---------------------------------------------------------------------------
def _linear_deconv1_kernel(z_ref, wl_ref, bl_ref, w1_ref, o_ref, sum_ref, ssq_ref):
    """code = relu(z @ Wl + bl); y = code @ W1_tap_tile; also emit BN partial stats."""
    code = jnp.dot(z_ref[...], wl_ref[...], preferred_element_type=jnp.float32)
    code = jnp.maximum(code + bl_ref[...], 0.0)
    y = jnp.dot(code.astype(jnp.bfloat16), w1_ref[...],
                preferred_element_type=jnp.float32)
    o_ref[...] = y
    sum_ref[...] = jnp.sum(y, axis=0, keepdims=True)
    ssq_ref[...] = jnp.sum(y * y, axis=0, keepdims=True)


def _deconv_mm_kernel(*refs, activation, use_bias, compute_stats, nk):
    """Per-phase tiled matmul; optional bias/activation epilogue + BN partial stats."""
    x_ref, w_ref = refs[0], refs[1]
    pos = 2
    b_ref = None
    if use_bias:
        b_ref = refs[pos]
        pos += 1
    o_ref = refs[pos]
    pos += 1
    sum_ref = ssq_ref = None
    if compute_stats:
        sum_ref, ssq_ref = refs[pos], refs[pos + 1]

    part = jnp.dot(x_ref[...], w_ref[...], preferred_element_type=jnp.float32)

    def finish(acc):
        if use_bias:
            acc = acc + b_ref[...]
        if activation == "relu":
            out = jnp.maximum(acc, 0.0)
        elif activation == "tanh":
            out = jnp.tanh(acc)
        else:
            out = acc
        o_ref[...] = out.astype(o_ref.dtype)
        if compute_stats:
            sum_ref[...] = jnp.sum(acc, axis=0, keepdims=True)
            ssq_ref[...] = jnp.sum(acc * acc, axis=0, keepdims=True)

    if nk == 1:
        finish(part)
    else:
        # Accumulate straight into the (f32) output block; no scratch accumulator.
        k = pl.program_id(3)

        @pl.when(k == 0)
        def _():
            o_ref[...] = part

        @pl.when(jnp.logical_and(k > 0, k < nk - 1))
        def _():
            o_ref[...] = o_ref[...] + part

        @pl.when(k == nk - 1)
        def _():
            finish(o_ref[...] + part)


def _bn_relu_kernel(y_ref, sum_ref, ssq_ref, g_ref, b_ref, o_ref, *, m_total, eps):
    """Normalize + ReLU from precomputed per-tile sums (training-mode batch stats)."""
    mean = jnp.sum(sum_ref[...], axis=0, keepdims=True) * (1.0 / m_total)
    msq = jnp.sum(ssq_ref[...], axis=0, keepdims=True) * (1.0 / m_total)
    var = msq - mean * mean          # biased variance, matches torch BN train mode
    inv = jax.lax.rsqrt(var + eps)
    scale = g_ref[...] * inv
    shift = b_ref[...] - mean * scale
    o_ref[...] = jnp.maximum(y_ref[...] * scale + shift, 0.0).astype(o_ref.dtype)


# ---------------------------------------------------------------------------
# pallas_call wrappers
# ---------------------------------------------------------------------------
def linear_deconv1(z, wl, bl, w1, tn=512):
    """Fused snlinear+ReLU+deconv1 (1x1 input): returns y (B, 4*C1), sum/ssq (1, 4*C1)."""
    B, kin = z.shape
    kin2, cmid = wl.shape
    cmid2, nout = w1.shape
    assert kin == kin2 and cmid == cmid2 and nout % tn == 0
    return pl.pallas_call(
        _linear_deconv1_kernel,
        out_shape=(jax.ShapeDtypeStruct((B, nout), jnp.float32),
                   jax.ShapeDtypeStruct((1, nout), jnp.float32),
                   jax.ShapeDtypeStruct((1, nout), jnp.float32)),
        grid_spec=pltpu.PrefetchScalarGridSpec(
            num_scalar_prefetch=0,
            grid=(nout // tn,),
            in_specs=[pl.BlockSpec((B, kin), lambda j: (0, 0)),
                      pl.BlockSpec((kin, cmid), lambda j: (0, 0)),
                      pl.BlockSpec((1, cmid), lambda j: (0, 0)),
                      pl.BlockSpec((cmid, tn), lambda j: (0, j))],
            out_specs=(pl.BlockSpec((B, tn), lambda j: (0, j)),
                       pl.BlockSpec((1, tn), lambda j: (0, j)),
                       pl.BlockSpec((1, tn), lambda j: (0, j)))),
        compiler_params=pltpu.CompilerParams(dimension_semantics=("parallel",)),
    )(z, wl, bl, w1)


def deconv_matmul(x, w, bias=None, activation="none",
                  out_dtype=jnp.float32, compute_stats=False):
    """Phase-batched matmul: x (4, M, K) bf16 @ w (4, K, N) bf16 -> (4, M, N) out_dtype."""
    P, M, K = x.shape
    Pw, Kw, N = w.shape
    assert P == Pw and K == Kw
    tm = min(M, 256)
    tk = min(K, 1024)      # keeps the f32-accumulate working set small on v5e
    tn = min(N, 512)
    assert M % tm == 0 and K % tk == 0 and N % tn == 0
    nm, nn, nk = M // tm, N // tn, K // tk
    assert nk == 1 or out_dtype == jnp.float32   # in-o_ref accumulation must be f32

    in_specs = [pl.BlockSpec((None, tm, tk), lambda p, i, j, k: (p, i, k)),
                pl.BlockSpec((None, tk, tn), lambda p, i, j, k: (p, k, j))]
    args = [x, w]
    if bias is not None:
        in_specs.append(pl.BlockSpec((1, tn), lambda p, i, j, k: (0, j)))
        args.append(bias)

    out_specs = [pl.BlockSpec((None, tm, tn), lambda p, i, j, k: (p, i, j))]
    out_shapes = [jax.ShapeDtypeStruct((P, M, N), out_dtype)]
    if compute_stats:
        stat_spec = pl.BlockSpec((None, None, 1, tn), lambda p, i, j, k: (p, i, 0, j))
        out_specs += [stat_spec, stat_spec]
        out_shapes += [jax.ShapeDtypeStruct((P, nm, 1, N), jnp.float32)] * 2

    kernel = functools.partial(_deconv_mm_kernel, activation=activation,
                               use_bias=bias is not None,
                               compute_stats=compute_stats, nk=nk)
    out = pl.pallas_call(
        kernel,
        out_shape=tuple(out_shapes),
        grid_spec=pltpu.PrefetchScalarGridSpec(
            num_scalar_prefetch=0,
            grid=(P, nm, nn, nk),
            in_specs=in_specs,
            out_specs=tuple(out_specs)),
        compiler_params=pltpu.CompilerParams(
            dimension_semantics=("parallel", "parallel", "parallel", "arbitrary")),
    )(*args)
    return out if compute_stats else out[0]


def batchnorm_relu(y, ssum, ssq, gamma, beta, out_dtype=jnp.bfloat16):
    """BatchNorm2d (training-mode stats from precomputed sums) + ReLU on (Mtot, C)."""
    mtot, C = y.shape
    R = ssum.shape[0]
    tm = mtot if mtot <= 512 else 512
    tc = 256 if C % 256 == 0 else C
    assert mtot % tm == 0 and C % tc == 0
    kernel = functools.partial(_bn_relu_kernel, m_total=float(mtot), eps=1e-5)
    return pl.pallas_call(
        kernel,
        out_shape=jax.ShapeDtypeStruct((mtot, C), out_dtype),
        grid_spec=pltpu.PrefetchScalarGridSpec(
            num_scalar_prefetch=0,
            grid=(mtot // tm, C // tc),
            in_specs=[pl.BlockSpec((tm, tc), lambda i, j: (i, j)),
                      pl.BlockSpec((R, tc), lambda i, j: (0, j)),
                      pl.BlockSpec((R, tc), lambda i, j: (0, j)),
                      pl.BlockSpec((1, tc), lambda i, j: (0, j)),
                      pl.BlockSpec((1, tc), lambda i, j: (0, j))],
            out_specs=pl.BlockSpec((tm, tc), lambda i, j: (i, j))),
        compiler_params=pltpu.CompilerParams(
            dimension_semantics=("parallel", "parallel")),
    )(y, ssum, ssq, gamma.reshape(1, C).astype(jnp.float32),
      beta.reshape(1, C).astype(jnp.float32))


# ---------------------------------------------------------------------------
# JAX glue: sub-pixel decomposition, spectral norm, parameter prep
# ---------------------------------------------------------------------------
def subpixel_patches(x):
    """NHWC (B,H,W,C) -> (4 phases, B*H*W, 4*C) patches for ConvTranspose(k=4,s=2,p=1).

    Output pixel (2*py+ry, 2*px+rx) only sees input pixels (py+ry+dy-1, px+rx+dx-1),
    dy,dx in {0,1}, with kernel taps (3-ry-2*dy, 3-rx-2*dx)."""
    # TODO(synk): patch gather still goes through XLA pad/concat in HBM instead of an
    # in-kernel shifted-row DMA; acceptable at these sizes (<=2 MB bf16 per layer).
    B, H, W, C = x.shape
    xp = jnp.pad(x, ((0, 0), (1, 1), (1, 1), (0, 0)))
    phases = []
    for ry in range(2):
        for rx in range(2):
            taps = [xp[:, ry + dy:ry + dy + H, rx + dx:rx + dx + W, :]
                    for dy in range(2) for dx in range(2)]
            phases.append(jnp.concatenate(taps, axis=-1).reshape(B * H * W, 4 * C))
    return jnp.stack(phases, axis=0)


def subpixel_weights(wt):
    """torch ConvTranspose2d weight (Cin,Cout,4,4) -> (4 phases, 4*Cin, Cout)."""
    cin, cout = wt.shape[0], wt.shape[1]
    phases = []
    for ry in range(2):
        for rx in range(2):
            taps = [wt[:, :, 3 - ry - 2 * dy, 3 - rx - 2 * dx]
                    for dy in range(2) for dx in range(2)]            # each (Cin, Cout)
            phases.append(jnp.stack(taps, axis=0).reshape(4 * cin, cout))
    return jnp.stack(phases, axis=0)


def phases_to_nhwc(y, B, H, W, C):
    """(4, B*H*W, C) per-parity outputs -> NHWC (B, 2H, 2W, C)."""
    y = y.reshape(2, 2, B, H, W, C)
    y = jnp.transpose(y, (2, 3, 0, 4, 1, 5))   # (B, H, ry, W, rx, C)
    return y.reshape(B, 2 * H, 2 * W, C)


def spectral_normalize(w, w_mat, key, iters=50, eps=1e-12):
    """Divide w by its largest singular value (power iteration on torch-style w_mat)."""
    # TODO(synk): spectral-norm power iteration is init-time parameter prep in plain JAX
    # (torch keeps a persistent u and does 1 iteration per forward; sigma here is the
    # converged value, so results won't bit-match a torch checkpoint).
    u = jax.random.normal(key, (w_mat.shape[0],), dtype=jnp.float32)
    u = u / (jnp.linalg.norm(u) + eps)

    def body(_, u):
        v = w_mat.T @ u
        v = v / (jnp.linalg.norm(v) + eps)
        u = w_mat @ v
        u = u / (jnp.linalg.norm(u) + eps)
        return u

    u = jax.lax.fori_loop(0, iters, body, u)
    v = w_mat.T @ u
    v = v / (jnp.linalg.norm(v) + eps)
    sigma = u @ (w_mat @ v)
    return w / sigma


def init_params(key, latent_dim=10, noise_dim=100):
    in_ch = latent_dim + noise_dim
    in_ch_pad = ((in_ch + 127) // 128) * 128       # lane-pad K of the linear layer
    keys = jax.random.split(key, 16)
    params = {}

    # snlinear: torch weight (512, in_ch); spectral_norm dim=0 uses the 2D weight itself.
    wl = jax.random.normal(keys[0], (512, in_ch), jnp.float32) * 0.05
    wl = spectral_normalize(wl, wl, keys[1])
    bl = jax.random.normal(keys[2], (512,), jnp.float32) * 0.05
    wl_mat = jnp.zeros((in_ch_pad, 512), jnp.float32).at[:in_ch, :].set(wl.T)
    params["linear"] = (wl_mat.astype(jnp.bfloat16), bl.reshape(1, 512))

    chans = [(512, 512), (512, 512), (512, 256), (256, 128), (128, 3)]
    ki = 3
    for i, (cin, cout) in enumerate(chans, start=1):
        wt = jax.random.normal(keys[ki], (cin, cout, 4, 4), jnp.float32) * 0.05
        ki += 1
        # torch spectral_norm uses dim=1 for ConvTranspose2d -> (C_out, C_in*kH*kW)
        w_mat = jnp.transpose(wt, (1, 0, 2, 3)).reshape(cout, -1)
        wt = spectral_normalize(wt, w_mat, keys[ki])
        ki += 1
        if i == 1:
            # 1x1 input: each of the 2x2 output pixels sees exactly one tap (ry+1, rx+1).
            wp = jnp.stack([wt[:, :, 1 + ry, 1 + rx]
                            for ry in range(2) for rx in range(2)], axis=1)  # (Cin,4,Cout)
            wp = wp.reshape(cin, 4 * cout)
            # NOTE: deconv1-4 biases are dropped: training-mode BN cancels them exactly.
            params["deconv1"] = (wp.astype(jnp.bfloat16),
                                 jnp.ones((cout,), jnp.float32),
                                 jnp.zeros((cout,), jnp.float32))
        elif i < 5:
            wp = subpixel_weights(wt)                                  # (4, 4*Cin, Cout)
            params[f"deconv{i}"] = (wp.astype(jnp.bfloat16),
                                    jnp.ones((cout,), jnp.float32),
                                    jnp.zeros((cout,), jnp.float32))
        else:
            bc = jax.random.normal(keys[ki], (cout,), jnp.float32) * 0.05
            ki += 1
            wp = subpixel_weights(wt)                                  # (4, 512, 3)
            wp = jnp.pad(wp, ((0, 0), (0, 0), (0, 128 - cout)))        # lane-dense N=128
            bp = jnp.pad(bc, (0, 128 - cout))
            params["deconv5"] = (wp.astype(jnp.bfloat16), bp.reshape(1, 128))
    return params


# ---------------------------------------------------------------------------
# Forward
# ---------------------------------------------------------------------------
def decoder_forward(z, params):
    B = z.shape[0]
    wl, bl = params["linear"]
    w1, g1, b1 = params["deconv1"]
    in_ch_pad = wl.shape[0]

    zp = jnp.zeros((B, in_ch_pad), jnp.bfloat16)
    zp = zp.at[:, :z.shape[1]].set(z.astype(jnp.bfloat16))

    # linear -> relu -> deconv1 (folded), fused in one Pallas kernel (+ BN partial stats)
    y1, s1, q1 = linear_deconv1(zp, wl, bl, w1)          # (B, 2048), (1, 2048) x2
    c1 = w1.shape[1] // 4
    h1 = batchnorm_relu(y1.reshape(B * 4, c1),
                        s1.reshape(4, c1), q1.reshape(4, c1), g1, b1)
    out = h1.reshape(B, 2, 2, c1)                        # NHWC bf16

    # deconv2..deconv4: sub-pixel matmul (+stats) then normalize+ReLU
    for i in range(2, 5):
        wp, gamma, beta = params[f"deconv{i}"]
        bb, hh, ww, cc = out.shape
        patches = subpixel_patches(out)                  # (4, B*H*W, 4*C) bf16
        y, ssum, ssq = deconv_matmul(patches, wp, compute_stats=True)
        cout = wp.shape[2]
        m = bb * hh * ww
        h = batchnorm_relu(y.reshape(4 * m, cout),
                           ssum.reshape(-1, cout), ssq.reshape(-1, cout), gamma, beta)
        out = phases_to_nhwc(h.reshape(4, m, cout), bb, hh, ww, cout)

    # deconv5 + tanh, lane-dense (C_out padded to 128), slice back to 3 channels
    wp5, b5 = params["deconv5"]
    bb, hh, ww, cc = out.shape
    patches = subpixel_patches(out)
    y5 = deconv_matmul(patches, wp5, bias=b5, activation="tanh",
                       out_dtype=jnp.float32)            # (4, B*H*W, 128)
    img = phases_to_nhwc(y5, bb, hh, ww, 128)[:, :, :, :3]
    return jnp.transpose(img, (0, 3, 1, 2))              # NCHW, matches PyTorch


if __name__ == "__main__":
    key = jax.random.PRNGKey(0)
    kp, kz = jax.random.split(key)
    params = init_params(kp, latent_dim=10, noise_dim=100)

    B = 2
    z = jax.random.normal(kz, (B, 110), dtype=jnp.float32)  # latent_dim + noise_dim

    fwd = jax.jit(decoder_forward)
    out = fwd(z, params)
    out = jax.block_until_ready(out)
    assert out.shape == (B, 3, 32, 32), out.shape
    assert bool(jnp.all(jnp.isfinite(out)))
    print("KERNEL_OK")
</pallas_src>

<mosaic_0001>
module attributes {stable_mosaic.version = 11 : i64} {
  func.func @_linear_deconv1_kernel(%arg0: i32, %arg1: memref<2x128xbf16, #tpu.memory_space<vmem>>, %arg2: memref<128x512xbf16, #tpu.memory_space<vmem>>, %arg3: memref<1x512xf32, #tpu.memory_space<vmem>>, %arg4: memref<512x512xbf16, #tpu.memory_space<vmem>>, %arg5: memref<2x512xf32, #tpu.memory_space<vmem>>, %arg6: memref<1x512xf32, #tpu.memory_space<vmem>>, %arg7: memref<1x512xf32, #tpu.memory_space<vmem>>) attributes {dimension_semantics = [#tpu.dimension_semantics<parallel>], iteration_bounds = array<i64: 4>, scalar_prefetch = 0 : i64, scratch_operands = 0 : i64, tpu.core_type = #tpu.core_type<tc>, window_params = [{pipeline_mode = #tpu.pipeline_mode<synchronous>, transform_indices = @transform_0, window_bounds = array<i64: 2, 128>}, {pipeline_mode = #tpu.pipeline_mode<synchronous>, transform_indices = @transform_1, window_bounds = array<i64: 128, 512>}, {pipeline_mode = #tpu.pipeline_mode<synchronous>, transform_indices = @transform_2, window_bounds = array<i64: 1, 512>}, {transform_indices = @transform_3, window_bounds = array<i64: 512, 512>}, {transform_indices = @transform_4, window_bounds = array<i64: 2, 512>}, {transform_indices = @transform_5, window_bounds = array<i64: 1, 512>}, {transform_indices = @transform_6, window_bounds = array<i64: 1, 512>}]} {
    %c0 = arith.constant 0 : index
    %c0_0 = arith.constant 0 : index
    %0 = vector.load %arg1[%c0, %c0_0] : memref<2x128xbf16, #tpu.memory_space<vmem>>, vector<2x128xbf16>
    %c0_1 = arith.constant 0 : index
    %c0_2 = arith.constant 0 : index
    %1 = vector.load %arg2[%c0_1, %c0_2] : memref<128x512xbf16, #tpu.memory_space<vmem>>, vector<128x512xbf16>
    %cst = arith.constant dense<0.000000e+00> : vector<2x512xf32>
    %2 = tpu.matmul %0, %1, %cst {dimension_numbers = #tpu.dot_dimension_numbers<[1], [0], [0], [1], [0, 0, 1, 1], [], []>} : vector<2x128xbf16>, vector<128x512xbf16>, vector<2x512xf32> -> vector<2x512xf32>
    %c0_3 = arith.constant 0 : index
    %c0_4 = arith.constant 0 : index
    %3 = vector.load %arg3[%c0_3, %c0_4] : memref<1x512xf32, #tpu.memory_space<vmem>>, vector<1x512xf32>
    %4 = vector.broadcast %3 : vector<1x512xf32> to vector<2x512xf32>
    %5 = arith.addf %2, %4 : vector<2x512xf32>
    %cst_5 = arith.constant 0.000000e+00 : f32
    %6 = vector.broadcast %cst_5 : f32 to vector<2x512xf32>
    %7 = arith.maximumf %5, %6 : vector<2x512xf32>
    %8 = arith.truncf %7 : vector<2x512xf32> to vector<2x512xbf16>
    %c0_6 = arith.constant 0 : index
    %c0_7 = arith.constant 0 : index
    %9 = vector.load %arg4[%c0_6, %c0_7] : memref<512x512xbf16, #tpu.memory_space<vmem>>, vector<512x512xbf16>
    %cst_8 = arith.constant dense<0.000000e+00> : vector<2x512xf32>
    %10 = tpu.matmul %8, %9, %cst_8 {dimension_numbers = #tpu.dot_dimension_numbers<[1], [0], [0], [1], [0, 0, 1, 1], [], []>} : vector<2x512xbf16>, vector<512x512xbf16>, vector<2x512xf32> -> vector<2x512xf32>
    %c0_9 = arith.constant 0 : index
    %c0_10 = arith.constant 0 : index
    %11 = vector.load %arg5[%c0_9, %c0_10] : memref<2x512xf32, #tpu.memory_space<vmem>>, vector<2x512xf32>
    tpu.vector_store %arg5[%c0_9, %c0_10], %10 {strides = array<i32>} : memref<2x512xf32, #tpu.memory_space<vmem>>, vector<2x512xf32>,
    %cst_11 = arith.constant dense<0.000000e+00> : vector<512xf32>
    %12 = vector.multi_reduction <add>, %10, %cst_11 [0] : vector<2x512xf32> to vector<512xf32>
    %13 = vector.shape_cast %12 : vector<512xf32> to vector<1x512xf32>
    %c0_12 = arith.constant 0 : index
    %c0_13 = arith.constant 0 : index
    %14 = vector.load %arg6[%c0_12, %c0_13] : memref<1x512xf32, #tpu.memory_space<vmem>>, vector<1x512xf32>
    tpu.vector_store %arg6[%c0_12, %c0_13], %13 {strides = array<i32>} : memref<1x512xf32, #tpu.memory_space<vmem>>, vector<1x512xf32>,
    %15 = arith.mulf %10, %10 : vector<2x512xf32>
    %cst_14 = arith.constant dense<0.000000e+00> : vector<512xf32>
    %16 = vector.multi_reduction <add>, %15, %cst_14 [0] : vector<2x512xf32> to vector<512xf32>
    %17 = vector.shape_cast %16 : vector<512xf32> to vector<1x512xf32>
    %c0_15 = arith.constant 0 : index
    %c0_16 = arith.constant 0 : index
    %18 = vector.load %arg7[%c0_15, %c0_16] : memref<1x512xf32, #tpu.memory_space<vmem>>, vector<1x512xf32>
    tpu.vector_store %arg7[%c0_15, %c0_16], %17 {strides = array<i32>} : memref<1x512xf32, #tpu.memory_space<vmem>>, vector<1x512xf32>,
    return
  }
  func.func @transform_0(%arg0: i32) -> (i32, i32) {
    %c0_i32 = arith.constant 0 : i32
    %c0_i32_0 = arith.constant 0 : i32
    %c0_i32_1 = arith.constant 0 : i32
    return %c0_i32, %c0_i32_0 : i32, i32
  }
  func.func @transform_1(%arg0: i32) -> (i32, i32) {
    %c0_i32 = arith.constant 0 : i32
    %c0_i32_0 = arith.constant 0 : i32
    %c0_i32_1 = arith.constant 0 : i32
    return %c0_i32, %c0_i32_0 : i32, i32
  }
  func.func @transform_2(%arg0: i32) -> (i32, i32) {
    %c0_i32 = arith.constant 0 : i32
    %c0_i32_0 = arith.constant 0 : i32
    %c0_i32_1 = arith.constant 0 : i32
    return %c0_i32, %c0_i32_0 : i32, i32
  }
  func.func @transform_3(%arg0: i32) -> (i32, i32) {
    %c0_i32 = arith.constant 0 : i32
    %c0_i32_0 = arith.constant 0 : i32
    return %c0_i32, %arg0 : i32, i32
  }
  func.func @transform_4(%arg0: i32) -> (i32, i32) {
    %c0_i32 = arith.constant 0 : i32
    %c0_i32_0 = arith.constant 0 : i32
    return %c0_i32, %arg0 : i32, i32
  }
  func.func @transform_5(%arg0: i32) -> (i32, i32) {
    %c0_i32 = arith.constant 0 : i32
    %c0_i32_0 = arith.constant 0 : i32
    return %c0_i32, %arg0 : i32, i32
  }
  func.func @transform_6(%arg0: i32) -> (i32, i32) {
    %c0_i32 = arith.constant 0 : i32
    %c0_i32_0 = arith.constant 0 : i32
    return %c0_i32, %arg0 : i32, i32
  }
}

module attributes {stable_mosaic.version = 11 : i64} {
  func.func @_bn_relu_kernel(%arg0: i32, %arg1: i32, %arg2: memref<8x256xf32, #tpu.memory_space<vmem>>, %arg3: memref<4x256xf32, #tpu.memory_space<vmem>>, %arg4: memref<4x256xf32, #tpu.memory_space<vmem>>, %arg5: memref<1x256xf32, #tpu.memory_space<vmem>>, %arg6: memref<1x256xf32, #tpu.memory_space<vmem>>, %arg7: memref<8x256xbf16, #tpu.memory_space<vmem>>) attributes {dimension_semantics = [#tpu.dimension_semantics<parallel>, #tpu.dimension_semantics<parallel>], iteration_bounds = array<i64: 1, 2>, scalar_prefetch = 0 : i64, scratch_operands = 0 : i64, tpu.core_type = #tpu.core_type<tc>, window_params = [{transform_indices = @transform_0, window_bounds = array<i64: 8, 256>}, {transform_indices = @transform_1, window_bounds = array<i64: 4, 256>}, {transform_indices = @transform_2, window_bounds = array<i64: 4, 256>}, {transform_indices = @transform_3, window_bounds = array<i64: 1, 256>}, {transform_indices = @transform_4, window_bounds = array<i64: 1, 256>}, {transform_indices = @transform_5, window_bounds = array<i64: 8, 256>}]} {
    %c0 = arith.constant 0 : index
    %c0_0 = arith.constant 0 : index
    %0 = vector.load %arg3[%c0, %c0_0] : memref<4x256xf32, #tpu.memory_space<vmem>>, vector<4x256xf32>
    %cst = arith.constant dense<0.000000e+00> : vector<256xf32>
    %1 = vector.multi_reduction <add>, %0, %cst [0] : vector<4x256xf32> to vector<256xf32>
    %2 = vector.shape_cast %1 : vector<256xf32> to vector<1x256xf32>
    %cst_1 = arith.constant 1.250000e-01 : f32
    %3 = vector.broadcast %cst_1 : f32 to vector<1x256xf32>
    %4 = arith.mulf %2, %3 : vector<1x256xf32>
    %c0_2 = arith.constant 0 : index
    %c0_3 = arith.constant 0 : index
    %5 = vector.load %arg4[%c0_2, %c0_3] : memref<4x256xf32, #tpu.memory_space<vmem>>, vector<4x256xf32>
    %cst_4 = arith.constant dense<0.000000e+00> : vector<256xf32>
    %6 = vector.multi_reduction <add>, %5, %cst_4 [0] : vector<4x256xf32> to vector<256xf32>
    %7 = vector.shape_cast %6 : vector<256xf32> to vector<1x256xf32>
    %cst_5 = arith.constant 1.250000e-01 : f32
    %8 = vector.broadcast %cst_5 : f32 to vector<1x256xf32>
    %9 = arith.mulf %7, %8 : vector<1x256xf32>
    %10 = arith.mulf %4, %4 : vector<1x256xf32>
    %11 = arith.subf %9, %10 : vector<1x256xf32>
    %cst_6 = arith.constant 9.99999974E-6 : f32
    %12 = vector.broadcast %cst_6 : f32 to vector<1x256xf32>
    %13 = arith.addf %11, %12 : vector<1x256xf32>
    %14 = math.rsqrt %13 : vector<1x256xf32>
    %c0_7 = arith.constant 0 : index
    %c0_8 = arith.constant 0 : index
    %15 = vector.load %arg5[%c0_7, %c0_8] : memref<1x256xf32, #tpu.memory_space<vmem>>, vector<1x256xf32>
    %16 = arith.mulf %15, %14 : vector<1x256xf32>
    %c0_9 = arith.constant 0 : index
    %c0_10 = arith.constant 0 : index
    %17 = vector.load %arg6[%c0_9, %c0_10] : memref<1x256xf32, #tpu.memory_space<vmem>>, vector<1x256xf32>
    %18 = arith.mulf %4, %16 : vector<1x256xf32>
    %19 = arith.subf %17, %18 : vector<1x256xf32>
    %c0_11 = arith.constant 0 : index
    %c0_12 = arith.constant 0 : index
    %20 = vector.load %arg2[%c0_11, %c0_12] : memref<8x256xf32, #tpu.memory_space<vmem>>, vector<8x256xf32>
    %21 = vector.broadcast %16 : vector<1x256xf32> to vector<8x256xf32>
    %22 = arith.mulf %20, %21 : vector<8x256xf32>
    %23 = vector.broadcast %19 : vector<1x256xf32> to vector<8x256xf32>
    %24 = arith.addf %22, %23 : vector<8x256xf32>
    %cst_13 = arith.constant 0.000000e+00 : f32
    %25 = vector.broadcast %cst_13 : f32 to vector<8x256xf32>
    %26 = arith.maximumf %24, %25 : vector<8x256xf32>
    %27 = arith.truncf %26 : vector<8x256xf32> to vector<8x256xbf16>
    %c0_14 = arith.constant 0 : index
    %c0_15 = arith.constant 0 : index
    %28 = vector.load %arg7[%c0_14, %c0_15] : memref<8x256xbf16, #tpu.memory_space<vmem>>, vector<8x256xbf16>
    tpu.vector_store %arg7[%c0_14, %c0_15], %27 {strides = array<i32>} : memref<8x256xbf16, #tpu.memory_space<vmem>>, vector<8x256xbf16>,
    return
  }
  func.func @transform_0(%arg0: i32, %arg1: i32) -> (i32, i32) {
    %c0_i32 = arith.constant 0 : i32
    return %arg0, %arg1 : i32, i32
  }
  func.func @transform_1(%arg0: i32, %arg1: i32) -> (i32, i32) {
    %c0_i32 = arith.constant 0 : i32
    %c0_i32_0 = arith.constant 0 : i32
    return %c0_i32, %arg1 : i32, i32
  }
  func.func @transform_2(%arg0: i32, %arg1: i32) -> (i32, i32) {
    %c0_i32 = arith.constant 0 : i32
    %c0_i32_0 = arith.constant 0 : i32
    return %c0_i32, %arg1 : i32, i32
  }
  func.func @transform_3(%arg0: i32, %arg1: i32) -> (i32, i32) {
    %c0_i32 = arith.constant 0 : i32
    %c0_i32_0 = arith.constant 0 : i32
    return %c0_i32, %arg1 : i32, i32
  }
  func.func @transform_4(%arg0: i32, %arg1: i32) -> (i32, i32) {
    %c0_i32 = arith.constant 0 : i32
    %c0_i32_0 = arith.constant 0 : i32
    return %c0_i32, %arg1 : i32, i32
  }
  func.func @transform_5(%arg0: i32, %arg1: i32) -> (i32, i32) {
    %c0_i32 = arith.constant 0 : i32
    return %arg0, %arg1 : i32, i32
  }
}

module attributes {stable_mosaic.version = 11 : i64} {
  func.func @_deconv_mm_kernel(%arg0: i32, %arg1: i32, %arg2: i32, %arg3: i32, %arg4: memref<1x8x1024xbf16, #tpu.memory_space<vmem>>, %arg5: memref<1x1024x512xbf16, #tpu.memory_space<vmem>>, %arg6: memref<1x8x512xf32, #tpu.memory_space<vmem>>, %arg7: memref<1x1x1x512xf32, #tpu.memory_space<vmem>>, %arg8: memref<1x1x1x512xf32, #tpu.memory_space<vmem>>) attributes {dimension_semantics = [#tpu.dimension_semantics<parallel>, #tpu.dimension_semantics<parallel>, #tpu.dimension_semantics<parallel>, #tpu.dimension_semantics<arbitrary>], iteration_bounds = array<i64: 4, 1, 1, 2>, scalar_prefetch = 0 : i64, scratch_operands = 0 : i64, tpu.core_type = #tpu.core_type<tc>, window_params = [{transform_indices = @transform_0, window_bounds = array<i64: 1, 8, 1024>}, {transform_indices = @transform_1, window_bounds = array<i64: 1, 1024, 512>}, {transform_indices = @transform_2, window_bounds = array<i64: 1, 8, 512>}, {transform_indices = @transform_3, window_bounds = array<i64: 1, 1, 1, 512>}, {transform_indices = @transform_4, window_bounds = array<i64: 1, 1, 1, 512>}]} {
    %c0 = arith.constant 0 : index
    %c0_0 = arith.constant 0 : index
    %c0_1 = arith.constant 0 : index
    %0 = vector.load %arg4[%c0, %c0_0, %c0_1] : memref<1x8x1024xbf16, #tpu.memory_space<vmem>>, vector<1x8x1024xbf16>
    %1 = vector.shape_cast %0 : vector<1x8x1024xbf16> to vector<8x1024xbf16>
    %c0_2 = arith.constant 0 : index
    %c0_3 = arith.constant 0 : index
    %c0_4 = arith.constant 0 : index
    %2 = vector.load %arg5[%c0_2, %c0_3, %c0_4] : memref<1x1024x512xbf16, #tpu.memory_space<vmem>>, vector<1x1024x512xbf16>
    %3 = vector.shape_cast %2 : vector<1x1024x512xbf16> to vector<1024x512xbf16>
    %cst = arith.constant dense<0.000000e+00> : vector<8x512xf32>
    %4 = tpu.matmul %1, %3, %cst {dimension_numbers = #tpu.dot_dimension_numbers<[1], [0], [0], [1], [0, 0, 1, 1], [], []>} : vector<8x1024xbf16>, vector<1024x512xbf16>, vector<8x512xf32> -> vector<8x512xf32>
    %c0_i32 = arith.constant 0 : i32
    %5 = arith.cmpi eq, %arg3, %c0_i32 : i32
    %6 = arith.extui %5 : i1 to i32
    %c0_i32_5 = arith.constant 0 : i32
    %7 = arith.cmpi ne, %6, %c0_i32_5 : i32
    scf.if %7 {
      %c0_10 = arith.constant 0 : index
      %c0_11 = arith.constant 0 : index
      %c0_12 = arith.constant 0 : index
      %16 = vector.load %arg6[%c0_10, %c0_11, %c0_12] : memref<1x8x512xf32, #tpu.memory_space<vmem>>, vector<1x8x512xf32>
      %17 = vector.shape_cast %16 : vector<1x8x512xf32> to vector<8x512xf32>
      %18 = vector.shape_cast %4 : vector<8x512xf32> to vector<1x8x512xf32>
      tpu.vector_store %arg6[%c0_10, %c0_11, %c0_12], %18 {strides = array<i32>} : memref<1x8x512xf32, #tpu.memory_space<vmem>>, vector<1x8x512xf32>,
    } else {
    }
    %c0_i32_6 = arith.constant 0 : i32
    %8 = arith.cmpi sgt, %arg3, %c0_i32_6 : i32
    %c1_i32 = arith.constant 1 : i32
    %9 = arith.cmpi slt, %arg3, %c1_i32 : i32
    %10 = arith.andi %8, %9 : i1
    %11 = arith.extui %10 : i1 to i32
    %c0_i32_7 = arith.constant 0 : i32
    %12 = arith.cmpi ne, %11, %c0_i32_7 : i32
    scf.if %12 {
      %c0_10 = arith.constant 0 : index
      %c0_11 = arith.constant 0 : index
      %c0_12 = arith.constant 0 : index
      %16 = vector.load %arg6[%c0_10, %c0_11, %c0_12] : memref<1x8x512xf32, #tpu.memory_space<vmem>>, vector<1x8x512xf32>
      %17 = vector.shape_cast %16 : vector<1x8x512xf32> to vector<8x512xf32>
      %18 = arith.addf %17, %4 : vector<8x512xf32>
      %c0_13 = arith.constant 0 : index
      %c0_14 = arith.constant 0 : index
      %c0_15 = arith.constant 0 : index
      %19 = vector.load %arg6[%c0_13, %c0_14, %c0_15] : memref<1x8x512xf32, #tpu.memory_space<vmem>>, vector<1x8x512xf32>
      %20 = vector.shape_cast %19 : vector<1x8x512xf32> to vector<8x512xf32>
      %21 = vector.shape_cast %18 : vector<8x512xf32> to vector<1x8x512xf32>
      tpu.vector_store %arg6[%c0_13, %c0_14, %c0_15], %21 {strides = array<i32>} : memref<1x8x512xf32, #tpu.memory_space<vmem>>, vector<1x8x512xf32>,
    } else {
    }
    %c1_i32_8 = arith.constant 1 : i32
    %13 = arith.cmpi eq, %arg3, %c1_i32_8 : i32
    %14 = arith.extui %13 : i1 to i32
    %c0_i32_9 = arith.constant 0 : i32
    %15 = arith.cmpi ne, %14, %c0_i32_9 : i32
    scf.if %15 {
      %c0_10 = arith.constant 0 : index
      %c0_11 = arith.constant 0 : index
      %c0_12 = arith.constant 0 : index
      %16 = vector.load %arg6[%c0_10, %c0_11, %c0_12] : memref<1x8x512xf32, #tpu.memory_space<vmem>>, vector<1x8x512xf32>
      %17 = vector.shape_cast %16 : vector<1x8x512xf32> to vector<8x512xf32>
      %18 = arith.addf %17, %4 : vector<8x512xf32>
      %c0_13 = arith.constant 0 : index
      %c0_14 = arith.constant 0 : index
      %c0_15 = arith.constant 0 : index
      %19 = vector.load %arg6[%c0_13, %c0_14, %c0_15] : memref<1x8x512xf32, #tpu.memory_space<vmem>>, vector<1x8x512xf32>
      %20 = vector.shape_cast %19 : vector<1x8x512xf32> to vector<8x512xf32>
      %21 = vector.shape_cast %18 : vector<8x512xf32> to vector<1x8x512xf32>
      tpu.vector_store %arg6[%c0_13, %c0_14, %c0_15], %21 {strides = array<i32>} : memref<1x8x512xf32, #tpu.memory_space<vmem>>, vector<1x8x512xf32>,
      %cst_16 = arith.constant dense<0.000000e+00> : vector<512xf32>
      %22 = vector.multi_reduction <add>, %18, %cst_16 [0] : vector<8x512xf32> to vector<512xf32>
      %23 = vector.shape_cast %22 : vector<512xf32> to vector<1x512xf32>
      %c0_17 = arith.constant 0 : index
      %c0_18 = arith.constant 0 : index
      %c0_19 = arith.constant 0 : index
      %c0_20 = arith.constant 0 : index
      %24 = vector.load %arg7[%c0_17, %c0_18, %c0_19, %c0_20] : memref<1x1x1x512xf32, #tpu.memory_space<vmem>>, vector<1x1x1x512xf32>
      %25 = vector.shape_cast %24 : vector<1x1x1x512xf32> to vector<1x512xf32>
      %26 = vector.shape_cast %23 : vector<1x512xf32> to vector<1x1x1x512xf32>
      tpu.vector_store %arg7[%c0_17, %c0_18, %c0_19, %c0_20], %26 {strides = array<i32>} : memref<1x1x1x512xf32, #tpu.memory_space<vmem>>, vector<1x1x1x512xf32>,
      %27 = arith.mulf %18, %18 : vector<8x512xf32>
      %cst_21 = arith.constant dense<0.000000e+00> : vector<512xf32>
      %28 = vector.multi_reduction <add>, %27, %cst_21 [0] : vector<8x512xf32> to vector<512xf32>
      %29 = vector.shape_cast %28 : vector<512xf32> to vector<1x512xf32>
      %c0_22 = arith.constant 0 : index
      %c0_23 = arith.constant 0 : index
      %c0_24 = arith.constant 0 : index
      %c0_25 = arith.constant 0 : index
      %30 = vector.load %arg8[%c0_22, %c0_23, %c0_24, %c0_25] : memref<1x1x1x512xf32, #tpu.memory_space<vmem>>, vector<1x1x1x512xf32>
      %31 = vector.shape_cast %30 : vector<1x1x1x512xf32> to vector<1x512xf32>
      %32 = vector.shape_cast %29 : vector<1x512xf32> to vector<1x1x1x512xf32>
      tpu.vector_store %arg8[%c0_22, %c0_23, %c0_24, %c0_25], %32 {strides = array<i32>} : memref<1x1x1x512xf32, #tpu.memory_space<vmem>>, vector<1x1x1x512xf32>,
    } else {
    }
    return
  }
  func.func @transform_0(%arg0: i32, %arg1: i32, %arg2: i32, %arg3: i32) -> (i32, i32, i32) {
    %c0_i32 = arith.constant 0 : i32
    return %arg0, %arg1, %arg3 : i32, i32, i32
  }
  func.func @transform_1(%arg0: i32, %arg1: i32, %arg2: i32, %arg3: i32) -> (i32, i32, i32) {
    %c0_i32 = arith.constant 0 : i32
    return %arg0, %arg3, %arg2 : i32, i32, i32
  }
  func.func @transform_2(%arg0: i32, %arg1: i32, %arg2: i32, %arg3: i32) -> (i32, i32, i32) {
    %c0_i32 = arith.constant 0 : i32
    return %arg0, %arg1, %arg2 : i32, i32, i32
  }
  func.func @transform_3(%arg0: i32, %arg1: i32, %arg2: i32, %arg3: i32) -> (i32, i32, i32, i32) {
    %c0_i32 = arith.constant 0 : i32
    %c0_i32_0 = arith.constant 0 : i32
    return %arg0, %arg1, %c0_i32, %arg2 : i32, i32, i32, i32
  }
  func.func @transform_4(%arg0: i32, %arg1: i32, %arg2: i32, %arg3: i32) -> (i32, i32, i32, i32) {
    %c0_i32 = arith.constant 0 : i32
    %c0_i32_0 = arith.constant 0 : i32
    return %arg0, %arg1, %c0_i32, %arg2 : i32, i32, i32, i32
  }
}

module attributes {stable_mosaic.version = 11 : i64} {
  func.func @_bn_relu_kernel(%arg0: i32, %arg1: i32, %arg2: memref<32x256xf32, #tpu.memory_space<vmem>>, %arg3: memref<4x256xf32, #tpu.memory_space<vmem>>, %arg4: memref<4x256xf32, #tpu.memory_space<vmem>>, %arg5: memref<1x256xf32, #tpu.memory_space<vmem>>, %arg6: memref<1x256xf32, #tpu.memory_space<vmem>>, %arg7: memref<32x256xbf16, #tpu.memory_space<vmem>>) attributes {dimension_semantics = [#tpu.dimension_semantics<parallel>, #tpu.dimension_semantics<parallel>], iteration_bounds = array<i64: 1, 2>, scalar_prefetch = 0 : i64, scratch_operands = 0 : i64, tpu.core_type = #tpu.core_type<tc>, window_params = [{transform_indices = @transform_0, window_bounds = array<i64: 32, 256>}, {transform_indices = @transform_1, window_bounds = array<i64: 4, 256>}, {transform_indices = @transform_2, window_bounds = array<i64: 4, 256>}, {transform_indices = @transform_3, window_bounds = array<i64: 1, 256>}, {transform_indices = @transform_4, window_bounds = array<i64: 1, 256>}, {transform_indices = @transform_5, window_bounds = array<i64: 32, 256>}]} {
    %c0 = arith.constant 0 : index
    %c0_0 = arith.constant 0 : index
    %0 = vector.load %arg3[%c0, %c0_0] : memref<4x256xf32, #tpu.memory_space<vmem>>, vector<4x256xf32>
    %cst = arith.constant dense<0.000000e+00> : vector<256xf32>
    %1 = vector.multi_reduction <add>, %0, %cst [0] : vector<4x256xf32> to vector<256xf32>
    %2 = vector.shape_cast %1 : vector<256xf32> to vector<1x256xf32>
    %cst_1 = arith.constant 3.125000e-02 : f32
    %3 = vector.broadcast %cst_1 : f32 to vector<1x256xf32>
    %4 = arith.mulf %2, %3 : vector<1x256xf32>
    %c0_2 = arith.constant 0 : index
    %c0_3 = arith.constant 0 : index
    %5 = vector.load %arg4[%c0_2, %c0_3] : memref<4x256xf32, #tpu.memory_space<vmem>>, vector<4x256xf32>
    %cst_4 = arith.constant dense<0.000000e+00> : vector<256xf32>
    %6 = vector.multi_reduction <add>, %5, %cst_4 [0] : vector<4x256xf32> to vector<256xf32>
    %7 = vector.shape_cast %6 : vector<256xf32> to vector<1x256xf32>
    %cst_5 = arith.constant 3.125000e-02 : f32
    %8 = vector.broadcast %cst_5 : f32 to vector<1x256xf32>
    %9 = arith.mulf %7, %8 : vector<1x256xf32>
    %10 = arith.mulf %4, %4 : vector<1x256xf32>
    %11 = arith.subf %9, %10 : vector<1x256xf32>
    %cst_6 = arith.constant 9.99999974E-6 : f32
    %12 = vector.broadcast %cst_6 : f32 to vector<1x256xf32>
    %13 = arith.addf %11, %12 : vector<1x256xf32>
    %14 = math.rsqrt %13 : vector<1x256xf32>
    %c0_7 = arith.constant 0 : index
    %c0_8 = arith.constant 0 : index
    %15 = vector.load %arg5[%c0_7, %c0_8] : memref<1x256xf32, #tpu.memory_space<vmem>>, vector<1x256xf32>
    %16 = arith.mulf %15, %14 : vector<1x256xf32>
    %c0_9 = arith.constant 0 : index
    %c0_10 = arith.constant 0 : index
    %17 = vector.load %arg6[%c0_9, %c0_10] : memref<1x256xf32, #tpu.memory_space<vmem>>, vector<1x256xf32>
    %18 = arith.mulf %4, %16 : vector<1x256xf32>
    %19 = arith.subf %17, %18 : vector<1x256xf32>
    %c0_11 = arith.constant 0 : index
    %c0_12 = arith.constant 0 : index
    %20 = vector.load %arg2[%c0_11, %c0_12] : memref<32x256xf32, #tpu.memory_space<vmem>>, vector<32x256xf32>
    %21 = vector.broadcast %16 : vector<1x256xf32> to vector<32x256xf32>
    %22 = arith.mulf %20, %21 : vector<32x256xf32>
    %23 = vector.broadcast %19 : vector<1x256xf32> to vector<32x256xf32>
    %24 = arith.addf %22, %23 : vector<32x256xf32>
    %cst_13 = arith.constant 0.000000e+00 : f32
    %25 = vector.broadcast %cst_13 : f32 to vector<32x256xf32>
    %26 = arith.maximumf %24, %25 : vector<32x256xf32>
    %27 = arith.truncf %26 : vector<32x256xf32> to vector<32x256xbf16>
    %c0_14 = arith.constant 0 : index
    %c0_15 = arith.constant 0 : index
    %28 = vector.load %arg7[%c0_14, %c0_15] : memref<32x256xbf16, #tpu.memory_space<vmem>>, vector<32x256xbf16>
    tpu.vector_store %arg7[%c0_14, %c0_15], %27 {strides = array<i32>} : memref<32x256xbf16, #tpu.memory_space<vmem>>, vector<32x256xbf16>,
    return
  }
  func.func @transform_0(%arg0: i32, %arg1: i32) -> (i32, i32) {
    %c0_i32 = arith.constant 0 : i32
    return %arg0, %arg1 : i32, i32
  }
  func.func @transform_1(%arg0: i32, %arg1: i32) -> (i32, i32) {
    %c0_i32 = arith.constant 0 : i32
    %c0_i32_0 = arith.constant 0 : i32
    return %c0_i32, %arg1 : i32, i32
  }
  func.func @transform_2(%arg0: i32, %arg1: i32) -> (i32, i32) {
    %c0_i32 = arith.constant 0 : i32
    %c0_i32_0 = arith.constant 0 : i32
    return %c0_i32, %arg1 : i32, i32
  }
  func.func @transform_3(%arg0: i32, %arg1: i32) -> (i32, i32) {
    %c0_i32 = arith.constant 0 : i32
    %c0_i32_0 = arith.constant 0 : i32
    return %c0_i32, %arg1 : i32, i32
  }
  func.func @transform_4(%arg0: i32, %arg1: i32) -> (i32, i32) {
    %c0_i32 = arith.constant 0 : i32
    %c0_i32_0 = arith.constant 0 : i32
    return %c0_i32, %arg1 : i32, i32
  }
  func.func @transform_5(%arg0: i32, %arg1: i32) -> (i32, i32) {
    %c0_i32 = arith.constant 0 : i32
    return %arg0, %arg1 : i32, i32
  }
}

module attributes {stable_mosaic.version = 11 : i64} {
  func.func @_deconv_mm_kernel(%arg0: i32, %arg1: i32, %arg2: i32, %arg3: i32, %arg4: memref<1x32x1024xbf16, #tpu.memory_space<vmem>>, %arg5: memref<1x1024x256xbf16, #tpu.memory_space<vmem>>, %arg6: memref<1x32x256xf32, #tpu.memory_space<vmem>>, %arg7: memref<1x1x1x256xf32, #tpu.memory_space<vmem>>, %arg8: memref<1x1x1x256xf32, #tpu.memory_space<vmem>>) attributes {dimension_semantics = [#tpu.dimension_semantics<parallel>, #tpu.dimension_semantics<parallel>, #tpu.dimension_semantics<parallel>, #tpu.dimension_semantics<arbitrary>], iteration_bounds = array<i64: 4, 1, 1, 2>, scalar_prefetch = 0 : i64, scratch_operands = 0 : i64, tpu.core_type = #tpu.core_type<tc>, window_params = [{transform_indices = @transform_0, window_bounds = array<i64: 1, 32, 1024>}, {transform_indices = @transform_1, window_bounds = array<i64: 1, 1024, 256>}, {transform_indices = @transform_2, window_bounds = array<i64: 1, 32, 256>}, {transform_indices = @transform_3, window_bounds = array<i64: 1, 1, 1, 256>}, {transform_indices = @transform_4, window_bounds = array<i64: 1, 1, 1, 256>}]} {
    %c0 = arith.constant 0 : index
    %c0_0 = arith.constant 0 : index
    %c0_1 = arith.constant 0 : index
    %0 = vector.load %arg4[%c0, %c0_0, %c0_1] : memref<1x32x1024xbf16, #tpu.memory_space<vmem>>, vector<1x32x1024xbf16>
    %1 = vector.shape_cast %0 : vector<1x32x1024xbf16> to vector<32x1024xbf16>
    %c0_2 = arith.constant 0 : index
    %c0_3 = arith.constant 0 : index
    %c0_4 = arith.constant 0 : index
    %2 = vector.load %arg5[%c0_2, %c0_3, %c0_4] : memref<1x1024x256xbf16, #tpu.memory_space<vmem>>, vector<1x1024x256xbf16>
    %3 = vector.shape_cast %2 : vector<1x1024x256xbf16> to vector<1024x256xbf16>
    %cst = arith.constant dense<0.000000e+00> : vector<32x256xf32>
    %4 = tpu.matmul %1, %3, %cst {dimension_numbers = #tpu.dot_dimension_numbers<[1], [0], [0], [1], [0, 0, 1, 1], [], []>} : vector<32x1024xbf16>, vector<1024x256xbf16>, vector<32x256xf32> -> vector<32x256xf32>
    %c0_i32 = arith.constant 0 : i32
    %5 = arith.cmpi eq, %arg3, %c0_i32 : i32
    %6 = arith.extui %5 : i1 to i32
    %c0_i32_5 = arith.constant 0 : i32
    %7 = arith.cmpi ne, %6, %c0_i32_5 : i32
    scf.if %7 {
      %c0_10 = arith.constant 0 : index
      %c0_11 = arith.constant 0 : index
      %c0_12 = arith.constant 0 : index
      %16 = vector.load %arg6[%c0_10, %c0_11, %c0_12] : memref<1x32x256xf32, #tpu.memory_space<vmem>>, vector<1x32x256xf32>
      %17 = vector.shape_cast %16 : vector<1x32x256xf32> to vector<32x256xf32>
      %18 = vector.shape_cast %4 : vector<32x256xf32> to vector<1x32x256xf32>
      tpu.vector_store %arg6[%c0_10, %c0_11, %c0_12], %18 {strides = array<i32>} : memref<1x32x256xf32, #tpu.memory_space<vmem>>, vector<1x32x256xf32>,
    } else {
    }
    %c0_i32_6 = arith.constant 0 : i32
    %8 = arith.cmpi sgt, %arg3, %c0_i32_6 : i32
    %c1_i32 = arith.constant 1 : i32
    %9 = arith.cmpi slt, %arg3, %c1_i32 : i32
    %10 = arith.andi %8, %9 : i1
    %11 = arith.extui %10 : i1 to i32
    %c0_i32_7 = arith.constant 0 : i32
    %12 = arith.cmpi ne, %11, %c0_i32_7 : i32
    scf.if %12 {
      %c0_10 = arith.constant 0 : index
      %c0_11 = arith.constant 0 : index
      %c0_12 = arith.constant 0 : index
      %16 = vector.load %arg6[%c0_10, %c0_11, %c0_12] : memref<1x32x256xf32, #tpu.memory_space<vmem>>, vector<1x32x256xf32>
      %17 = vector.shape_cast %16 : vector<1x32x256xf32> to vector<32x256xf32>
      %18 = arith.addf %17, %4 : vector<32x256xf32>
      %c0_13 = arith.constant 0 : index
      %c0_14 = arith.constant 0 : index
      %c0_15 = arith.constant 0 : index
      %19 = vector.load %arg6[%c0_13, %c0_14, %c0_15] : memref<1x32x256xf32, #tpu.memory_space<vmem>>, vector<1x32x256xf32>
      %20 = vector.shape_cast %19 : vector<1x32x256xf32> to vector<32x256xf32>
      %21 = vector.shape_cast %18 : vector<32x256xf32> to vector<1x32x256xf32>
      tpu.vector_store %arg6[%c0_13, %c0_14, %c0_15], %21 {strides = array<i32>} : memref<1x32x256xf32, #tpu.memory_space<vmem>>, vector<1x32x256xf32>,
    } else {
    }
    %c1_i32_8 = arith.constant 1 : i32
    %13 = arith.cmpi eq, %arg3, %c1_i32_8 : i32
    %14 = arith.extui %13 : i1 to i32
    %c0_i32_9 = arith.constant 0 : i32
    %15 = arith.cmpi ne, %14, %c0_i32_9 : i32
    scf.if %15 {
      %c0_10 = arith.constant 0 : index
      %c0_11 = arith.constant 0 : index
      %c0_12 = arith.constant 0 : index
      %16 = vector.load %arg6[%c0_10, %c0_11, %c0_12] : memref<1x32x256xf32, #tpu.memory_space<vmem>>, vector<1x32x256xf32>
      %17 = vector.shape_cast %16 : vector<1x32x256xf32> to vector<32x256xf32>
      %18 = arith.addf %17, %4 : vector<32x256xf32>
      %c0_13 = arith.constant 0 : index
      %c0_14 = arith.constant 0 : index
      %c0_15 = arith.constant 0 : index
      %19 = vector.load %arg6[%c0_13, %c0_14, %c0_15] : memref<1x32x256xf32, #tpu.memory_space<vmem>>, vector<1x32x256xf32>
      %20 = vector.shape_cast %19 : vector<1x32x256xf32> to vector<32x256xf32>
      %21 = vector.shape_cast %18 : vector<32x256xf32> to vector<1x32x256xf32>
      tpu.vector_store %arg6[%c0_13, %c0_14, %c0_15], %21 {strides = array<i32>} : memref<1x32x256xf32, #tpu.memory_space<vmem>>, vector<1x32x256xf32>,
      %cst_16 = arith.constant dense<0.000000e+00> : vector<256xf32>
      %22 = vector.multi_reduction <add>, %18, %cst_16 [0] : vector<32x256xf32> to vector<256xf32>
      %23 = vector.shape_cast %22 : vector<256xf32> to vector<1x256xf32>
      %c0_17 = arith.constant 0 : index
      %c0_18 = arith.constant 0 : index
      %c0_19 = arith.constant 0 : index
      %c0_20 = arith.constant 0 : index
      %24 = vector.load %arg7[%c0_17, %c0_18, %c0_19, %c0_20] : memref<1x1x1x256xf32, #tpu.memory_space<vmem>>, vector<1x1x1x256xf32>
      %25 = vector.shape_cast %24 : vector<1x1x1x256xf32> to vector<1x256xf32>
      %26 = vector.shape_cast %23 : vector<1x256xf32> to vector<1x1x1x256xf32>
      tpu.vector_store %arg7[%c0_17, %c0_18, %c0_19, %c0_20], %26 {strides = array<i32>} : memref<1x1x1x256xf32, #tpu.memory_space<vmem>>, vector<1x1x1x256xf32>,
      %27 = arith.mulf %18, %18 : vector<32x256xf32>
      %cst_21 = arith.constant dense<0.000000e+00> : vector<256xf32>
      %28 = vector.multi_reduction <add>, %27, %cst_21 [0] : vector<32x256xf32> to vector<256xf32>
      %29 = vector.shape_cast %28 : vector<256xf32> to vector<1x256xf32>
      %c0_22 = arith.constant 0 : index
      %c0_23 = arith.constant 0 : index
      %c0_24 = arith.constant 0 : index
      %c0_25 = arith.constant 0 : index
      %30 = vector.load %arg8[%c0_22, %c0_23, %c0_24, %c0_25] : memref<1x1x1x256xf32, #tpu.memory_space<vmem>>, vector<1x1x1x256xf32>
      %31 = vector.shape_cast %30 : vector<1x1x1x256xf32> to vector<1x256xf32>
      %32 = vector.shape_cast %29 : vector<1x256xf32> to vector<1x1x1x256xf32>
      tpu.vector_store %arg8[%c0_22, %c0_23, %c0_24, %c0_25], %32 {strides = array<i32>} : memref<1x1x1x256xf32, #tpu.memory_space<vmem>>, vector<1x1x1x256xf32>,
    } else {
    }
    return
  }
  func.func @transform_0(%arg0: i32, %arg1: i32, %arg2: i32, %arg3: i32) -> (i32, i32, i32) {
    %c0_i32 = arith.constant 0 : i32
    return %arg0, %arg1, %arg3 : i32, i32, i32
  }
  func.func @transform_1(%arg0: i32, %arg1: i32, %arg2: i32, %arg3: i32) -> (i32, i32, i32) {
    %c0_i32 = arith.constant 0 : i32
    return %arg0, %arg3, %arg2 : i32, i32, i32
  }
  func.func @transform_2(%arg0: i32, %arg1: i32, %arg2: i32, %arg3: i32) -> (i32, i32, i32) {
    %c0_i32 = arith.constant 0 : i32
    return %arg0, %arg1, %arg2 : i32, i32, i32
  }
  func.func @transform_3(%arg0: i32, %arg1: i32, %arg2: i32, %arg3: i32) -> (i32, i32, i32, i32) {
    %c0_i32 = arith.constant 0 : i32
    %c0_i32_0 = arith.constant 0 : i32
    return %arg0, %arg1, %c0_i32, %arg2 : i32, i32, i32, i32
  }
  func.func @transform_4(%arg0: i32, %arg1: i32, %arg2: i32, %arg3: i32) -> (i32, i32, i32, i32) {
    %c0_i32 = arith.constant 0 : i32
    %c0_i32_0 = arith.constant 0 : i32
    return %arg0, %arg1, %c0_i32, %arg2 : i32, i32, i32, i32
  }
}

module attributes {stable_mosaic.version = 11 : i64} {
  func.func @_bn_relu_kernel(%arg0: i32, %arg1: i32, %arg2: memref<128x256xf32, #tpu.memory_space<vmem>>, %arg3: memref<4x256xf32, #tpu.memory_space<vmem>>, %arg4: memref<4x256xf32, #tpu.memory_space<vmem>>, %arg5: memref<1x256xf32, #tpu.memory_space<vmem>>, %arg6: memref<1x256xf32, #tpu.memory_space<vmem>>, %arg7: memref<128x256xbf16, #tpu.memory_space<vmem>>) attributes {dimension_semantics = [#tpu.dimension_semantics<parallel>, #tpu.dimension_semantics<parallel>], iteration_bounds = array<i64: 1, 1>, scalar_prefetch = 0 : i64, scratch_operands = 0 : i64, tpu.core_type = #tpu.core_type<tc>, window_params = [{transform_indices = @transform_0, window_bounds = array<i64: 128, 256>}, {transform_indices = @transform_1, window_bounds = array<i64: 4, 256>}, {transform_indices = @transform_2, window_bounds = array<i64: 4, 256>}, {transform_indices = @transform_3, window_bounds = array<i64: 1, 256>}, {transform_indices = @transform_4, window_bounds = array<i64: 1, 256>}, {transform_indices = @transform_5, window_bounds = array<i64: 128, 256>}]} {
    %c0 = arith.constant 0 : index
    %c0_0 = arith.constant 0 : index
    %0 = vector.load %arg3[%c0, %c0_0] : memref<4x256xf32, #tpu.memory_space<vmem>>, vector<4x256xf32>
    %cst = arith.constant dense<0.000000e+00> : vector<256xf32>
    %1 = vector.multi_reduction <add>, %0, %cst [0] : vector<4x256xf32> to vector<256xf32>
    %2 = vector.shape_cast %1 : vector<256xf32> to vector<1x256xf32>
    %cst_1 = arith.constant 7.812500e-03 : f32
    %3 = vector.broadcast %cst_1 : f32 to vector<1x256xf32>
    %4 = arith.mulf %2, %3 : vector<1x256xf32>
    %c0_2 = arith.constant 0 : index
    %c0_3 = arith.constant 0 : index
    %5 = vector.load %arg4[%c0_2, %c0_3] : memref<4x256xf32, #tpu.memory_space<vmem>>, vector<4x256xf32>
    %cst_4 = arith.constant dense<0.000000e+00> : vector<256xf32>
    %6 = vector.multi_reduction <add>, %5, %cst_4 [0] : vector<4x256xf32> to vector<256xf32>
    %7 = vector.shape_cast %6 : vector<256xf32> to vector<1x256xf32>
    %cst_5 = arith.constant 7.812500e-03 : f32
    %8 = vector.broadcast %cst_5 : f32 to vector<1x256xf32>
    %9 = arith.mulf %7, %8 : vector<1x256xf32>
    %10 = arith.mulf %4, %4 : vector<1x256xf32>
    %11 = arith.subf %9, %10 : vector<1x256xf32>
    %cst_6 = arith.constant 9.99999974E-6 : f32
    %12 = vector.broadcast %cst_6 : f32 to vector<1x256xf32>
    %13 = arith.addf %11, %12 : vector<1x256xf32>
    %14 = math.rsqrt %13 : vector<1x256xf32>
    %c0_7 = arith.constant 0 : index
    %c0_8 = arith.constant 0 : index
    %15 = vector.load %arg5[%c0_7, %c0_8] : memref<1x256xf32, #tpu.memory_space<vmem>>, vector<1x256xf32>
    %16 = arith.mulf %15, %14 : vector<1x256xf32>
    %c0_9 = arith.constant 0 : index
    %c0_10 = arith.constant 0 : index
    %17 = vector.load %arg6[%c0_9, %c0_10] : memref<1x256xf32, #tpu.memory_space<vmem>>, vector<1x256xf32>
    %18 = arith.mulf %4, %16 : vector<1x256xf32>
    %19 = arith.subf %17, %18 : vector<1x256xf32>
    %c0_11 = arith.constant 0 : index
    %c0_12 = arith.constant 0 : index
    %20 = vector.load %arg2[%c0_11, %c0_12] : memref<128x256xf32, #tpu.memory_space<vmem>>, vector<128x256xf32>
    %21 = vector.broadcast %16 : vector<1x256xf32> to vector<128x256xf32>
    %22 = arith.mulf %20, %21 : vector<128x256xf32>
    %23 = vector.broadcast %19 : vector<1x256xf32> to vector<128x256xf32>
    %24 = arith.addf %22, %23 : vector<128x256xf32>
    %cst_13 = arith.constant 0.000000e+00 : f32
    %25 = vector.broadcast %cst_13 : f32 to vector<128x256xf32>
    %26 = arith.maximumf %24, %25 : vector<128x256xf32>
    %27 = arith.truncf %26 : vector<128x256xf32> to vector<128x256xbf16>
    %c0_14 = arith.constant 0 : index
    %c0_15 = arith.constant 0 : index
    %28 = vector.load %arg7[%c0_14, %c0_15] : memref<128x256xbf16, #tpu.memory_space<vmem>>, vector<128x256xbf16>
    tpu.vector_store %arg7[%c0_14, %c0_15], %27 {strides = array<i32>} : memref<128x256xbf16, #tpu.memory_space<vmem>>, vector<128x256xbf16>,
    return
  }
  func.func @transform_0(%arg0: i32, %arg1: i32) -> (i32, i32) {
    %c0_i32 = arith.constant 0 : i32
    return %arg0, %arg1 : i32, i32
  }
  func.func @transform_1(%arg0: i32, %arg1: i32) -> (i32, i32) {
    %c0_i32 = arith.constant 0 : i32
    %c0_i32_0 = arith.constant 0 : i32
    return %c0_i32, %arg1 : i32, i32
  }
  func.func @transform_2(%arg0: i32, %arg1: i32) -> (i32, i32) {
    %c0_i32 = arith.constant 0 : i32
    %c0_i32_0 = arith.constant 0 : i32
    return %c0_i32, %arg1 : i32, i32
  }
  func.func @transform_3(%arg0: i32, %arg1: i32) -> (i32, i32) {
    %c0_i32 = arith.constant 0 : i32
    %c0_i32_0 = arith.constant 0 : i32
    return %c0_i32, %arg1 : i32, i32
  }
  func.func @transform_4(%arg0: i32, %arg1: i32) -> (i32, i32) {
    %c0_i32 = arith.constant 0 : i32
    %c0_i32_0 = arith.constant 0 : i32
    return %c0_i32, %arg1 : i32, i32
  }
  func.func @transform_5(%arg0: i32, %arg1: i32) -> (i32, i32) {
    %c0_i32 = arith.constant 0 : i32
    return %arg0, %arg1 : i32, i32
  }
}

module attributes {stable_mosaic.version = 11 : i64} {
  func.func @_deconv_mm_kernel(%arg0: i32, %arg1: i32, %arg2: i32, %arg3: i32, %arg4: memref<1x128x1024xbf16, #tpu.memory_space<vmem>>, %arg5: memref<1x1024x128xbf16, #tpu.memory_space<vmem>>, %arg6: memref<1x128x128xf32, #tpu.memory_space<vmem>>, %arg7: memref<1x1x1x128xf32, #tpu.memory_space<vmem>>, %arg8: memref<1x1x1x128xf32, #tpu.memory_space<vmem>>) attributes {dimension_semantics = [#tpu.dimension_semantics<parallel>, #tpu.dimension_semantics<parallel>, #tpu.dimension_semantics<parallel>, #tpu.dimension_semantics<arbitrary>], iteration_bounds = array<i64: 4, 1, 1, 1>, scalar_prefetch = 0 : i64, scratch_operands = 0 : i64, tpu.core_type = #tpu.core_type<tc>, window_params = [{transform_indices = @transform_0, window_bounds = array<i64: 1, 128, 1024>}, {transform_indices = @transform_1, window_bounds = array<i64: 1, 1024, 128>}, {transform_indices = @transform_2, window_bounds = array<i64: 1, 128, 128>}, {transform_indices = @transform_3, window_bounds = array<i64: 1, 1, 1, 128>}, {transform_indices = @transform_4, window_bounds = array<i64: 1, 1, 1, 128>}]} {
    %c0 = arith.constant 0 : index
    %c0_0 = arith.constant 0 : index
    %c0_1 = arith.constant 0 : index
    %0 = vector.load %arg4[%c0, %c0_0, %c0_1] : memref<1x128x1024xbf16, #tpu.memory_space<vmem>>, vector<1x128x1024xbf16>
    %1 = vector.shape_cast %0 : vector<1x128x1024xbf16> to vector<128x1024xbf16>
    %c0_2 = arith.constant 0 : index
    %c0_3 = arith.constant 0 : index
    %c0_4 = arith.constant 0 : index
    %2 = vector.load %arg5[%c0_2, %c0_3, %c0_4] : memref<1x1024x128xbf16, #tpu.memory_space<vmem>>, vector<1x1024x128xbf16>
    %3 = vector.shape_cast %2 : vector<1x1024x128xbf16> to vector<1024x128xbf16>
    %cst = arith.constant dense<0.000000e+00> : vector<128x128xf32>
    %4 = tpu.matmul %1, %3, %cst {dimension_numbers = #tpu.dot_dimension_numbers<[1], [0], [0], [1], [0, 0, 1, 1], [], []>} : vector<128x1024xbf16>, vector<1024x128xbf16>, vector<128x128xf32> -> vector<128x128xf32>
    %c0_5 = arith.constant 0 : index
    %c0_6 = arith.constant 0 : index
    %c0_7 = arith.constant 0 : index
    %5 = vector.load %arg6[%c0_5, %c0_6, %c0_7] : memref<1x128x128xf32, #tpu.memory_space<vmem>>, vector<1x128x128xf32>
    %6 = vector.shape_cast %5 : vector<1x128x128xf32> to vector<128x128xf32>
    %7 = vector.shape_cast %4 : vector<128x128xf32> to vector<1x128x128xf32>
    tpu.vector_store %arg6[%c0_5, %c0_6, %c0_7], %7 {strides = array<i32>} : memref<1x128x128xf32, #tpu.memory_space<vmem>>, vector<1x128x128xf32>,
    %cst_8 = arith.constant dense<0.000000e+00> : vector<128xf32>
    %8 = vector.multi_reduction <add>, %4, %cst_8 [0] : vector<128x128xf32> to vector<128xf32>
    %9 = vector.shape_cast %8 : vector<128xf32> to vector<1x128xf32>
    %c0_9 = arith.constant 0 : index
    %c0_10 = arith.constant 0 : index
    %c0_11 = arith.constant 0 : index
    %c0_12 = arith.constant 0 : index
    %10 = vector.load %arg7[%c0_9, %c0_10, %c0_11, %c0_12] : memref<1x1x1x128xf32, #tpu.memory_space<vmem>>, vector<1x1x1x128xf32>
    %11 = vector.shape_cast %10 : vector<1x1x1x128xf32> to vector<1x128xf32>
    %12 = vector.shape_cast %9 : vector<1x128xf32> to vector<1x1x1x128xf32>
    tpu.vector_store %arg7[%c0_9, %c0_10, %c0_11, %c0_12], %12 {strides = array<i32>} : memref<1x1x1x128xf32, #tpu.memory_space<vmem>>, vector<1x1x1x128xf32>,
    %13 = arith.mulf %4, %4 : vector<128x128xf32>
    %cst_13 = arith.constant dense<0.000000e+00> : vector<128xf32>
    %14 = vector.multi_reduction <add>, %13, %cst_13 [0] : vector<128x128xf32> to vector<128xf32>
    %15 = vector.shape_cast %14 : vector<128xf32> to vector<1x128xf32>
    %c0_14 = arith.constant 0 : index
    %c0_15 = arith.constant 0 : index
    %c0_16 = arith.constant 0 : index
    %c0_17 = arith.constant 0 : index
    %16 = vector.load %arg8[%c0_14, %c0_15, %c0_16, %c0_17] : memref<1x1x1x128xf32, #tpu.memory_space<vmem>>, vector<1x1x1x128xf32>
    %17 = vector.shape_cast %16 : vector<1x1x1x128xf32> to vector<1x128xf32>
    %18 = vector.shape_cast %15 : vector<1x128xf32> to vector<1x1x1x128xf32>
    tpu.vector_store %arg8[%c0_14, %c0_15, %c0_16, %c0_17], %18 {strides = array<i32>} : memref<1x1x1x128xf32, #tpu.memory_space<vmem>>, vector<1x1x1x128xf32>,
    return
  }
  func.func @transform_0(%arg0: i32, %arg1: i32, %arg2: i32, %arg3: i32) -> (i32, i32, i32) {
    %c0_i32 = arith.constant 0 : i32
    return %arg0, %arg1, %arg3 : i32, i32, i32
  }
  func.func @transform_1(%arg0: i32, %arg1: i32, %arg2: i32, %arg3: i32) -> (i32, i32, i32) {
    %c0_i32 = arith.constant 0 : i32
    return %arg0, %arg3, %arg2 : i32, i32, i32
  }
  func.func @transform_2(%arg0: i32, %arg1: i32, %arg2: i32, %arg3: i32) -> (i32, i32, i32) {
    %c0_i32 = arith.constant 0 : i32
    return %arg0, %arg1, %arg2 : i32, i32, i32
  }
  func.func @transform_3(%arg0: i32, %arg1: i32, %arg2: i32, %arg3: i32) -> (i32, i32, i32, i32) {
    %c0_i32 = arith.constant 0 : i32
    %c0_i32_0 = arith.constant 0 : i32
    return %arg0, %arg1, %c0_i32, %arg2 : i32, i32, i32, i32
  }
  func.func @transform_4(%arg0: i32, %arg1: i32, %arg2: i32, %arg3: i32) -> (i32, i32, i32, i32) {
    %c0_i32 = arith.constant 0 : i32
    %c0_i32_0 = arith.constant 0 : i32
    return %arg0, %arg1, %c0_i32, %arg2 : i32, i32, i32, i32
  }
}

module attributes {stable_mosaic.version = 11 : i64} {
  func.func @_bn_relu_kernel(%arg0: i32, %arg1: i32, %arg2: memref<512x128xf32, #tpu.memory_space<vmem>>, %arg3: memref<4x128xf32, #tpu.memory_space<vmem>>, %arg4: memref<4x128xf32, #tpu.memory_space<vmem>>, %arg5: memref<1x128xf32, #tpu.memory_space<vmem>>, %arg6: memref<1x128xf32, #tpu.memory_space<vmem>>, %arg7: memref<512x128xbf16, #tpu.memory_space<vmem>>) attributes {dimension_semantics = [#tpu.dimension_semantics<parallel>, #tpu.dimension_semantics<parallel>], iteration_bounds = array<i64: 1, 1>, scalar_prefetch = 0 : i64, scratch_operands = 0 : i64, tpu.core_type = #tpu.core_type<tc>, window_params = [{transform_indices = @transform_0, window_bounds = array<i64: 512, 128>}, {transform_indices = @transform_1, window_bounds = array<i64: 4, 128>}, {transform_indices = @transform_2, window_bounds = array<i64: 4, 128>}, {transform_indices = @transform_3, window_bounds = array<i64: 1, 128>}, {transform_indices = @transform_4, window_bounds = array<i64: 1, 128>}, {transform_indices = @transform_5, window_bounds = array<i64: 512, 128>}]} {
    %c0 = arith.constant 0 : index
    %c0_0 = arith.constant 0 : index
    %0 = vector.load %arg3[%c0, %c0_0] : memref<4x128xf32, #tpu.memory_space<vmem>>, vector<4x128xf32>
    %cst = arith.constant dense<0.000000e+00> : vector<128xf32>
    %1 = vector.multi_reduction <add>, %0, %cst [0] : vector<4x128xf32> to vector<128xf32>
    %2 = vector.shape_cast %1 : vector<128xf32> to vector<1x128xf32>
    %cst_1 = arith.constant 0.001953125 : f32
    %3 = vector.broadcast %cst_1 : f32 to vector<1x128xf32>
    %4 = arith.mulf %2, %3 : vector<1x128xf32>
    %c0_2 = arith.constant 0 : index
    %c0_3 = arith.constant 0 : index
    %5 = vector.load %arg4[%c0_2, %c0_3] : memref<4x128xf32, #tpu.memory_space<vmem>>, vector<4x128xf32>
    %cst_4 = arith.constant dense<0.000000e+00> : vector<128xf32>
    %6 = vector.multi_reduction <add>, %5, %cst_4 [0] : vector<4x128xf32> to vector<128xf32>
    %7 = vector.shape_cast %6 : vector<128xf32> to vector<1x128xf32>
    %cst_5 = arith.constant 0.001953125 : f32
    %8 = vector.broadcast %cst_5 : f32 to vector<1x128xf32>
    %9 = arith.mulf %7, %8 : vector<1x128xf32>
    %10 = arith.mulf %4, %4 : vector<1x128xf32>
    %11 = arith.subf %9, %10 : vector<1x128xf32>
    %cst_6 = arith.constant 9.99999974E-6 : f32
    %12 = vector.broadcast %cst_6 : f32 to vector<1x128xf32>
    %13 = arith.addf %11, %12 : vector<1x128xf32>
    %14 = math.rsqrt %13 : vector<1x128xf32>
    %c0_7 = arith.constant 0 : index
    %c0_8 = arith.constant 0 : index
    %15 = vector.load %arg5[%c0_7, %c0_8] : memref<1x128xf32, #tpu.memory_space<vmem>>, vector<1x128xf32>
    %16 = arith.mulf %15, %14 : vector<1x128xf32>
    %c0_9 = arith.constant 0 : index
    %c0_10 = arith.constant 0 : index
    %17 = vector.load %arg6[%c0_9, %c0_10] : memref<1x128xf32, #tpu.memory_space<vmem>>, vector<1x128xf32>
    %18 = arith.mulf %4, %16 : vector<1x128xf32>
    %19 = arith.subf %17, %18 : vector<1x128xf32>
    %c0_11 = arith.constant 0 : index
    %c0_12 = arith.constant 0 : index
    %20 = vector.load %arg2[%c0_11, %c0_12] : memref<512x128xf32, #tpu.memory_space<vmem>>, vector<512x128xf32>
    %21 = vector.broadcast %16 : vector<1x128xf32> to vector<512x128xf32>
    %22 = arith.mulf %20, %21 : vector<512x128xf32>
    %23 = vector.broadcast %19 : vector<1x128xf32> to vector<512x128xf32>
    %24 = arith.addf %22, %23 : vector<512x128xf32>
    %cst_13 = arith.constant 0.000000e+00 : f32
    %25 = vector.broadcast %cst_13 : f32 to vector<512x128xf32>
    %26 = arith.maximumf %24, %25 : vector<512x128xf32>
    %27 = arith.truncf %26 : vector<512x128xf32> to vector<512x128xbf16>
    %c0_14 = arith.constant 0 : index
    %c0_15 = arith.constant 0 : index
    %28 = vector.load %arg7[%c0_14, %c0_15] : memref<512x128xbf16, #tpu.memory_space<vmem>>, vector<512x128xbf16>
    tpu.vector_store %arg7[%c0_14, %c0_15], %27 {strides = array<i32>} : memref<512x128xbf16, #tpu.memory_space<vmem>>, vector<512x128xbf16>,
    return
  }
  func.func @transform_0(%arg0: i32, %arg1: i32) -> (i32, i32) {
    %c0_i32 = arith.constant 0 : i32
    return %arg0, %arg1 : i32, i32
  }
  func.func @transform_1(%arg0: i32, %arg1: i32) -> (i32, i32) {
    %c0_i32 = arith.constant 0 : i32
    %c0_i32_0 = arith.constant 0 : i32
    return %c0_i32, %arg1 : i32, i32
  }
  func.func @transform_2(%arg0: i32, %arg1: i32) -> (i32, i32) {
    %c0_i32 = arith.constant 0 : i32
    %c0_i32_0 = arith.constant 0 : i32
    return %c0_i32, %arg1 : i32, i32
  }
  func.func @transform_3(%arg0: i32, %arg1: i32) -> (i32, i32) {
    %c0_i32 = arith.constant 0 : i32
    %c0_i32_0 = arith.constant 0 : i32
    return %c0_i32, %arg1 : i32, i32
  }
  func.func @transform_4(%arg0: i32, %arg1: i32) -> (i32, i32) {
    %c0_i32 = arith.constant 0 : i32
    %c0_i32_0 = arith.constant 0 : i32
    return %c0_i32, %arg1 : i32, i32
  }
  func.func @transform_5(%arg0: i32, %arg1: i32) -> (i32, i32) {
    %c0_i32 = arith.constant 0 : i32
    return %arg0, %arg1 : i32, i32
  }
}

module attributes {stable_mosaic.version = 11 : i64} {
  func.func @_deconv_mm_kernel(%arg0: i32, %arg1: i32, %arg2: i32, %arg3: i32, %arg4: memref<1x256x512xbf16, #tpu.memory_space<vmem>>, %arg5: memref<1x512x128xbf16, #tpu.memory_space<vmem>>, %arg6: memref<1x128xf32, #tpu.memory_space<vmem>>, %arg7: memref<1x256x128xf32, #tpu.memory_space<vmem>>) attributes {dimension_semantics = [#tpu.dimension_semantics<parallel>, #tpu.dimension_semantics<parallel>, #tpu.dimension_semantics<parallel>, #tpu.dimension_semantics<arbitrary>], iteration_bounds = array<i64: 4, 2, 1, 1>, scalar_prefetch = 0 : i64, scratch_operands = 0 : i64, tpu.core_type = #tpu.core_type<tc>, window_params = [{transform_indices = @transform_0, window_bounds = array<i64: 1, 256, 512>}, {transform_indices = @transform_1, window_bounds = array<i64: 1, 512, 128>}, {transform_indices = @transform_2, window_bounds = array<i64: 1, 128>}, {transform_indices = @transform_3, window_bounds = array<i64: 1, 256, 128>}]} {
    %c0 = arith.constant 0 : index
    %c0_0 = arith.constant 0 : index
    %c0_1 = arith.constant 0 : index
    %0 = vector.load %arg4[%c0, %c0_0, %c0_1] : memref<1x256x512xbf16, #tpu.memory_space<vmem>>, vector<1x256x512xbf16>
    %1 = vector.shape_cast %0 : vector<1x256x512xbf16> to vector<256x512xbf16>
    %c0_2 = arith.constant 0 : index
    %c0_3 = arith.constant 0 : index
    %c0_4 = arith.constant 0 : index
    %2 = vector.load %arg5[%c0_2, %c0_3, %c0_4] : memref<1x512x128xbf16, #tpu.memory_space<vmem>>, vector<1x512x128xbf16>
    %3 = vector.shape_cast %2 : vector<1x512x128xbf16> to vector<512x128xbf16>
    %cst = arith.constant dense<0.000000e+00> : vector<256x128xf32>
    %4 = tpu.matmul %1, %3, %cst {dimension_numbers = #tpu.dot_dimension_numbers<[1], [0], [0], [1], [0, 0, 1, 1], [], []>} : vector<256x512xbf16>, vector<512x128xbf16>, vector<256x128xf32> -> vector<256x128xf32>
    %c0_5 = arith.constant 0 : index
    %c0_6 = arith.constant 0 : index
    %5 = vector.load %arg6[%c0_5, %c0_6] : memref<1x128xf32, #tpu.memory_space<vmem>>, vector<1x128xf32>
    %6 = vector.broadcast %5 : vector<1x128xf32> to vector<256x128xf32>
    %7 = arith.addf %4, %6 : vector<256x128xf32>
    %8 = math.tanh %7 : vector<256x128xf32>
    %c0_7 = arith.constant 0 : index
    %c0_8 = arith.constant 0 : index
    %c0_9 = arith.constant 0 : index
    %9 = vector.load %arg7[%c0_7, %c0_8, %c0_9] : memref<1x256x128xf32, #tpu.memory_space<vmem>>, vector<1x256x128xf32>
    %10 = vector.shape_cast %9 : vector<1x256x128xf32> to vector<256x128xf32>
    %11 = vector.shape_cast %8 : vector<256x128xf32> to vector<1x256x128xf32>
    tpu.vector_store %arg7[%c0_7, %c0_8, %c0_9], %11 {strides = array<i32>} : memref<1x256x128xf32, #tpu.memory_space<vmem>>, vector<1x256x128xf32>,
    return
  }
  func.func @transform_0(%arg0: i32, %arg1: i32, %arg2: i32, %arg3: i32) -> (i32, i32, i32) {
    %c0_i32 = arith.constant 0 : i32
    return %arg0, %arg1, %arg3 : i32, i32, i32
  }
  func.func @transform_1(%arg0: i32, %arg1: i32, %arg2: i32, %arg3: i32) -> (i32, i32, i32) {
    %c0_i32 = arith.constant 0 : i32
    return %arg0, %arg3, %arg2 : i32, i32, i32
  }
  func.func @transform_2(%arg0: i32, %arg1: i32, %arg2: i32, %arg3: i32) -> (i32, i32) {
    %c0_i32 = arith.constant 0 : i32
    %c0_i32_0 = arith.constant 0 : i32
    return %c0_i32, %arg2 : i32, i32
  }
  func.func @transform_3(%arg0: i32, %arg1: i32, %arg2: i32, %arg3: i32) -> (i32, i32, i32) {
    %c0_i32 = arith.constant 0 : i32
    return %arg0, %arg1, %arg2 : i32, i32, i32
  }
}

</mosaic_0001>

<llo_original>
// kernel: decoder_forward.10
$region0: #{decoder_forward.10}
  #allocation0 [shape = 'u32[]', space=smem, size = 0x4, offset = 0x4, fixed_abs, tag = 'smem constant byte address 0x4 - core index']
  #allocation1 [shape = 'u32[144,128]{1,0:T(1,128)}', space=vmem, size = 0x12000, scoped, tag = 'internal scratch']
  %s0 = inlined_call_operand.vmem [shape: f32[8,512], index: 0, kind: input, shape index: {}]
  %s1 = inlined_call_operand.vmem [shape: f32[4,512], index: 1, kind: input, shape index: {}]
  %s2 = inlined_call_operand.vmem [shape: f32[4,512], index: 2, kind: input, shape index: {}]
  %s3 = inlined_call_operand.vmem [shape: f32[1,512], index: 3, kind: input, shape index: {}]
  %s4 = inlined_call_operand.vmem [shape: f32[1,512], index: 4, kind: input, shape index: {}]
  %s5 = inlined_call_operand.vmem [shape: bf16[8,512], index: 5, kind: output, shape index: {}]
  %s6 = sld [smem:[#allocation0]]
  $region53: #{decoder_forward.10} parent=0
    _
  %s8 = ssub.s32 1, %s6
  %s9 = scalar_select 0, %s8, %s6
  loop: start=0, step=1, limit=4
  $region2: #{decoder_forward.10} parent=0 // loop_pre_header
    _
  $region3: #{decoder_forward.10} parent=0 // loop_header
    %s11 = sphi 0, %s15
    %p12 = scmp.ge.s32.totalorder %s11, 4
    %s18 = sphi 0, %s30
    %s19 = sphi 0, %s26
    %s20 = sphi 0, %s18
    %s21 = sphi 0, %s19
    %s22 = sphi 0, %s20
    %s23 = sphi 0, %s21
    %s35 = sphi 0, %s37
    %s38 = sphi 0, %s35
    %s39 = sphi 0, %s38
    %s55 = sphi 0, %s39
    %s61 = sphi 0, %s63
    %s64 = sphi 0, %s61
    %s65 = sphi 0, %s64
    %s81 = sphi 0, %s65
    %s87 = sphi 0, %s89
    %s90 = sphi 0, %s87
    %s91 = sphi 0, %s90
    %s107 = sphi 0, %s91
    %s113 = sphi 0, %s115
    %s116 = sphi 0, %s113
    %s117 = sphi 0, %s116
    %s133 = sphi 0, %s117
    %s139 = sphi 0, %s141
    %s142 = sphi 0, %s139
    %s143 = sphi 0, %s142
    %s159 = sphi 0, %s143
    %s167 = sphi 0, %s169
    %s170 = sphi 0, %s167
    %s171 = sphi 0, %s170
    %s187 = sphi 0, %s171
  $region4: #{decoder_forward.10} parent=0 // loop_header_branch
    %14 = sbr.rel (%p12) target = $region8
  $region5: #{decoder_forward.10} parent=0 // loop_body
    %s16 = ssub.s32 %s11, 1
    %s17 = ssub.s32 %s11, 2
    %s24 = sadd.s32 1, %s19
    %p25 = scmp.ge.s32.totalorder %s24, 2
    %s26 = scalar_select %p25, 0, %s24
    %s27 = sadd.s32 1, %s18
    %s28 = scalar_select %p25, %s27, %s18
    %p29 = scmp.ge.s32.totalorder %s28, 1
    %s30 = scalar_select %p29, 0, %s28
    %s31 = ssub.s32 %s18, %s30
    %s32 = ssub.s32 %s19, %s26
    %s33 = sor.u32 %s31, %s32
    %p34 = scmp.eq.s32.totalorder %s33, 0
    %s36 = sadd.s32 %s35, 1
    %s37 = scalar_select %p34, %s35, %s36
    %p40 = pneg %p34
    %p41 = scmp.eq.s32.totalorder %s11, 1
    %p42 = por %p40, %p41
    %p43 = scmp.ne.s32.totalorder %s35, %s38
    %p44 = scmp.eq.s32.totalorder %s11, 0
    %p45 = por %p43, %p44
    %p46 = scmp.ne.s32.totalorder %s35, %s38
    %p47 = scmp.eq.s32.totalorder %s16, 1
    %p48 = por %p46, %p47
    %p49 = scmp.ne.s32.totalorder %s38, %s39
    %p50 = scmp.eq.s32.totalorder %s16, 0
    %p51 = por %p49, %p50
    %p52 = scmp.ne.s32.totalorder %s38, %s39
    %p53 = scmp.eq.s32.totalorder %s17, 1
    %p54 = por %p52, %p53
    %p56 = scmp.ne.s32.totalorder %s39, %s55
    %p57 = scmp.eq.s32.totalorder %s17, 0
    %p58 = por %p56, %p57
    %s59 = ssub.s32 %s19, %s26
    %p60 = scmp.eq.s32.totalorder %s59, 0
    %s62 = sadd.s32 %s61, 1
    %s63 = scalar_select %p60, %s61, %s62
    %p66 = pneg %p60
    %p67 = scmp.eq.s32.totalorder %s11, 1
    %p68 = por %p66, %p67
    %p69 = scmp.ne.s32.totalorder %s61, %s64
    %p70 = scmp.eq.s32.totalorder %s11, 0
    %p71 = por %p69, %p70
    %p72 = scmp.ne.s32.totalorder %s61, %s64
    %p73 = scmp.eq.s32.totalorder %s16, 1
    %p74 = por %p72, %p73
    %p75 = scmp.ne.s32.totalorder %s64, %s65
    %p76 = scmp.eq.s32.totalorder %s16, 0
    %p77 = por %p75, %p76
    %p78 = scmp.ne.s32.totalorder %s64, %s65
    %p79 = scmp.eq.s32.totalorder %s17, 1
    %p80 = por %p78, %p79
    %p82 = scmp.ne.s32.totalorder %s65, %s81
    %p83 = scmp.eq.s32.totalorder %s17, 0
    %p84 = por %p82, %p83
    %s85 = ssub.s32 %s19, %s26
    %p86 = scmp.eq.s32.totalorder %s85, 0
    %s88 = sadd.s32 %s87, 1
    %s89 = scalar_select %p86, %s87, %s88
    %p92 = pneg %p86
    %p93 = scmp.eq.s32.totalorder %s11, 1
    %p94 = por %p92, %p93
    %p95 = scmp.ne.s32.totalorder %s87, %s90
    %p96 = scmp.eq.s32.totalorder %s11, 0
    %p97 = por %p95, %p96
    %p98 = scmp.ne.s32.totalorder %s87, %s90
    %p99 = scmp.eq.s32.totalorder %s16, 1
    %p100 = por %p98, %p99
    %p101 = scmp.ne.s32.totalorder %s90, %s91
    %p102 = scmp.eq.s32.totalorder %s16, 0
    %p103 = por %p101, %p102
    %p104 = scmp.ne.s32.totalorder %s90, %s91
    %p105 = scmp.eq.s32.totalorder %s17, 1
    %p106 = por %p104, %p105
    %p108 = scmp.ne.s32.totalorder %s91, %s107
    %p109 = scmp.eq.s32.totalorder %s17, 0
    %p110 = por %p108, %p109
    %s111 = ssub.s32 %s19, %s26
    %p112 = scmp.eq.s32.totalorder %s111, 0
    %s114 = sadd.s32 %s113, 1
    %s115 = scalar_select %p112, %s113, %s114
    %p118 = pneg %p112
    %p119 = scmp.eq.s32.totalorder %s11, 1
    %p120 = por %p118, %p119
    %p121 = scmp.ne.s32.totalorder %s113, %s116
    %p122 = scmp.eq.s32.totalorder %s11, 0
    %p123 = por %p121, %p122
    %p124 = scmp.ne.s32.totalorder %s113, %s116
    %p125 = scmp.eq.s32.totalorder %s16, 1
    %p126 = por %p124, %p125
    %p127 = scmp.ne.s32.totalorder %s116, %s117
    %p128 = scmp.eq.s32.totalorder %s16, 0
    %p129 = por %p127, %p128
    %p130 = scmp.ne.s32.totalorder %s116, %s117
    %p131 = scmp.eq.s32.totalorder %s17, 1
    %p132 = por %p130, %p131
    %p134 = scmp.ne.s32.totalorder %s117, %s133
    %p135 = scmp.eq.s32.totalorder %s17, 0
    %p136 = por %p134, %p135
    %s137 = ssub.s32 %s19, %s26
    %p138 = scmp.eq.s32.totalorder %s137, 0
    %s140 = sadd.s32 %s139, 1
    %s141 = scalar_select %p138, %s139, %s140
    %p144 = pneg %p138
    %p145 = scmp.eq.s32.totalorder %s11, 1
    %p146 = por %p144, %p145
    %p147 = scmp.ne.s32.totalorder %s139, %s142
    %p148 = scmp.eq.s32.totalorder %s11, 0
    %p149 = por %p147, %p148
    %p150 = scmp.ne.s32.totalorder %s139, %s142
    %p151 = scmp.eq.s32.totalorder %s16, 1
    %p152 = por %p150, %p151
    %p153 = scmp.ne.s32.totalorder %s142, %s143
    %p154 = scmp.eq.s32.totalorder %s16, 0
    %p155 = por %p153, %p154
    %p156 = scmp.ne.s32.totalorder %s142, %s143
    %p157 = scmp.eq.s32.totalorder %s17, 1
    %p158 = por %p156, %p157
    %p160 = scmp.ne.s32.totalorder %s143, %s159
    %p161 = scmp.eq.s32.totalorder %s17, 0
    %p162 = por %p160, %p161
    %s163 = ssub.s32 %s18, %s30
    %s164 = ssub.s32 %s19, %s26
    %s165 = sor.u32 %s163, %s164
    %p166 = scmp.eq.s32.totalorder %s165, 0
    %s168 = sadd.s32 %s167, 1
    %s169 = scalar_select %p166, %s167, %s168
    %p172 = pneg %p166
    %p173 = scmp.eq.s32.totalorder %s11, 1
    %p174 = por %p172, %p173
    %p175 = scmp.ne.s32.totalorder %s167, %s170
    %p176 = scmp.eq.s32.totalorder %s11, 0
    %p177 = por %p175, %p176
    %p178 = scmp.ne.s32.totalorder %s167, %s170
    %p179 = scmp.eq.s32.totalorder %s16, 1
    %p180 = por %p178, %p179
    %p181 = scmp.ne.s32.totalorder %s170, %s171
    %p182 = scmp.eq.s32.totalorder %s16, 0
    %p183 = por %p181, %p182
    %p184 = scmp.ne.s32.totalorder %s170, %s171
    %p185 = scmp.eq.s32.totalorder %s17, 1
    %p186 = por %p184, %p185
    %p188 = scmp.ne.s32.totalorder %s171, %s187
    %p189 = scmp.eq.s32.totalorder %s17, 0
    %p190 = por %p188, %p189
    %p191 = scmp.le.s32.totalorder 1, %s11
    %p192 = scmp.lt.s32.totalorder %s11, 3
    %p193 = pnand %p191, %p192
    %p194 = pneg %p193
    // Predicated region
    $region9: #{decoder_forward.10} parent=5 // pred_check
      _
    $region10: #{decoder_forward.10} parent=5 // pred_check_branch
      %196 = sbr.rel (%p193) target = $region12
    $region11: #{decoder_forward.10} parent=5 // pred_region
      %s197 = ssub.s32 %s11, 1
    $region12: #{decoder_forward.10} parent=5 // pred_fallthru
      _
    %p198 = scmp.lt.s32.totalorder %s11, 2
    // Predicated region
    $region13: #{decoder_forward.10} parent=5 // pred_check
      %p199 = pneg %p198
    $region14: #{decoder_forward.10} parent=5 // pred_check_branch
      %201 = sbr.rel (%p199) target = $region16
    $region15: #{decoder_forward.10} parent=5 // pred_region
      // Predicated region
      $region17: #{decoder_forward.10} parent=15 // pred_check
        %p202 = pneg %p45
      $region18: #{decoder_forward.10} parent=15 // pred_check_branch
        %204 = sbr.rel (%p202) target = $region20
      $region19: #{decoder_forward.10} parent=15 // pred_region
        %s205 = smul.u32 2, %s19
        %p206 = scmp.lt.s32.totalorder %s18, 0
        %s207 = scalar_select %p206, %s18, 0
        %p208 = scmp.lt.s32.totalorder %s205, 3
        %s209 = scalar_select %p208, %s205, 3
        %s210 = smul.addr %s207, 4
        %s211 = sadd.s32 %s209, %s210
        %s212 = smul.addr %s211, 8
        %s213 = scalar_lea.vmem %s0, %s212
        %s214 = smul.u32 2, %s19
      $region20: #{decoder_forward.10} parent=15 // pred_fallthru
        _
      // Predicated region
      $region21: #{decoder_forward.10} parent=15 // pred_check
        %p215 = pneg %p71
      $region22: #{decoder_forward.10} parent=15 // pred_check_branch
        %217 = sbr.rel (%p215) target = $region24
      $region23: #{decoder_forward.10} parent=15 // pred_region
        %s218 = smul.u32 2, %s19
        %p219 = scmp.lt.s32.totalorder %s218, 3
        %s220 = scalar_select %p219, %s218, 3
        %s221 = smul.addr %s220, 4
        %s222 = scalar_lea.vmem %s1, %s221
        %s223 = smul.u32 2, %s19
      $region24: #{decoder_forward.10} parent=15 // pred_fallthru
        _
      // Predicated region
      $region25: #{decoder_forward.10} parent=15 // pred_check
        %p224 = pneg %p97
      $region26: #{decoder_forward.10} parent=15 // pred_check_branch
        %226 = sbr.rel (%p224) target = $region28
      $region27: #{decoder_forward.10} parent=15 // pred_region
        %s227 = smul.u32 2, %s19
        %p228 = scmp.lt.s32.totalorder %s227, 3
        %s229 = scalar_select %p228, %s227, 3
        %s230 = smul.addr %s229, 4
        %s231 = scalar_lea.vmem %s2, %s230
        %s232 = smul.u32 2, %s19
      $region28: #{decoder_forward.10} parent=15 // pred_fallthru
        _
      // Predicated region
      $region29: #{decoder_forward.10} parent=15 // pred_check
        %p233 = pneg %p123
      $region30: #{decoder_forward.10} parent=15 // pred_check_branch
        %235 = sbr.rel (%p233) target = $region32
      $region31: #{decoder_forward.10} parent=15 // pred_region
        %s236 = smul.u32 2, %s19
        %p237 = scmp.lt.s32.totalorder %s236, 3
        %s238 = scalar_select %p237, %s236, 3
        %s239 = scalar_lea.vmem %s3, %s238
        %s240 = smul.u32 2, %s19
      $region32: #{decoder_forward.10} parent=15 // pred_fallthru
        _
      // Predicated region
      $region33: #{decoder_forward.10} parent=15 // pred_check
        %p241 = pneg %p149
      $region34: #{decoder_forward.10} parent=15 // pred_check_branch
        %243 = sbr.rel (%p241) target = $region36
      $region35: #{decoder_forward.10} parent=15 // pred_region
        %s244 = smul.u32 2, %s19
        %p245 = scmp.lt.s32.totalorder %s244, 3
        %s246 = scalar_select %p245, %s244, 3
        %s247 = scalar_lea.vmem %s4, %s246
        %s248 = smul.u32 2, %s19
      $region36: #{decoder_forward.10} parent=15 // pred_fallthru
        _
    $region16: #{decoder_forward.10} parent=5 // pred_fallthru
      _
    %p249 = scmp.le.s32.totalorder 1, %s11
    %p250 = scmp.lt.s32.totalorder %s11, 3
    %p251 = pnand %p249, %p250
    %p252 = pneg %p251
    // Predicated region
    $region37: #{decoder_forward.10} parent=5 // pred_check
      _
    $region38: #{decoder_forward.10} parent=5 // pred_check_branch
      %254 = sbr.rel (%p251) target = $region40
    $region39: #{decoder_forward.10} parent=5 // pred_region
      %s255 = ssub.s32 %s11, 1
      %s256 = smul.u32 2, %s21
      %p257 = scmp.lt.s32.totalorder %s20, 0
      %s258 = scalar_select %p257, %s20, 0
      %p259 = scmp.lt.s32.totalorder %s256, 3
      %s260 = scalar_select %p259, %s256, 3
      %s261 = smul.addr %s258, 4
      %s262 = sadd.s32 %s260, %s261
      %s263 = smul.addr %s262, 8
      %s264 = scalar_lea.vmem %s0, %s263
      %p265 = pneg %p51
      %p266 = pneg %p48
      %s267 = smul.u32 2, %s21
      %p268 = scmp.lt.s32.totalorder %s267, 3
      %s269 = scalar_select %p268, %s267, 3
      %s270 = smul.addr %s269, 4
      %s271 = scalar_lea.vmem %s1, %s270
      %p272 = pneg %p77
      %p273 = pneg %p74
      %s274 = smul.u32 2, %s21
      %p275 = scmp.lt.s32.totalorder %s274, 3
      %s276 = scalar_select %p275, %s274, 3
      %s277 = smul.addr %s276, 4
      %s278 = scalar_lea.vmem %s2, %s277
      %p279 = pneg %p103
      %p280 = pneg %p100
      %s281 = smul.u32 2, %s21
      %p282 = scmp.lt.s32.totalorder %s281, 3
      %s283 = scalar_select %p282, %s281, 3
      %s284 = scalar_lea.vmem %s3, %s283
      %p285 = pneg %p129
      %p286 = pneg %p126
      %s287 = smul.u32 2, %s21
      %p288 = scmp.lt.s32.totalorder %s287, 3
      %s289 = scalar_select %p288, %s287, 3
      %s290 = scalar_lea.vmem %s4, %s289
      %p291 = pneg %p155
      %p292 = pneg %p152
      %p293 = pneg %p183
      %p294 = pneg %p180
      %s295 = smul.u32 2, %s21
      %p296 = scmp.lt.s32.totalorder %s20, 0
      %s297 = scalar_select %p296, %s20, 0
      %p298 = scmp.lt.s32.totalorder %s295, 3
      %s299 = scalar_select %p298, %s295, 3
      %s300 = smul.addr %s297, 4
      %s301 = sadd.s32 %s299, %s300
      %s302 = smul.addr %s301, 4
      %s303 = scalar_lea.vmem %s5, %s302
      %s304 = smul.u32 2, %s21
      %p305 = scmp.lt.s32.totalorder %s20, 0
      %s306 = scalar_select %p305, %s20, 0
      %p307 = scmp.lt.s32.totalorder %s304, 3
      %s308 = scalar_select %p307, %s304, 3
      %s309 = smul.addr %s306, 4
      %s310 = sadd.s32 %s308, %s309
      %s311 = smul.addr %s310, 8
      %s312 = scalar_lea.vmem %s0, %s311
      %s313 = smul.u32 2, %s21
      %s314 = smul.u32 2, %s21
      %p315 = scmp.lt.s32.totalorder %s314, 3
      %s316 = scalar_select %p315, %s314, 3
      %s317 = smul.addr %s316, 4
      %s318 = scalar_lea.vmem %s1, %s317
      %s319 = smul.u32 2, %s21
      %s320 = smul.u32 2, %s21
      %p321 = scmp.lt.s32.totalorder %s320, 3
      %s322 = scalar_select %p321, %s320, 3
      %s323 = smul.addr %s322, 4
      %s324 = scalar_lea.vmem %s2, %s323
      %s325 = smul.u32 2, %s21
      %s326 = smul.u32 2, %s21
      %p327 = scmp.lt.s32.totalorder %s326, 3
      %s328 = scalar_select %p327, %s326, 3
      %s329 = scalar_lea.vmem %s3, %s328
      %s330 = smul.u32 2, %s21
      %s331 = smul.u32 2, %s21
      %p332 = scmp.lt.s32.totalorder %s331, 3
      %s333 = scalar_select %p332, %s331, 3
      %s334 = scalar_lea.vmem %s4, %s333
      %s335 = smul.u32 2, %s21
      %s336 = smul.u32 2, %s21
      %p337 = scmp.lt.s32.totalorder %s20, 0
      %s338 = scalar_select %p337, %s20, 0
      %p339 = scmp.lt.s32.totalorder %s336, 3
      %s340 = scalar_select %p339, %s336, 3
      %s341 = smul.addr %s338, 4
      %s342 = sadd.s32 %s340, %s341
      %s343 = smul.addr %s342, 4
      %s344 = scalar_lea.vmem %s5, %s343
      %s345 = smul.u32 2, %s21
      %v346 = vld [vmem:[%s318] sm:$0xff]
      %v348 = vcombine.high %v346, %v346
      %vm350 = vcmask 1043456
      %v351 = vsel %vm350, %v346, 0.0
      %v352 = vrot.slane %v351, 4
      %v353 = vadd.f32 %v351, %v352
      %v354 = vrot.slane %v353, 2
      %v355 = vadd.f32 %v353, %v354
      %v356 = vrot.slane %v355, 1
      %v357 = vadd.f32 %v355, %v356
      %v358 = vsel %vm350, %v348, 0.0
      %v359 = vrot.slane %v358, 4
      %v360 = vadd.f32 %v358, %v359
      %v361 = vrot.slane %v360, 2
      %v362 = vadd.f32 %v360, %v361
      %v363 = vrot.slane %v362, 1
      %v364 = vadd.f32 %v362, %v363
      %v365 = vmul.f32 %v357, 0.125
      %v366 = vmul.f32 %v364, 0.125
      %v367 = vld [vmem:[%s324] sm:$0xff]
      %v369 = vcombine.high %v367, %v367
      %v371 = vsel %vm350, %v367, 0.0
      %v372 = vrot.slane %v371, 4
      %v373 = vadd.f32 %v371, %v372
      %v374 = vrot.slane %v373, 2
      %v375 = vadd.f32 %v373, %v374
      %v376 = vrot.slane %v375, 1
      %v377 = vadd.f32 %v375, %v376
      %v378 = vsel %vm350, %v369, 0.0
      %v379 = vrot.slane %v378, 4
      %v380 = vadd.f32 %v378, %v379
      %v381 = vrot.slane %v380, 2
      %v382 = vadd.f32 %v380, %v381
      %v383 = vrot.slane %v382, 1
      %v384 = vadd.f32 %v382, %v383
      %v385 = vmul.f32 %v377, 0.125
      %v386 = vmul.f32 %v384, 0.125
      %v387 = vmul.f32 %v365, %v365
      %v388 = vmul.f32 %v366, %v366
      %v389 = vsub.f32 %v385, %v387
      %v390 = vsub.f32 %v386, %v388
      %v391 = vadd.f32 %v389, 1e-05
      %v392 = vadd.f32 %v390, 1e-05
      %v393 = vrsqrt.pop %v391
      %v394 = vrsqrt.pop %v392
      %v395 = vld [vmem:[%s329] sm:$0x3]
      %v398 = vcombine.low %v393, %v394
      %v400 = vunpack.c.l.s4 1966171168
      %v401 = vunpack.c.0.s8 %v400
      %v402 = vlaneseq
      %v403 = vshrl.u32 %v402, 7
      %v404 = vsub.s32 %v401, %v403
      %v405 = vrot.slane %v398, %v404
      %v407 = vunpack.c.l.s4 1966171168
      %v408 = vunpack.c.0.s8 %v407
      %v409 = vlaneseq
      %v410 = vshrl.u32 %v409, 7
      %v411 = vsub.s32 %v408, %v410
      %v412 = vrot.slane %v405, %v411
      %v414 = vmul.f32 %v395, %v412
      %v415 = vld [vmem:[%s334] sm:$0x3]
      %v417 = vlaneseq
      %v418 = vshrl.u32 %v417, 7
      %v419 = vsub.s32 0, %v418
      %v420 = vrot.slane %v414, %v419
      %v421 = vlaneseq
      %v422 = vshrl.u32 %v421, 7
      %v423 = vsub.s32 1, %v422
      %v424 = vrot.slane %v414, %v423
      %v427 = vmul.f32 %v365, %v420
      %v428 = vmul.f32 %v366, %v424
      %v431 = vcombine.low %v427, %v428
      %v433 = vunpack.c.l.s4 1966171168
      %v434 = vunpack.c.0.s8 %v433
      %v435 = vlaneseq
      %v436 = vshrl.u32 %v435, 7
      %v437 = vsub.s32 %v434, %v436
      %v438 = vrot.slane %v431, %v437
      %v440 = vunpack.c.l.s4 1966171168
      %v441 = vunpack.c.0.s8 %v440
      %v442 = vlaneseq
      %v443 = vshrl.u32 %v442, 7
      %v444 = vsub.s32 %v441, %v443
      %v445 = vrot.slane %v438, %v444
      %v447 = vsub.f32 %v415, %v445
      %v448 = vld [vmem:[%s312] sm:$0xff]
      %v449 = vld [vmem:[%s312 + $0x8] sm:$0xff]
      %v450 = vmul.f32 %v448, %v420
      %v451 = vmul.f32 %v449, %v424
      %v453 = vlaneseq
      %v454 = vshrl.u32 %v453, 7
      %v455 = vsub.s32 0, %v454
      %v456 = vrot.slane %v447, %v455
      %v457 = vlaneseq
      %v458 = vshrl.u32 %v457, 7
      %v459 = vsub.s32 1, %v458
      %v460 = vrot.slane %v447, %v459
      %v463 = vadd.f32 %v450, %v456
      %v464 = vadd.f32 %v451, %v460
      %v465 = vmax.f32 %v463, 0.0
      %v466 = vmax.f32 %v464, 0.0
      %v467 = vpack.c.bf16 %v465, %v465
      %v468 = vpack.c.bf16 %v466, %v466
      %v471 = vunpack.c.l.b16 %v467
      %v472 = vunpack.c.l.b16 %v468
      %v473 = vpack.c.b16 %v472, %v471
      %475 = vst [vmem:[%s344] sm:$0xff] %v473
      %s476 = smul.u32 2, %s21
      %p477 = scmp.lt.s32.totalorder %s20, 0
      %s478 = scalar_select %p477, %s20, 0
      %p479 = scmp.lt.s32.totalorder %s476, 3
      %s480 = scalar_select %p479, %s476, 3
      %s481 = smul.addr %s478, 4
      %s482 = sadd.s32 %s480, %s481
      %s483 = smul.addr %s482, 4
      %s484 = scalar_lea.vmem %s5, %s483
      // Predicated region
      $region41: #{decoder_forward.10} parent=39 // pred_check
        %p485 = pneg %p180
      $region42: #{decoder_forward.10} parent=39 // pred_check_branch
        %487 = sbr.rel (%p485) target = $region44
      $region43: #{decoder_forward.10} parent=39 // pred_region
        %s488 = smul.u32 2, %s21
      $region44: #{decoder_forward.10} parent=39 // pred_fallthru
        _
    $region40: #{decoder_forward.10} parent=5 // pred_fallthru
      _
    %p489 = scmp.le.s32.totalorder 2, %s11
    // Predicated region
    $region45: #{decoder_forward.10} parent=5 // pred_check
      %p490 = pneg %p489
    $region46: #{decoder_forward.10} parent=5 // pred_check_branch
      %492 = sbr.rel (%p490) target = $region48
    $region47: #{decoder_forward.10} parent=5 // pred_region
      %s493 = ssub.s32 %s11, 2
      // Predicated region
      $region49: #{decoder_forward.10} parent=47 // pred_check
        %p494 = pneg %p186
      $region50: #{decoder_forward.10} parent=47 // pred_check_branch
        %496 = sbr.rel (%p494) target = $region52
      $region51: #{decoder_forward.10} parent=47 // pred_region
        %s497 = smul.u32 2, %s23
        %p498 = scmp.lt.s32.totalorder %s22, 0
        %s499 = scalar_select %p498, %s22, 0
        %p500 = scmp.lt.s32.totalorder %s497, 3
        %s501 = scalar_select %p500, %s497, 3
        %s502 = smul.addr %s499, 4
        %s503 = sadd.s32 %s501, %s502
        %s504 = smul.addr %s503, 4
        %s505 = scalar_lea.vmem %s5, %s504
      $region52: #{decoder_forward.10} parent=47 // pred_fallthru
        _
    $region48: #{decoder_forward.10} parent=5 // pred_fallthru
      _
  $region6: #{decoder_forward.10} parent=0 // loop_footer
    %s15 = sadd.s32 1, %s11
  $region7: #{decoder_forward.10} parent=0 // loop_footer_branch
    %10 = sbr.rel target = $region3
  $region8: #{decoder_forward.10} parent=0 // loop_exit
    _

// kernel: decoder_forward.12
$region0: #{decoder_forward.12}
  #allocation0 [shape = 'u32[]', space=smem, size = 0x4, offset = 0x4, fixed_abs, tag = 'smem constant byte address 0x4 - core index']
  #allocation1 [shape = 'u32[144,128]{1,0:T(1,128)}', space=vmem, size = 0x12000, scoped, tag = 'internal scratch']
  %s0 = inlined_call_operand.vmem [shape: f32[32,512], index: 0, kind: input, shape index: {}]
  %s1 = inlined_call_operand.vmem [shape: f32[4,512], index: 1, kind: input, shape index: {}]
  %s2 = inlined_call_operand.vmem [shape: f32[4,512], index: 2, kind: input, shape index: {}]
  %s3 = inlined_call_operand.vmem [shape: f32[1,512], index: 3, kind: input, shape index: {}]
  %s4 = inlined_call_operand.vmem [shape: f32[1,512], index: 4, kind: input, shape index: {}]
  %s5 = inlined_call_operand.vmem [shape: bf16[32,512], index: 5, kind: output, shape index: {}]
  %s6 = sld [smem:[#allocation0]]
  $region110: #{decoder_forward.12} parent=0
    _
  %s8 = ssub.s32 1, %s6
  %s9 = scalar_select 0, %s8, %s6
  $region1: #{decoder_forward.12} parent=0
    #allocation2 [shape = 'u8[65536]{0}', space=vmem, size = 0x10000, scoped, tag = 'input window, operand 0']
    #allocation3 [shape = 'u8[32768]{0}', space=vmem, size = 0x8000, scoped, tag = 'output window, operand 0']
    loop: start=0, step=1, limit=4
    $region2: #{decoder_forward.12} parent=1 // loop_pre_header
      _
    $region3: #{decoder_forward.12} parent=1 // loop_header
      %s11 = sphi 0, %s15
      %p12 = scmp.ge.s32.totalorder %s11, 4
      %s18 = sphi 0, %s30
      %s19 = sphi 0, %s26
      %s20 = sphi 0, %s18
      %s21 = sphi 0, %s19
      %s22 = sphi 0, %s20
      %s23 = sphi 0, %s21
      %s35 = sphi 0, %s37
      %s38 = sphi 0, %s35
      %s39 = sphi 0, %s38
      %s55 = sphi 0, %s39
      %s61 = sphi 0, %s63
      %s64 = sphi 0, %s61
      %s65 = sphi 0, %s64
      %s81 = sphi 0, %s65
      %s87 = sphi 0, %s89
      %s90 = sphi 0, %s87
      %s91 = sphi 0, %s90
      %s107 = sphi 0, %s91
      %s113 = sphi 0, %s115
      %s116 = sphi 0, %s113
      %s117 = sphi 0, %s116
      %s133 = sphi 0, %s117
      %s139 = sphi 0, %s141
      %s142 = sphi 0, %s139
      %s143 = sphi 0, %s142
      %s159 = sphi 0, %s143
      %s167 = sphi 0, %s169
      %s170 = sphi 0, %s167
      %s171 = sphi 0, %s170
      %s187 = sphi 0, %s171
    $region4: #{decoder_forward.12} parent=1 // loop_header_branch
      %14 = sbr.rel (%p12) target = $region8
    $region5: #{decoder_forward.12} parent=1 // loop_body
      %s16 = ssub.s32 %s11, 1
      %s17 = ssub.s32 %s11, 2
      %s24 = sadd.s32 1, %s19
      %p25 = scmp.ge.s32.totalorder %s24, 2
      %s26 = scalar_select %p25, 0, %s24
      %s27 = sadd.s32 1, %s18
      %s28 = scalar_select %p25, %s27, %s18
      %p29 = scmp.ge.s32.totalorder %s28, 1
      %s30 = scalar_select %p29, 0, %s28
      %s31 = ssub.s32 %s18, %s30
      %s32 = ssub.s32 %s19, %s26
      %s33 = sor.u32 %s31, %s32
      %p34 = scmp.eq.s32.totalorder %s33, 0
      %s36 = sadd.s32 %s35, 1
      %s37 = scalar_select %p34, %s35, %s36
      %p40 = pneg %p34
      %p41 = scmp.eq.s32.totalorder %s11, 1
      %p42 = por %p40, %p41
      %p43 = scmp.ne.s32.totalorder %s35, %s38
      %p44 = scmp.eq.s32.totalorder %s11, 0
      %p45 = por %p43, %p44
      %p46 = scmp.ne.s32.totalorder %s35, %s38
      %p47 = scmp.eq.s32.totalorder %s16, 1
      %p48 = por %p46, %p47
      %p49 = scmp.ne.s32.totalorder %s38, %s39
      %p50 = scmp.eq.s32.totalorder %s16, 0
      %p51 = por %p49, %p50
      %p52 = scmp.ne.s32.totalorder %s38, %s39
      %p53 = scmp.eq.s32.totalorder %s17, 1
      %p54 = por %p52, %p53
      %p56 = scmp.ne.s32.totalorder %s39, %s55
      %p57 = scmp.eq.s32.totalorder %s17, 0
      %p58 = por %p56, %p57
      %s59 = ssub.s32 %s19, %s26
      %p60 = scmp.eq.s32.totalorder %s59, 0
      %s62 = sadd.s32 %s61, 1
      %s63 = scalar_select %p60, %s61, %s62
      %p66 = pneg %p60
      %p67 = scmp.eq.s32.totalorder %s11, 1
      %p68 = por %p66, %p67
      %p69 = scmp.ne.s32.totalorder %s61, %s64
      %p70 = scmp.eq.s32.totalorder %s11, 0
      %p71 = por %p69, %p70
      %p72 = scmp.ne.s32.totalorder %s61, %s64
      %p73 = scmp.eq.s32.totalorder %s16, 1
      %p74 = por %p72, %p73
      %p75 = scmp.ne.s32.totalorder %s64, %s65
      %p76 = scmp.eq.s32.totalorder %s16, 0
      %p77 = por %p75, %p76
      %p78 = scmp.ne.s32.totalorder %s64, %s65
      %p79 = scmp.eq.s32.totalorder %s17, 1
      %p80 = por %p78, %p79
      %p82 = scmp.ne.s32.totalorder %s65, %s81
      %p83 = scmp.eq.s32.totalorder %s17, 0
      %p84 = por %p82, %p83
      %s85 = ssub.s32 %s19, %s26
      %p86 = scmp.eq.s32.totalorder %s85, 0
      %s88 = sadd.s32 %s87, 1
      %s89 = scalar_select %p86, %s87, %s88
      %p92 = pneg %p86
      %p93 = scmp.eq.s32.totalorder %s11, 1
      %p94 = por %p92, %p93
      %p95 = scmp.ne.s32.totalorder %s87, %s90
      %p96 = scmp.eq.s32.totalorder %s11, 0
      %p97 = por %p95, %p96
      %p98 = scmp.ne.s32.totalorder %s87, %s90
      %p99 = scmp.eq.s32.totalorder %s16, 1
      %p100 = por %p98, %p99
      %p101 = scmp.ne.s32.totalorder %s90, %s91
      %p102 = scmp.eq.s32.totalorder %s16, 0
      %p103 = por %p101, %p102
      %p104 = scmp.ne.s32.totalorder %s90, %s91
      %p105 = scmp.eq.s32.totalorder %s17, 1
      %p106 = por %p104, %p105
      %p108 = scmp.ne.s32.totalorder %s91, %s107
      %p109 = scmp.eq.s32.totalorder %s17, 0
      %p110 = por %p108, %p109
      %s111 = ssub.s32 %s19, %s26
      %p112 = scmp.eq.s32.totalorder %s111, 0
      %s114 = sadd.s32 %s113, 1
      %s115 = scalar_select %p112, %s113, %s114
      %p118 = pneg %p112
      %p119 = scmp.eq.s32.totalorder %s11, 1
      %p120 = por %p118, %p119
      %p121 = scmp.ne.s32.totalorder %s113, %s116
      %p122 = scmp.eq.s32.totalorder %s11, 0
      %p123 = por %p121, %p122
      %p124 = scmp.ne.s32.totalorder %s113, %s116
      %p125 = scmp.eq.s32.totalorder %s16, 1
      %p126 = por %p124, %p125
      %p127 = scmp.ne.s32.totalorder %s116, %s117
      %p128 = scmp.eq.s32.totalorder %s16, 0
      %p129 = por %p127, %p128
      %p130 = scmp.ne.s32.totalorder %s116, %s117
      %p131 = scmp.eq.s32.totalorder %s17, 1
      %p132 = por %p130, %p131
      %p134 = scmp.ne.s32.totalorder %s117, %s133
      %p135 = scmp.eq.s32.totalorder %s17, 0
      %p136 = por %p134, %p135
      %s137 = ssub.s32 %s19, %s26
      %p138 = scmp.eq.s32.totalorder %s137, 0
      %s140 = sadd.s32 %s139, 1
      %s141 = scalar_select %p138, %s139, %s140
      %p144 = pneg %p138
      %p145 = scmp.eq.s32.totalorder %s11, 1
      %p146 = por %p144, %p145
      %p147 = scmp.ne.s32.totalorder %s139, %s142
      %p148 = scmp.eq.s32.totalorder %s11, 0
      %p149 = por %p147, %p148
      %p150 = scmp.ne.s32.totalorder %s139, %s142
      %p151 = scmp.eq.s32.totalorder %s16, 1
      %p152 = por %p150, %p151
      %p153 = scmp.ne.s32.totalorder %s142, %s143
      %p154 = scmp.eq.s32.totalorder %s16, 0
      %p155 = por %p153, %p154
      %p156 = scmp.ne.s32.totalorder %s142, %s143
      %p157 = scmp.eq.s32.totalorder %s17, 1
      %p158 = por %p156, %p157
      %p160 = scmp.ne.s32.totalorder %s143, %s159
      %p161 = scmp.eq.s32.totalorder %s17, 0
      %p162 = por %p160, %p161
      %s163 = ssub.s32 %s18, %s30
      %s164 = ssub.s32 %s19, %s26
      %s165 = sor.u32 %s163, %s164
      %p166 = scmp.eq.s32.totalorder %s165, 0
      %s168 = sadd.s32 %s167, 1
      %s169 = scalar_select %p166, %s167, %s168
      %p172 = pneg %p166
      %p173 = scmp.eq.s32.totalorder %s11, 1
      %p174 = por %p172, %p173
      %p175 = scmp.ne.s32.totalorder %s167, %s170
      %p176 = scmp.eq.s32.totalorder %s11, 0
      %p177 = por %p175, %p176
      %p178 = scmp.ne.s32.totalorder %s167, %s170
      %p179 = scmp.eq.s32.totalorder %s16, 1
      %p180 = por %p178, %p179
      %p181 = scmp.ne.s32.totalorder %s170, %s171
      %p182 = scmp.eq.s32.totalorder %s16, 0
      %p183 = por %p181, %p182
      %p184 = scmp.ne.s32.totalorder %s170, %s171
      %p185 = scmp.eq.s32.totalorder %s17, 1
      %p186 = por %p184, %p185
      %p188 = scmp.ne.s32.totalorder %s171, %s187
      %p189 = scmp.eq.s32.totalorder %s17, 0
      %p190 = por %p188, %p189
      %p191 = scmp.le.s32.totalorder 1, %s11
      %p192 = scmp.lt.s32.totalorder %s11, 3
      %p193 = pnand %p191, %p192
      %p194 = pneg %p193
      // Predicated region
      $region9: #{decoder_forward.12} parent=5 // pred_check
        _
      $region10: #{decoder_forward.12} parent=5 // pred_check_branch
        %196 = sbr.rel (%p193) target = $region12
      $region11: #{decoder_forward.12} parent=5 // pred_region
        %s197 = ssub.s32 %s11, 1
      $region12: #{decoder_forward.12} parent=5 // pred_fallthru
        _
      %p198 = scmp.lt.s32.totalorder %s11, 2
      // Predicated region
      $region13: #{decoder_forward.12} parent=5 // pred_check
        %p199 = pneg %p198
      $region14: #{decoder_forward.12} parent=5 // pred_check_branch
        %201 = sbr.rel (%p199) target = $region16
      $region15: #{decoder_forward.12} parent=5 // pred_region
        // Predicated region
        $region17: #{decoder_forward.12} parent=15 // pred_check
          %p202 = pneg %p45
        $region18: #{decoder_forward.12} parent=15 // pred_check_branch
          %204 = sbr.rel (%p202) target = $region20
        $region19: #{decoder_forward.12} parent=15 // pred_region
          %s205 = sand.u32 %s35, 1
          %s206 = sand.u32 %s35, 1
          %s207 = smul.addr %s206, 64
          %s208 = scalar_lea.vmem [#allocation2], %s207
          %s209 = smul.u32 4, %s18
          %s210 = smul.u32 2, %s19
          %s211 = smul.addr %s209, 4
          %s212 = sadd.s32 %s210, %s211
          %s213 = smul.addr %s212, 8
          %s214 = scalar_lea.vmem %s0, %s213
          // Predicated region
          $region21: #{decoder_forward.12} parent=19 // pred_check
            _
          $region22: #{decoder_forward.12} parent=19 // pred_check_branch
            %216 = sbr.rel (0) target = $region24
          $region23: #{decoder_forward.12} parent=19 // pred_region
            // Predicated region
            $region25: #{decoder_forward.12} parent=23 // pred_check
              _
            $region26: #{decoder_forward.12} parent=23 // pred_check_branch
              %218 = sbr.rel (0) target = $region28
            $region27: #{decoder_forward.12} parent=23 // pred_region
              loop: start=0, step=1, limit=1
              $region29: #{decoder_forward.12} parent=27 // loop_pre_header
                _
              $region30: #{decoder_forward.12} parent=27 // loop_header
                %s220 = sphi 0, %s224
                %p221 = scmp.ge.s32.totalorder %s220, 1
                %s225 = sphi %s214, %s214
                %s226 = sphi %s208, %s208
              $region31: #{decoder_forward.12} parent=27 // loop_header_branch
                %223 = sbr.rel (%p221) target = $region35
              $region32: #{decoder_forward.12} parent=27 // loop_body
                %v227 = vld [vmem:[%s225] sm:$0xff]
                %228 = vst [vmem:[%s226] sm:$0xff] %v227
                %v229 = vld [vmem:[%s225 + $0x8] sm:$0xff]
                %230 = vst [vmem:[%s226 + $0x8] sm:$0xff] %v229
                %v231 = vld [vmem:[%s225 + $0x20] sm:$0xff]
                %232 = vst [vmem:[%s226 + $0x10] sm:$0xff] %v231
                %v233 = vld [vmem:[%s225 + $0x28] sm:$0xff]
                %234 = vst [vmem:[%s226 + $0x18] sm:$0xff] %v233
                %v235 = vld [vmem:[%s225 + $0x40] sm:$0xff]
                %236 = vst [vmem:[%s226 + $0x20] sm:$0xff] %v235
                %v237 = vld [vmem:[%s225 + $0x48] sm:$0xff]
                %238 = vst [vmem:[%s226 + $0x28] sm:$0xff] %v237
                %v239 = vld [vmem:[%s225 + $0x60] sm:$0xff]
                %240 = vst [vmem:[%s226 + $0x30] sm:$0xff] %v239
                %v241 = vld [vmem:[%s225 + $0x68] sm:$0xff]
                %242 = vst [vmem:[%s226 + $0x38] sm:$0xff] %v241
              $region33: #{decoder_forward.12} parent=27 // loop_footer
                %s224 = sadd.s32 1, %s220
              $region34: #{decoder_forward.12} parent=27 // loop_footer_branch
                %219 = sbr.rel target = $region30
              $region35: #{decoder_forward.12} parent=27 // loop_exit
                _
            $region28: #{decoder_forward.12} parent=23 // pred_fallthru
              _
            // Predicated region
            $region36: #{decoder_forward.12} parent=23 // pred_check
              _
            $region37: #{decoder_forward.12} parent=23 // pred_check_branch
              %244 = sbr.rel target = $region39
            $region38: #{decoder_forward.12} parent=23 // pred_region
              _
            $region39: #{decoder_forward.12} parent=23 // pred_fallthru
              _
          $region24: #{decoder_forward.12} parent=19 // pred_fallthru
            _
          %245 = vnop
        $region20: #{decoder_forward.12} parent=15 // pred_fallthru
          _
        // Predicated region
        $region40: #{decoder_forward.12} parent=15 // pred_check
          %p246 = pneg %p71
        $region41: #{decoder_forward.12} parent=15 // pred_check_branch
          %248 = sbr.rel (%p246) target = $region43
        $region42: #{decoder_forward.12} parent=15 // pred_region
          %s249 = smul.u32 2, %s19
          %p250 = scmp.lt.s32.totalorder %s249, 3
          %s251 = scalar_select %p250, %s249, 3
          %s252 = smul.addr %s251, 4
          %s253 = scalar_lea.vmem %s1, %s252
          %s254 = smul.u32 2, %s19
        $region43: #{decoder_forward.12} parent=15 // pred_fallthru
          _
        // Predicated region
        $region44: #{decoder_forward.12} parent=15 // pred_check
          %p255 = pneg %p97
        $region45: #{decoder_forward.12} parent=15 // pred_check_branch
          %257 = sbr.rel (%p255) target = $region47
        $region46: #{decoder_forward.12} parent=15 // pred_region
          %s258 = smul.u32 2, %s19
          %p259 = scmp.lt.s32.totalorder %s258, 3
          %s260 = scalar_select %p259, %s258, 3
          %s261 = smul.addr %s260, 4
          %s262 = scalar_lea.vmem %s2, %s261
          %s263 = smul.u32 2, %s19
        $region47: #{decoder_forward.12} parent=15 // pred_fallthru
          _
        // Predicated region
        $region48: #{decoder_forward.12} parent=15 // pred_check
          %p264 = pneg %p123
        $region49: #{decoder_forward.12} parent=15 // pred_check_branch
          %266 = sbr.rel (%p264) target = $region51
        $region50: #{decoder_forward.12} parent=15 // pred_region
          %s267 = smul.u32 2, %s19
          %p268 = scmp.lt.s32.totalorder %s267, 3
          %s269 = scalar_select %p268, %s267, 3
          %s270 = scalar_lea.vmem %s3, %s269
          %s271 = smul.u32 2, %s19
        $region51: #{decoder_forward.12} parent=15 // pred_fallthru
          _
        // Predicated region
        $region52: #{decoder_forward.12} parent=15 // pred_check
          %p272 = pneg %p149
        $region53: #{decoder_forward.12} parent=15 // pred_check_branch
          %274 = sbr.rel (%p272) target = $region55
        $region54: #{decoder_forward.12} parent=15 // pred_region
          %s275 = smul.u32 2, %s19
          %p276 = scmp.lt.s32.totalorder %s275, 3
          %s277 = scalar_select %p276, %s275, 3
          %s278 = scalar_lea.vmem %s4, %s277
          %s279 = smul.u32 2, %s19
        $region55: #{decoder_forward.12} parent=15 // pred_fallthru
          _
      $region16: #{decoder_forward.12} parent=5 // pred_fallthru
        _
      %p280 = scmp.le.s32.totalorder 1, %s11
      %p281 = scmp.lt.s32.totalorder %s11, 3
      %p282 = pnand %p280, %p281
      %p283 = pneg %p282
      // Predicated region
      $region56: #{decoder_forward.12} parent=5 // pred_check
        _
      $region57: #{decoder_forward.12} parent=5 // pred_check_branch
        %285 = sbr.rel (%p282) target = $region59
      $region58: #{decoder_forward.12} parent=5 // pred_region
        %s286 = ssub.s32 %s11, 1
        %s287 = sand.u32 %s38, 1
        %s288 = sand.u32 %s38, 1
        %s289 = smul.addr %s288, 64
        %s290 = scalar_lea.vmem [#allocation2], %s289
        // Predicated region
        $region60: #{decoder_forward.12} parent=58 // pred_check
          %p291 = pneg %p51
        $region61: #{decoder_forward.12} parent=58 // pred_check_branch
          %293 = sbr.rel (%p291) target = $region63
        $region62: #{decoder_forward.12} parent=58 // pred_region
          _
        $region63: #{decoder_forward.12} parent=58 // pred_fallthru
          _
        %s294 = sand.u32 %s38, 1
        %s295 = sand.u32 %s38, 1
        %s296 = smul.addr %s295, 64
        %s297 = scalar_lea.vmem [#allocation2], %s296
        %p298 = pneg %p51
        %p299 = pneg %p48
        %s300 = smul.u32 2, %s21
        %p301 = scmp.lt.s32.totalorder %s300, 3
        %s302 = scalar_select %p301, %s300, 3
        %s303 = smul.addr %s302, 4
        %s304 = scalar_lea.vmem %s1, %s303
        %p305 = pneg %p77
        %p306 = pneg %p74
        %s307 = smul.u32 2, %s21
        %p308 = scmp.lt.s32.totalorder %s307, 3
        %s309 = scalar_select %p308, %s307, 3
        %s310 = smul.addr %s309, 4
        %s311 = scalar_lea.vmem %s2, %s310
        %p312 = pneg %p103
        %p313 = pneg %p100
        %s314 = smul.u32 2, %s21
        %p315 = scmp.lt.s32.totalorder %s314, 3
        %s316 = scalar_select %p315, %s314, 3
        %s317 = scalar_lea.vmem %s3, %s316
        %p318 = pneg %p129
        %p319 = pneg %p126
        %s320 = smul.u32 2, %s21
        %p321 = scmp.lt.s32.totalorder %s320, 3
        %s322 = scalar_select %p321, %s320, 3
        %s323 = scalar_lea.vmem %s4, %s322
        %p324 = pneg %p155
        %p325 = pneg %p152
        %p326 = pneg %p183
        %p327 = pneg %p180
        %s328 = sand.u32 %s170, 1
        %s329 = sand.u32 %s170, 1
        %s330 = smul.addr %s329, 32
        %s331 = scalar_lea.vmem [#allocation3], %s330
        %s332 = smul.u32 4, %s20
        %s333 = smul.u32 2, %s21
        %s334 = smul.u32 2, %s21
        %p335 = scmp.lt.s32.totalorder %s334, 3
        %s336 = scalar_select %p335, %s334, 3
        %s337 = smul.addr %s336, 4
        %s338 = scalar_lea.vmem %s1, %s337
        %s339 = smul.u32 2, %s21
        %s340 = smul.u32 2, %s21
        %p341 = scmp.lt.s32.totalorder %s340, 3
        %s342 = scalar_select %p341, %s340, 3
        %s343 = smul.addr %s342, 4
        %s344 = scalar_lea.vmem %s2, %s343
        %s345 = smul.u32 2, %s21
        %s346 = smul.u32 2, %s21
        %p347 = scmp.lt.s32.totalorder %s346, 3
        %s348 = scalar_select %p347, %s346, 3
        %s349 = scalar_lea.vmem %s3, %s348
        %s350 = smul.u32 2, %s21
        %s351 = smul.u32 2, %s21
        %p352 = scmp.lt.s32.totalorder %s351, 3
        %s353 = scalar_select %p352, %s351, 3
        %s354 = scalar_lea.vmem %s4, %s353
        %s355 = smul.u32 2, %s21
        %s356 = smul.u32 4, %s20
        %s357 = smul.u32 2, %s21
        %v358 = vld [vmem:[%s338] sm:$0xff]
        %v360 = vcombine.high %v358, %v358
        %vm362 = vcmask 1043456
        %v363 = vsel %vm362, %v358, 0.0
        %v364 = vrot.slane %v363, 4
        %v365 = vadd.f32 %v363, %v364
        %v366 = vrot.slane %v365, 2
        %v367 = vadd.f32 %v365, %v366
        %v368 = vrot.slane %v367, 1
        %v369 = vadd.f32 %v367, %v368
        %v370 = vsel %vm362, %v360, 0.0
        %v371 = vrot.slane %v370, 4
        %v372 = vadd.f32 %v370, %v371
        %v373 = vrot.slane %v372, 2
        %v374 = vadd.f32 %v372, %v373
        %v375 = vrot.slane %v374, 1
        %v376 = vadd.f32 %v374, %v375
        %v377 = vmul.f32 %v369, 0.03125
        %v378 = vmul.f32 %v376, 0.03125
        %v379 = vld [vmem:[%s344] sm:$0xff]
        %v381 = vcombine.high %v379, %v379
        %v383 = vsel %vm362, %v379, 0.0
        %v384 = vrot.slane %v383, 4
        %v385 = vadd.f32 %v383, %v384
        %v386 = vrot.slane %v385, 2
        %v387 = vadd.f32 %v385, %v386
        %v388 = vrot.slane %v387, 1
        %v389 = vadd.f32 %v387, %v388
        %v390 = vsel %vm362, %v381, 0.0
        %v391 = vrot.slane %v390, 4
        %v392 = vadd.f32 %v390, %v391
        %v393 = vrot.slane %v392, 2
        %v394 = vadd.f32 %v392, %v393
        %v395 = vrot.slane %v394, 1
        %v396 = vadd.f32 %v394, %v395
        %v397 = vmul.f32 %v389, 0.03125
        %v398 = vmul.f32 %v396, 0.03125
        %v399 = vmul.f32 %v377, %v377
        %v400 = vmul.f32 %v378, %v378
        %v401 = vsub.f32 %v397, %v399
        %v402 = vsub.f32 %v398, %v400
        %v403 = vadd.f32 %v401, 1e-05
        %v404 = vadd.f32 %v402, 1e-05
        %v405 = vrsqrt.pop %v403
        %v406 = vrsqrt.pop %v404
        %v407 = vld [vmem:[%s349] sm:$0x3]
        %v410 = vcombine.low %v405, %v406
        %v412 = vunpack.c.l.s4 1966171168
        %v413 = vunpack.c.0.s8 %v412
        %v414 = vlaneseq
        %v415 = vshrl.u32 %v414, 7
        %v416 = vsub.s32 %v413, %v415
        %v417 = vrot.slane %v410, %v416
        %v419 = vunpack.c.l.s4 1966171168
        %v420 = vunpack.c.0.s8 %v419
        %v421 = vlaneseq
        %v422 = vshrl.u32 %v421, 7
        %v423 = vsub.s32 %v420, %v422
        %v424 = vrot.slane %v417, %v423
        %v426 = vmul.f32 %v407, %v424
        %v427 = vld [vmem:[%s354] sm:$0x3]
        %v429 = vlaneseq
        %v430 = vshrl.u32 %v429, 7
        %v431 = vsub.s32 0, %v430
        %v432 = vrot.slane %v426, %v431
        %v433 = vlaneseq
        %v434 = vshrl.u32 %v433, 7
        %v435 = vsub.s32 1, %v434
        %v436 = vrot.slane %v426, %v435
        %v439 = vmul.f32 %v377, %v432
        %v440 = vmul.f32 %v378, %v436
        %v443 = vcombine.low %v439, %v440
        %v445 = vunpack.c.l.s4 1966171168
        %v446 = vunpack.c.0.s8 %v445
        %v447 = vlaneseq
        %v448 = vshrl.u32 %v447, 7
        %v449 = vsub.s32 %v446, %v448
        %v450 = vrot.slane %v443, %v449
        %v452 = vunpack.c.l.s4 1966171168
        %v453 = vunpack.c.0.s8 %v452
        %v454 = vlaneseq
        %v455 = vshrl.u32 %v454, 7
        %v456 = vsub.s32 %v453, %v455
        %v457 = vrot.slane %v450, %v456
        %v459 = vsub.f32 %v427, %v457
        %v460 = vld [vmem:[%s290] sm:$0xff]
        %v461 = vld [vmem:[%s290 + $0x8] sm:$0xff]
        %v462 = vld [vmem:[%s290 + $0x10] sm:$0xff]
        %v463 = vld [vmem:[%s290 + $0x18] sm:$0xff]
        %v464 = vld [vmem:[%s290 + $0x20] sm:$0xff]
        %v465 = vld [vmem:[%s290 + $0x28] sm:$0xff]
        %v466 = vld [vmem:[%s290 + $0x30] sm:$0xff]
        %v467 = vld [vmem:[%s290 + $0x38] sm:$0xff]
        %v468 = vmul.f32 %v460, %v432
        %v469 = vmul.f32 %v461, %v436
        %v470 = vmul.f32 %v462, %v432
        %v471 = vmul.f32 %v463, %v436
        %v472 = vmul.f32 %v464, %v432
        %v473 = vmul.f32 %v465, %v436
        %v474 = vmul.f32 %v466, %v432
        %v475 = vmul.f32 %v467, %v436
        %v477 = vlaneseq
        %v478 = vshrl.u32 %v477, 7
        %v479 = vsub.s32 0, %v478
        %v480 = vrot.slane %v459, %v479
        %v481 = vlaneseq
        %v482 = vshrl.u32 %v481, 7
        %v483 = vsub.s32 1, %v482
        %v484 = vrot.slane %v459, %v483
        %v487 = vadd.f32 %v468, %v480
        %v488 = vadd.f32 %v469, %v484
        %v489 = vadd.f32 %v470, %v480
        %v490 = vadd.f32 %v471, %v484
        %v491 = vadd.f32 %v472, %v480
        %v492 = vadd.f32 %v473, %v484
        %v493 = vadd.f32 %v474, %v480
        %v494 = vadd.f32 %v475, %v484
        %v495 = vmax.f32 %v487, 0.0
        %v496 = vmax.f32 %v488, 0.0
        %v497 = vmax.f32 %v489, 0.0
        %v498 = vmax.f32 %v490, 0.0
        %v499 = vmax.f32 %v491, 0.0
        %v500 = vmax.f32 %v492, 0.0
        %v501 = vmax.f32 %v493, 0.0
        %v502 = vmax.f32 %v494, 0.0
        %v503 = vpack.c.bf16 %v497, %v495
        %v504 = vpack.c.bf16 %v498, %v496
        %v505 = vpack.c.bf16 %v501, %v499
        %v506 = vpack.c.bf16 %v502, %v500
        %v511 = vunpack.c.l.b16 %v503
        %v512 = vunpack.c.l.b16 %v504
        %v513 = vunpack.c.h.b16 %v503
        %v514 = vunpack.c.h.b16 %v504
        %v515 = vunpack.c.l.b16 %v505
        %v516 = vunpack.c.l.b16 %v506
        %v517 = vunpack.c.h.b16 %v505
        %v518 = vunpack.c.h.b16 %v506
        %v519 = vpack.c.b16 %v512, %v511
        %v520 = vpack.c.b16 %v514, %v513
        %v521 = vpack.c.b16 %v516, %v515
        %v522 = vpack.c.b16 %v518, %v517
        %527 = vst [vmem:[%s331] sm:$0xff] %v519
        %528 = vst [vmem:[%s331 + $0x8] sm:$0xff] %v520
        %529 = vst [vmem:[%s331 + $0x10] sm:$0xff] %v521
        %530 = vst [vmem:[%s331 + $0x18] sm:$0xff] %v522
        %s531 = sand.u32 %s170, 1
        %s532 = sand.u32 %s170, 1
        %s533 = smul.addr %s532, 32
        %s534 = scalar_lea.vmem [#allocation3], %s533
        // Predicated region
        $region64: #{decoder_forward.12} parent=58 // pred_check
          %p535 = pneg %p180
        $region65: #{decoder_forward.12} parent=58 // pred_check_branch
          %537 = sbr.rel (%p535) target = $region67
        $region66: #{decoder_forward.12} parent=58 // pred_region
          %s538 = smul.u32 4, %s20
          %s539 = smul.u32 2, %s21
          %s540 = smul.addr %s538, 4
          %s541 = sadd.s32 %s539, %s540
          %s542 = smul.addr %s541, 4
          %s543 = scalar_lea.vmem %s5, %s542
          // Predicated region
          $region68: #{decoder_forward.12} parent=66 // pred_check
            _
          $region69: #{decoder_forward.12} parent=66 // pred_check_branch
            %545 = sbr.rel (0) target = $region71
          $region70: #{decoder_forward.12} parent=66 // pred_region
            // Predicated region
            $region72: #{decoder_forward.12} parent=70 // pred_check
              _
            $region73: #{decoder_forward.12} parent=70 // pred_check_branch
              %547 = sbr.rel (0) target = $region75
            $region74: #{decoder_forward.12} parent=70 // pred_region
              // Predicated region
              $region87: #{decoder_forward.12} parent=74 // pred_check
                _
              $region88: #{decoder_forward.12} parent=74 // pred_check_branch
                %568 = sbr.rel (0) target = $region90
              $region89: #{decoder_forward.12} parent=74 // pred_region
                loop: start=0, step=1, limit=1
                $region91: #{decoder_forward.12} parent=89 // loop_pre_header
                  _
                $region92: #{decoder_forward.12} parent=89 // loop_header
                  %s570 = sphi 0, %s574
                  %p571 = scmp.ge.s32.totalorder %s570, 1
                  %s575 = sphi %s534, %s534
                  %s576 = sphi %s543, %s543
                $region93: #{decoder_forward.12} parent=89 // loop_header_branch
                  %573 = sbr.rel (%p571) target = $region97
                $region94: #{decoder_forward.12} parent=89 // loop_body
                  %v577 = vld [vmem:[%s575] sm:$0xff]
                  %578 = vst [vmem:[%s576] sm:$0xff] %v577
                  %v579 = vld [vmem:[%s575 + $0x8] sm:$0xff]
                  %580 = vst [vmem:[%s576 + $0x10] sm:$0xff] %v579
                  %v581 = vld [vmem:[%s575 + $0x10] sm:$0xff]
                  %582 = vst [vmem:[%s576 + $0x20] sm:$0xff] %v581
                  %v583 = vld [vmem:[%s575 + $0x18] sm:$0xff]
                  %584 = vst [vmem:[%s576 + $0x30] sm:$0xff] %v583
                $region95: #{decoder_forward.12} parent=89 // loop_footer
                  %s574 = sadd.s32 1, %s570
                $region96: #{decoder_forward.12} parent=89 // loop_footer_branch
                  %569 = sbr.rel target = $region92
                $region97: #{decoder_forward.12} parent=89 // loop_exit
                  _
              $region90: #{decoder_forward.12} parent=74 // pred_fallthru
                _
              // Predicated region
              $region98: #{decoder_forward.12} parent=74 // pred_check
                _
              $region99: #{decoder_forward.12} parent=74 // pred_check_branch
                %586 = sbr.rel target = $region101
              $region100: #{decoder_forward.12} parent=74 // pred_region
                _
              $region101: #{decoder_forward.12} parent=74 // pred_fallthru
                _
            $region75: #{decoder_forward.12} parent=70 // pred_fallthru
              _
            // Predicated region
            $region76: #{decoder_forward.12} parent=70 // pred_check
              _
            $region77: #{decoder_forward.12} parent=70 // pred_check_branch
              %549 = sbr.rel target = $region79
            $region78: #{decoder_forward.12} parent=70 // pred_region
              loop: start=0, step=1, limit=1
              $region80: #{decoder_forward.12} parent=78 // loop_pre_header
                _
              $region81: #{decoder_forward.12} parent=78 // loop_header
                %s552 = sphi 0, %s556
                %p553 = scmp.ge.s32.totalorder %s552, 1
                %s557 = sphi %s534, %s534
                %s558 = sphi %s543, %s543
              $region82: #{decoder_forward.12} parent=78 // loop_header_branch
                %555 = sbr.rel (%p553) target = $region86
              $region83: #{decoder_forward.12} parent=78 // loop_body
                %v559 = vld [vmem:[%s557] sm:$0xff]
                %560 = vst [vmem:[%s558] sm:$0xff] %v559
                %v561 = vld [vmem:[%s557 + $0x8] sm:$0xff]
                %562 = vst [vmem:[%s558 + $0x10] sm:$0xff] %v561
                %v563 = vld [vmem:[%s557 + $0x10] sm:$0xff]
                %564 = vst [vmem:[%s558 + $0x20] sm:$0xff] %v563
                %v565 = vld [vmem:[%s557 + $0x18] sm:$0xff]
                %566 = vst [vmem:[%s558 + $0x30] sm:$0xff] %v565
              $region84: #{decoder_forward.12} parent=78 // loop_footer
                %s556 = sadd.s32 1, %s552
              $region85: #{decoder_forward.12} parent=78 // loop_footer_branch
                %551 = sbr.rel target = $region81
              $region86: #{decoder_forward.12} parent=78 // loop_exit
                _
            $region79: #{decoder_forward.12} parent=70 // pred_fallthru
              _
          $region71: #{decoder_forward.12} parent=66 // pred_fallthru
            _
          %587 = vnop
        $region67: #{decoder_forward.12} parent=58 // pred_fallthru
          _
      $region59: #{decoder_forward.12} parent=5 // pred_fallthru
        _
      %p588 = scmp.le.s32.totalorder 2, %s11
      // Predicated region
      $region102: #{decoder_forward.12} parent=5 // pred_check
        %p589 = pneg %p588
      $region103: #{decoder_forward.12} parent=5 // pred_check_branch
        %591 = sbr.rel (%p589) target = $region105
      $region104: #{decoder_forward.12} parent=5 // pred_region
        %s592 = ssub.s32 %s11, 2
        // Predicated region
        $region106: #{decoder_forward.12} parent=104 // pred_check
          %p593 = pneg %p186
        $region107: #{decoder_forward.12} parent=104 // pred_check_branch
          %595 = sbr.rel (%p593) target = $region109
        $region108: #{decoder_forward.12} parent=104 // pred_region
          %s596 = sand.u32 %s171, 1
          %s597 = sand.u32 %s171, 1
          %s598 = smul.addr %s597, 32
          %s599 = scalar_lea.vmem [#allocation3], %s598
        $region109: #{decoder_forward.12} parent=104 // pred_fallthru
          _
      $region105: #{decoder_forward.12} parent=5 // pred_fallthru
        _
    $region6: #{decoder_forward.12} parent=1 // loop_footer
      %s15 = sadd.s32 1, %s11
    $region7: #{decoder_forward.12} parent=1 // loop_footer_branch
      %10 = sbr.rel target = $region3
    $region8: #{decoder_forward.12} parent=1 // loop_exit
      _

// kernel: decoder_forward.9
$region0: #{decoder_forward.9}
  #allocation0 [shape = 'u32[]', space=smem, size = 0x4, offset = 0x4, fixed_abs, tag = 'smem constant byte address 0x4 - core index']
  #allocation1 [shape = 'u32[144,128]{1,0:T(1,128)}', space=vmem, size = 0x12000, scoped, tag = 'internal scratch']
  %s0 = inlined_call_operand.vmem [shape: bf16[2,128], index: 0, kind: input, shape index: {}]
  %s1 = inlined_call_operand.hbm [shape: bf16[128,512], index: 1, kind: input, shape index: {}]
  %s2 = inlined_call_operand.hbm [shape: f32[1,512], index: 2, kind: input, shape index: {}]
  %s3 = inlined_call_operand.hbm [shape: bf16[512,2048], index: 3, kind: input, shape index: {}]
  %s4 = inlined_call_operand.vmem [shape: f32[2,2048], index: 4, kind: output, shape index: {0}]
  %s5 = inlined_call_operand.vmem [shape: f32[1,2048], index: 5, kind: output, shape index: {1}]
  %s6 = inlined_call_operand.vmem [shape: f32[1,2048], index: 6, kind: output, shape index: {2}]
  %7 = xla_tuple %s4, %s5, %s6
  %s8 = sld [smem:[#allocation0]]
  $region77: #{decoder_forward.9} parent=0
    _
  %s10 = ssub.s32 1, %s8
  %s11 = scalar_select 0, %s10, %s8
  $region1: #{decoder_forward.9} parent=0
    #allocation2 [shape = 'u8[131072]{0}', space=vmem, size = 0x20000, scoped, tag = 'input window, operand 1, single buffered']
    #allocation3 [shape = 's32[2]{0}', space=sflag, size = 0x8, scoped, tag = 'scoped memory for decoder_forward.9']
    #allocation4 [shape = 'u8[2048]{0}', space=vmem, size = 0x800, scoped, tag = 'input window, operand 2, single buffered']
    #allocation5 [shape = 's32[1]{0}', space=sflag, size = 0x4, scoped, tag = 'scoped memory for decoder_forward.9']
    #allocation6 [shape = 'u8[1048576]{0}', space=vmem, size = 0x100000, scoped, tag = 'input window, operand 3']
    %12 = vsyncpa [#allocation3], 0
    %13 = vsyncpa [#allocation5], 0
    loop: start=0, step=1, limit=6
    $region2: #{decoder_forward.9} parent=1 // loop_pre_header
      _
    $region3: #{decoder_forward.9} parent=1 // loop_header
      %s15 = sphi 0, %s19
      %p16 = scmp.ge.s32.totalorder %s15, 6
      %s23 = sphi 0, %s23
      %s25 = sphi 0, %s23
      %s26 = sphi 0, %s25
      %s40 = sphi 0, %s26
      %s44 = sphi 0, %s44
      %s46 = sphi 0, %s44
      %s47 = sphi 0, %s46
      %s61 = sphi 0, %s47
      %s65 = sphi 0, %s65
      %s67 = sphi 0, %s65
      %s68 = sphi 0, %s67
      %s82 = sphi 0, %s68
      %s88 = sphi 0, %s90
      %s91 = sphi 0, %s88
      %s92 = sphi 0, %s91
      %s108 = sphi 0, %s92
      %s114 = sphi 0, %s116
      %s117 = sphi 0, %s114
      %s118 = sphi 0, %s117
      %s134 = sphi 0, %s118
      %s140 = sphi 0, %s142
      %s143 = sphi 0, %s140
      %s144 = sphi 0, %s143
      %s160 = sphi 0, %s144
      %s166 = sphi 0, %s168
      %s169 = sphi 0, %s166
      %s170 = sphi 0, %s169
      %s186 = sphi 0, %s170
    $region4: #{decoder_forward.9} parent=1 // loop_header_branch
      %18 = sbr.rel (%p16) target = $region8
    $region5: #{decoder_forward.9} parent=1 // loop_body
      %s20 = ssub.s32 %s15, 1
      %s21 = ssub.s32 %s15, 2
      %s22 = sadd.s32 %s15, 1
      %s24 = sadd.s32 %s23, 1
      %p27 = scmp.eq.s32.totalorder %s15, 3
      %p28 = scmp.ne.s32.totalorder %s23, %s25
      %p29 = scmp.eq.s32.totalorder %s15, 0
      %p30 = por %p28, %p29
      %p31 = scmp.ne.s32.totalorder %s23, %s25
      %p32 = scmp.eq.s32.totalorder %s20, 3
      %p33 = por %p31, %p32
      %p34 = scmp.ne.s32.totalorder %s25, %s26
      %p35 = scmp.eq.s32.totalorder %s20, 0
      %p36 = por %p34, %p35
      %p37 = scmp.ne.s32.totalorder %s25, %s26
      %p38 = scmp.eq.s32.totalorder %s21, 3
      %p39 = por %p37, %p38
      %p41 = scmp.ne.s32.totalorder %s26, %s40
      %p42 = scmp.eq.s32.totalorder %s21, 0
      %p43 = por %p41, %p42
      %s45 = sadd.s32 %s44, 1
      %p48 = scmp.eq.s32.totalorder %s15, 3
      %p49 = scmp.ne.s32.totalorder %s44, %s46
      %p50 = scmp.eq.s32.totalorder %s15, 0
      %p51 = por %p49, %p50
      %p52 = scmp.ne.s32.totalorder %s44, %s46
      %p53 = scmp.eq.s32.totalorder %s20, 3
      %p54 = por %p52, %p53
      %p55 = scmp.ne.s32.totalorder %s46, %s47
      %p56 = scmp.eq.s32.totalorder %s20, 0
      %p57 = por %p55, %p56
      %p58 = scmp.ne.s32.totalorder %s46, %s47
      %p59 = scmp.eq.s32.totalorder %s21, 3
      %p60 = por %p58, %p59
      %p62 = scmp.ne.s32.totalorder %s47, %s61
      %p63 = scmp.eq.s32.totalorder %s21, 0
      %p64 = por %p62, %p63
      %s66 = sadd.s32 %s65, 1
      %p69 = scmp.eq.s32.totalorder %s15, 3
      %p70 = scmp.ne.s32.totalorder %s65, %s67
      %p71 = scmp.eq.s32.totalorder %s15, 0
      %p72 = por %p70, %p71
      %p73 = scmp.ne.s32.totalorder %s65, %s67
      %p74 = scmp.eq.s32.totalorder %s20, 3
      %p75 = por %p73, %p74
      %p76 = scmp.ne.s32.totalorder %s67, %s68
      %p77 = scmp.eq.s32.totalorder %s20, 0
      %p78 = por %p76, %p77
      %p79 = scmp.ne.s32.totalorder %s67, %s68
      %p80 = scmp.eq.s32.totalorder %s21, 3
      %p81 = por %p79, %p80
      %p83 = scmp.ne.s32.totalorder %s68, %s82
      %p84 = scmp.eq.s32.totalorder %s21, 0
      %p85 = por %p83, %p84
      %s86 = ssub.s32 %s15, %s22
      %p87 = scmp.eq.s32.totalorder %s86, 0
      %s89 = sadd.s32 %s88, 1
      %s90 = scalar_select %p87, %s88, %s89
      %p93 = pneg %p87
      %p94 = scmp.eq.s32.totalorder %s15, 3
      %p95 = por %p93, %p94
      %p96 = scmp.ne.s32.totalorder %s88, %s91
      %p97 = scmp.eq.s32.totalorder %s15, 0
      %p98 = por %p96, %p97
      %p99 = scmp.ne.s32.totalorder %s88, %s91
      %p100 = scmp.eq.s32.totalorder %s20, 3
      %p101 = por %p99, %p100
      %p102 = scmp.ne.s32.totalorder %s91, %s92
      %p103 = scmp.eq.s32.totalorder %s20, 0
      %p104 = por %p102, %p103
      %p105 = scmp.ne.s32.totalorder %s91, %s92
      %p106 = scmp.eq.s32.totalorder %s21, 3
      %p107 = por %p105, %p106
      %p109 = scmp.ne.s32.totalorder %s92, %s108
      %p110 = scmp.eq.s32.totalorder %s21, 0
      %p111 = por %p109, %p110
      %s112 = ssub.s32 %s15, %s22
      %p113 = scmp.eq.s32.totalorder %s112, 0
      %s115 = sadd.s32 %s114, 1
      %s116 = scalar_select %p113, %s114, %s115
      %p119 = pneg %p113
      %p120 = scmp.eq.s32.totalorder %s15, 3
      %p121 = por %p119, %p120
      %p122 = scmp.ne.s32.totalorder %s114, %s117
      %p123 = scmp.eq.s32.totalorder %s15, 0
      %p124 = por %p122, %p123
      %p125 = scmp.ne.s32.totalorder %s114, %s117
      %p126 = scmp.eq.s32.totalorder %s20, 3
      %p127 = por %p125, %p126
      %p128 = scmp.ne.s32.totalorder %s117, %s118
      %p129 = scmp.eq.s32.totalorder %s20, 0
      %p130 = por %p128, %p129
      %p131 = scmp.ne.s32.totalorder %s117, %s118
      %p132 = scmp.eq.s32.totalorder %s21, 3
      %p133 = por %p131, %p132
      %p135 = scmp.ne.s32.totalorder %s118, %s134
      %p136 = scmp.eq.s32.totalorder %s21, 0
      %p137 = por %p135, %p136
      %s138 = ssub.s32 %s15, %s22
      %p139 = scmp.eq.s32.totalorder %s138, 0
      %s141 = sadd.s32 %s140, 1
      %s142 = scalar_select %p139, %s140, %s141
      %p145 = pneg %p139
      %p146 = scmp.eq.s32.totalorder %s15, 3
      %p147 = por %p145, %p146
      %p148 = scmp.ne.s32.totalorder %s140, %s143
      %p149 = scmp.eq.s32.totalorder %s15, 0
      %p150 = por %p148, %p149
      %p151 = scmp.ne.s32.totalorder %s140, %s143
      %p152 = scmp.eq.s32.totalorder %s20, 3
      %p153 = por %p151, %p152
      %p154 = scmp.ne.s32.totalorder %s143, %s144
      %p155 = scmp.eq.s32.totalorder %s20, 0
      %p156 = por %p154, %p155
      %p157 = scmp.ne.s32.totalorder %s143, %s144
      %p158 = scmp.eq.s32.totalorder %s21, 3
      %p159 = por %p157, %p158
      %p161 = scmp.ne.s32.totalorder %s144, %s160
      %p162 = scmp.eq.s32.totalorder %s21, 0
      %p163 = por %p161, %p162
      %s164 = ssub.s32 %s15, %s22
      %p165 = scmp.eq.s32.totalorder %s164, 0
      %s167 = sadd.s32 %s166, 1
      %s168 = scalar_select %p165, %s166, %s167
      %p171 = pneg %p165
      %p172 = scmp.eq.s32.totalorder %s15, 3
      %p173 = por %p171, %p172
      %p174 = scmp.ne.s32.totalorder %s166, %s169
      %p175 = scmp.eq.s32.totalorder %s15, 0
      %p176 = por %p174, %p175
      %p177 = scmp.ne.s32.totalorder %s166, %s169
      %p178 = scmp.eq.s32.totalorder %s20, 3
      %p179 = por %p177, %p178
      %p180 = scmp.ne.s32.totalorder %s169, %s170
      %p181 = scmp.eq.s32.totalorder %s20, 0
      %p182 = por %p180, %p181
      %p183 = scmp.ne.s32.totalorder %s169, %s170
      %p184 = scmp.eq.s32.totalorder %s21, 3
      %p185 = por %p183, %p184
      %p187 = scmp.ne.s32.totalorder %s170, %s186
      %p188 = scmp.eq.s32.totalorder %s21, 0
      %p189 = por %p187, %p188
      %p190 = scmp.le.s32.totalorder 1, %s15
      %p191 = scmp.lt.s32.totalorder %s15, 5
      %p192 = pnand %p190, %p191
      %p193 = pneg %p192
      // Predicated region
      $region9: #{decoder_forward.9} parent=5 // pred_check
        _
      $region10: #{decoder_forward.9} parent=5 // pred_check_branch
        %195 = sbr.rel (%p192) target = $region12
      $region11: #{decoder_forward.9} parent=5 // pred_region
        %s196 = ssub.s32 %s15, 1
        // Predicated region
        $region13: #{decoder_forward.9} parent=11 // pred_check
          %p197 = pneg %p36
        $region14: #{decoder_forward.9} parent=11 // pred_check_branch
          %199 = sbr.rel (%p197) target = $region16
        $region15: #{decoder_forward.9} parent=11 // pred_region
          _
        $region16: #{decoder_forward.9} parent=11 // pred_fallthru
          _
        // Predicated region
        $region17: #{decoder_forward.9} parent=11 // pred_check
          %p200 = pneg %p57
        $region18: #{decoder_forward.9} parent=11 // pred_check_branch
          %202 = sbr.rel (%p200) target = $region20
        $region19: #{decoder_forward.9} parent=11 // pred_region
          %s204 = ssub.s32 4096, 4096
          %205 = vsyncadd [#allocation3], %s204
          %s206 = sshll.u32 [#allocation2], 4
          %s207 = int_to_ptr.vmem [resolvable:$true] %s206
          %212 = dma.hbm_to_vmem [thread:$0]  %s1, 4096, %s207, [#allocation3], 256, 256, 16
        $region20: #{decoder_forward.9} parent=11 // pred_fallthru
          _
        // Predicated region
        $region21: #{decoder_forward.9} parent=11 // pred_check
          %p213 = pneg %p78
        $region22: #{decoder_forward.9} parent=11 // pred_check_branch
          %215 = sbr.rel (%p213) target = $region24
        $region23: #{decoder_forward.9} parent=11 // pred_region
          %s217 = ssub.s32 64, 64
          %218 = vsyncadd [#allocation5], %s217
          %s220 = sshll.u32 [#allocation4], 4
          %s221 = int_to_ptr.vmem [resolvable:$true] %s220
          %223 = dma.hbm_to_vmem [thread:$0]  %s2, 64, %s221, [#allocation5]
        $region24: #{decoder_forward.9} parent=11 // pred_fallthru
          _
      $region12: #{decoder_forward.9} parent=5 // pred_fallthru
        _
      %p224 = scmp.lt.s32.totalorder %s15, 4
      // Predicated region
      $region25: #{decoder_forward.9} parent=5 // pred_check
        %p225 = pneg %p224
      $region26: #{decoder_forward.9} parent=5 // pred_check_branch
        %227 = sbr.rel (%p225) target = $region28
      $region27: #{decoder_forward.9} parent=5 // pred_region
        // Predicated region
        $region29: #{decoder_forward.9} parent=27 // pred_check
          %p228 = pneg %p98
        $region30: #{decoder_forward.9} parent=27 // pred_check_branch
          %230 = sbr.rel (%p228) target = $region32
        $region31: #{decoder_forward.9} parent=27 // pred_region
          %s231 = sand.u32 %s15, 1
          %s232 = scalar_lea.sflag [#allocation3], %s231
          %s233 = sand.u32 %s88, 1
          %s234 = smul.addr %s233, 1024
          %s235 = scalar_lea.vmem [#allocation6], %s234
          %s236 = smul.u32 4, %s15
          %s238 = ssub.s32 16384, 16384
          %239 = vsyncadd %s232, %s238
          %s240 = smul.addr %s236, 64
          %s241 = scalar_lea.hbm %s3, %s240
          %s242 = sshll.u32 %s235, 4
          %s243 = int_to_ptr.vmem [resolvable:$true] %s242
          %248 = dma.hbm_to_vmem [thread:$0]  %s241, 16384, %s243, %s232, 1024, 256, 16
        $region32: #{decoder_forward.9} parent=27 // pred_fallthru
          _
      $region28: #{decoder_forward.9} parent=5 // pred_fallthru
        _
      %p249 = scmp.le.s32.totalorder 1, %s15
      %p250 = scmp.lt.s32.totalorder %s15, 5
      %p251 = pnand %p249, %p250
      %p252 = pneg %p251
      // Predicated region
      $region33: #{decoder_forward.9} parent=5 // pred_check
        _
      $region34: #{decoder_forward.9} parent=5 // pred_check_branch
        %254 = sbr.rel (%p251) target = $region36
      $region35: #{decoder_forward.9} parent=5 // pred_region
        %s255 = ssub.s32 %s15, 1
        // Predicated region
        $region37: #{decoder_forward.9} parent=35 // pred_check
          %p256 = pneg %p57
        $region38: #{decoder_forward.9} parent=35 // pred_check_branch
          %258 = sbr.rel (%p256) target = $region40
        $region39: #{decoder_forward.9} parent=35 // pred_region
          %259 = dma.done [#allocation3], 4096
        $region40: #{decoder_forward.9} parent=35 // pred_fallthru
          _
        // Predicated region
        $region41: #{decoder_forward.9} parent=35 // pred_check
          %p260 = pneg %p78
        $region42: #{decoder_forward.9} parent=35 // pred_check_branch
          %262 = sbr.rel (%p260) target = $region44
        $region43: #{decoder_forward.9} parent=35 // pred_region
          %263 = dma.done [#allocation5], 64
        $region44: #{decoder_forward.9} parent=35 // pred_fallthru
          _
        %s264 = sand.u32 %s20, 1
        %s265 = scalar_lea.sflag [#allocation3], %s264
        %s266 = sand.u32 %s91, 1
        %s267 = smul.addr %s266, 1024
        %s268 = scalar_lea.vmem [#allocation6], %s267
        // Predicated region
        $region45: #{decoder_forward.9} parent=35 // pred_check
          %p269 = pneg %p104
        $region46: #{decoder_forward.9} parent=35 // pred_check_branch
          %271 = sbr.rel (%p269) target = $region48
        $region47: #{decoder_forward.9} parent=35 // pred_region
          %272 = dma.done %s265, 16384
        $region48: #{decoder_forward.9} parent=35 // pred_fallthru
          _
        %p273 = pneg %p36
        %p274 = pneg %p33
        %p275 = pneg %p57
        %p276 = pneg %p54
        %p277 = pneg %p78
        %p278 = pneg %p75
        %s279 = sand.u32 %s20, 1
        %s280 = scalar_lea.sflag [#allocation3], %s279
        %s281 = sand.u32 %s91, 1
        %s282 = smul.addr %s281, 1024
        %s283 = scalar_lea.vmem [#allocation6], %s282
        %p284 = pneg %p104
        %p285 = pneg %p101
        %p286 = pneg %p130
        %p287 = pneg %p127
        %s288 = smul.u32 4, %s20
        %p289 = scmp.lt.s32.totalorder %s288, 15
        %s290 = scalar_select %p289, %s288, 15
        %s291 = smul.addr %s290, 2
        %s292 = scalar_lea.vmem %s4, %s291
        %p293 = pneg %p156
        %p294 = pneg %p153
        %s295 = smul.u32 4, %s20
        %p296 = scmp.lt.s32.totalorder %s295, 15
        %s297 = scalar_select %p296, %s295, 15
        %s298 = scalar_lea.vmem %s5, %s297
        %p299 = pneg %p182
        %p300 = pneg %p179
        %s301 = smul.u32 4, %s20
        %p302 = scmp.lt.s32.totalorder %s301, 15
        %s303 = scalar_select %p302, %s301, 15
        %s304 = scalar_lea.vmem %s6, %s303
        %s305 = smul.u32 4, %s20
        %s306 = smul.u32 4, %s20
        %p307 = scmp.lt.s32.totalorder %s306, 15
        %s308 = scalar_select %p307, %s306, 15
        %s309 = smul.addr %s308, 2
        %s310 = scalar_lea.vmem %s4, %s309
        %s311 = smul.u32 4, %s20
        %s312 = smul.u32 4, %s20
        %p313 = scmp.lt.s32.totalorder %s312, 15
        %s314 = scalar_select %p313, %s312, 15
        %s315 = scalar_lea.vmem %s5, %s314
        %s316 = smul.u32 4, %s20
        %s317 = smul.u32 4, %s20
        %p318 = scmp.lt.s32.totalorder %s317, 15
        %s319 = scalar_select %p318, %s317, 15
        %s320 = scalar_lea.vmem %s6, %s319
        %s321 = smul.u32 4, %s20
        %v323 = vld [vmem:[%s0] sm:$0x1]
        %v324 = vld [vmem:[#allocation2] sm:$0xff]
        %v325 = vld [vmem:[#allocation2 + $0x8] sm:$0xff]
        %v326 = vld [vmem:[#allocation2 + $0x10] sm:$0xff]
        %v327 = vld [vmem:[#allocation2 + $0x18] sm:$0xff]
        %v328 = vld [vmem:[#allocation2 + $0x20] sm:$0xff]
        %v329 = vld [vmem:[#allocation2 + $0x28] sm:$0xff]
        %v330 = vld [vmem:[#allocation2 + $0x30] sm:$0xff]
        %v331 = vld [vmem:[#allocation2 + $0x38] sm:$0xff]
        %v332 = vld [vmem:[#allocation2 + $0x40] sm:$0xff]
        %v333 = vld [vmem:[#allocation2 + $0x48] sm:$0xff]
        %v334 = vld [vmem:[#allocation2 + $0x50] sm:$0xff]
        %v335 = vld [vmem:[#allocation2 + $0x58] sm:$0xff]
        %v336 = vld [vmem:[#allocation2 + $0x60] sm:$0xff]
        %v337 = vld [vmem:[#allocation2 + $0x68] sm:$0xff]
        %v338 = vld [vmem:[#allocation2 + $0x70] sm:$0xff]
        %v339 = vld [vmem:[#allocation2 + $0x78] sm:$0xff]
        %v340 = vld [vmem:[#allocation2 + $0x80] sm:$0xff]
        %v341 = vld [vmem:[#allocation2 + $0x88] sm:$0xff]
        %v342 = vld [vmem:[#allocation2 + $0x90] sm:$0xff]
        %v343 = vld [vmem:[#allocation2 + $0x98] sm:$0xff]
        %v344 = vld [vmem:[#allocation2 + $0xa0] sm:$0xff]
        %v345 = vld [vmem:[#allocation2 + $0xa8] sm:$0xff]
        %v346 = vld [vmem:[#allocation2 + $0xb0] sm:$0xff]
        %v347 = vld [vmem:[#allocation2 + $0xb8] sm:$0xff]
        %v348 = vld [vmem:[#allocation2 + $0xc0] sm:$0xff]
        %v349 = vld [vmem:[#allocation2 + $0xc8] sm:$0xff]
        %v350 = vld [vmem:[#allocation2 + $0xd0] sm:$0xff]
        %v351 = vld [vmem:[#allocation2 + $0xd8] sm:$0xff]
        %v352 = vld [vmem:[#allocation2 + $0xe0] sm:$0xff]
        %v353 = vld [vmem:[#allocation2 + $0xe8] sm:$0xff]
        %v354 = vld [vmem:[#allocation2 + $0xf0] sm:$0xff]
        %v355 = vld [vmem:[#allocation2 + $0xf8] sm:$0xff]
        %v356 = vld [vmem:[#allocation4] sm:$0xf]
        %v358 = vlaneseq
        %v359 = vshrl.u32 %v358, 7
        %v360 = vsub.s32 0, %v359
        %v361 = vrot.slane %v356, %v360
        %v362 = vlaneseq
        %v363 = vshrl.u32 %v362, 7
        %v364 = vsub.s32 1, %v363
        %v365 = vrot.slane %v356, %v364
        %v366 = vlaneseq
        %v367 = vshrl.u32 %v366, 7
        %v368 = vsub.s32 2, %v367
        %v369 = vrot.slane %v356, %v368
        %v370 = vlaneseq
        %v371 = vshrl.u32 %v370, 7
        %v372 = vsub.s32 3, %v371
        %v373 = vrot.slane %v356, %v372
        %v410 = vunpack.c.l.b16 %v324
        %v411 = vunpack.c.h.b16 %v324
        %v412 = vunpack.c.l.b16 %v325
        %v413 = vunpack.c.h.b16 %v325
        %v414 = vunpack.c.l.b16 %v326
        %v415 = vunpack.c.h.b16 %v326
        %v416 = vunpack.c.l.b16 %v327
        %v417 = vunpack.c.h.b16 %v327
        %v418 = vunpack.c.l.b16 %v328
        %v419 = vunpack.c.h.b16 %v328
        %v420 = vunpack.c.l.b16 %v329
        %v421 = vunpack.c.h.b16 %v329
        %v422 = vunpack.c.l.b16 %v330
        %v423 = vunpack.c.h.b16 %v330
        %v424 = vunpack.c.l.b16 %v331
        %v425 = vunpack.c.h.b16 %v331
        %v426 = vunpack.c.l.b16 %v332
        %v427 = vunpack.c.h.b16 %v332
        %v428 = vunpack.c.l.b16 %v333
        %v429 = vunpack.c.h.b16 %v333
        %v430 = vunpack.c.l.b16 %v334
        %v431 = vunpack.c.h.b16 %v334
        %v432 = vunpack.c.l.b16 %v335
        %v433 = vunpack.c.h.b16 %v335
        %v434 = vunpack.c.l.b16 %v336
        %v435 = vunpack.c.h.b16 %v336
        %v436 = vunpack.c.l.b16 %v337
        %v437 = vunpack.c.h.b16 %v337
        %v438 = vunpack.c.l.b16 %v338
        %v439 = vunpack.c.h.b16 %v338
        %v440 = vunpack.c.l.b16 %v339
        %v441 = vunpack.c.h.b16 %v339
        %v442 = vunpack.c.l.b16 %v340
        %v443 = vunpack.c.h.b16 %v340
        %v444 = vunpack.c.l.b16 %v341
        %v445 = vunpack.c.h.b16 %v341
        %v446 = vunpack.c.l.b16 %v342
        %v447 = vunpack.c.h.b16 %v342
        %v448 = vunpack.c.l.b16 %v343
        %v449 = vunpack.c.h.b16 %v343
        %v450 = vunpack.c.l.b16 %v344
        %v451 = vunpack.c.h.b16 %v344
        %v452 = vunpack.c.l.b16 %v345
        %v453 = vunpack.c.h.b16 %v345
        %v454 = vunpack.c.l.b16 %v346
        %v455 = vunpack.c.h.b16 %v346
        %v456 = vunpack.c.l.b16 %v347
        %v457 = vunpack.c.h.b16 %v347
        %v458 = vunpack.c.l.b16 %v348
        %v459 = vunpack.c.h.b16 %v348
        %v460 = vunpack.c.l.b16 %v349
        %v461 = vunpack.c.h.b16 %v349
        %v462 = vunpack.c.l.b16 %v350
        %v463 = vunpack.c.h.b16 %v350
        %v464 = vunpack.c.l.b16 %v351
        %v465 = vunpack.c.h.b16 %v351
        %v466 = vunpack.c.l.b16 %v352
        %v467 = vunpack.c.h.b16 %v352
        %v468 = vunpack.c.l.b16 %v353
        %v469 = vunpack.c.h.b16 %v353
        %v470 = vunpack.c.l.b16 %v354
        %v471 = vunpack.c.h.b16 %v354
        %v472 = vunpack.c.l.b16 %v355
        %v473 = vunpack.c.h.b16 %v355
        %v474 = vpack.c.b16 %v414, %v410
        %v475 = vpack.c.b16 %v415, %v411
        %v476 = vpack.c.b16 %v416, %v412
        %v477 = vpack.c.b16 %v417, %v413
        %v478 = vpack.c.b16 %v422, %v418
        %v479 = vpack.c.b16 %v423, %v419
        %v480 = vpack.c.b16 %v424, %v420
        %v481 = vpack.c.b16 %v425, %v421
        %v482 = vpack.c.b16 %v430, %v426
        %v483 = vpack.c.b16 %v431, %v427
        %v484 = vpack.c.b16 %v432, %v428
        %v485 = vpack.c.b16 %v433, %v429
        %v486 = vpack.c.b16 %v438, %v434
        %v487 = vpack.c.b16 %v439, %v435
        %v488 = vpack.c.b16 %v440, %v436
        %v489 = vpack.c.b16 %v441, %v437
        %v490 = vpack.c.b16 %v446, %v442
        %v491 = vpack.c.b16 %v447, %v443
        %v492 = vpack.c.b16 %v448, %v444
        %v493 = vpack.c.b16 %v449, %v445
        %v494 = vpack.c.b16 %v454, %v450
        %v495 = vpack.c.b16 %v455, %v451
        %v496 = vpack.c.b16 %v456, %v452
        %v497 = vpack.c.b16 %v457, %v453
        %v498 = vpack.c.b16 %v462, %v458
        %v499 = vpack.c.b16 %v463, %v459
        %v500 = vpack.c.b16 %v464, %v460
        %v501 = vpack.c.b16 %v465, %v461
        %v502 = vpack.c.b16 %v470, %v466
        %v503 = vpack.c.b16 %v471, %v467
        %v504 = vpack.c.b16 %v472, %v468
        %v505 = vpack.c.b16 %v473, %v469
        %538 = vmatprep.subr.bf16.mxu0 %v475
        %539 = vmatpush1.bf16.msra.mxu0 %v474
        %540 = vmatprep.subr.bf16.mxu0 %v479
        %541 = vmatpush1.bf16.msra.mxu0 %v478
        %542 = vmatprep.subr.bf16.mxu0 %v483
        %543 = vmatpush1.bf16.msra.mxu0 %v482
        %544 = vmatprep.subr.bf16.mxu0 %v487
        %545 = vmatpush1.bf16.msra.mxu0 %v486
        %546 = vmatprep.subr.bf16.mxu0 %v491
        %547 = vmatpush1.bf16.msra.mxu0 %v490
        %548 = vmatprep.subr.bf16.mxu0 %v495
        %549 = vmatpush1.bf16.msra.mxu0 %v494
        %550 = vmatprep.subr.bf16.mxu0 %v499
        %551 = vmatpush1.bf16.msra.mxu0 %v498
        %552 = vmatprep.subr.bf16.mxu0 %v503
        %553 = vmatpush1.bf16.msra.mxu0 %v502
        %554 = vmatprep.subr.bf16.mxu0 0
        %555 = vmatpush1.bf16.msra.mxu0 0
        %556 = vmatprep.subr.bf16.mxu0 0
        %557 = vmatpush1.bf16.msra.mxu0 0
        %558 = vmatprep.subr.bf16.mxu0 0
        %559 = vmatpush1.bf16.msra.mxu0 0
        %560 = vmatprep.subr.bf16.mxu0 0
        %561 = vmatpush1.bf16.msra.mxu0 0
        %562 = vmatprep.subr.bf16.mxu0 0
        %563 = vmatpush1.bf16.msra.mxu0 0
        %564 = vmatprep.subr.bf16.mxu0 0
        %565 = vmatpush1.bf16.msra.mxu0 0
        %566 = vmatprep.subr.bf16.mxu0 0
        %567 = vmatpush1.bf16.msra.mxu0 0
        %568 = vmatprep.subr.bf16.mxu0 0
        %569 = vmatpush1.bf16.msra.mxu0 0
        %570 = vmatprep.mubr.bf16.mxu0 0
        %571 = vmatmul.mubr.bf16.gmra.mrb[0].mxu0 %v323
        %v572 = vpop.f32.mrb[0].mxu0
        %v573 = vadd.f32 %v361, %v572
        %v574 = vpop.f32.mrb[0].mxu0
        %v575 = vadd.f32 %v365, %v574
        %v576 = vpop.f32.mrb[0].mxu0
        %v577 = vpop.f32.mrb[0].mxu0
        %578 = vdwg.mxu0
        %579 = vmatprep.subr.bf16.mxu0 %v477
        %580 = vmatpush1.bf16.msra.mxu0 %v476
        %581 = vmatprep.subr.bf16.mxu0 %v481
        %582 = vmatpush1.bf16.msra.mxu0 %v480
        %583 = vmatprep.subr.bf16.mxu0 %v485
        %584 = vmatpush1.bf16.msra.mxu0 %v484
        %585 = vmatprep.subr.bf16.mxu0 %v489
        %586 = vmatpush1.bf16.msra.mxu0 %v488
        %587 = vmatprep.subr.bf16.mxu0 %v493
        %588 = vmatpush1.bf16.msra.mxu0 %v492
        %589 = vmatprep.subr.bf16.mxu0 %v497
        %590 = vmatpush1.bf16.msra.mxu0 %v496
        %591 = vmatprep.subr.bf16.mxu0 %v501
        %592 = vmatpush1.bf16.msra.mxu0 %v500
        %593 = vmatprep.subr.bf16.mxu0 %v505
        %594 = vmatpush1.bf16.msra.mxu0 %v504
        %595 = vmatprep.subr.bf16.mxu0 0
        %596 = vmatpush1.bf16.msra.mxu0 0
        %597 = vmatprep.subr.bf16.mxu0 0
        %598 = vmatpush1.bf16.msra.mxu0 0
        %599 = vmatprep.subr.bf16.mxu0 0
        %600 = vmatpush1.bf16.msra.mxu0 0
        %601 = vmatprep.subr.bf16.mxu0 0
        %602 = vmatpush1.bf16.msra.mxu0 0
        %603 = vmatprep.subr.bf16.mxu0 0
        %604 = vmatpush1.bf16.msra.mxu0 0
        %605 = vmatprep.subr.bf16.mxu0 0
        %606 = vmatpush1.bf16.msra.mxu0 0
        %607 = vmatprep.subr.bf16.mxu0 0
        %608 = vmatpush1.bf16.msra.mxu0 0
        %609 = vmatprep.subr.bf16.mxu0 0
        %610 = vmatpush1.bf16.msra.mxu0 0
        %611 = vmatprep.mubr.bf16.mxu0 0
        %612 = vmatmul.mubr.bf16.gmra.mrb[0].mxu0 %v323
        %v613 = vpop.f32.mrb[0].mxu0
        %v614 = vadd.f32 %v369, %v613
        %v615 = vpop.f32.mrb[0].mxu0
        %v616 = vadd.f32 %v373, %v615
        %v617 = vpop.f32.mrb[0].mxu0
        %v618 = vpop.f32.mrb[0].mxu0
        %619 = vdwg.mxu0
        %v620 = vmax.f32 %v573, 0.0
        %v621 = vmax.f32 %v575, 0.0
        %v622 = vmax.f32 %v614, 0.0
        %v623 = vmax.f32 %v616, 0.0
        %v624 = vpack.c.bf16 %v620, %v620
        %v625 = vpack.c.bf16 %v621, %v621
        %v626 = vpack.c.bf16 %v622, %v622
        %v627 = vpack.c.bf16 %v623, %v623
        %v628 = vld [vmem:[%s268] sm:$0xff]
        %v629 = vld [vmem:[%s268 + $0x8] sm:$0xff]
        %v630 = vld [vmem:[%s268 + $0x10] sm:$0xff]
        %v631 = vld [vmem:[%s268 + $0x18] sm:$0xff]
        %v632 = vld [vmem:[%s268 + $0x20] sm:$0xff]
        %v633 = vld [vmem:[%s268 + $0x28] sm:$0xff]
        %v634 = vld [vmem:[%s268 + $0x30] sm:$0xff]
        %v635 = vld [vmem:[%s268 + $0x38] sm:$0xff]
        %v636 = vld [vmem:[%s268 + $0x40] sm:$0xff]
        %v637 = vld [vmem:[%s268 + $0x48] sm:$0xff]
        %v638 = vld [vmem:[%s268 + $0x50] sm:$0xff]
        %v639 = vld [vmem:[%s268 + $0x58] sm:$0xff]
        %v640 = vld [vmem:[%s268 + $0x60] sm:$0xff]
        %v641 = vld [vmem:[%s268 + $0x68] sm:$0xff]
        %v642 = vld [vmem:[%s268 + $0x70] sm:$0xff]
        %v643 = vld [vmem:[%s268 + $0x78] sm:$0xff]
        %v644 = vld [vmem:[%s268 + $0x80] sm:$0xff]
        %v645 = vld [vmem:[%s268 + $0x88] sm:$0xff]
        %v646 = vld [vmem:[%s268 + $0x90] sm:$0xff]
        %v647 = vld [vmem:[%s268 + $0x98] sm:$0xff]
        %v648 = vld [vmem:[%s268 + $0xa0] sm:$0xff]
        %v649 = vld [vmem:[%s268 + $0xa8] sm:$0xff]
        %v650 = vld [vmem:[%s268 + $0xb0] sm:$0xff]
        %v651 = vld [vmem:[%s268 + $0xb8] sm:$0xff]
        %v652 = vld [vmem:[%s268 + $0xc0] sm:$0xff]
        %v653 = vld [vmem:[%s268 + $0xc8] sm:$0xff]
        %v654 = vld [vmem:[%s268 + $0xd0] sm:$0xff]
        %v655 = vld [vmem:[%s268 + $0xd8] sm:$0xff]
        %v656 = vld [vmem:[%s268 + $0xe0] sm:$0xff]
        %v657 = vld [vmem:[%s268 + $0xe8] sm:$0xff]
        %v658 = vld [vmem:[%s268 + $0xf0] sm:$0xff]
        %v659 = vld [vmem:[%s268 + $0xf8] sm:$0xff]
        %v660 = vld [vmem:[%s268 + $0x100] sm:$0xff]
        %v661 = vld [vmem:[%s268 + $0x108] sm:$0xff]
        %v662 = vld [vmem:[%s268 + $0x110] sm:$0xff]
        %v663 = vld [vmem:[%s268 + $0x118] sm:$0xff]
        %v664 = vld [vmem:[%s268 + $0x120] sm:$0xff]
        %v665 = vld [vmem:[%s268 + $0x128] sm:$0xff]
        %v666 = vld [vmem:[%s268 + $0x130] sm:$0xff]
        %v667 = vld [vmem:[%s268 + $0x138] sm:$0xff]
        %v668 = vld [vmem:[%s268 + $0x140] sm:$0xff]
        %v669 = vld [vmem:[%s268 + $0x148] sm:$0xff]
        %v670 = vld [vmem:[%s268 + $0x150] sm:$0xff]
        %v671 = vld [vmem:[%s268 + $0x158] sm:$0xff]
        %v672 = vld [vmem:[%s268 + $0x160] sm:$0xff]
        %v673 = vld [vmem:[%s268 + $0x168] sm:$0xff]
        %v674 = vld [vmem:[%s268 + $0x170] sm:$0xff]
        %v675 = vld [vmem:[%s268 + $0x178] sm:$0xff]
        %v676 = vld [vmem:[%s268 + $0x180] sm:$0xff]
        %v677 = vld [vmem:[%s268 + $0x188] sm:$0xff]
        %v678 = vld [vmem:[%s268 + $0x190] sm:$0xff]
        %v679 = vld [vmem:[%s268 + $0x198] sm:$0xff]
        %v680 = vld [vmem:[%s268 + $0x1a0] sm:$0xff]
        %v681 = vld [vmem:[%s268 + $0x1a8] sm:$0xff]
        %v682 = vld [vmem:[%s268 + $0x1b0] sm:$0xff]
        %v683 = vld [vmem:[%s268 + $0x1b8] sm:$0xff]
        %v684 = vld [vmem:[%s268 + $0x1c0] sm:$0xff]
        %v685 = vld [vmem:[%s268 + $0x1c8] sm:$0xff]
        %v686 = vld [vmem:[%s268 + $0x1d0] sm:$0xff]
        %v687 = vld [vmem:[%s268 + $0x1d8] sm:$0xff]
        %v688 = vld [vmem:[%s268 + $0x1e0] sm:$0xff]
        %v689 = vld [vmem:[%s268 + $0x1e8] sm:$0xff]
        %v690 = vld [vmem:[%s268 + $0x1f0] sm:$0xff]
        %v691 = vld [vmem:[%s268 + $0x1f8] sm:$0xff]
        %v692 = vld [vmem:[%s268 + $0x200] sm:$0xff]
        %v693 = vld [vmem:[%s268 + $0x208] sm:$0xff]
        %v694 = vld [vmem:[%s268 + $0x210] sm:$0xff]
        %v695 = vld [vmem:[%s268 + $0x218] sm:$0xff]
        %v696 = vld [vmem:[%s268 + $0x220] sm:$0xff]
        %v697 = vld [vmem:[%s268 + $0x228] sm:$0xff]
        %v698 = vld [vmem:[%s268 + $0x230] sm:$0xff]
        %v699 = vld [vmem:[%s268 + $0x238] sm:$0xff]
        %v700 = vld [vmem:[%s268 + $0x240] sm:$0xff]
        %v701 = vld [vmem:[%s268 + $0x248] sm:$0xff]
        %v702 = vld [vmem:[%s268 + $0x250] sm:$0xff]
        %v703 = vld [vmem:[%s268 + $0x258] sm:$0xff]
        %v704 = vld [vmem:[%s268 + $0x260] sm:$0xff]
        %v705 = vld [vmem:[%s268 + $0x268] sm:$0xff]
        %v706 = vld [vmem:[%s268 + $0x270] sm:$0xff]
        %v707 = vld [vmem:[%s268 + $0x278] sm:$0xff]
        %v708 = vld [vmem:[%s268 + $0x280] sm:$0xff]
        %v709 = vld [vmem:[%s268 + $0x288] sm:$0xff]
        %v710 = vld [vmem:[%s268 + $0x290] sm:$0xff]
        %v711 = vld [vmem:[%s268 + $0x298] sm:$0xff]
        %v712 = vld [vmem:[%s268 + $0x2a0] sm:$0xff]
        %v713 = vld [vmem:[%s268 + $0x2a8] sm:$0xff]
        %v714 = vld [vmem:[%s268 + $0x2b0] sm:$0xff]
        %v715 = vld [vmem:[%s268 + $0x2b8] sm:$0xff]
        %v716 = vld [vmem:[%s268 + $0x2c0] sm:$0xff]
        %v717 = vld [vmem:[%s268 + $0x2c8] sm:$0xff]
        %v718 = vld [vmem:[%s268 + $0x2d0] sm:$0xff]
        %v719 = vld [vmem:[%s268 + $0x2d8] sm:$0xff]
        %v720 = vld [vmem:[%s268 + $0x2e0] sm:$0xff]
        %v721 = vld [vmem:[%s268 + $0x2e8] sm:$0xff]
        %v722 = vld [vmem:[%s268 + $0x2f0] sm:$0xff]
        %v723 = vld [vmem:[%s268 + $0x2f8] sm:$0xff]
        %v724 = vld [vmem:[%s268 + $0x300] sm:$0xff]
        %v725 = vld [vmem:[%s268 + $0x308] sm:$0xff]
        %v726 = vld [vmem:[%s268 + $0x310] sm:$0xff]
        %v727 = vld [vmem:[%s268 + $0x318] sm:$0xff]
        %v728 = vld [vmem:[%s268 + $0x320] sm:$0xff]
        %v729 = vld [vmem:[%s268 + $0x328] sm:$0xff]
        %v730 = vld [vmem:[%s268 + $0x330] sm:$0xff]
        %v731 = vld [vmem:[%s268 + $0x338] sm:$0xff]
        %v732 = vld [vmem:[%s268 + $0x340] sm:$0xff]
        %v733 = vld [vmem:[%s268 + $0x348] sm:$0xff]
        %v734 = vld [vmem:[%s268 + $0x350] sm:$0xff]
        %v735 = vld [vmem:[%s268 + $0x358] sm:$0xff]
        %v736 = vld [vmem:[%s268 + $0x360] sm:$0xff]
        %v737 = vld [vmem:[%s268 + $0x368] sm:$0xff]
        %v738 = vld [vmem:[%s268 + $0x370] sm:$0xff]
        %v739 = vld [vmem:[%s268 + $0x378] sm:$0xff]
        %v740 = vld [vmem:[%s268 + $0x380] sm:$0xff]
        %v741 = vld [vmem:[%s268 + $0x388] sm:$0xff]
        %v742 = vld [vmem:[%s268 + $0x390] sm:$0xff]
        %v743 = vld [vmem:[%s268 + $0x398] sm:$0xff]
        %v744 = vld [vmem:[%s268 + $0x3a0] sm:$0xff]
        %v745 = vld [vmem:[%s268 + $0x3a8] sm:$0xff]
        %v746 = vld [vmem:[%s268 + $0x3b0] sm:$0xff]
        %v747 = vld [vmem:[%s268 + $0x3b8] sm:$0xff]
        %v748 = vld [vmem:[%s268 + $0x3c0] sm:$0xff]
        %v749 = vld [vmem:[%s268 + $0x3c8] sm:$0xff]
        %v750 = vld [vmem:[%s268 + $0x3d0] sm:$0xff]
        %v751 = vld [vmem:[%s268 + $0x3d8] sm:$0xff]
        %v752 = vld [vmem:[%s268 + $0x3e0] sm:$0xff]
        %v753 = vld [vmem:[%s268 + $0x3e8] sm:$0xff]
        %v754 = vld [vmem:[%s268 + $0x3f0] sm:$0xff]
        %v755 = vld [vmem:[%s268 + $0x3f8] sm:$0xff]
        %v884 = vunpack.c.l.b16 %v628
        %v885 = vunpack.c.h.b16 %v628
        %v886 = vunpack.c.l.b16 %v629
        %v887 = vunpack.c.h.b16 %v629
        %v888 = vunpack.c.l.b16 %v630
        %v889 = vunpack.c.h.b16 %v630
        %v890 = vunpack.c.l.b16 %v631
        %v891 = vunpack.c.h.b16 %v631
        %v892 = vunpack.c.l.b16 %v632
        %v893 = vunpack.c.h.b16 %v632
        %v894 = vunpack.c.l.b16 %v633
        %v895 = vunpack.c.h.b16 %v633
        %v896 = vunpack.c.l.b16 %v634
        %v897 = vunpack.c.h.b16 %v634
        %v898 = vunpack.c.l.b16 %v635
        %v899 = vunpack.c.h.b16 %v635
        %v900 = vunpack.c.l.b16 %v636
        %v901 = vunpack.c.h.b16 %v636
        %v902 = vunpack.c.l.b16 %v637
        %v903 = vunpack.c.h.b16 %v637
        %v904 = vunpack.c.l.b16 %v638
        %v905 = vunpack.c.h.b16 %v638
        %v906 = vunpack.c.l.b16 %v639
        %v907 = vunpack.c.h.b16 %v639
        %v908 = vunpack.c.l.b16 %v640
        %v909 = vunpack.c.h.b16 %v640
        %v910 = vunpack.c.l.b16 %v641
        %v911 = vunpack.c.h.b16 %v641
        %v912 = vunpack.c.l.b16 %v642
        %v913 = vunpack.c.h.b16 %v642
        %v914 = vunpack.c.l.b16 %v643
        %v915 = vunpack.c.h.b16 %v643
        %v916 = vunpack.c.l.b16 %v644
        %v917 = vunpack.c.h.b16 %v644
        %v918 = vunpack.c.l.b16 %v645
        %v919 = vunpack.c.h.b16 %v645
        %v920 = vunpack.c.l.b16 %v646
        %v921 = vunpack.c.h.b16 %v646
        %v922 = vunpack.c.l.b16 %v647
        %v923 = vunpack.c.h.b16 %v647
        %v924 = vunpack.c.l.b16 %v648
        %v925 = vunpack.c.h.b16 %v648
        %v926 = vunpack.c.l.b16 %v649
        %v927 = vunpack.c.h.b16 %v649
        %v928 = vunpack.c.l.b16 %v650
        %v929 = vunpack.c.h.b16 %v650
        %v930 = vunpack.c.l.b16 %v651
        %v931 = vunpack.c.h.b16 %v651
        %v932 = vunpack.c.l.b16 %v652
        %v933 = vunpack.c.h.b16 %v652
        %v934 = vunpack.c.l.b16 %v653
        %v935 = vunpack.c.h.b16 %v653
        %v936 = vunpack.c.l.b16 %v654
        %v937 = vunpack.c.h.b16 %v654
        %v938 = vunpack.c.l.b16 %v655
        %v939 = vunpack.c.h.b16 %v655
        %v940 = vunpack.c.l.b16 %v656
        %v941 = vunpack.c.h.b16 %v656
        %v942 = vunpack.c.l.b16 %v657
        %v943 = vunpack.c.h.b16 %v657
        %v944 = vunpack.c.l.b16 %v658
        %v945 = vunpack.c.h.b16 %v658
        %v946 = vunpack.c.l.b16 %v659
        %v947 = vunpack.c.h.b16 %v659
        %v948 = vunpack.c.l.b16 %v660
        %v949 = vunpack.c.h.b16 %v660
        %v950 = vunpack.c.l.b16 %v661
        %v951 = vunpack.c.h.b16 %v661
        %v952 = vunpack.c.l.b16 %v662
        %v953 = vunpack.c.h.b16 %v662
        %v954 = vunpack.c.l.b16 %v663
        %v955 = vunpack.c.h.b16 %v663
        %v956 = vunpack.c.l.b16 %v664
        %v957 = vunpack.c.h.b16 %v664
        %v958 = vunpack.c.l.b16 %v665
        %v959 = vunpack.c.h.b16 %v665
        %v960 = vunpack.c.l.b16 %v666
        %v961 = vunpack.c.h.b16 %v666
        %v962 = vunpack.c.l.b16 %v667
        %v963 = vunpack.c.h.b16 %v667
        %v964 = vunpack.c.l.b16 %v668
        %v965 = vunpack.c.h.b16 %v668
        %v966 = vunpack.c.l.b16 %v669
        %v967 = vunpack.c.h.b16 %v669
        %v968 = vunpack.c.l.b16 %v670
        %v969 = vunpack.c.h.b16 %v670
        %v970 = vunpack.c.l.b16 %v671
        %v971 = vunpack.c.h.b16 %v671
        %v972 = vunpack.c.l.b16 %v672
        %v973 = vunpack.c.h.b16 %v672
        %v974 = vunpack.c.l.b16 %v673
        %v975 = vunpack.c.h.b16 %v673
        %v976 = vunpack.c.l.b16 %v674
        %v977 = vunpack.c.h.b16 %v674
        %v978 = vunpack.c.l.b16 %v675
        %v979 = vunpack.c.h.b16 %v675
        %v980 = vunpack.c.l.b16 %v676
        %v981 = vunpack.c.h.b16 %v676
        %v982 = vunpack.c.l.b16 %v677
        %v983 = vunpack.c.h.b16 %v677
        %v984 = vunpack.c.l.b16 %v678
        %v985 = vunpack.c.h.b16 %v678
        %v986 = vunpack.c.l.b16 %v679
        %v987 = vunpack.c.h.b16 %v679
        %v988 = vunpack.c.l.b16 %v680
        %v989 = vunpack.c.h.b16 %v680
        %v990 = vunpack.c.l.b16 %v681
        %v991 = vunpack.c.h.b16 %v681
        %v992 = vunpack.c.l.b16 %v682
        %v993 = vunpack.c.h.b16 %v682
        %v994 = vunpack.c.l.b16 %v683
        %v995 = vunpack.c.h.b16 %v683
        %v996 = vunpack.c.l.b16 %v684
        %v997 = vunpack.c.h.b16 %v684
        %v998 = vunpack.c.l.b16 %v685
        %v999 = vunpack.c.h.b16 %v685
        %v1000 = vunpack.c.l.b16 %v686
        %v1001 = vunpack.c.h.b16 %v686
        %v1002 = vunpack.c.l.b16 %v687
        %v1003 = vunpack.c.h.b16 %v687
        %v1004 = vunpack.c.l.b16 %v688
        %v1005 = vunpack.c.h.b16 %v688
        %v1006 = vunpack.c.l.b16 %v689
        %v1007 = vunpack.c.h.b16 %v689
        %v1008 = vunpack.c.l.b16 %v690
        %v1009 = vunpack.c.h.b16 %v690
        %v1010 = vunpack.c.l.b16 %v691
        %v1011 = vunpack.c.h.b16 %v691
        %v1012 = vunpack.c.l.b16 %v692
        %v1013 = vunpack.c.h.b16 %v692
        %v1014 = vunpack.c.l.b16 %v693
        %v1015 = vunpack.c.h.b16 %v693
        %v1016 = vunpack.c.l.b16 %v694
        %v1017 = vunpack.c.h.b16 %v694
        %v1018 = vunpack.c.l.b16 %v695
        %v1019 = vunpack.c.h.b16 %v695
        %v1020 = vunpack.c.l.b16 %v696
        %v1021 = vunpack.c.h.b16 %v696
        %v1022 = vunpack.c.l.b16 %v697
        %v1023 = vunpack.c.h.b16 %v697
        %v1024 = vunpack.c.l.b16 %v698
        %v1025 = vunpack.c.h.b16 %v698
        %v1026 = vunpack.c.l.b16 %v699
        %v1027 = vunpack.c.h.b16 %v699
        %v1028 = vunpack.c.l.b16 %v700
        %v1029 = vunpack.c.h.b16 %v700
        %v1030 = vunpack.c.l.b16 %v701
        %v1031 = vunpack.c.h.b16 %v701
        %v1032 = vunpack.c.l.b16 %v702
        %v1033 = vunpack.c.h.b16 %v702
        %v1034 = vunpack.c.l.b16 %v703
        %v1035 = vunpack.c.h.b16 %v703
        %v1036 = vunpack.c.l.b16 %v704
        %v1037 = vunpack.c.h.b16 %v704
        %v1038 = vunpack.c.l.b16 %v705
        %v1039 = vunpack.c.h.b16 %v705
        %v1040 = vunpack.c.l.b16 %v706
        %v1041 = vunpack.c.h.b16 %v706
        %v1042 = vunpack.c.l.b16 %v707
        %v1043 = vunpack.c.h.b16 %v707
        %v1044 = vunpack.c.l.b16 %v708
        %v1045 = vunpack.c.h.b16 %v708
        %v1046 = vunpack.c.l.b16 %v709
        %v1047 = vunpack.c.h.b16 %v709
        %v1048 = vunpack.c.l.b16 %v710
        %v1049 = vunpack.c.h.b16 %v710
        %v1050 = vunpack.c.l.b16 %v711
        %v1051 = vunpack.c.h.b16 %v711
        %v1052 = vunpack.c.l.b16 %v712
        %v1053 = vunpack.c.h.b16 %v712
        %v1054 = vunpack.c.l.b16 %v713
        %v1055 = vunpack.c.h.b16 %v713
        %v1056 = vunpack.c.l.b16 %v714
        %v1057 = vunpack.c.h.b16 %v714
        %v1058 = vunpack.c.l.b16 %v715
        %v1059 = vunpack.c.h.b16 %v715
        %v1060 = vunpack.c.l.b16 %v716
        %v1061 = vunpack.c.h.b16 %v716
        %v1062 = vunpack.c.l.b16 %v717
        %v1063 = vunpack.c.h.b16 %v717
        %v1064 = vunpack.c.l.b16 %v718
        %v1065 = vunpack.c.h.b16 %v718
        %v1066 = vunpack.c.l.b16 %v719
        %v1067 = vunpack.c.h.b16 %v719
        %v1068 = vunpack.c.l.b16 %v720
        %v1069 = vunpack.c.h.b16 %v720
        %v1070 = vunpack.c.l.b16 %v721
        %v1071 = vunpack.c.h.b16 %v721
        %v1072 = vunpack.c.l.b16 %v722
        %v1073 = vunpack.c.h.b16 %v722
        %v1074 = vunpack.c.l.b16 %v723
        %v1075 = vunpack.c.h.b16 %v723
        %v1076 = vunpack.c.l.b16 %v724
        %v1077 = vunpack.c.h.b16 %v724
        %v1078 = vunpack.c.l.b16 %v725
        %v1079 = vunpack.c.h.b16 %v725
        %v1080 = vunpack.c.l.b16 %v726
        %v1081 = vunpack.c.h.b16 %v726
        %v1082 = vunpack.c.l.b16 %v727
        %v1083 = vunpack.c.h.b16 %v727
        %v1084 = vunpack.c.l.b16 %v728
        %v1085 = vunpack.c.h.b16 %v728
        %v1086 = vunpack.c.l.b16 %v729
        %v1087 = vunpack.c.h.b16 %v729
        %v1088 = vunpack.c.l.b16 %v730
        %v1089 = vunpack.c.h.b16 %v730
        %v1090 = vunpack.c.l.b16 %v731
        %v1091 = vunpack.c.h.b16 %v731
        %v1092 = vunpack.c.l.b16 %v732
        %v1093 = vunpack.c.h.b16 %v732
        %v1094 = vunpack.c.l.b16 %v733
        %v1095 = vunpack.c.h.b16 %v733
        %v1096 = vunpack.c.l.b16 %v734
        %v1097 = vunpack.c.h.b16 %v734
        %v1098 = vunpack.c.l.b16 %v735
        %v1099 = vunpack.c.h.b16 %v735
        %v1100 = vunpack.c.l.b16 %v736
        %v1101 = vunpack.c.h.b16 %v736
        %v1102 = vunpack.c.l.b16 %v737
        %v1103 = vunpack.c.h.b16 %v737
        %v1104 = vunpack.c.l.b16 %v738
        %v1105 = vunpack.c.h.b16 %v738
        %v1106 = vunpack.c.l.b16 %v739
        %v1107 = vunpack.c.h.b16 %v739
        %v1108 = vunpack.c.l.b16 %v740
        %v1109 = vunpack.c.h.b16 %v740
        %v1110 = vunpack.c.l.b16 %v741
        %v1111 = vunpack.c.h.b16 %v741
        %v1112 = vunpack.c.l.b16 %v742
        %v1113 = vunpack.c.h.b16 %v742
        %v1114 = vunpack.c.l.b16 %v743
        %v1115 = vunpack.c.h.b16 %v743
        %v1116 = vunpack.c.l.b16 %v744
        %v1117 = vunpack.c.h.b16 %v744
        %v1118 = vunpack.c.l.b16 %v745
        %v1119 = vunpack.c.h.b16 %v745
        %v1120 = vunpack.c.l.b16 %v746
        %v1121 = vunpack.c.h.b16 %v746
        %v1122 = vunpack.c.l.b16 %v747
        %v1123 = vunpack.c.h.b16 %v747
        %v1124 = vunpack.c.l.b16 %v748
        %v1125 = vunpack.c.h.b16 %v748
        %v1126 = vunpack.c.l.b16 %v749
        %v1127 = vunpack.c.h.b16 %v749
        %v1128 = vunpack.c.l.b16 %v750
        %v1129 = vunpack.c.h.b16 %v750
        %v1130 = vunpack.c.l.b16 %v751
        %v1131 = vunpack.c.h.b16 %v751
        %v1132 = vunpack.c.l.b16 %v752
        %v1133 = vunpack.c.h.b16 %v752
        %v1134 = vunpack.c.l.b16 %v753
        %v1135 = vunpack.c.h.b16 %v753
        %v1136 = vunpack.c.l.b16 %v754
        %v1137 = vunpack.c.h.b16 %v754
        %v1138 = vunpack.c.l.b16 %v755
        %v1139 = vunpack.c.h.b16 %v755
        %v1140 = vpack.c.b16 %v888, %v884
        %v1141 = vpack.c.b16 %v889, %v885
        %v1142 = vpack.c.b16 %v890, %v886
        %v1143 = vpack.c.b16 %v891, %v887
        %v1144 = vpack.c.b16 %v896, %v892
        %v1145 = vpack.c.b16 %v897, %v893
        %v1146 = vpack.c.b16 %v898, %v894
        %v1147 = vpack.c.b16 %v899, %v895
        %v1148 = vpack.c.b16 %v904, %v900
        %v1149 = vpack.c.b16 %v905, %v901
        %v1150 = vpack.c.b16 %v906, %v902
        %v1151 = vpack.c.b16 %v907, %v903
        %v1152 = vpack.c.b16 %v912, %v908
        %v1153 = vpack.c.b16 %v913, %v909
        %v1154 = vpack.c.b16 %v914, %v910
        %v1155 = vpack.c.b16 %v915, %v911
        %v1156 = vpack.c.b16 %v920, %v916
        %v1157 = vpack.c.b16 %v921, %v917
        %v1158 = vpack.c.b16 %v922, %v918
        %v1159 = vpack.c.b16 %v923, %v919
        %v1160 = vpack.c.b16 %v928, %v924
        %v1161 = vpack.c.b16 %v929, %v925
        %v1162 = vpack.c.b16 %v930, %v926
        %v1163 = vpack.c.b16 %v931, %v927
        %v1164 = vpack.c.b16 %v936, %v932
        %v1165 = vpack.c.b16 %v937, %v933
        %v1166 = vpack.c.b16 %v938, %v934
        %v1167 = vpack.c.b16 %v939, %v935
        %v1168 = vpack.c.b16 %v944, %v940
        %v1169 = vpack.c.b16 %v945, %v941
        %v1170 = vpack.c.b16 %v946, %v942
        %v1171 = vpack.c.b16 %v947, %v943
        %v1172 = vpack.c.b16 %v952, %v948
        %v1173 = vpack.c.b16 %v953, %v949
        %v1174 = vpack.c.b16 %v954, %v950
        %v1175 = vpack.c.b16 %v955, %v951
        %v1176 = vpack.c.b16 %v960, %v956
        %v1177 = vpack.c.b16 %v961, %v957
        %v1178 = vpack.c.b16 %v962, %v958
        %v1179 = vpack.c.b16 %v963, %v959
        %v1180 = vpack.c.b16 %v968, %v964
        %v1181 = vpack.c.b16 %v969, %v965
        %v1182 = vpack.c.b16 %v970, %v966
        %v1183 = vpack.c.b16 %v971, %v967
        %v1184 = vpack.c.b16 %v976, %v972
        %v1185 = vpack.c.b16 %v977, %v973
        %v1186 = vpack.c.b16 %v978, %v974
        %v1187 = vpack.c.b16 %v979, %v975
        %v1188 = vpack.c.b16 %v984, %v980
        %v1189 = vpack.c.b16 %v985, %v981
        %v1190 = vpack.c.b16 %v986, %v982
        %v1191 = vpack.c.b16 %v987, %v983
        %v1192 = vpack.c.b16 %v992, %v988
        %v1193 = vpack.c.b16 %v993, %v989
        %v1194 = vpack.c.b16 %v994, %v990
        %v1195 = vpack.c.b16 %v995, %v991
        %v1196 = vpack.c.b16 %v1000, %v996
        %v1197 = vpack.c.b16 %v1001, %v997
        %v1198 = vpack.c.b16 %v1002, %v998
        %v1199 = vpack.c.b16 %v1003, %v999
        %v1200 = vpack.c.b16 %v1008, %v1004
        %v1201 = vpack.c.b16 %v1009, %v1005
        %v1202 = vpack.c.b16 %v1010, %v1006
        %v1203 = vpack.c.b16 %v1011, %v1007
        %v1204 = vpack.c.b16 %v1016, %v1012
        %v1205 = vpack.c.b16 %v1017, %v1013
        %v1206 = vpack.c.b16 %v1018, %v1014
        %v1207 = vpack.c.b16 %v1019, %v1015
        %v1208 = vpack.c.b16 %v1024, %v1020
        %v1209 = vpack.c.b16 %v1025, %v1021
        %v1210 = vpack.c.b16 %v1026, %v1022
        %v1211 = vpack.c.b16 %v1027, %v1023
        %v1212 = vpack.c.b16 %v1032, %v1028
        %v1213 = vpack.c.b16 %v1033, %v1029
        %v1214 = vpack.c.b16 %v1034, %v1030
        %v1215 = vpack.c.b16 %v1035, %v1031
        %v1216 = vpack.c.b16 %v1040, %v1036
        %v1217 = vpack.c.b16 %v1041, %v1037
        %v1218 = vpack.c.b16 %v1042, %v1038
        %v1219 = vpack.c.b16 %v1043, %v1039
        %v1220 = vpack.c.b16 %v1048, %v1044
        %v1221 = vpack.c.b16 %v1049, %v1045
        %v1222 = vpack.c.b16 %v1050, %v1046
        %v1223 = vpack.c.b16 %v1051, %v1047
        %v1224 = vpack.c.b16 %v1056, %v1052
        %v1225 = vpack.c.b16 %v1057, %v1053
        %v1226 = vpack.c.b16 %v1058, %v1054
        %v1227 = vpack.c.b16 %v1059, %v1055
        %v1228 = vpack.c.b16 %v1064, %v1060
        %v1229 = vpack.c.b16 %v1065, %v1061
        %v1230 = vpack.c.b16 %v1066, %v1062
        %v1231 = vpack.c.b16 %v1067, %v1063
        %v1232 = vpack.c.b16 %v1072, %v1068
        %v1233 = vpack.c.b16 %v1073, %v1069
        %v1234 = vpack.c.b16 %v1074, %v1070
        %v1235 = vpack.c.b16 %v1075, %v1071
        %v1236 = vpack.c.b16 %v1080, %v1076
        %v1237 = vpack.c.b16 %v1081, %v1077
        %v1238 = vpack.c.b16 %v1082, %v1078
        %v1239 = vpack.c.b16 %v1083, %v1079
        %v1240 = vpack.c.b16 %v1088, %v1084
        %v1241 = vpack.c.b16 %v1089, %v1085
        %v1242 = vpack.c.b16 %v1090, %v1086
        %v1243 = vpack.c.b16 %v1091, %v1087
        %v1244 = vpack.c.b16 %v1096, %v1092
        %v1245 = vpack.c.b16 %v1097, %v1093
        %v1246 = vpack.c.b16 %v1098, %v1094
        %v1247 = vpack.c.b16 %v1099, %v1095
        %v1248 = vpack.c.b16 %v1104, %v1100
        %v1249 = vpack.c.b16 %v1105, %v1101
        %v1250 = vpack.c.b16 %v1106, %v1102
        %v1251 = vpack.c.b16 %v1107, %v1103
        %v1252 = vpack.c.b16 %v1112, %v1108
        %v1253 = vpack.c.b16 %v1113, %v1109
        %v1254 = vpack.c.b16 %v1114, %v1110
        %v1255 = vpack.c.b16 %v1115, %v1111
        %v1256 = vpack.c.b16 %v1120, %v1116
        %v1257 = vpack.c.b16 %v1121, %v1117
        %v1258 = vpack.c.b16 %v1122, %v1118
        %v1259 = vpack.c.b16 %v1123, %v1119
        %v1260 = vpack.c.b16 %v1128, %v1124
        %v1261 = vpack.c.b16 %v1129, %v1125
        %v1262 = vpack.c.b16 %v1130, %v1126
        %v1263 = vpack.c.b16 %v1131, %v1127
        %v1264 = vpack.c.b16 %v1136, %v1132
        %v1265 = vpack.c.b16 %v1137, %v1133
        %v1266 = vpack.c.b16 %v1138, %v1134
        %v1267 = vpack.c.b16 %v1139, %v1135
        %1396 = vmatprep.subr.bf16.mxu0 %v1141
        %1397 = vmatpush1.bf16.msra.mxu0 %v1140
        %1398 = vmatprep.subr.bf16.mxu0 %v1145
        %1399 = vmatpush1.bf16.msra.mxu0 %v1144
        %1400 = vmatprep.subr.bf16.mxu0 %v1149
        %1401 = vmatpush1.bf16.msra.mxu0 %v1148
        %1402 = vmatprep.subr.bf16.mxu0 %v1153
        %1403 = vmatpush1.bf16.msra.mxu0 %v1152
        %1404 = vmatprep.subr.bf16.mxu0 %v1157
        %1405 = vmatpush1.bf16.msra.mxu0 %v1156
        %1406 = vmatprep.subr.bf16.mxu0 %v1161
        %1407 = vmatpush1.bf16.msra.mxu0 %v1160
        %1408 = vmatprep.subr.bf16.mxu0 %v1165
        %1409 = vmatpush1.bf16.msra.mxu0 %v1164
        %1410 = vmatprep.subr.bf16.mxu0 %v1169
        %1411 = vmatpush1.bf16.msra.mxu0 %v1168
        %1412 = vmatprep.subr.bf16.mxu0 %v1173
        %1413 = vmatpush1.bf16.msra.mxu0 %v1172
        %1414 = vmatprep.subr.bf16.mxu0 %v1177
        %1415 = vmatpush1.bf16.msra.mxu0 %v1176
        %1416 = vmatprep.subr.bf16.mxu0 %v1181
        %1417 = vmatpush1.bf16.msra.mxu0 %v1180
        %1418 = vmatprep.subr.bf16.mxu0 %v1185
        %1419 = vmatpush1.bf16.msra.mxu0 %v1184
        %1420 = vmatprep.subr.bf16.mxu0 %v1189
        %1421 = vmatpush1.bf16.msra.mxu0 %v1188
        %1422 = vmatprep.subr.bf16.mxu0 %v1193
        %1423 = vmatpush1.bf16.msra.mxu0 %v1192
        %1424 = vmatprep.subr.bf16.mxu0 %v1197
        %1425 = vmatpush1.bf16.msra.mxu0 %v1196
        %1426 = vmatprep.subr.bf16.mxu0 %v1201
        %1427 = vmatpush1.bf16.msra.mxu0 %v1200
        %1428 = vmatprep.mubr.bf16.mxu0 %v625
        %1429 = vmatmul.mubr.bf16.gmra.mrb[0].mxu0 %v624
        %v1430 = vpop.f32.mrb[0].mxu0
        %v1431 = vadd.f32 0.0, %v1430
        %v1432 = vpop.f32.mrb[0].mxu0
        %v1433 = vadd.f32 0.0, %v1432
        %v1434 = vpop.f32.mrb[0].mxu0
        %v1435 = vpop.f32.mrb[0].mxu0
        %1436 = vdwg.mxu0
        %1437 = vmatprep.subr.bf16.mxu0 %v1205
        %1438 = vmatpush1.bf16.msra.mxu0 %v1204
        %1439 = vmatprep.subr.bf16.mxu0 %v1209
        %1440 = vmatpush1.bf16.msra.mxu0 %v1208
        %1441 = vmatprep.subr.bf16.mxu0 %v1213
        %1442 = vmatpush1.bf16.msra.mxu0 %v1212
        %1443 = vmatprep.subr.bf16.mxu0 %v1217
        %1444 = vmatpush1.bf16.msra.mxu0 %v1216
        %1445 = vmatprep.subr.bf16.mxu0 %v1221
        %1446 = vmatpush1.bf16.msra.mxu0 %v1220
        %1447 = vmatprep.subr.bf16.mxu0 %v1225
        %1448 = vmatpush1.bf16.msra.mxu0 %v1224
        %1449 = vmatprep.subr.bf16.mxu0 %v1229
        %1450 = vmatpush1.bf16.msra.mxu0 %v1228
        %1451 = vmatprep.subr.bf16.mxu0 %v1233
        %1452 = vmatpush1.bf16.msra.mxu0 %v1232
        %1453 = vmatprep.subr.bf16.mxu0 %v1237
        %1454 = vmatpush1.bf16.msra.mxu0 %v1236
        %1455 = vmatprep.subr.bf16.mxu0 %v1241
        %1456 = vmatpush1.bf16.msra.mxu0 %v1240
        %1457 = vmatprep.subr.bf16.mxu0 %v1245
        %1458 = vmatpush1.bf16.msra.mxu0 %v1244
        %1459 = vmatprep.subr.bf16.mxu0 %v1249
        %1460 = vmatpush1.bf16.msra.mxu0 %v1248
        %1461 = vmatprep.subr.bf16.mxu0 %v1253
        %1462 = vmatpush1.bf16.msra.mxu0 %v1252
        %1463 = vmatprep.subr.bf16.mxu0 %v1257
        %1464 = vmatpush1.bf16.msra.mxu0 %v1256
        %1465 = vmatprep.subr.bf16.mxu0 %v1261
        %1466 = vmatpush1.bf16.msra.mxu0 %v1260
        %1467 = vmatprep.subr.bf16.mxu0 %v1265
        %1468 = vmatpush1.bf16.msra.mxu0 %v1264
        %1469 = vmatprep.mubr.bf16.mxu0 %v627
        %1470 = vmatmul.mubr.bf16.gmra.mrb[0].mxu0 %v626
        %v1471 = vpop.f32.mrb[0].mxu0
        %v1472 = vadd.f32 %v1431, %v1471
        %v1473 = vpop.f32.mrb[0].mxu0
        %v1474 = vadd.f32 %v1433, %v1473
        %v1475 = vpop.f32.mrb[0].mxu0
        %v1476 = vpop.f32.mrb[0].mxu0
        %1477 = vdwg.mxu0
        %1478 = vmatprep.subr.bf16.mxu0 %v1143
        %1479 = vmatpush1.bf16.msra.mxu0 %v1142
        %1480 = vmatprep.subr.bf16.mxu0 %v1147
        %1481 = vmatpush1.bf16.msra.mxu0 %v1146
        %1482 = vmatprep.subr.bf16.mxu0 %v1151
        %1483 = vmatpush1.bf16.msra.mxu0 %v1150
        %1484 = vmatprep.subr.bf16.mxu0 %v1155
        %1485 = vmatpush1.bf16.msra.mxu0 %v1154
        %1486 = vmatprep.subr.bf16.mxu0 %v1159
        %1487 = vmatpush1.bf16.msra.mxu0 %v1158
        %1488 = vmatprep.subr.bf16.mxu0 %v1163
        %1489 = vmatpush1.bf16.msra.mxu0 %v1162
        %1490 = vmatprep.subr.bf16.mxu0 %v1167
        %1491 = vmatpush1.bf16.msra.mxu0 %v1166
        %1492 = vmatprep.subr.bf16.mxu0 %v1171
        %1493 = vmatpush1.bf16.msra.mxu0 %v1170
        %1494 = vmatprep.subr.bf16.mxu0 %v1175
        %1495 = vmatpush1.bf16.msra.mxu0 %v1174
        %1496 = vmatprep.subr.bf16.mxu0 %v1179
        %1497 = vmatpush1.bf16.msra.mxu0 %v1178
        %1498 = vmatprep.subr.bf16.mxu0 %v1183
        %1499 = vmatpush1.bf16.msra.mxu0 %v1182
        %1500 = vmatprep.subr.bf16.mxu0 %v1187
        %1501 = vmatpush1.bf16.msra.mxu0 %v1186
        %1502 = vmatprep.subr.bf16.mxu0 %v1191
        %1503 = vmatpush1.bf16.msra.mxu0 %v1190
        %1504 = vmatprep.subr.bf16.mxu0 %v1195
        %1505 = vmatpush1.bf16.msra.mxu0 %v1194
        %1506 = vmatprep.subr.bf16.mxu0 %v1199
        %1507 = vmatpush1.bf16.msra.mxu0 %v1198
        %1508 = vmatprep.subr.bf16.mxu0 %v1203
        %1509 = vmatpush1.bf16.msra.mxu0 %v1202
        %1510 = vmatprep.mubr.bf16.mxu0 %v625
        %1511 = vmatmul.mubr.bf16.gmra.mrb[0].mxu0 %v624
        %v1512 = vpop.f32.mrb[0].mxu0
        %v1513 = vadd.f32 0.0, %v1512
        %v1514 = vpop.f32.mrb[0].mxu0
        %v1515 = vadd.f32 0.0, %v1514
        %v1516 = vpop.f32.mrb[0].mxu0
        %v1517 = vpop.f32.mrb[0].mxu0
        %1518 = vdwg.mxu0
        %1519 = vmatprep.subr.bf16.mxu0 %v1207
        %1520 = vmatpush1.bf16.msra.mxu0 %v1206
        %1521 = vmatprep.subr.bf16.mxu0 %v1211
        %1522 = vmatpush1.bf16.msra.mxu0 %v1210
        %1523 = vmatprep.subr.bf16.mxu0 %v1215
        %1524 = vmatpush1.bf16.msra.mxu0 %v1214
        %1525 = vmatprep.subr.bf16.mxu0 %v1219
        %1526 = vmatpush1.bf16.msra.mxu0 %v1218
        %1527 = vmatprep.subr.bf16.mxu0 %v1223
        %1528 = vmatpush1.bf16.msra.mxu0 %v1222
        %1529 = vmatprep.subr.bf16.mxu0 %v1227
        %1530 = vmatpush1.bf16.msra.mxu0 %v1226
        %1531 = vmatprep.subr.bf16.mxu0 %v1231
        %1532 = vmatpush1.bf16.msra.mxu0 %v1230
        %1533 = vmatprep.subr.bf16.mxu0 %v1235
        %1534 = vmatpush1.bf16.msra.mxu0 %v1234
        %1535 = vmatprep.subr.bf16.mxu0 %v1239
        %1536 = vmatpush1.bf16.msra.mxu0 %v1238
        %1537 = vmatprep.subr.bf16.mxu0 %v1243
        %1538 = vmatpush1.bf16.msra.mxu0 %v1242
        %1539 = vmatprep.subr.bf16.mxu0 %v1247
        %1540 = vmatpush1.bf16.msra.mxu0 %v1246
        %1541 = vmatprep.subr.bf16.mxu0 %v1251
        %1542 = vmatpush1.bf16.msra.mxu0 %v1250
        %1543 = vmatprep.subr.bf16.mxu0 %v1255
        %1544 = vmatpush1.bf16.msra.mxu0 %v1254
        %1545 = vmatprep.subr.bf16.mxu0 %v1259
        %1546 = vmatpush1.bf16.msra.mxu0 %v1258
        %1547 = vmatprep.subr.bf16.mxu0 %v1263
        %1548 = vmatpush1.bf16.msra.mxu0 %v1262
        %1549 = vmatprep.subr.bf16.mxu0 %v1267
        %1550 = vmatpush1.bf16.msra.mxu0 %v1266
        %1551 = vmatprep.mubr.bf16.mxu0 %v627
        %1552 = vmatmul.mubr.bf16.gmra.mrb[0].mxu0 %v626
        %v1553 = vpop.f32.mrb[0].mxu0
        %v1554 = vadd.f32 %v1513, %v1553
        %v1555 = vpop.f32.mrb[0].mxu0
        %v1556 = vadd.f32 %v1515, %v1555
        %v1557 = vpop.f32.mrb[0].mxu0
        %v1558 = vpop.f32.mrb[0].mxu0
        %1559 = vdwg.mxu0
        %v1564 = vcombine.low %v1472, %v1474
        %v1565 = vcombine.low %v1554, %v1556
        %v1567 = vunpack.c.l.s4 1983009808
        %v1568 = vunpack.c.0.s8 %v1567
        %v1569 = vlaneseq
        %v1570 = vshrl.u32 %v1569, 7
        %v1571 = vsub.s32 %v1568, %v1570
        %v1572 = vrot.slane %v1564, %v1571
        %v1574 = vunpack.c.l.s4 1983009808
        %v1575 = vunpack.c.0.s8 %v1574
        %v1576 = vlaneseq
        %v1577 = vshrl.u32 %v1576, 7
        %v1578 = vsub.s32 %v1575, %v1577
        %v1579 = vrot.slane %v1565, %v1578
        %v1580 = vcombine.low %v1572, %v1579
        %1582 = vst [vmem:[%s310] sm:$0xff] %v1580
        %vm1583 = vcmask 1041408
        %v1584 = vsel %vm1583, %v1472, 0.0
        %v1585 = vrot.slane %v1584, 4
        %v1586 = vadd.f32 %v1584, %v1585
        %v1587 = vrot.slane %v1586, 2
        %v1588 = vadd.f32 %v1586, %v1587
        %v1589 = vrot.slane %v1588, 1
        %v1590 = vadd.f32 %v1588, %v1589
        %v1591 = vsel %vm1583, %v1474, 0.0
        %v1592 = vrot.slane %v1591, 4
        %v1593 = vadd.f32 %v1591, %v1592
        %v1594 = vrot.slane %v1593, 2
        %v1595 = vadd.f32 %v1593, %v1594
        %v1596 = vrot.slane %v1595, 1
        %v1597 = vadd.f32 %v1595, %v1596
        %v1598 = vsel %vm1583, %v1554, 0.0
        %v1599 = vrot.slane %v1598, 4
        %v1600 = vadd.f32 %v1598, %v1599
        %v1601 = vrot.slane %v1600, 2
        %v1602 = vadd.f32 %v1600, %v1601
        %v1603 = vrot.slane %v1602, 1
        %v1604 = vadd.f32 %v1602, %v1603
        %v1605 = vsel %vm1583, %v1556, 0.0
        %v1606 = vrot.slane %v1605, 4
        %v1607 = vadd.f32 %v1605, %v1606
        %v1608 = vrot.slane %v1607, 2
        %v1609 = vadd.f32 %v1607, %v1608
        %v1610 = vrot.slane %v1609, 1
        %v1611 = vadd.f32 %v1609, %v1610
        %v1616 = vcombine.low %v1590, %v1597
        %v1617 = vcombine.low %v1604, %v1611
        %v1619 = vunpack.c.l.s4 1966171168
        %v1620 = vunpack.c.0.s8 %v1619
        %v1621 = vlaneseq
        %v1622 = vshrl.u32 %v1621, 7
        %v1623 = vsub.s32 %v1620, %v1622
        %v1624 = vrot.slane %v1616, %v1623
        %v1626 = vunpack.c.l.s4 1966171168
        %v1627 = vunpack.c.0.s8 %v1626
        %v1628 = vlaneseq
        %v1629 = vshrl.u32 %v1628, 7
        %v1630 = vsub.s32 %v1627, %v1629
        %v1631 = vrot.slane %v1617, %v1630
        %v1632 = vcombine.low %v1624, %v1631
        %v1634 = vunpack.c.l.s4 1966171168
        %v1635 = vunpack.c.0.s8 %v1634
        %v1636 = vlaneseq
        %v1637 = vshrl.u32 %v1636, 7
        %v1638 = vsub.s32 %v1635, %v1637
        %v1639 = vrot.slane %v1632, %v1638
        %v1641 = vlaneseq
        %vm1642 = vcmp.ge.s32.totalorder %v1641, 0
        %vm1643 = vcmp.lt.s32.totalorder %v1641, 512
        %vm1644 = vmand %vm1642, %vm1643
        %1645 = vst.msk [vmem:[%s315] sm:$0xf] %vm1644, %v1639
        %v1646 = vmul.f32 %v1472, %v1472
        %v1647 = vmul.f32 %v1474, %v1474
        %v1648 = vmul.f32 %v1554, %v1554
        %v1649 = vmul.f32 %v1556, %v1556
        %v1650 = vsel %vm1583, %v1646, 0.0
        %v1651 = vrot.slane %v1650, 4
        %v1652 = vadd.f32 %v1650, %v1651
        %v1653 = vrot.slane %v1652, 2
        %v1654 = vadd.f32 %v1652, %v1653
        %v1655 = vrot.slane %v1654, 1
        %v1656 = vadd.f32 %v1654, %v1655
        %v1657 = vsel %vm1583, %v1647, 0.0
        %v1658 = vrot.slane %v1657, 4
        %v1659 = vadd.f32 %v1657, %v1658
        %v1660 = vrot.slane %v1659, 2
        %v1661 = vadd.f32 %v1659, %v1660
        %v1662 = vrot.slane %v1661, 1
        %v1663 = vadd.f32 %v1661, %v1662
        %v1664 = vsel %vm1583, %v1648, 0.0
        %v1665 = vrot.slane %v1664, 4
        %v1666 = vadd.f32 %v1664, %v1665
        %v1667 = vrot.slane %v1666, 2
        %v1668 = vadd.f32 %v1666, %v1667
        %v1669 = vrot.slane %v1668, 1
        %v1670 = vadd.f32 %v1668, %v1669
        %v1671 = vsel %vm1583, %v1649, 0.0
        %v1672 = vrot.slane %v1671, 4
        %v1673 = vadd.f32 %v1671, %v1672
        %v1674 = vrot.slane %v1673, 2
        %v1675 = vadd.f32 %v1673, %v1674
        %v1676 = vrot.slane %v1675, 1
        %v1677 = vadd.f32 %v1675, %v1676
        %v1682 = vcombine.low %v1656, %v1663
        %v1683 = vcombine.low %v1670, %v1677
        %v1685 = vunpack.c.l.s4 1966171168
        %v1686 = vunpack.c.0.s8 %v1685
        %v1687 = vlaneseq
        %v1688 = vshrl.u32 %v1687, 7
        %v1689 = vsub.s32 %v1686, %v1688
        %v1690 = vrot.slane %v1682, %v1689
        %v1692 = vunpack.c.l.s4 1966171168
        %v1693 = vunpack.c.0.s8 %v1692
        %v1694 = vlaneseq
        %v1695 = vshrl.u32 %v1694, 7
        %v1696 = vsub.s32 %v1693, %v1695
        %v1697 = vrot.slane %v1683, %v1696
        %v1698 = vcombine.low %v1690, %v1697
        %v1700 = vunpack.c.l.s4 1966171168
        %v1701 = vunpack.c.0.s8 %v1700
        %v1702 = vlaneseq
        %v1703 = vshrl.u32 %v1702, 7
        %v1704 = vsub.s32 %v1701, %v1703
        %v1705 = vrot.slane %v1698, %v1704
        %1707 = vst.msk [vmem:[%s320] sm:$0xf] %vm1644, %v1705
        %s1708 = smul.u32 4, %s20
        %p1709 = scmp.lt.s32.totalorder %s1708, 15
        %s1710 = scalar_select %p1709, %s1708, 15
        %s1711 = smul.addr %s1710, 2
        %s1712 = scalar_lea.vmem %s4, %s1711
        %s1713 = smul.u32 4, %s20
        %p1714 = scmp.lt.s32.totalorder %s1713, 15
        %s1715 = scalar_select %p1714, %s1713, 15
        %s1716 = scalar_lea.vmem %s5, %s1715
        %s1717 = smul.u32 4, %s20
        %p1718 = scmp.lt.s32.totalorder %s1717, 15
        %s1719 = scalar_select %p1718, %s1717, 15
        %s1720 = scalar_lea.vmem %s6, %s1719
        // Predicated region
        $region49: #{decoder_forward.9} parent=35 // pred_check
          %p1721 = pneg %p127
        $region50: #{decoder_forward.9} parent=35 // pred_check_branch
          %1723 = sbr.rel (%p1721) target = $region52
        $region51: #{decoder_forward.9} parent=35 // pred_region
          %s1724 = smul.u32 4, %s20
        $region52: #{decoder_forward.9} parent=35 // pred_fallthru
          _
        // Predicated region
        $region53: #{decoder_forward.9} parent=35 // pred_check
          %p1725 = pneg %p153
        $region54: #{decoder_forward.9} parent=35 // pred_check_branch
          %1727 = sbr.rel (%p1725) target = $region56
        $region55: #{decoder_forward.9} parent=35 // pred_region
          %s1728 = smul.u32 4, %s20
        $region56: #{decoder_forward.9} parent=35 // pred_fallthru
          _
        // Predicated region
        $region57: #{decoder_forward.9} parent=35 // pred_check
          %p1729 = pneg %p179
        $region58: #{decoder_forward.9} parent=35 // pred_check_branch
          %1731 = sbr.rel (%p1729) target = $region60
        $region59: #{decoder_forward.9} parent=35 // pred_region
          %s1732 = smul.u32 4, %s20
        $region60: #{decoder_forward.9} parent=35 // pred_fallthru
          _
      $region36: #{decoder_forward.9} parent=5 // pred_fallthru
        _
      %p1733 = scmp.le.s32.totalorder 2, %s15
      // Predicated region
      $region61: #{decoder_forward.9} parent=5 // pred_check
        %p1734 = pneg %p1733
      $region62: #{decoder_forward.9} parent=5 // pred_check_branch
        %1736 = sbr.rel (%p1734) target = $region64
      $region63: #{decoder_forward.9} parent=5 // pred_region
        %s1737 = ssub.s32 %s15, 2
        // Predicated region
        $region65: #{decoder_forward.9} parent=63 // pred_check
          %p1738 = pneg %p133
        $region66: #{decoder_forward.9} parent=63 // pred_check_branch
          %1740 = sbr.rel (%p1738) target = $region68
        $region67: #{decoder_forward.9} parent=63 // pred_region
          %s1741 = smul.u32 4, %s21
          %p1742 = scmp.lt.s32.totalorder %s1741, 15
          %s1743 = scalar_select %p1742, %s1741, 15
          %s1744 = smul.addr %s1743, 2
          %s1745 = scalar_lea.vmem %s4, %s1744
        $region68: #{decoder_forward.9} parent=63 // pred_fallthru
          _
        // Predicated region
        $region69: #{decoder_forward.9} parent=63 // pred_check
          %p1746 = pneg %p159
        $region70: #{decoder_forward.9} parent=63 // pred_check_branch
          %1748 = sbr.rel (%p1746) target = $region72
        $region71: #{decoder_forward.9} parent=63 // pred_region
          %s1749 = smul.u32 4, %s21
          %p1750 = scmp.lt.s32.totalorder %s1749, 15
          %s1751 = scalar_select %p1750, %s1749, 15
          %s1752 = scalar_lea.vmem %s5, %s1751
        $region72: #{decoder_forward.9} parent=63 // pred_fallthru
          _
        // Predicated region
        $region73: #{decoder_forward.9} parent=63 // pred_check
          %p1753 = pneg %p185
        $region74: #{decoder_forward.9} parent=63 // pred_check_branch
          %1755 = sbr.rel (%p1753) target = $region76
        $region75: #{decoder_forward.9} parent=63 // pred_region
          %s1756 = smul.u32 4, %s21
          %p1757 = scmp.lt.s32.totalorder %s1756, 15
          %s1758 = scalar_select %p1757, %s1756, 15
          %s1759 = scalar_lea.vmem %s6, %s1758
        $region76: #{decoder_forward.9} parent=63 // pred_fallthru
          _
      $region64: #{decoder_forward.9} parent=5 // pred_fallthru
        _
    $region6: #{decoder_forward.9} parent=1 // loop_footer
      %s19 = sadd.s32 1, %s15
    $region7: #{decoder_forward.9} parent=1 // loop_footer_branch
      %14 = sbr.rel target = $region3
    $region8: #{decoder_forward.9} parent=1 // loop_exit
      _
    %1760 = vsyncpa [#allocation3], 1
    %s1761 = scalar_lea.sflag [#allocation3], 1
    %1762 = vsyncpa %s1761, 1
    %1763 = vsyncpa [#allocation5], 1

// kernel: decoder_forward.11
$region0: #{decoder_forward.11}
  #allocation0 [shape = 'u32[]', space=smem, size = 0x4, offset = 0x4, fixed_abs, tag = 'smem constant byte address 0x4 - core index']
  #allocation1 [shape = 'u32[144,128]{1,0:T(1,128)}', space=vmem, size = 0x12000, scoped, tag = 'internal scratch']
  %s0 = inlined_call_operand.vmem [shape: bf16[4,8,2048], index: 0, kind: input, shape index: {}]
  %s1 = inlined_call_operand.hbm [shape: bf16[4,2048,512], index: 1, kind: input, shape index: {}]
  %s2 = inlined_call_operand.vmem [shape: f32[4,8,512], index: 2, kind: output, shape index: {0}]
  %s3 = inlined_call_operand.vmem [shape: f32[4,1,1,512], index: 3, kind: output, shape index: {1}]
  %s4 = inlined_call_operand.vmem [shape: f32[4,1,1,512], index: 4, kind: output, shape index: {2}]
  %5 = xla_tuple %s2, %s3, %s4
  %s6 = sld [smem:[#allocation0]]
  $region73: #{decoder_forward.11} parent=0
    _
  %s8 = ssub.s32 1, %s6
  %s9 = scalar_select 0, %s8, %s6
  $region1: #{decoder_forward.11} parent=0
    #allocation2 [shape = 'u8[2097152]{0}', space=vmem, size = 0x200000, scoped, tag = 'input window, operand 1']
    #allocation3 [shape = 's32[2]{0}', space=sflag, size = 0x8, scoped, tag = 'scoped memory for decoder_forward.11']
    %10 = vsyncpa [#allocation3], 0
    %s11 = scalar_lea.sflag [#allocation3], 1
    %12 = vsyncpa %s11, 0
    loop: start=0, step=1, limit=10
    $region2: #{decoder_forward.11} parent=1 // loop_pre_header
      _
    $region3: #{decoder_forward.11} parent=1 // loop_header
      %s14 = sphi 0, %s18
      %p15 = scmp.ge.s32.totalorder %s14, 10
      %s21 = sphi 0, %s47
      %s22 = sphi 0, %s43
      %s23 = sphi 0, %s39
      %s24 = sphi 0, %s35
      %s25 = sphi 0, %s21
      %s26 = sphi 0, %s22
      %s27 = sphi 0, %s23
      %s28 = sphi 0, %s24
      %s29 = sphi 0, %s25
      %s30 = sphi 0, %s26
      %s31 = sphi 0, %s27
      %s32 = sphi 0, %s28
      %s54 = sphi 0, %s56
      %s57 = sphi 0, %s54
      %s58 = sphi 0, %s57
      %s74 = sphi 0, %s58
      %s84 = sphi 0, %s86
      %s87 = sphi 0, %s84
      %s88 = sphi 0, %s87
      %s104 = sphi 0, %s88
      %s114 = sphi 0, %s116
      %s117 = sphi 0, %s114
      %s118 = sphi 0, %s117
      %s134 = sphi 0, %s118
      %s144 = sphi 0, %s146
      %s147 = sphi 0, %s144
      %s148 = sphi 0, %s147
      %s164 = sphi 0, %s148
      %s174 = sphi 0, %s176
      %s177 = sphi 0, %s174
      %s178 = sphi 0, %s177
      %s194 = sphi 0, %s178
    $region4: #{decoder_forward.11} parent=1 // loop_header_branch
      %17 = sbr.rel (%p15) target = $region8
    $region5: #{decoder_forward.11} parent=1 // loop_body
      %s19 = ssub.s32 %s14, 1
      %s20 = ssub.s32 %s14, 2
      %s33 = sadd.s32 1, %s24
      %p34 = scmp.ge.s32.totalorder %s33, 2
      %s35 = scalar_select %p34, 0, %s33
      %s36 = sadd.s32 1, %s23
      %s37 = scalar_select %p34, %s36, %s23
      %p38 = scmp.ge.s32.totalorder %s37, 1
      %s39 = scalar_select %p38, 0, %s37
      %s40 = sadd.s32 1, %s22
      %s41 = scalar_select %p38, %s40, %s22
      %p42 = scmp.ge.s32.totalorder %s41, 1
      %s43 = scalar_select %p42, 0, %s41
      %s44 = sadd.s32 1, %s21
      %s45 = scalar_select %p42, %s44, %s21
      %p46 = scmp.ge.s32.totalorder %s45, 4
      %s47 = scalar_select %p46, 0, %s45
      %s48 = ssub.s32 %s21, %s47
      %s49 = ssub.s32 %s22, %s43
      %s50 = sor.u32 %s48, %s49
      %s51 = ssub.s32 %s24, %s35
      %s52 = sor.u32 %s50, %s51
      %p53 = scmp.eq.s32.totalorder %s52, 0
      %s55 = sadd.s32 %s54, 1
      %s56 = scalar_select %p53, %s54, %s55
      %p59 = pneg %p53
      %p60 = scmp.eq.s32.totalorder %s14, 7
      %p61 = por %p59, %p60
      %p62 = scmp.ne.s32.totalorder %s54, %s57
      %p63 = scmp.eq.s32.totalorder %s14, 0
      %p64 = por %p62, %p63
      %p65 = scmp.ne.s32.totalorder %s54, %s57
      %p66 = scmp.eq.s32.totalorder %s19, 7
      %p67 = por %p65, %p66
      %p68 = scmp.ne.s32.totalorder %s57, %s58
      %p69 = scmp.eq.s32.totalorder %s19, 0
      %p70 = por %p68, %p69
      %p71 = scmp.ne.s32.totalorder %s57, %s58
      %p72 = scmp.eq.s32.totalorder %s20, 7
      %p73 = por %p71, %p72
      %p75 = scmp.ne.s32.totalorder %s58, %s74
      %p76 = scmp.eq.s32.totalorder %s20, 0
      %p77 = por %p75, %p76
      %s78 = ssub.s32 %s21, %s47
      %s79 = ssub.s32 %s24, %s35
      %s80 = sor.u32 %s78, %s79
      %s81 = ssub.s32 %s23, %s39
      %s82 = sor.u32 %s80, %s81
      %p83 = scmp.eq.s32.totalorder %s82, 0
      %s85 = sadd.s32 %s84, 1
      %s86 = scalar_select %p83, %s84, %s85
      %p89 = pneg %p83
      %p90 = scmp.eq.s32.totalorder %s14, 7
      %p91 = por %p89, %p90
      %p92 = scmp.ne.s32.totalorder %s84, %s87
      %p93 = scmp.eq.s32.totalorder %s14, 0
      %p94 = por %p92, %p93
      %p95 = scmp.ne.s32.totalorder %s84, %s87
      %p96 = scmp.eq.s32.totalorder %s19, 7
      %p97 = por %p95, %p96
      %p98 = scmp.ne.s32.totalorder %s87, %s88
      %p99 = scmp.eq.s32.totalorder %s19, 0
      %p100 = por %p98, %p99
      %p101 = scmp.ne.s32.totalorder %s87, %s88
      %p102 = scmp.eq.s32.totalorder %s20, 7
      %p103 = por %p101, %p102
      %p105 = scmp.ne.s32.totalorder %s88, %s104
      %p106 = scmp.eq.s32.totalorder %s20, 0
      %p107 = por %p105, %p106
      %s108 = ssub.s32 %s21, %s47
      %s109 = ssub.s32 %s22, %s43
      %s110 = sor.u32 %s108, %s109
      %s111 = ssub.s32 %s23, %s39
      %s112 = sor.u32 %s110, %s111
      %p113 = scmp.eq.s32.totalorder %s112, 0
      %s115 = sadd.s32 %s114, 1
      %s116 = scalar_select %p113, %s114, %s115
      %p119 = pneg %p113
      %p120 = scmp.eq.s32.totalorder %s14, 7
      %p121 = por %p119, %p120
      %p122 = scmp.ne.s32.totalorder %s114, %s117
      %p123 = scmp.eq.s32.totalorder %s14, 0
      %p124 = por %p122, %p123
      %p125 = scmp.ne.s32.totalorder %s114, %s117
      %p126 = scmp.eq.s32.totalorder %s19, 7
      %p127 = por %p125, %p126
      %p128 = scmp.ne.s32.totalorder %s117, %s118
      %p129 = scmp.eq.s32.totalorder %s19, 0
      %p130 = por %p128, %p129
      %p131 = scmp.ne.s32.totalorder %s117, %s118
      %p132 = scmp.eq.s32.totalorder %s20, 7
      %p133 = por %p131, %p132
      %p135 = scmp.ne.s32.totalorder %s118, %s134
      %p136 = scmp.eq.s32.totalorder %s20, 0
      %p137 = por %p135, %p136
      %s138 = ssub.s32 %s21, %s47
      %s139 = ssub.s32 %s22, %s43
      %s140 = sor.u32 %s138, %s139
      %s141 = ssub.s32 %s23, %s39
      %s142 = sor.u32 %s140, %s141
      %p143 = scmp.eq.s32.totalorder %s142, 0
      %s145 = sadd.s32 %s144, 1
      %s146 = scalar_select %p143, %s144, %s145
      %p149 = pneg %p143
      %p150 = scmp.eq.s32.totalorder %s14, 7
      %p151 = por %p149, %p150
      %p152 = scmp.ne.s32.totalorder %s144, %s147
      %p153 = scmp.eq.s32.totalorder %s14, 0
      %p154 = por %p152, %p153
      %p155 = scmp.ne.s32.totalorder %s144, %s147
      %p156 = scmp.eq.s32.totalorder %s19, 7
      %p157 = por %p155, %p156
      %p158 = scmp.ne.s32.totalorder %s147, %s148
      %p159 = scmp.eq.s32.totalorder %s19, 0
      %p160 = por %p158, %p159
      %p161 = scmp.ne.s32.totalorder %s147, %s148
      %p162 = scmp.eq.s32.totalorder %s20, 7
      %p163 = por %p161, %p162
      %p165 = scmp.ne.s32.totalorder %s148, %s164
      %p166 = scmp.eq.s32.totalorder %s20, 0
      %p167 = por %p165, %p166
      %s168 = ssub.s32 %s21, %s47
      %s169 = ssub.s32 %s22, %s43
      %s170 = sor.u32 %s168, %s169
      %s171 = ssub.s32 %s23, %s39
      %s172 = sor.u32 %s170, %s171
      %p173 = scmp.eq.s32.totalorder %s172, 0
      %s175 = sadd.s32 %s174, 1
      %s176 = scalar_select %p173, %s174, %s175
      %p179 = pneg %p173
      %p180 = scmp.eq.s32.totalorder %s14, 7
      %p181 = por %p179, %p180
      %p182 = scmp.ne.s32.totalorder %s174, %s177
      %p183 = scmp.eq.s32.totalorder %s14, 0
      %p184 = por %p182, %p183
      %p185 = scmp.ne.s32.totalorder %s174, %s177
      %p186 = scmp.eq.s32.totalorder %s19, 7
      %p187 = por %p185, %p186
      %p188 = scmp.ne.s32.totalorder %s177, %s178
      %p189 = scmp.eq.s32.totalorder %s19, 0
      %p190 = por %p188, %p189
      %p191 = scmp.ne.s32.totalorder %s177, %s178
      %p192 = scmp.eq.s32.totalorder %s20, 7
      %p193 = por %p191, %p192
      %p195 = scmp.ne.s32.totalorder %s178, %s194
      %p196 = scmp.eq.s32.totalorder %s20, 0
      %p197 = por %p195, %p196
      %p198 = scmp.le.s32.totalorder 1, %s14
      %p199 = scmp.lt.s32.totalorder %s14, 9
      %p200 = pnand %p198, %p199
      %p201 = pneg %p200
      // Predicated region
      $region9: #{decoder_forward.11} parent=5 // pred_check
        _
      $region10: #{decoder_forward.11} parent=5 // pred_check_branch
        %203 = sbr.rel (%p200) target = $region12
      $region11: #{decoder_forward.11} parent=5 // pred_region
        %s204 = ssub.s32 %s14, 1
      $region12: #{decoder_forward.11} parent=5 // pred_fallthru
        _
      %p205 = scmp.lt.s32.totalorder %s14, 8
      // Predicated region
      $region13: #{decoder_forward.11} parent=5 // pred_check
        %p206 = pneg %p205
      $region14: #{decoder_forward.11} parent=5 // pred_check_branch
        %208 = sbr.rel (%p206) target = $region16
      $region15: #{decoder_forward.11} parent=5 // pred_region
        // Predicated region
        $region17: #{decoder_forward.11} parent=15 // pred_check
          %p209 = pneg %p64
        $region18: #{decoder_forward.11} parent=15 // pred_check_branch
          %211 = sbr.rel (%p209) target = $region20
        $region19: #{decoder_forward.11} parent=15 // pred_region
          %s212 = smul.u32 8, %s24
          %p213 = scmp.lt.s32.totalorder %s21, 3
          %s214 = scalar_select %p213, %s21, 3
          %p215 = scmp.lt.s32.totalorder %s22, 0
          %s216 = scalar_select %p215, %s22, 0
          %p217 = scmp.lt.s32.totalorder %s212, 15
          %s218 = scalar_select %p217, %s212, 15
          %s219 = smul.addr %s216, 16
          %s220 = sadd.s32 %s218, %s219
          %s221 = smul.addr %s214, 16
          %s222 = sadd.s32 %s220, %s221
          %s223 = smul.addr %s222, 4
          %s224 = scalar_lea.vmem %s0, %s223
          %s225 = smul.u32 8, %s24
        $region20: #{decoder_forward.11} parent=15 // pred_fallthru
          _
        // Predicated region
        $region21: #{decoder_forward.11} parent=15 // pred_check
          %p226 = pneg %p94
        $region22: #{decoder_forward.11} parent=15 // pred_check_branch
          %228 = sbr.rel (%p226) target = $region24
        $region23: #{decoder_forward.11} parent=15 // pred_region
          %s229 = sand.u32 %s84, 1
          %s230 = scalar_lea.sflag [#allocation3], %s229
          %s231 = sand.u32 %s84, 1
          %s232 = smul.addr %s231, 2048
          %s233 = scalar_lea.vmem [#allocation2], %s232
          %s234 = smul.u32 128, %s24
          %s235 = smul.u32 4, %s23
          %s237 = ssub.s32 32768, 32768
          %238 = vsyncadd %s230, %s237
          %s239 = smul.addr %s234, 4
          %s240 = sadd.s32 %s235, %s239
          %s241 = smul.addr %s21, 1024
          %s242 = sadd.s32 %s240, %s241
          %s243 = smul.addr %s242, 64
          %s244 = scalar_lea.hbm %s1, %s243
          %s245 = sshll.u32 %s233, 4
          %s246 = int_to_ptr.vmem [resolvable:$true] %s245
          %251 = dma.hbm_to_vmem [thread:$0]  %s244, 32768, %s246, %s230, 256, 256, 16
        $region24: #{decoder_forward.11} parent=15 // pred_fallthru
          _
      $region16: #{decoder_forward.11} parent=5 // pred_fallthru
        _
      %p252 = scmp.le.s32.totalorder 1, %s14
      %p253 = scmp.lt.s32.totalorder %s14, 9
      %p254 = pnand %p252, %p253
      %p255 = pneg %p254
      // Predicated region
      $region25: #{decoder_forward.11} parent=5 // pred_check
        _
      $region26: #{decoder_forward.11} parent=5 // pred_check_branch
        %257 = sbr.rel (%p254) target = $region28
      $region27: #{decoder_forward.11} parent=5 // pred_region
        %s258 = ssub.s32 %s14, 1
        %s259 = sand.u32 %s87, 1
        %s260 = scalar_lea.sflag [#allocation3], %s259
        %s261 = sand.u32 %s87, 1
        %s262 = smul.addr %s261, 2048
        %s263 = scalar_lea.vmem [#allocation2], %s262
        // Predicated region
        $region29: #{decoder_forward.11} parent=27 // pred_check
          %p264 = pneg %p100
        $region30: #{decoder_forward.11} parent=27 // pred_check_branch
          %266 = sbr.rel (%p264) target = $region32
        $region31: #{decoder_forward.11} parent=27 // pred_region
          %267 = dma.done %s260, 32768
        $region32: #{decoder_forward.11} parent=27 // pred_fallthru
          _
        %s268 = smul.u32 8, %s28
        %p269 = scmp.lt.s32.totalorder %s25, 3
        %s270 = scalar_select %p269, %s25, 3
        %p271 = scmp.lt.s32.totalorder %s26, 0
        %s272 = scalar_select %p271, %s26, 0
        %p273 = scmp.lt.s32.totalorder %s268, 15
        %s274 = scalar_select %p273, %s268, 15
        %s275 = smul.addr %s272, 16
        %s276 = sadd.s32 %s274, %s275
        %s277 = smul.addr %s270, 16
        %s278 = sadd.s32 %s276, %s277
        %s279 = smul.addr %s278, 4
        %s280 = scalar_lea.vmem %s0, %s279
        %p281 = pneg %p70
        %p282 = pneg %p67
        %s283 = sand.u32 %s87, 1
        %s284 = scalar_lea.sflag [#allocation3], %s283
        %s285 = sand.u32 %s87, 1
        %s286 = smul.addr %s285, 2048
        %s287 = scalar_lea.vmem [#allocation2], %s286
        %p288 = pneg %p100
        %p289 = pneg %p97
        %p290 = pneg %p130
        %p291 = pneg %p127
        %s292 = smul.u32 4, %s27
        %p293 = scmp.lt.s32.totalorder %s25, 3
        %s294 = scalar_select %p293, %s25, 3
        %p295 = scmp.lt.s32.totalorder %s26, 0
        %s296 = scalar_select %p295, %s26, 0
        %p297 = scmp.lt.s32.totalorder %s292, 3
        %s298 = scalar_select %p297, %s292, 3
        %s299 = smul.addr %s296, 4
        %s300 = sadd.s32 %s298, %s299
        %s301 = smul.addr %s294, 4
        %s302 = sadd.s32 %s300, %s301
        %s303 = smul.addr %s302, 8
        %s304 = scalar_lea.vmem %s2, %s303
        %p305 = pneg %p160
        %p306 = pneg %p157
        %s307 = smul.u32 4, %s27
        %p308 = scmp.lt.s32.totalorder %s25, 3
        %s309 = scalar_select %p308, %s25, 3
        %p310 = scmp.lt.s32.totalorder %s26, 0
        %s311 = scalar_select %p310, %s26, 0
        %p312 = scmp.lt.s32.totalorder %s307, 3
        %s313 = scalar_select %p312, %s307, 3
        %s314 = smul.addr %s311, 4
        %s315 = sadd.s32 %s313, %s314
        %s316 = smul.addr %s309, 4
        %s317 = sadd.s32 %s315, %s316
        %s318 = scalar_lea.vmem %s3, %s317
        %p319 = pneg %p190
        %p320 = pneg %p187
        %s321 = smul.u32 4, %s27
        %p322 = scmp.lt.s32.totalorder %s25, 3
        %s323 = scalar_select %p322, %s25, 3
        %p324 = scmp.lt.s32.totalorder %s26, 0
        %s325 = scalar_select %p324, %s26, 0
        %p326 = scmp.lt.s32.totalorder %s321, 3
        %s327 = scalar_select %p326, %s321, 3
        %s328 = smul.addr %s325, 4
        %s329 = sadd.s32 %s327, %s328
        %s330 = smul.addr %s323, 4
        %s331 = sadd.s32 %s329, %s330
        %s332 = scalar_lea.vmem %s4, %s331
        %s333 = smul.u32 8, %s28
        %p334 = scmp.lt.s32.totalorder %s25, 3
        %s335 = scalar_select %p334, %s25, 3
        %p336 = scmp.lt.s32.totalorder %s26, 0
        %s337 = scalar_select %p336, %s26, 0
        %p338 = scmp.lt.s32.totalorder %s333, 15
        %s339 = scalar_select %p338, %s333, 15
        %s340 = smul.addr %s337, 16
        %s341 = sadd.s32 %s339, %s340
        %s342 = smul.addr %s335, 16
        %s343 = sadd.s32 %s341, %s342
        %s344 = smul.addr %s343, 4
        %s345 = scalar_lea.vmem %s0, %s344
        %s346 = smul.u32 8, %s28
        %s347 = smul.u32 128, %s28
        %s348 = smul.u32 4, %s27
        %s349 = smul.u32 4, %s27
        %p350 = scmp.lt.s32.totalorder %s25, 3
        %s351 = scalar_select %p350, %s25, 3
        %p352 = scmp.lt.s32.totalorder %s26, 0
        %s353 = scalar_select %p352, %s26, 0
        %p354 = scmp.lt.s32.totalorder %s349, 3
        %s355 = scalar_select %p354, %s349, 3
        %s356 = smul.addr %s353, 4
        %s357 = sadd.s32 %s355, %s356
        %s358 = smul.addr %s351, 4
        %s359 = sadd.s32 %s357, %s358
        %s360 = smul.addr %s359, 8
        %s361 = scalar_lea.vmem %s2, %s360
        %s362 = smul.u32 4, %s27
        %s363 = smul.u32 4, %s27
        %p364 = scmp.lt.s32.totalorder %s25, 3
        %s365 = scalar_select %p364, %s25, 3
        %p366 = scmp.lt.s32.totalorder %s26, 0
        %s367 = scalar_select %p366, %s26, 0
        %p368 = scmp.lt.s32.totalorder %s363, 3
        %s369 = scalar_select %p368, %s363, 3
        %s370 = smul.addr %s367, 4
        %s371 = sadd.s32 %s369, %s370
        %s372 = smul.addr %s365, 4
        %s373 = sadd.s32 %s371, %s372
        %s374 = scalar_lea.vmem %s3, %s373
        %s375 = smul.u32 4, %s27
        %s376 = smul.u32 4, %s27
        %p377 = scmp.lt.s32.totalorder %s25, 3
        %s378 = scalar_select %p377, %s25, 3
        %p379 = scmp.lt.s32.totalorder %s26, 0
        %s380 = scalar_select %p379, %s26, 0
        %p381 = scmp.lt.s32.totalorder %s376, 3
        %s382 = scalar_select %p381, %s376, 3
        %s383 = smul.addr %s380, 4
        %s384 = sadd.s32 %s382, %s383
        %s385 = smul.addr %s378, 4
        %s386 = sadd.s32 %s384, %s385
        %s387 = scalar_lea.vmem %s4, %s386
        %s388 = smul.u32 4, %s27
        %v389 = vld [vmem:[%s345] sm:$0xff]
        %v390 = vld [vmem:[%s345 + $0x8] sm:$0xff]
        %v391 = vld [vmem:[%s345 + $0x10] sm:$0xff]
        %v392 = vld [vmem:[%s345 + $0x18] sm:$0xff]
        %v393 = vld [vmem:[%s263] sm:$0xff]
        %v394 = vld [vmem:[%s263 + $0x8] sm:$0xff]
        %v395 = vld [vmem:[%s263 + $0x10] sm:$0xff]
        %v396 = vld [vmem:[%s263 + $0x18] sm:$0xff]
        %v397 = vld [vmem:[%s263 + $0x20] sm:$0xff]
        %v398 = vld [vmem:[%s263 + $0x28] sm:$0xff]
        %v399 = vld [vmem:[%s263 + $0x30] sm:$0xff]
        %v400 = vld [vmem:[%s263 + $0x38] sm:$0xff]
        %v401 = vld [vmem:[%s263 + $0x40] sm:$0xff]
        %v402 = vld [vmem:[%s263 + $0x48] sm:$0xff]
        %v403 = vld [vmem:[%s263 + $0x50] sm:$0xff]
        %v404 = vld [vmem:[%s263 + $0x58] sm:$0xff]
        %v405 = vld [vmem:[%s263 + $0x60] sm:$0xff]
        %v406 = vld [vmem:[%s263 + $0x68] sm:$0xff]
        %v407 = vld [vmem:[%s263 + $0x70] sm:$0xff]
        %v408 = vld [vmem:[%s263 + $0x78] sm:$0xff]
        %v409 = vld [vmem:[%s263 + $0x80] sm:$0xff]
        %v410 = vld [vmem:[%s263 + $0x88] sm:$0xff]
        %v411 = vld [vmem:[%s263 + $0x90] sm:$0xff]
        %v412 = vld [vmem:[%s263 + $0x98] sm:$0xff]
        %v413 = vld [vmem:[%s263 + $0xa0] sm:$0xff]
        %v414 = vld [vmem:[%s263 + $0xa8] sm:$0xff]
        %v415 = vld [vmem:[%s263 + $0xb0] sm:$0xff]
        %v416 = vld [vmem:[%s263 + $0xb8] sm:$0xff]
        %v417 = vld [vmem:[%s263 + $0xc0] sm:$0xff]
        %v418 = vld [vmem:[%s263 + $0xc8] sm:$0xff]
        %v419 = vld [vmem:[%s263 + $0xd0] sm:$0xff]
        %v420 = vld [vmem:[%s263 + $0xd8] sm:$0xff]
        %v421 = vld [vmem:[%s263 + $0xe0] sm:$0xff]
        %v422 = vld [vmem:[%s263 + $0xe8] sm:$0xff]
        %v423 = vld [vmem:[%s263 + $0xf0] sm:$0xff]
        %v424 = vld [vmem:[%s263 + $0xf8] sm:$0xff]
        %v425 = vld [vmem:[%s263 + $0x100] sm:$0xff]
        %v426 = vld [vmem:[%s263 + $0x108] sm:$0xff]
        %v427 = vld [vmem:[%s263 + $0x110] sm:$0xff]
        %v428 = vld [vmem:[%s263 + $0x118] sm:$0xff]
        %v429 = vld [vmem:[%s263 + $0x120] sm:$0xff]
        %v430 = vld [vmem:[%s263 + $0x128] sm:$0xff]
        %v431 = vld [vmem:[%s263 + $0x130] sm:$0xff]
        %v432 = vld [vmem:[%s263 + $0x138] sm:$0xff]
        %v433 = vld [vmem:[%s263 + $0x140] sm:$0xff]
        %v434 = vld [vmem:[%s263 + $0x148] sm:$0xff]
        %v435 = vld [vmem:[%s263 + $0x150] sm:$0xff]
        %v436 = vld [vmem:[%s263 + $0x158] sm:$0xff]
        %v437 = vld [vmem:[%s263 + $0x160] sm:$0xff]
        %v438 = vld [vmem:[%s263 + $0x168] sm:$0xff]
        %v439 = vld [vmem:[%s263 + $0x170] sm:$0xff]
        %v440 = vld [vmem:[%s263 + $0x178] sm:$0xff]
        %v441 = vld [vmem:[%s263 + $0x180] sm:$0xff]
        %v442 = vld [vmem:[%s263 + $0x188] sm:$0xff]
        %v443 = vld [vmem:[%s263 + $0x190] sm:$0xff]
        %v444 = vld [vmem:[%s263 + $0x198] sm:$0xff]
        %v445 = vld [vmem:[%s263 + $0x1a0] sm:$0xff]
        %v446 = vld [vmem:[%s263 + $0x1a8] sm:$0xff]
        %v447 = vld [vmem:[%s263 + $0x1b0] sm:$0xff]
        %v448 = vld [vmem:[%s263 + $0x1b8] sm:$0xff]
        %v449 = vld [vmem:[%s263 + $0x1c0] sm:$0xff]
        %v450 = vld [vmem:[%s263 + $0x1c8] sm:$0xff]
        %v451 = vld [vmem:[%s263 + $0x1d0] sm:$0xff]
        %v452 = vld [vmem:[%s263 + $0x1d8] sm:$0xff]
        %v453 = vld [vmem:[%s263 + $0x1e0] sm:$0xff]
        %v454 = vld [vmem:[%s263 + $0x1e8] sm:$0xff]
        %v455 = vld [vmem:[%s263 + $0x1f0] sm:$0xff]
        %v456 = vld [vmem:[%s263 + $0x1f8] sm:$0xff]
        %v457 = vld [vmem:[%s263 + $0x200] sm:$0xff]
        %v458 = vld [vmem:[%s263 + $0x208] sm:$0xff]
        %v459 = vld [vmem:[%s263 + $0x210] sm:$0xff]
        %v460 = vld [vmem:[%s263 + $0x218] sm:$0xff]
        %v461 = vld [vmem:[%s263 + $0x220] sm:$0xff]
        %v462 = vld [vmem:[%s263 + $0x228] sm:$0xff]
        %v463 = vld [vmem:[%s263 + $0x230] sm:$0xff]
        %v464 = vld [vmem:[%s263 + $0x238] sm:$0xff]
        %v465 = vld [vmem:[%s263 + $0x240] sm:$0xff]
        %v466 = vld [vmem:[%s263 + $0x248] sm:$0xff]
        %v467 = vld [vmem:[%s263 + $0x250] sm:$0xff]
        %v468 = vld [vmem:[%s263 + $0x258] sm:$0xff]
        %v469 = vld [vmem:[%s263 + $0x260] sm:$0xff]
        %v470 = vld [vmem:[%s263 + $0x268] sm:$0xff]
        %v471 = vld [vmem:[%s263 + $0x270] sm:$0xff]
        %v472 = vld [vmem:[%s263 + $0x278] sm:$0xff]
        %v473 = vld [vmem:[%s263 + $0x280] sm:$0xff]
        %v474 = vld [vmem:[%s263 + $0x288] sm:$0xff]
        %v475 = vld [vmem:[%s263 + $0x290] sm:$0xff]
        %v476 = vld [vmem:[%s263 + $0x298] sm:$0xff]
        %v477 = vld [vmem:[%s263 + $0x2a0] sm:$0xff]
        %v478 = vld [vmem:[%s263 + $0x2a8] sm:$0xff]
        %v479 = vld [vmem:[%s263 + $0x2b0] sm:$0xff]
        %v480 = vld [vmem:[%s263 + $0x2b8] sm:$0xff]
        %v481 = vld [vmem:[%s263 + $0x2c0] sm:$0xff]
        %v482 = vld [vmem:[%s263 + $0x2c8] sm:$0xff]
        %v483 = vld [vmem:[%s263 + $0x2d0] sm:$0xff]
        %v484 = vld [vmem:[%s263 + $0x2d8] sm:$0xff]
        %v485 = vld [vmem:[%s263 + $0x2e0] sm:$0xff]
        %v486 = vld [vmem:[%s263 + $0x2e8] sm:$0xff]
        %v487 = vld [vmem:[%s263 + $0x2f0] sm:$0xff]
        %v488 = vld [vmem:[%s263 + $0x2f8] sm:$0xff]
        %v489 = vld [vmem:[%s263 + $0x300] sm:$0xff]
        %v490 = vld [vmem:[%s263 + $0x308] sm:$0xff]
        %v491 = vld [vmem:[%s263 + $0x310] sm:$0xff]
        %v492 = vld [vmem:[%s263 + $0x318] sm:$0xff]
        %v493 = vld [vmem:[%s263 + $0x320] sm:$0xff]
        %v494 = vld [vmem:[%s263 + $0x328] sm:$0xff]
        %v495 = vld [vmem:[%s263 + $0x330] sm:$0xff]
        %v496 = vld [vmem:[%s263 + $0x338] sm:$0xff]
        %v497 = vld [vmem:[%s263 + $0x340] sm:$0xff]
        %v498 = vld [vmem:[%s263 + $0x348] sm:$0xff]
        %v499 = vld [vmem:[%s263 + $0x350] sm:$0xff]
        %v500 = vld [vmem:[%s263 + $0x358] sm:$0xff]
        %v501 = vld [vmem:[%s263 + $0x360] sm:$0xff]
        %v502 = vld [vmem:[%s263 + $0x368] sm:$0xff]
        %v503 = vld [vmem:[%s263 + $0x370] sm:$0xff]
        %v504 = vld [vmem:[%s263 + $0x378] sm:$0xff]
        %v505 = vld [vmem:[%s263 + $0x380] sm:$0xff]
        %v506 = vld [vmem:[%s263 + $0x388] sm:$0xff]
        %v507 = vld [vmem:[%s263 + $0x390] sm:$0xff]
        %v508 = vld [vmem:[%s263 + $0x398] sm:$0xff]
        %v509 = vld [vmem:[%s263 + $0x3a0] sm:$0xff]
        %v510 = vld [vmem:[%s263 + $0x3a8] sm:$0xff]
        %v511 = vld [vmem:[%s263 + $0x3b0] sm:$0xff]
        %v512 = vld [vmem:[%s263 + $0x3b8] sm:$0xff]
        %v513 = vld [vmem:[%s263 + $0x3c0] sm:$0xff]
        %v514 = vld [vmem:[%s263 + $0x3c8] sm:$0xff]
        %v515 = vld [vmem:[%s263 + $0x3d0] sm:$0xff]
        %v516 = vld [vmem:[%s263 + $0x3d8] sm:$0xff]
        %v517 = vld [vmem:[%s263 + $0x3e0] sm:$0xff]
        %v518 = vld [vmem:[%s263 + $0x3e8] sm:$0xff]
        %v519 = vld [vmem:[%s263 + $0x3f0] sm:$0xff]
        %v520 = vld [vmem:[%s263 + $0x3f8] sm:$0xff]
        %v521 = vld [vmem:[%s263 + $0x400] sm:$0xff]
        %v522 = vld [vmem:[%s263 + $0x408] sm:$0xff]
        %v523 = vld [vmem:[%s263 + $0x410] sm:$0xff]
        %v524 = vld [vmem:[%s263 + $0x418] sm:$0xff]
        %v525 = vld [vmem:[%s263 + $0x420] sm:$0xff]
        %v526 = vld [vmem:[%s263 + $0x428] sm:$0xff]
        %v527 = vld [vmem:[%s263 + $0x430] sm:$0xff]
        %v528 = vld [vmem:[%s263 + $0x438] sm:$0xff]
        %v529 = vld [vmem:[%s263 + $0x440] sm:$0xff]
        %v530 = vld [vmem:[%s263 + $0x448] sm:$0xff]
        %v531 = vld [vmem:[%s263 + $0x450] sm:$0xff]
        %v532 = vld [vmem:[%s263 + $0x458] sm:$0xff]
        %v533 = vld [vmem:[%s263 + $0x460] sm:$0xff]
        %v534 = vld [vmem:[%s263 + $0x468] sm:$0xff]
        %v535 = vld [vmem:[%s263 + $0x470] sm:$0xff]
        %v536 = vld [vmem:[%s263 + $0x478] sm:$0xff]
        %v537 = vld [vmem:[%s263 + $0x480] sm:$0xff]
        %v538 = vld [vmem:[%s263 + $0x488] sm:$0xff]
        %v539 = vld [vmem:[%s263 + $0x490] sm:$0xff]
        %v540 = vld [vmem:[%s263 + $0x498] sm:$0xff]
        %v541 = vld [vmem:[%s263 + $0x4a0] sm:$0xff]
        %v542 = vld [vmem:[%s263 + $0x4a8] sm:$0xff]
        %v543 = vld [vmem:[%s263 + $0x4b0] sm:$0xff]
        %v544 = vld [vmem:[%s263 + $0x4b8] sm:$0xff]
        %v545 = vld [vmem:[%s263 + $0x4c0] sm:$0xff]
        %v546 = vld [vmem:[%s263 + $0x4c8] sm:$0xff]
        %v547 = vld [vmem:[%s263 + $0x4d0] sm:$0xff]
        %v548 = vld [vmem:[%s263 + $0x4d8] sm:$0xff]
        %v549 = vld [vmem:[%s263 + $0x4e0] sm:$0xff]
        %v550 = vld [vmem:[%s263 + $0x4e8] sm:$0xff]
        %v551 = vld [vmem:[%s263 + $0x4f0] sm:$0xff]
        %v552 = vld [vmem:[%s263 + $0x4f8] sm:$0xff]
        %v553 = vld [vmem:[%s263 + $0x500] sm:$0xff]
        %v554 = vld [vmem:[%s263 + $0x508] sm:$0xff]
        %v555 = vld [vmem:[%s263 + $0x510] sm:$0xff]
        %v556 = vld [vmem:[%s263 + $0x518] sm:$0xff]
        %v557 = vld [vmem:[%s263 + $0x520] sm:$0xff]
        %v558 = vld [vmem:[%s263 + $0x528] sm:$0xff]
        %v559 = vld [vmem:[%s263 + $0x530] sm:$0xff]
        %v560 = vld [vmem:[%s263 + $0x538] sm:$0xff]
        %v561 = vld [vmem:[%s263 + $0x540] sm:$0xff]
        %v562 = vld [vmem:[%s263 + $0x548] sm:$0xff]
        %v563 = vld [vmem:[%s263 + $0x550] sm:$0xff]
        %v564 = vld [vmem:[%s263 + $0x558] sm:$0xff]
        %v565 = vld [vmem:[%s263 + $0x560] sm:$0xff]
        %v566 = vld [vmem:[%s263 + $0x568] sm:$0xff]
        %v567 = vld [vmem:[%s263 + $0x570] sm:$0xff]
        %v568 = vld [vmem:[%s263 + $0x578] sm:$0xff]
        %v569 = vld [vmem:[%s263 + $0x580] sm:$0xff]
        %v570 = vld [vmem:[%s263 + $0x588] sm:$0xff]
        %v571 = vld [vmem:[%s263 + $0x590] sm:$0xff]
        %v572 = vld [vmem:[%s263 + $0x598] sm:$0xff]
        %v573 = vld [vmem:[%s263 + $0x5a0] sm:$0xff]
        %v574 = vld [vmem:[%s263 + $0x5a8] sm:$0xff]
        %v575 = vld [vmem:[%s263 + $0x5b0] sm:$0xff]
        %v576 = vld [vmem:[%s263 + $0x5b8] sm:$0xff]
        %v577 = vld [vmem:[%s263 + $0x5c0] sm:$0xff]
        %v578 = vld [vmem:[%s263 + $0x5c8] sm:$0xff]
        %v579 = vld [vmem:[%s263 + $0x5d0] sm:$0xff]
        %v580 = vld [vmem:[%s263 + $0x5d8] sm:$0xff]
        %v581 = vld [vmem:[%s263 + $0x5e0] sm:$0xff]
        %v582 = vld [vmem:[%s263 + $0x5e8] sm:$0xff]
        %v583 = vld [vmem:[%s263 + $0x5f0] sm:$0xff]
        %v584 = vld [vmem:[%s263 + $0x5f8] sm:$0xff]
        %v585 = vld [vmem:[%s263 + $0x600] sm:$0xff]
        %v586 = vld [vmem:[%s263 + $0x608] sm:$0xff]
        %v587 = vld [vmem:[%s263 + $0x610] sm:$0xff]
        %v588 = vld [vmem:[%s263 + $0x618] sm:$0xff]
        %v589 = vld [vmem:[%s263 + $0x620] sm:$0xff]
        %v590 = vld [vmem:[%s263 + $0x628] sm:$0xff]
        %v591 = vld [vmem:[%s263 + $0x630] sm:$0xff]
        %v592 = vld [vmem:[%s263 + $0x638] sm:$0xff]
        %v593 = vld [vmem:[%s263 + $0x640] sm:$0xff]
        %v594 = vld [vmem:[%s263 + $0x648] sm:$0xff]
        %v595 = vld [vmem:[%s263 + $0x650] sm:$0xff]
        %v596 = vld [vmem:[%s263 + $0x658] sm:$0xff]
        %v597 = vld [vmem:[%s263 + $0x660] sm:$0xff]
        %v598 = vld [vmem:[%s263 + $0x668] sm:$0xff]
        %v599 = vld [vmem:[%s263 + $0x670] sm:$0xff]
        %v600 = vld [vmem:[%s263 + $0x678] sm:$0xff]
        %v601 = vld [vmem:[%s263 + $0x680] sm:$0xff]
        %v602 = vld [vmem:[%s263 + $0x688] sm:$0xff]
        %v603 = vld [vmem:[%s263 + $0x690] sm:$0xff]
        %v604 = vld [vmem:[%s263 + $0x698] sm:$0xff]
        %v605 = vld [vmem:[%s263 + $0x6a0] sm:$0xff]
        %v606 = vld [vmem:[%s263 + $0x6a8] sm:$0xff]
        %v607 = vld [vmem:[%s263 + $0x6b0] sm:$0xff]
        %v608 = vld [vmem:[%s263 + $0x6b8] sm:$0xff]
        %v609 = vld [vmem:[%s263 + $0x6c0] sm:$0xff]
        %v610 = vld [vmem:[%s263 + $0x6c8] sm:$0xff]
        %v611 = vld [vmem:[%s263 + $0x6d0] sm:$0xff]
        %v612 = vld [vmem:[%s263 + $0x6d8] sm:$0xff]
        %v613 = vld [vmem:[%s263 + $0x6e0] sm:$0xff]
        %v614 = vld [vmem:[%s263 + $0x6e8] sm:$0xff]
        %v615 = vld [vmem:[%s263 + $0x6f0] sm:$0xff]
        %v616 = vld [vmem:[%s263 + $0x6f8] sm:$0xff]
        %v617 = vld [vmem:[%s263 + $0x700] sm:$0xff]
        %v618 = vld [vmem:[%s263 + $0x708] sm:$0xff]
        %v619 = vld [vmem:[%s263 + $0x710] sm:$0xff]
        %v620 = vld [vmem:[%s263 + $0x718] sm:$0xff]
        %v621 = vld [vmem:[%s263 + $0x720] sm:$0xff]
        %v622 = vld [vmem:[%s263 + $0x728] sm:$0xff]
        %v623 = vld [vmem:[%s263 + $0x730] sm:$0xff]
        %v624 = vld [vmem:[%s263 + $0x738] sm:$0xff]
        %v625 = vld [vmem:[%s263 + $0x740] sm:$0xff]
        %v626 = vld [vmem:[%s263 + $0x748] sm:$0xff]
        %v627 = vld [vmem:[%s263 + $0x750] sm:$0xff]
        %v628 = vld [vmem:[%s263 + $0x758] sm:$0xff]
        %v629 = vld [vmem:[%s263 + $0x760] sm:$0xff]
        %v630 = vld [vmem:[%s263 + $0x768] sm:$0xff]
        %v631 = vld [vmem:[%s263 + $0x770] sm:$0xff]
        %v632 = vld [vmem:[%s263 + $0x778] sm:$0xff]
        %v633 = vld [vmem:[%s263 + $0x780] sm:$0xff]
        %v634 = vld [vmem:[%s263 + $0x788] sm:$0xff]
        %v635 = vld [vmem:[%s263 + $0x790] sm:$0xff]
        %v636 = vld [vmem:[%s263 + $0x798] sm:$0xff]
        %v637 = vld [vmem:[%s263 + $0x7a0] sm:$0xff]
        %v638 = vld [vmem:[%s263 + $0x7a8] sm:$0xff]
        %v639 = vld [vmem:[%s263 + $0x7b0] sm:$0xff]
        %v640 = vld [vmem:[%s263 + $0x7b8] sm:$0xff]
        %v641 = vld [vmem:[%s263 + $0x7c0] sm:$0xff]
        %v642 = vld [vmem:[%s263 + $0x7c8] sm:$0xff]
        %v643 = vld [vmem:[%s263 + $0x7d0] sm:$0xff]
        %v644 = vld [vmem:[%s263 + $0x7d8] sm:$0xff]
        %v645 = vld [vmem:[%s263 + $0x7e0] sm:$0xff]
        %v646 = vld [vmem:[%s263 + $0x7e8] sm:$0xff]
        %v647 = vld [vmem:[%s263 + $0x7f0] sm:$0xff]
        %v648 = vld [vmem:[%s263 + $0x7f8] sm:$0xff]
        %v653 = vunpack.c.l.b16 %v389
        %v654 = vunpack.c.h.b16 %v389
        %v655 = vunpack.c.l.b16 %v390
        %v656 = vunpack.c.h.b16 %v390
        %v657 = vunpack.c.l.b16 %v391
        %v658 = vunpack.c.h.b16 %v391
        %v659 = vunpack.c.l.b16 %v392
        %v660 = vunpack.c.h.b16 %v392
        %v661 = vpack.c.b16 %v653, %v653
        %v662 = vpack.c.b16 %v654, %v654
        %v663 = vpack.c.b16 %v655, %v655
        %v664 = vpack.c.b16 %v656, %v656
        %v665 = vpack.c.b16 %v657, %v657
        %v666 = vpack.c.b16 %v658, %v658
        %v667 = vpack.c.b16 %v659, %v659
        %v668 = vpack.c.b16 %v660, %v660
        %v933 = vunpack.c.l.b16 %v393
        %v934 = vunpack.c.h.b16 %v393
        %v935 = vunpack.c.l.b16 %v394
        %v936 = vunpack.c.h.b16 %v394
        %v937 = vunpack.c.l.b16 %v395
        %v938 = vunpack.c.h.b16 %v395
        %v939 = vunpack.c.l.b16 %v396
        %v940 = vunpack.c.h.b16 %v396
        %v941 = vunpack.c.l.b16 %v397
        %v942 = vunpack.c.h.b16 %v397
        %v943 = vunpack.c.l.b16 %v398
        %v944 = vunpack.c.h.b16 %v398
        %v945 = vunpack.c.l.b16 %v399
        %v946 = vunpack.c.h.b16 %v399
        %v947 = vunpack.c.l.b16 %v400
        %v948 = vunpack.c.h.b16 %v400
        %v949 = vunpack.c.l.b16 %v401
        %v950 = vunpack.c.h.b16 %v401
        %v951 = vunpack.c.l.b16 %v402
        %v952 = vunpack.c.h.b16 %v402
        %v953 = vunpack.c.l.b16 %v403
        %v954 = vunpack.c.h.b16 %v403
        %v955 = vunpack.c.l.b16 %v404
        %v956 = vunpack.c.h.b16 %v404
        %v957 = vunpack.c.l.b16 %v405
        %v958 = vunpack.c.h.b16 %v405
        %v959 = vunpack.c.l.b16 %v406
        %v960 = vunpack.c.h.b16 %v406
        %v961 = vunpack.c.l.b16 %v407
        %v962 = vunpack.c.h.b16 %v407
        %v963 = vunpack.c.l.b16 %v408
        %v964 = vunpack.c.h.b16 %v408
        %v965 = vunpack.c.l.b16 %v409
        %v966 = vunpack.c.h.b16 %v409
        %v967 = vunpack.c.l.b16 %v410
        %v968 = vunpack.c.h.b16 %v410
        %v969 = vunpack.c.l.b16 %v411
        %v970 = vunpack.c.h.b16 %v411
        %v971 = vunpack.c.l.b16 %v412
        %v972 = vunpack.c.h.b16 %v412
        %v973 = vunpack.c.l.b16 %v413
        %v974 = vunpack.c.h.b16 %v413
        %v975 = vunpack.c.l.b16 %v414
        %v976 = vunpack.c.h.b16 %v414
        %v977 = vunpack.c.l.b16 %v415
        %v978 = vunpack.c.h.b16 %v415
        %v979 = vunpack.c.l.b16 %v416
        %v980 = vunpack.c.h.b16 %v416
        %v981 = vunpack.c.l.b16 %v417
        %v982 = vunpack.c.h.b16 %v417
        %v983 = vunpack.c.l.b16 %v418
        %v984 = vunpack.c.h.b16 %v418
        %v985 = vunpack.c.l.b16 %v419
        %v986 = vunpack.c.h.b16 %v419
        %v987 = vunpack.c.l.b16 %v420
        %v988 = vunpack.c.h.b16 %v420
        %v989 = vunpack.c.l.b16 %v421
        %v990 = vunpack.c.h.b16 %v421
        %v991 = vunpack.c.l.b16 %v422
        %v992 = vunpack.c.h.b16 %v422
        %v993 = vunpack.c.l.b16 %v423
        %v994 = vunpack.c.h.b16 %v423
        %v995 = vunpack.c.l.b16 %v424
        %v996 = vunpack.c.h.b16 %v424
        %v997 = vunpack.c.l.b16 %v425
        %v998 = vunpack.c.h.b16 %v425
        %v999 = vunpack.c.l.b16 %v426
        %v1000 = vunpack.c.h.b16 %v426
        %v1001 = vunpack.c.l.b16 %v427
        %v1002 = vunpack.c.h.b16 %v427
        %v1003 = vunpack.c.l.b16 %v428
        %v1004 = vunpack.c.h.b16 %v428
        %v1005 = vunpack.c.l.b16 %v429
        %v1006 = vunpack.c.h.b16 %v429
        %v1007 = vunpack.c.l.b16 %v430
        %v1008 = vunpack.c.h.b16 %v430
        %v1009 = vunpack.c.l.b16 %v431
        %v1010 = vunpack.c.h.b16 %v431
        %v1011 = vunpack.c.l.b16 %v432
        %v1012 = vunpack.c.h.b16 %v432
        %v1013 = vunpack.c.l.b16 %v433
        %v1014 = vunpack.c.h.b16 %v433
        %v1015 = vunpack.c.l.b16 %v434
        %v1016 = vunpack.c.h.b16 %v434
        %v1017 = vunpack.c.l.b16 %v435
        %v1018 = vunpack.c.h.b16 %v435
        %v1019 = vunpack.c.l.b16 %v436
        %v1020 = vunpack.c.h.b16 %v436
        %v1021 = vunpack.c.l.b16 %v437
        %v1022 = vunpack.c.h.b16 %v437
        %v1023 = vunpack.c.l.b16 %v438
        %v1024 = vunpack.c.h.b16 %v438
        %v1025 = vunpack.c.l.b16 %v439
        %v1026 = vunpack.c.h.b16 %v439
        %v1027 = vunpack.c.l.b16 %v440
        %v1028 = vunpack.c.h.b16 %v440
        %v1029 = vunpack.c.l.b16 %v441
        %v1030 = vunpack.c.h.b16 %v441
        %v1031 = vunpack.c.l.b16 %v442
        %v1032 = vunpack.c.h.b16 %v442
        %v1033 = vunpack.c.l.b16 %v443
        %v1034 = vunpack.c.h.b16 %v443
        %v1035 = vunpack.c.l.b16 %v444
        %v1036 = vunpack.c.h.b16 %v444
        %v1037 = vunpack.c.l.b16 %v445
        %v1038 = vunpack.c.h.b16 %v445
        %v1039 = vunpack.c.l.b16 %v446
        %v1040 = vunpack.c.h.b16 %v446
        %v1041 = vunpack.c.l.b16 %v447
        %v1042 = vunpack.c.h.b16 %v447
        %v1043 = vunpack.c.l.b16 %v448
        %v1044 = vunpack.c.h.b16 %v448
        %v1045 = vunpack.c.l.b16 %v449
        %v1046 = vunpack.c.h.b16 %v449
        %v1047 = vunpack.c.l.b16 %v450
        %v1048 = vunpack.c.h.b16 %v450
        %v1049 = vunpack.c.l.b16 %v451
        %v1050 = vunpack.c.h.b16 %v451
        %v1051 = vunpack.c.l.b16 %v452
        %v1052 = vunpack.c.h.b16 %v452
        %v1053 = vunpack.c.l.b16 %v453
        %v1054 = vunpack.c.h.b16 %v453
        %v1055 = vunpack.c.l.b16 %v454
        %v1056 = vunpack.c.h.b16 %v454
        %v1057 = vunpack.c.l.b16 %v455
        %v1058 = vunpack.c.h.b16 %v455
        %v1059 = vunpack.c.l.b16 %v456
        %v1060 = vunpack.c.h.b16 %v456
        %v1061 = vunpack.c.l.b16 %v457
        %v1062 = vunpack.c.h.b16 %v457
        %v1063 = vunpack.c.l.b16 %v458
        %v1064 = vunpack.c.h.b16 %v458
        %v1065 = vunpack.c.l.b16 %v459
        %v1066 = vunpack.c.h.b16 %v459
        %v1067 = vunpack.c.l.b16 %v460
        %v1068 = vunpack.c.h.b16 %v460
        %v1069 = vunpack.c.l.b16 %v461
        %v1070 = vunpack.c.h.b16 %v461
        %v1071 = vunpack.c.l.b16 %v462
        %v1072 = vunpack.c.h.b16 %v462
        %v1073 = vunpack.c.l.b16 %v463
        %v1074 = vunpack.c.h.b16 %v463
        %v1075 = vunpack.c.l.b16 %v464
        %v1076 = vunpack.c.h.b16 %v464
        %v1077 = vunpack.c.l.b16 %v465
        %v1078 = vunpack.c.h.b16 %v465
        %v1079 = vunpack.c.l.b16 %v466
        %v1080 = vunpack.c.h.b16 %v466
        %v1081 = vunpack.c.l.b16 %v467
        %v1082 = vunpack.c.h.b16 %v467
        %v1083 = vunpack.c.l.b16 %v468
        %v1084 = vunpack.c.h.b16 %v468
        %v1085 = vunpack.c.l.b16 %v469
        %v1086 = vunpack.c.h.b16 %v469
        %v1087 = vunpack.c.l.b16 %v470
        %v1088 = vunpack.c.h.b16 %v470
        %v1089 = vunpack.c.l.b16 %v471
        %v1090 = vunpack.c.h.b16 %v471
        %v1091 = vunpack.c.l.b16 %v472
        %v1092 = vunpack.c.h.b16 %v472
        %v1093 = vunpack.c.l.b16 %v473
        %v1094 = vunpack.c.h.b16 %v473
        %v1095 = vunpack.c.l.b16 %v474
        %v1096 = vunpack.c.h.b16 %v474
        %v1097 = vunpack.c.l.b16 %v475
        %v1098 = vunpack.c.h.b16 %v475
        %v1099 = vunpack.c.l.b16 %v476
        %v1100 = vunpack.c.h.b16 %v476
        %v1101 = vunpack.c.l.b16 %v477
        %v1102 = vunpack.c.h.b16 %v477
        %v1103 = vunpack.c.l.b16 %v478
        %v1104 = vunpack.c.h.b16 %v478
        %v1105 = vunpack.c.l.b16 %v479
        %v1106 = vunpack.c.h.b16 %v479
        %v1107 = vunpack.c.l.b16 %v480
        %v1108 = vunpack.c.h.b16 %v480
        %v1109 = vunpack.c.l.b16 %v481
        %v1110 = vunpack.c.h.b16 %v481
        %v1111 = vunpack.c.l.b16 %v482
        %v1112 = vunpack.c.h.b16 %v482
        %v1113 = vunpack.c.l.b16 %v483
        %v1114 = vunpack.c.h.b16 %v483
        %v1115 = vunpack.c.l.b16 %v484
        %v1116 = vunpack.c.h.b16 %v484
        %v1117 = vunpack.c.l.b16 %v485
        %v1118 = vunpack.c.h.b16 %v485
        %v1119 = vunpack.c.l.b16 %v486
        %v1120 = vunpack.c.h.b16 %v486
        %v1121 = vunpack.c.l.b16 %v487
        %v1122 = vunpack.c.h.b16 %v487
        %v1123 = vunpack.c.l.b16 %v488
        %v1124 = vunpack.c.h.b16 %v488
        %v1125 = vunpack.c.l.b16 %v489
        %v1126 = vunpack.c.h.b16 %v489
        %v1127 = vunpack.c.l.b16 %v490
        %v1128 = vunpack.c.h.b16 %v490
        %v1129 = vunpack.c.l.b16 %v491
        %v1130 = vunpack.c.h.b16 %v491
        %v1131 = vunpack.c.l.b16 %v492
        %v1132 = vunpack.c.h.b16 %v492
        %v1133 = vunpack.c.l.b16 %v493
        %v1134 = vunpack.c.h.b16 %v493
        %v1135 = vunpack.c.l.b16 %v494
        %v1136 = vunpack.c.h.b16 %v494
        %v1137 = vunpack.c.l.b16 %v495
        %v1138 = vunpack.c.h.b16 %v495
        %v1139 = vunpack.c.l.b16 %v496
        %v1140 = vunpack.c.h.b16 %v496
        %v1141 = vunpack.c.l.b16 %v497
        %v1142 = vunpack.c.h.b16 %v497
        %v1143 = vunpack.c.l.b16 %v498
        %v1144 = vunpack.c.h.b16 %v498
        %v1145 = vunpack.c.l.b16 %v499
        %v1146 = vunpack.c.h.b16 %v499
        %v1147 = vunpack.c.l.b16 %v500
        %v1148 = vunpack.c.h.b16 %v500
        %v1149 = vunpack.c.l.b16 %v501
        %v1150 = vunpack.c.h.b16 %v501
        %v1151 = vunpack.c.l.b16 %v502
        %v1152 = vunpack.c.h.b16 %v502
        %v1153 = vunpack.c.l.b16 %v503
        %v1154 = vunpack.c.h.b16 %v503
        %v1155 = vunpack.c.l.b16 %v504
        %v1156 = vunpack.c.h.b16 %v504
        %v1157 = vunpack.c.l.b16 %v505
        %v1158 = vunpack.c.h.b16 %v505
        %v1159 = vunpack.c.l.b16 %v506
        %v1160 = vunpack.c.h.b16 %v506
        %v1161 = vunpack.c.l.b16 %v507
        %v1162 = vunpack.c.h.b16 %v507
        %v1163 = vunpack.c.l.b16 %v508
        %v1164 = vunpack.c.h.b16 %v508
        %v1165 = vunpack.c.l.b16 %v509
        %v1166 = vunpack.c.h.b16 %v509
        %v1167 = vunpack.c.l.b16 %v510
        %v1168 = vunpack.c.h.b16 %v510
        %v1169 = vunpack.c.l.b16 %v511
        %v1170 = vunpack.c.h.b16 %v511
        %v1171 = vunpack.c.l.b16 %v512
        %v1172 = vunpack.c.h.b16 %v512
        %v1173 = vunpack.c.l.b16 %v513
        %v1174 = vunpack.c.h.b16 %v513
        %v1175 = vunpack.c.l.b16 %v514
        %v1176 = vunpack.c.h.b16 %v514
        %v1177 = vunpack.c.l.b16 %v515
        %v1178 = vunpack.c.h.b16 %v515
        %v1179 = vunpack.c.l.b16 %v516
        %v1180 = vunpack.c.h.b16 %v516
        %v1181 = vunpack.c.l.b16 %v517
        %v1182 = vunpack.c.h.b16 %v517
        %v1183 = vunpack.c.l.b16 %v518
        %v1184 = vunpack.c.h.b16 %v518
        %v1185 = vunpack.c.l.b16 %v519
        %v1186 = vunpack.c.h.b16 %v519
        %v1187 = vunpack.c.l.b16 %v520
        %v1188 = vunpack.c.h.b16 %v520
        %v1189 = vunpack.c.l.b16 %v521
        %v1190 = vunpack.c.h.b16 %v521
        %v1191 = vunpack.c.l.b16 %v522
        %v1192 = vunpack.c.h.b16 %v522
        %v1193 = vunpack.c.l.b16 %v523
        %v1194 = vunpack.c.h.b16 %v523
        %v1195 = vunpack.c.l.b16 %v524
        %v1196 = vunpack.c.h.b16 %v524
        %v1197 = vunpack.c.l.b16 %v525
        %v1198 = vunpack.c.h.b16 %v525
        %v1199 = vunpack.c.l.b16 %v526
        %v1200 = vunpack.c.h.b16 %v526
        %v1201 = vunpack.c.l.b16 %v527
        %v1202 = vunpack.c.h.b16 %v527
        %v1203 = vunpack.c.l.b16 %v528
        %v1204 = vunpack.c.h.b16 %v528
        %v1205 = vunpack.c.l.b16 %v529
        %v1206 = vunpack.c.h.b16 %v529
        %v1207 = vunpack.c.l.b16 %v530
        %v1208 = vunpack.c.h.b16 %v530
        %v1209 = vunpack.c.l.b16 %v531
        %v1210 = vunpack.c.h.b16 %v531
        %v1211 = vunpack.c.l.b16 %v532
        %v1212 = vunpack.c.h.b16 %v532
        %v1213 = vunpack.c.l.b16 %v533
        %v1214 = vunpack.c.h.b16 %v533
        %v1215 = vunpack.c.l.b16 %v534
        %v1216 = vunpack.c.h.b16 %v534
        %v1217 = vunpack.c.l.b16 %v535
        %v1218 = vunpack.c.h.b16 %v535
        %v1219 = vunpack.c.l.b16 %v536
        %v1220 = vunpack.c.h.b16 %v536
        %v1221 = vunpack.c.l.b16 %v537
        %v1222 = vunpack.c.h.b16 %v537
        %v1223 = vunpack.c.l.b16 %v538
        %v1224 = vunpack.c.h.b16 %v538
        %v1225 = vunpack.c.l.b16 %v539
        %v1226 = vunpack.c.h.b16 %v539
        %v1227 = vunpack.c.l.b16 %v540
        %v1228 = vunpack.c.h.b16 %v540
        %v1229 = vunpack.c.l.b16 %v541
        %v1230 = vunpack.c.h.b16 %v541
        %v1231 = vunpack.c.l.b16 %v542
        %v1232 = vunpack.c.h.b16 %v542
        %v1233 = vunpack.c.l.b16 %v543
        %v1234 = vunpack.c.h.b16 %v543
        %v1235 = vunpack.c.l.b16 %v544
        %v1236 = vunpack.c.h.b16 %v544
        %v1237 = vunpack.c.l.b16 %v545
        %v1238 = vunpack.c.h.b16 %v545
        %v1239 = vunpack.c.l.b16 %v546
        %v1240 = vunpack.c.h.b16 %v546
        %v1241 = vunpack.c.l.b16 %v547
        %v1242 = vunpack.c.h.b16 %v547
        %v1243 = vunpack.c.l.b16 %v548
        %v1244 = vunpack.c.h.b16 %v548
        %v1245 = vunpack.c.l.b16 %v549
        %v1246 = vunpack.c.h.b16 %v549
        %v1247 = vunpack.c.l.b16 %v550
        %v1248 = vunpack.c.h.b16 %v550
        %v1249 = vunpack.c.l.b16 %v551
        %v1250 = vunpack.c.h.b16 %v551
        %v1251 = vunpack.c.l.b16 %v552
        %v1252 = vunpack.c.h.b16 %v552
        %v1253 = vunpack.c.l.b16 %v553
        %v1254 = vunpack.c.h.b16 %v553
        %v1255 = vunpack.c.l.b16 %v554
        %v1256 = vunpack.c.h.b16 %v554
        %v1257 = vunpack.c.l.b16 %v555
        %v1258 = vunpack.c.h.b16 %v555
        %v1259 = vunpack.c.l.b16 %v556
        %v1260 = vunpack.c.h.b16 %v556
        %v1261 = vunpack.c.l.b16 %v557
        %v1262 = vunpack.c.h.b16 %v557
        %v1263 = vunpack.c.l.b16 %v558
        %v1264 = vunpack.c.h.b16 %v558
        %v1265 = vunpack.c.l.b16 %v559
        %v1266 = vunpack.c.h.b16 %v559
        %v1267 = vunpack.c.l.b16 %v560
        %v1268 = vunpack.c.h.b16 %v560
        %v1269 = vunpack.c.l.b16 %v561
        %v1270 = vunpack.c.h.b16 %v561
        %v1271 = vunpack.c.l.b16 %v562
        %v1272 = vunpack.c.h.b16 %v562
        %v1273 = vunpack.c.l.b16 %v563
        %v1274 = vunpack.c.h.b16 %v563
        %v1275 = vunpack.c.l.b16 %v564
        %v1276 = vunpack.c.h.b16 %v564
        %v1277 = vunpack.c.l.b16 %v565
        %v1278 = vunpack.c.h.b16 %v565
        %v1279 = vunpack.c.l.b16 %v566
        %v1280 = vunpack.c.h.b16 %v566
        %v1281 = vunpack.c.l.b16 %v567
        %v1282 = vunpack.c.h.b16 %v567
        %v1283 = vunpack.c.l.b16 %v568
        %v1284 = vunpack.c.h.b16 %v568
        %v1285 = vunpack.c.l.b16 %v569
        %v1286 = vunpack.c.h.b16 %v569
        %v1287 = vunpack.c.l.b16 %v570
        %v1288 = vunpack.c.h.b16 %v570
        %v1289 = vunpack.c.l.b16 %v571
        %v1290 = vunpack.c.h.b16 %v571
        %v1291 = vunpack.c.l.b16 %v572
        %v1292 = vunpack.c.h.b16 %v572
        %v1293 = vunpack.c.l.b16 %v573
        %v1294 = vunpack.c.h.b16 %v573
        %v1295 = vunpack.c.l.b16 %v574
        %v1296 = vunpack.c.h.b16 %v574
        %v1297 = vunpack.c.l.b16 %v575
        %v1298 = vunpack.c.h.b16 %v575
        %v1299 = vunpack.c.l.b16 %v576
        %v1300 = vunpack.c.h.b16 %v576
        %v1301 = vunpack.c.l.b16 %v577
        %v1302 = vunpack.c.h.b16 %v577
        %v1303 = vunpack.c.l.b16 %v578
        %v1304 = vunpack.c.h.b16 %v578
        %v1305 = vunpack.c.l.b16 %v579
        %v1306 = vunpack.c.h.b16 %v579
        %v1307 = vunpack.c.l.b16 %v580
        %v1308 = vunpack.c.h.b16 %v580
        %v1309 = vunpack.c.l.b16 %v581
        %v1310 = vunpack.c.h.b16 %v581
        %v1311 = vunpack.c.l.b16 %v582
        %v1312 = vunpack.c.h.b16 %v582
        %v1313 = vunpack.c.l.b16 %v583
        %v1314 = vunpack.c.h.b16 %v583
        %v1315 = vunpack.c.l.b16 %v584
        %v1316 = vunpack.c.h.b16 %v584
        %v1317 = vunpack.c.l.b16 %v585
        %v1318 = vunpack.c.h.b16 %v585
        %v1319 = vunpack.c.l.b16 %v586
        %v1320 = vunpack.c.h.b16 %v586
        %v1321 = vunpack.c.l.b16 %v587
        %v1322 = vunpack.c.h.b16 %v587
        %v1323 = vunpack.c.l.b16 %v588
        %v1324 = vunpack.c.h.b16 %v588
        %v1325 = vunpack.c.l.b16 %v589
        %v1326 = vunpack.c.h.b16 %v589
        %v1327 = vunpack.c.l.b16 %v590
        %v1328 = vunpack.c.h.b16 %v590
        %v1329 = vunpack.c.l.b16 %v591
        %v1330 = vunpack.c.h.b16 %v591
        %v1331 = vunpack.c.l.b16 %v592
        %v1332 = vunpack.c.h.b16 %v592
        %v1333 = vunpack.c.l.b16 %v593
        %v1334 = vunpack.c.h.b16 %v593
        %v1335 = vunpack.c.l.b16 %v594
        %v1336 = vunpack.c.h.b16 %v594
        %v1337 = vunpack.c.l.b16 %v595
        %v1338 = vunpack.c.h.b16 %v595
        %v1339 = vunpack.c.l.b16 %v596
        %v1340 = vunpack.c.h.b16 %v596
        %v1341 = vunpack.c.l.b16 %v597
        %v1342 = vunpack.c.h.b16 %v597
        %v1343 = vunpack.c.l.b16 %v598
        %v1344 = vunpack.c.h.b16 %v598
        %v1345 = vunpack.c.l.b16 %v599
        %v1346 = vunpack.c.h.b16 %v599
        %v1347 = vunpack.c.l.b16 %v600
        %v1348 = vunpack.c.h.b16 %v600
        %v1349 = vunpack.c.l.b16 %v601
        %v1350 = vunpack.c.h.b16 %v601
        %v1351 = vunpack.c.l.b16 %v602
        %v1352 = vunpack.c.h.b16 %v602
        %v1353 = vunpack.c.l.b16 %v603
        %v1354 = vunpack.c.h.b16 %v603
        %v1355 = vunpack.c.l.b16 %v604
        %v1356 = vunpack.c.h.b16 %v604
        %v1357 = vunpack.c.l.b16 %v605
        %v1358 = vunpack.c.h.b16 %v605
        %v1359 = vunpack.c.l.b16 %v606
        %v1360 = vunpack.c.h.b16 %v606
        %v1361 = vunpack.c.l.b16 %v607
        %v1362 = vunpack.c.h.b16 %v607
        %v1363 = vunpack.c.l.b16 %v608
        %v1364 = vunpack.c.h.b16 %v608
        %v1365 = vunpack.c.l.b16 %v609
        %v1366 = vunpack.c.h.b16 %v609
        %v1367 = vunpack.c.l.b16 %v610
        %v1368 = vunpack.c.h.b16 %v610
        %v1369 = vunpack.c.l.b16 %v611
        %v1370 = vunpack.c.h.b16 %v611
        %v1371 = vunpack.c.l.b16 %v612
        %v1372 = vunpack.c.h.b16 %v612
        %v1373 = vunpack.c.l.b16 %v613
        %v1374 = vunpack.c.h.b16 %v613
        %v1375 = vunpack.c.l.b16 %v614
        %v1376 = vunpack.c.h.b16 %v614
        %v1377 = vunpack.c.l.b16 %v615
        %v1378 = vunpack.c.h.b16 %v615
        %v1379 = vunpack.c.l.b16 %v616
        %v1380 = vunpack.c.h.b16 %v616
        %v1381 = vunpack.c.l.b16 %v617
        %v1382 = vunpack.c.h.b16 %v617
        %v1383 = vunpack.c.l.b16 %v618
        %v1384 = vunpack.c.h.b16 %v618
        %v1385 = vunpack.c.l.b16 %v619
        %v1386 = vunpack.c.h.b16 %v619
        %v1387 = vunpack.c.l.b16 %v620
        %v1388 = vunpack.c.h.b16 %v620
        %v1389 = vunpack.c.l.b16 %v621
        %v1390 = vunpack.c.h.b16 %v621
        %v1391 = vunpack.c.l.b16 %v622
        %v1392 = vunpack.c.h.b16 %v622
        %v1393 = vunpack.c.l.b16 %v623
        %v1394 = vunpack.c.h.b16 %v623
        %v1395 = vunpack.c.l.b16 %v624
        %v1396 = vunpack.c.h.b16 %v624
        %v1397 = vunpack.c.l.b16 %v625
        %v1398 = vunpack.c.h.b16 %v625
        %v1399 = vunpack.c.l.b16 %v626
        %v1400 = vunpack.c.h.b16 %v626
        %v1401 = vunpack.c.l.b16 %v627
        %v1402 = vunpack.c.h.b16 %v627
        %v1403 = vunpack.c.l.b16 %v628
        %v1404 = vunpack.c.h.b16 %v628
        %v1405 = vunpack.c.l.b16 %v629
        %v1406 = vunpack.c.h.b16 %v629
        %v1407 = vunpack.c.l.b16 %v630
        %v1408 = vunpack.c.h.b16 %v630
        %v1409 = vunpack.c.l.b16 %v631
        %v1410 = vunpack.c.h.b16 %v631
        %v1411 = vunpack.c.l.b16 %v632
        %v1412 = vunpack.c.h.b16 %v632
        %v1413 = vunpack.c.l.b16 %v633
        %v1414 = vunpack.c.h.b16 %v633
        %v1415 = vunpack.c.l.b16 %v634
        %v1416 = vunpack.c.h.b16 %v634
        %v1417 = vunpack.c.l.b16 %v635
        %v1418 = vunpack.c.h.b16 %v635
        %v1419 = vunpack.c.l.b16 %v636
        %v1420 = vunpack.c.h.b16 %v636
        %v1421 = vunpack.c.l.b16 %v637
        %v1422 = vunpack.c.h.b16 %v637
        %v1423 = vunpack.c.l.b16 %v638
        %v1424 = vunpack.c.h.b16 %v638
        %v1425 = vunpack.c.l.b16 %v639
        %v1426 = vunpack.c.h.b16 %v639
        %v1427 = vunpack.c.l.b16 %v640
        %v1428 = vunpack.c.h.b16 %v640
        %v1429 = vunpack.c.l.b16 %v641
        %v1430 = vunpack.c.h.b16 %v641
        %v1431 = vunpack.c.l.b16 %v642
        %v1432 = vunpack.c.h.b16 %v642
        %v1433 = vunpack.c.l.b16 %v643
        %v1434 = vunpack.c.h.b16 %v643
        %v1435 = vunpack.c.l.b16 %v644
        %v1436 = vunpack.c.h.b16 %v644
        %v1437 = vunpack.c.l.b16 %v645
        %v1438 = vunpack.c.h.b16 %v645
        %v1439 = vunpack.c.l.b16 %v646
        %v1440 = vunpack.c.h.b16 %v646
        %v1441 = vunpack.c.l.b16 %v647
        %v1442 = vunpack.c.h.b16 %v647
        %v1443 = vunpack.c.l.b16 %v648
        %v1444 = vunpack.c.h.b16 %v648
        %v1445 = vpack.c.b16 %v937, %v933
        %v1446 = vpack.c.b16 %v938, %v934
        %v1447 = vpack.c.b16 %v939, %v935
        %v1448 = vpack.c.b16 %v940, %v936
        %v1449 = vpack.c.b16 %v945, %v941
        %v1450 = vpack.c.b16 %v946, %v942
        %v1451 = vpack.c.b16 %v947, %v943
        %v1452 = vpack.c.b16 %v948, %v944
        %v1453 = vpack.c.b16 %v953, %v949
        %v1454 = vpack.c.b16 %v954, %v950
        %v1455 = vpack.c.b16 %v955, %v951
        %v1456 = vpack.c.b16 %v956, %v952
        %v1457 = vpack.c.b16 %v961, %v957
        %v1458 = vpack.c.b16 %v962, %v958
        %v1459 = vpack.c.b16 %v963, %v959
        %v1460 = vpack.c.b16 %v964, %v960
        %v1461 = vpack.c.b16 %v969, %v965
        %v1462 = vpack.c.b16 %v970, %v966
        %v1463 = vpack.c.b16 %v971, %v967
        %v1464 = vpack.c.b16 %v972, %v968
        %v1465 = vpack.c.b16 %v977, %v973
        %v1466 = vpack.c.b16 %v978, %v974
        %v1467 = vpack.c.b16 %v979, %v975
        %v1468 = vpack.c.b16 %v980, %v976
        %v1469 = vpack.c.b16 %v985, %v981
        %v1470 = vpack.c.b16 %v986, %v982
        %v1471 = vpack.c.b16 %v987, %v983
        %v1472 = vpack.c.b16 %v988, %v984
        %v1473 = vpack.c.b16 %v993, %v989
        %v1474 = vpack.c.b16 %v994, %v990
        %v1475 = vpack.c.b16 %v995, %v991
        %v1476 = vpack.c.b16 %v996, %v992
        %v1477 = vpack.c.b16 %v1001, %v997
        %v1478 = vpack.c.b16 %v1002, %v998
        %v1479 = vpack.c.b16 %v1003, %v999
        %v1480 = vpack.c.b16 %v1004, %v1000
        %v1481 = vpack.c.b16 %v1009, %v1005
        %v1482 = vpack.c.b16 %v1010, %v1006
        %v1483 = vpack.c.b16 %v1011, %v1007
        %v1484 = vpack.c.b16 %v1012, %v1008
        %v1485 = vpack.c.b16 %v1017, %v1013
        %v1486 = vpack.c.b16 %v1018, %v1014
        %v1487 = vpack.c.b16 %v1019, %v1015
        %v1488 = vpack.c.b16 %v1020, %v1016
        %v1489 = vpack.c.b16 %v1025, %v1021
        %v1490 = vpack.c.b16 %v1026, %v1022
        %v1491 = vpack.c.b16 %v1027, %v1023
        %v1492 = vpack.c.b16 %v1028, %v1024
        %v1493 = vpack.c.b16 %v1033, %v1029
        %v1494 = vpack.c.b16 %v1034, %v1030
        %v1495 = vpack.c.b16 %v1035, %v1031
        %v1496 = vpack.c.b16 %v1036, %v1032
        %v1497 = vpack.c.b16 %v1041, %v1037
        %v1498 = vpack.c.b16 %v1042, %v1038
        %v1499 = vpack.c.b16 %v1043, %v1039
        %v1500 = vpack.c.b16 %v1044, %v1040
        %v1501 = vpack.c.b16 %v1049, %v1045
        %v1502 = vpack.c.b16 %v1050, %v1046
        %v1503 = vpack.c.b16 %v1051, %v1047
        %v1504 = vpack.c.b16 %v1052, %v1048
        %v1505 = vpack.c.b16 %v1057, %v1053
        %v1506 = vpack.c.b16 %v1058, %v1054
        %v1507 = vpack.c.b16 %v1059, %v1055
        %v1508 = vpack.c.b16 %v1060, %v1056
        %v1509 = vpack.c.b16 %v1065, %v1061
        %v1510 = vpack.c.b16 %v1066, %v1062
        %v1511 = vpack.c.b16 %v1067, %v1063
        %v1512 = vpack.c.b16 %v1068, %v1064
        %v1513 = vpack.c.b16 %v1073, %v1069
        %v1514 = vpack.c.b16 %v1074, %v1070
        %v1515 = vpack.c.b16 %v1075, %v1071
        %v1516 = vpack.c.b16 %v1076, %v1072
        %v1517 = vpack.c.b16 %v1081, %v1077
        %v1518 = vpack.c.b16 %v1082, %v1078
        %v1519 = vpack.c.b16 %v1083, %v1079
        %v1520 = vpack.c.b16 %v1084, %v1080
        %v1521 = vpack.c.b16 %v1089, %v1085
        %v1522 = vpack.c.b16 %v1090, %v1086
        %v1523 = vpack.c.b16 %v1091, %v1087
        %v1524 = vpack.c.b16 %v1092, %v1088
        %v1525 = vpack.c.b16 %v1097, %v1093
        %v1526 = vpack.c.b16 %v1098, %v1094
        %v1527 = vpack.c.b16 %v1099, %v1095
        %v1528 = vpack.c.b16 %v1100, %v1096
        %v1529 = vpack.c.b16 %v1105, %v1101
        %v1530 = vpack.c.b16 %v1106, %v1102
        %v1531 = vpack.c.b16 %v1107, %v1103
        %v1532 = vpack.c.b16 %v1108, %v1104
        %v1533 = vpack.c.b16 %v1113, %v1109
        %v1534 = vpack.c.b16 %v1114, %v1110
        %v1535 = vpack.c.b16 %v1115, %v1111
        %v1536 = vpack.c.b16 %v1116, %v1112
        %v1537 = vpack.c.b16 %v1121, %v1117
        %v1538 = vpack.c.b16 %v1122, %v1118
        %v1539 = vpack.c.b16 %v1123, %v1119
        %v1540 = vpack.c.b16 %v1124, %v1120
        %v1541 = vpack.c.b16 %v1129, %v1125
        %v1542 = vpack.c.b16 %v1130, %v1126
        %v1543 = vpack.c.b16 %v1131, %v1127
        %v1544 = vpack.c.b16 %v1132, %v1128
        %v1545 = vpack.c.b16 %v1137, %v1133
        %v1546 = vpack.c.b16 %v1138, %v1134
        %v1547 = vpack.c.b16 %v1139, %v1135
        %v1548 = vpack.c.b16 %v1140, %v1136
        %v1549 = vpack.c.b16 %v1145, %v1141
        %v1550 = vpack.c.b16 %v1146, %v1142
        %v1551 = vpack.c.b16 %v1147, %v1143
        %v1552 = vpack.c.b16 %v1148, %v1144
        %v1553 = vpack.c.b16 %v1153, %v1149
        %v1554 = vpack.c.b16 %v1154, %v1150
        %v1555 = vpack.c.b16 %v1155, %v1151
        %v1556 = vpack.c.b16 %v1156, %v1152
        %v1557 = vpack.c.b16 %v1161, %v1157
        %v1558 = vpack.c.b16 %v1162, %v1158
        %v1559 = vpack.c.b16 %v1163, %v1159
        %v1560 = vpack.c.b16 %v1164, %v1160
        %v1561 = vpack.c.b16 %v1169, %v1165
        %v1562 = vpack.c.b16 %v1170, %v1166
        %v1563 = vpack.c.b16 %v1171, %v1167
        %v1564 = vpack.c.b16 %v1172, %v1168
        %v1565 = vpack.c.b16 %v1177, %v1173
        %v1566 = vpack.c.b16 %v1178, %v1174
        %v1567 = vpack.c.b16 %v1179, %v1175
        %v1568 = vpack.c.b16 %v1180, %v1176
        %v1569 = vpack.c.b16 %v1185, %v1181
        %v1570 = vpack.c.b16 %v1186, %v1182
        %v1571 = vpack.c.b16 %v1187, %v1183
        %v1572 = vpack.c.b16 %v1188, %v1184
        %v1573 = vpack.c.b16 %v1193, %v1189
        %v1574 = vpack.c.b16 %v1194, %v1190
        %v1575 = vpack.c.b16 %v1195, %v1191
        %v1576 = vpack.c.b16 %v1196, %v1192
        %v1577 = vpack.c.b16 %v1201, %v1197
        %v1578 = vpack.c.b16 %v1202, %v1198
        %v1579 = vpack.c.b16 %v1203, %v1199
        %v1580 = vpack.c.b16 %v1204, %v1200
        %v1581 = vpack.c.b16 %v1209, %v1205
        %v1582 = vpack.c.b16 %v1210, %v1206
        %v1583 = vpack.c.b16 %v1211, %v1207
        %v1584 = vpack.c.b16 %v1212, %v1208
        %v1585 = vpack.c.b16 %v1217, %v1213
        %v1586 = vpack.c.b16 %v1218, %v1214
        %v1587 = vpack.c.b16 %v1219, %v1215
        %v1588 = vpack.c.b16 %v1220, %v1216
        %v1589 = vpack.c.b16 %v1225, %v1221
        %v1590 = vpack.c.b16 %v1226, %v1222
        %v1591 = vpack.c.b16 %v1227, %v1223
        %v1592 = vpack.c.b16 %v1228, %v1224
        %v1593 = vpack.c.b16 %v1233, %v1229
        %v1594 = vpack.c.b16 %v1234, %v1230
        %v1595 = vpack.c.b16 %v1235, %v1231
        %v1596 = vpack.c.b16 %v1236, %v1232
        %v1597 = vpack.c.b16 %v1241, %v1237
        %v1598 = vpack.c.b16 %v1242, %v1238
        %v1599 = vpack.c.b16 %v1243, %v1239
        %v1600 = vpack.c.b16 %v1244, %v1240
        %v1601 = vpack.c.b16 %v1249, %v1245
        %v1602 = vpack.c.b16 %v1250, %v1246
        %v1603 = vpack.c.b16 %v1251, %v1247
        %v1604 = vpack.c.b16 %v1252, %v1248
        %v1605 = vpack.c.b16 %v1257, %v1253
        %v1606 = vpack.c.b16 %v1258, %v1254
        %v1607 = vpack.c.b16 %v1259, %v1255
        %v1608 = vpack.c.b16 %v1260, %v1256
        %v1609 = vpack.c.b16 %v1265, %v1261
        %v1610 = vpack.c.b16 %v1266, %v1262
        %v1611 = vpack.c.b16 %v1267, %v1263
        %v1612 = vpack.c.b16 %v1268, %v1264
        %v1613 = vpack.c.b16 %v1273, %v1269
        %v1614 = vpack.c.b16 %v1274, %v1270
        %v1615 = vpack.c.b16 %v1275, %v1271
        %v1616 = vpack.c.b16 %v1276, %v1272
        %v1617 = vpack.c.b16 %v1281, %v1277
        %v1618 = vpack.c.b16 %v1282, %v1278
        %v1619 = vpack.c.b16 %v1283, %v1279
        %v1620 = vpack.c.b16 %v1284, %v1280
        %v1621 = vpack.c.b16 %v1289, %v1285
        %v1622 = vpack.c.b16 %v1290, %v1286
        %v1623 = vpack.c.b16 %v1291, %v1287
        %v1624 = vpack.c.b16 %v1292, %v1288
        %v1625 = vpack.c.b16 %v1297, %v1293
        %v1626 = vpack.c.b16 %v1298, %v1294
        %v1627 = vpack.c.b16 %v1299, %v1295
        %v1628 = vpack.c.b16 %v1300, %v1296
        %v1629 = vpack.c.b16 %v1305, %v1301
        %v1630 = vpack.c.b16 %v1306, %v1302
        %v1631 = vpack.c.b16 %v1307, %v1303
        %v1632 = vpack.c.b16 %v1308, %v1304
        %v1633 = vpack.c.b16 %v1313, %v1309
        %v1634 = vpack.c.b16 %v1314, %v1310
        %v1635 = vpack.c.b16 %v1315, %v1311
        %v1636 = vpack.c.b16 %v1316, %v1312
        %v1637 = vpack.c.b16 %v1321, %v1317
        %v1638 = vpack.c.b16 %v1322, %v1318
        %v1639 = vpack.c.b16 %v1323, %v1319
        %v1640 = vpack.c.b16 %v1324, %v1320
        %v1641 = vpack.c.b16 %v1329, %v1325
        %v1642 = vpack.c.b16 %v1330, %v1326
        %v1643 = vpack.c.b16 %v1331, %v1327
        %v1644 = vpack.c.b16 %v1332, %v1328
        %v1645 = vpack.c.b16 %v1337, %v1333
        %v1646 = vpack.c.b16 %v1338, %v1334
        %v1647 = vpack.c.b16 %v1339, %v1335
        %v1648 = vpack.c.b16 %v1340, %v1336
        %v1649 = vpack.c.b16 %v1345, %v1341
        %v1650 = vpack.c.b16 %v1346, %v1342
        %v1651 = vpack.c.b16 %v1347, %v1343
        %v1652 = vpack.c.b16 %v1348, %v1344
        %v1653 = vpack.c.b16 %v1353, %v1349
        %v1654 = vpack.c.b16 %v1354, %v1350
        %v1655 = vpack.c.b16 %v1355, %v1351
        %v1656 = vpack.c.b16 %v1356, %v1352
        %v1657 = vpack.c.b16 %v1361, %v1357
        %v1658 = vpack.c.b16 %v1362, %v1358
        %v1659 = vpack.c.b16 %v1363, %v1359
        %v1660 = vpack.c.b16 %v1364, %v1360
        %v1661 = vpack.c.b16 %v1369, %v1365
        %v1662 = vpack.c.b16 %v1370, %v1366
        %v1663 = vpack.c.b16 %v1371, %v1367
        %v1664 = vpack.c.b16 %v1372, %v1368
        %v1665 = vpack.c.b16 %v1377, %v1373
        %v1666 = vpack.c.b16 %v1378, %v1374
        %v1667 = vpack.c.b16 %v1379, %v1375
        %v1668 = vpack.c.b16 %v1380, %v1376
        %v1669 = vpack.c.b16 %v1385, %v1381
        %v1670 = vpack.c.b16 %v1386, %v1382
        %v1671 = vpack.c.b16 %v1387, %v1383
        %v1672 = vpack.c.b16 %v1388, %v1384
        %v1673 = vpack.c.b16 %v1393, %v1389
        %v1674 = vpack.c.b16 %v1394, %v1390
        %v1675 = vpack.c.b16 %v1395, %v1391
        %v1676 = vpack.c.b16 %v1396, %v1392
        %v1677 = vpack.c.b16 %v1401, %v1397
        %v1678 = vpack.c.b16 %v1402, %v1398
        %v1679 = vpack.c.b16 %v1403, %v1399
        %v1680 = vpack.c.b16 %v1404, %v1400
        %v1681 = vpack.c.b16 %v1409, %v1405
        %v1682 = vpack.c.b16 %v1410, %v1406
        %v1683 = vpack.c.b16 %v1411, %v1407
        %v1684 = vpack.c.b16 %v1412, %v1408
        %v1685 = vpack.c.b16 %v1417, %v1413
        %v1686 = vpack.c.b16 %v1418, %v1414
        %v1687 = vpack.c.b16 %v1419, %v1415
        %v1688 = vpack.c.b16 %v1420, %v1416
        %v1689 = vpack.c.b16 %v1425, %v1421
        %v1690 = vpack.c.b16 %v1426, %v1422
        %v1691 = vpack.c.b16 %v1427, %v1423
        %v1692 = vpack.c.b16 %v1428, %v1424
        %v1693 = vpack.c.b16 %v1433, %v1429
        %v1694 = vpack.c.b16 %v1434, %v1430
        %v1695 = vpack.c.b16 %v1435, %v1431
        %v1696 = vpack.c.b16 %v1436, %v1432
        %v1697 = vpack.c.b16 %v1441, %v1437
        %v1698 = vpack.c.b16 %v1442, %v1438
        %v1699 = vpack.c.b16 %v1443, %v1439
        %v1700 = vpack.c.b16 %v1444, %v1440
        %1957 = vmatprep.subr.bf16.mxu0 %v1446
        %1958 = vmatpush1.bf16.msra.mxu0 %v1445
        %1959 = vmatprep.subr.bf16.mxu0 %v1450
        %1960 = vmatpush1.bf16.msra.mxu0 %v1449
        %1961 = vmatprep.subr.bf16.mxu0 %v1454
        %1962 = vmatpush1.bf16.msra.mxu0 %v1453
        %1963 = vmatprep.subr.bf16.mxu0 %v1458
        %1964 = vmatpush1.bf16.msra.mxu0 %v1457
        %1965 = vmatprep.subr.bf16.mxu0 %v1462
        %1966 = vmatpush1.bf16.msra.mxu0 %v1461
        %1967 = vmatprep.subr.bf16.mxu0 %v1466
        %1968 = vmatpush1.bf16.msra.mxu0 %v1465
        %1969 = vmatprep.subr.bf16.mxu0 %v1470
        %1970 = vmatpush1.bf16.msra.mxu0 %v1469
        %1971 = vmatprep.subr.bf16.mxu0 %v1474
        %1972 = vmatpush1.bf16.msra.mxu0 %v1473
        %1973 = vmatprep.subr.bf16.mxu0 %v1478
        %1974 = vmatpush1.bf16.msra.mxu0 %v1477
        %1975 = vmatprep.subr.bf16.mxu0 %v1482
        %1976 = vmatpush1.bf16.msra.mxu0 %v1481
        %1977 = vmatprep.subr.bf16.mxu0 %v1486
        %1978 = vmatpush1.bf16.msra.mxu0 %v1485
        %1979 = vmatprep.subr.bf16.mxu0 %v1490
        %1980 = vmatpush1.bf16.msra.mxu0 %v1489
        %1981 = vmatprep.subr.bf16.mxu0 %v1494
        %1982 = vmatpush1.bf16.msra.mxu0 %v1493
        %1983 = vmatprep.subr.bf16.mxu0 %v1498
        %1984 = vmatpush1.bf16.msra.mxu0 %v1497
        %1985 = vmatprep.subr.bf16.mxu0 %v1502
        %1986 = vmatpush1.bf16.msra.mxu0 %v1501
        %1987 = vmatprep.subr.bf16.mxu0 %v1506
        %1988 = vmatpush1.bf16.msra.mxu0 %v1505
        %1989 = vmatprep.mubr.bf16.mxu0 %v662
        %1990 = vmatmul.mubr.bf16.gmra.mrb[0].mxu0 %v661
        %v1991 = vpop.f32.mrb[0].mxu0
        %v1992 = vadd.f32 0.0, %v1991
        %v1993 = vpop.f32.mrb[0].mxu0
        %v1994 = vadd.f32 0.0, %v1993
        %v1995 = vpop.f32.mrb[0].mxu0
        %v1996 = vpop.f32.mrb[0].mxu0
        %1997 = vdwg.mxu0
        %1998 = vmatprep.subr.bf16.mxu0 %v1510
        %1999 = vmatpush1.bf16.msra.mxu0 %v1509
        %2000 = vmatprep.subr.bf16.mxu0 %v1514
        %2001 = vmatpush1.bf16.msra.mxu0 %v1513
        %2002 = vmatprep.subr.bf16.mxu0 %v1518
        %2003 = vmatpush1.bf16.msra.mxu0 %v1517
        %2004 = vmatprep.subr.bf16.mxu0 %v1522
        %2005 = vmatpush1.bf16.msra.mxu0 %v1521
        %2006 = vmatprep.subr.bf16.mxu0 %v1526
        %2007 = vmatpush1.bf16.msra.mxu0 %v1525
        %2008 = vmatprep.subr.bf16.mxu0 %v1530
        %2009 = vmatpush1.bf16.msra.mxu0 %v1529
        %2010 = vmatprep.subr.bf16.mxu0 %v1534
        %2011 = vmatpush1.bf16.msra.mxu0 %v1533
        %2012 = vmatprep.subr.bf16.mxu0 %v1538
        %2013 = vmatpush1.bf16.msra.mxu0 %v1537
        %2014 = vmatprep.subr.bf16.mxu0 %v1542
        %2015 = vmatpush1.bf16.msra.mxu0 %v1541
        %2016 = vmatprep.subr.bf16.mxu0 %v1546
        %2017 = vmatpush1.bf16.msra.mxu0 %v1545
        %2018 = vmatprep.subr.bf16.mxu0 %v1550
        %2019 = vmatpush1.bf16.msra.mxu0 %v1549
        %2020 = vmatprep.subr.bf16.mxu0 %v1554
        %2021 = vmatpush1.bf16.msra.mxu0 %v1553
        %2022 = vmatprep.subr.bf16.mxu0 %v1558
        %2023 = vmatpush1.bf16.msra.mxu0 %v1557
        %2024 = vmatprep.subr.bf16.mxu0 %v1562
        %2025 = vmatpush1.bf16.msra.mxu0 %v1561
        %2026 = vmatprep.subr.bf16.mxu0 %v1566
        %2027 = vmatpush1.bf16.msra.mxu0 %v1565
        %2028 = vmatprep.subr.bf16.mxu0 %v1570
        %2029 = vmatpush1.bf16.msra.mxu0 %v1569
        %2030 = vmatprep.mubr.bf16.mxu0 %v664
        %2031 = vmatmul.mubr.bf16.gmra.mrb[0].mxu0 %v663
        %v2032 = vpop.f32.mrb[0].mxu0
        %v2033 = vadd.f32 %v1992, %v2032
        %v2034 = vpop.f32.mrb[0].mxu0
        %v2035 = vadd.f32 %v1994, %v2034
        %v2036 = vpop.f32.mrb[0].mxu0
        %v2037 = vpop.f32.mrb[0].mxu0
        %2038 = vdwg.mxu0
        %2039 = vmatprep.subr.bf16.mxu0 %v1574
        %2040 = vmatpush1.bf16.msra.mxu0 %v1573
        %2041 = vmatprep.subr.bf16.mxu0 %v1578
        %2042 = vmatpush1.bf16.msra.mxu0 %v1577
        %2043 = vmatprep.subr.bf16.mxu0 %v1582
        %2044 = vmatpush1.bf16.msra.mxu0 %v1581
        %2045 = vmatprep.subr.bf16.mxu0 %v1586
        %2046 = vmatpush1.bf16.msra.mxu0 %v1585
        %2047 = vmatprep.subr.bf16.mxu0 %v1590
        %2048 = vmatpush1.bf16.msra.mxu0 %v1589
        %2049 = vmatprep.subr.bf16.mxu0 %v1594
        %2050 = vmatpush1.bf16.msra.mxu0 %v1593
        %2051 = vmatprep.subr.bf16.mxu0 %v1598
        %2052 = vmatpush1.bf16.msra.mxu0 %v1597
        %2053 = vmatprep.subr.bf16.mxu0 %v1602
        %2054 = vmatpush1.bf16.msra.mxu0 %v1601
        %2055 = vmatprep.subr.bf16.mxu0 %v1606
        %2056 = vmatpush1.bf16.msra.mxu0 %v1605
        %2057 = vmatprep.subr.bf16.mxu0 %v1610
        %2058 = vmatpush1.bf16.msra.mxu0 %v1609
        %2059 = vmatprep.subr.bf16.mxu0 %v1614
        %2060 = vmatpush1.bf16.msra.mxu0 %v1613
        %2061 = vmatprep.subr.bf16.mxu0 %v1618
        %2062 = vmatpush1.bf16.msra.mxu0 %v1617
        %2063 = vmatprep.subr.bf16.mxu0 %v1622
        %2064 = vmatpush1.bf16.msra.mxu0 %v1621
        %2065 = vmatprep.subr.bf16.mxu0 %v1626
        %2066 = vmatpush1.bf16.msra.mxu0 %v1625
        %2067 = vmatprep.subr.bf16.mxu0 %v1630
        %2068 = vmatpush1.bf16.msra.mxu0 %v1629
        %2069 = vmatprep.subr.bf16.mxu0 %v1634
        %2070 = vmatpush1.bf16.msra.mxu0 %v1633
        %2071 = vmatprep.mubr.bf16.mxu0 %v666
        %2072 = vmatmul.mubr.bf16.gmra.mrb[0].mxu0 %v665
        %v2073 = vpop.f32.mrb[0].mxu0
        %v2074 = vadd.f32 %v2033, %v2073
        %v2075 = vpop.f32.mrb[0].mxu0
        %v2076 = vadd.f32 %v2035, %v2075
        %v2077 = vpop.f32.mrb[0].mxu0
        %v2078 = vpop.f32.mrb[0].mxu0
        %2079 = vdwg.mxu0
        %2080 = vmatprep.subr.bf16.mxu0 %v1638
        %2081 = vmatpush1.bf16.msra.mxu0 %v1637
        %2082 = vmatprep.subr.bf16.mxu0 %v1642
        %2083 = vmatpush1.bf16.msra.mxu0 %v1641
        %2084 = vmatprep.subr.bf16.mxu0 %v1646
        %2085 = vmatpush1.bf16.msra.mxu0 %v1645
        %2086 = vmatprep.subr.bf16.mxu0 %v1650
        %2087 = vmatpush1.bf16.msra.mxu0 %v1649
        %2088 = vmatprep.subr.bf16.mxu0 %v1654
        %2089 = vmatpush1.bf16.msra.mxu0 %v1653
        %2090 = vmatprep.subr.bf16.mxu0 %v1658
        %2091 = vmatpush1.bf16.msra.mxu0 %v1657
        %2092 = vmatprep.subr.bf16.mxu0 %v1662
        %2093 = vmatpush1.bf16.msra.mxu0 %v1661
        %2094 = vmatprep.subr.bf16.mxu0 %v1666
        %2095 = vmatpush1.bf16.msra.mxu0 %v1665
        %2096 = vmatprep.subr.bf16.mxu0 %v1670
        %2097 = vmatpush1.bf16.msra.mxu0 %v1669
        %2098 = vmatprep.subr.bf16.mxu0 %v1674
        %2099 = vmatpush1.bf16.msra.mxu0 %v1673
        %2100 = vmatprep.subr.bf16.mxu0 %v1678
        %2101 = vmatpush1.bf16.msra.mxu0 %v1677
        %2102 = vmatprep.subr.bf16.mxu0 %v1682
        %2103 = vmatpush1.bf16.msra.mxu0 %v1681
        %2104 = vmatprep.subr.bf16.mxu0 %v1686
        %2105 = vmatpush1.bf16.msra.mxu0 %v1685
        %2106 = vmatprep.subr.bf16.mxu0 %v1690
        %2107 = vmatpush1.bf16.msra.mxu0 %v1689
        %2108 = vmatprep.subr.bf16.mxu0 %v1694
        %2109 = vmatpush1.bf16.msra.mxu0 %v1693
        %2110 = vmatprep.subr.bf16.mxu0 %v1698
        %2111 = vmatpush1.bf16.msra.mxu0 %v1697
        %2112 = vmatprep.mubr.bf16.mxu0 %v668
        %2113 = vmatmul.mubr.bf16.gmra.mrb[0].mxu0 %v667
        %v2114 = vpop.f32.mrb[0].mxu0
        %v2115 = vadd.f32 %v2074, %v2114
        %v2116 = vpop.f32.mrb[0].mxu0
        %v2117 = vadd.f32 %v2076, %v2116
        %v2118 = vpop.f32.mrb[0].mxu0
        %v2119 = vpop.f32.mrb[0].mxu0
        %2120 = vdwg.mxu0
        %2121 = vmatprep.subr.bf16.mxu0 %v1448
        %2122 = vmatpush1.bf16.msra.mxu0 %v1447
        %2123 = vmatprep.subr.bf16.mxu0 %v1452
        %2124 = vmatpush1.bf16.msra.mxu0 %v1451
        %2125 = vmatprep.subr.bf16.mxu0 %v1456
        %2126 = vmatpush1.bf16.msra.mxu0 %v1455
        %2127 = vmatprep.subr.bf16.mxu0 %v1460
        %2128 = vmatpush1.bf16.msra.mxu0 %v1459
        %2129 = vmatprep.subr.bf16.mxu0 %v1464
        %2130 = vmatpush1.bf16.msra.mxu0 %v1463
        %2131 = vmatprep.subr.bf16.mxu0 %v1468
        %2132 = vmatpush1.bf16.msra.mxu0 %v1467
        %2133 = vmatprep.subr.bf16.mxu0 %v1472
        %2134 = vmatpush1.bf16.msra.mxu0 %v1471
        %2135 = vmatprep.subr.bf16.mxu0 %v1476
        %2136 = vmatpush1.bf16.msra.mxu0 %v1475
        %2137 = vmatprep.subr.bf16.mxu0 %v1480
        %2138 = vmatpush1.bf16.msra.mxu0 %v1479
        %2139 = vmatprep.subr.bf16.mxu0 %v1484
        %2140 = vmatpush1.bf16.msra.mxu0 %v1483
        %2141 = vmatprep.subr.bf16.mxu0 %v1488
        %2142 = vmatpush1.bf16.msra.mxu0 %v1487
        %2143 = vmatprep.subr.bf16.mxu0 %v1492
        %2144 = vmatpush1.bf16.msra.mxu0 %v1491
        %2145 = vmatprep.subr.bf16.mxu0 %v1496
        %2146 = vmatpush1.bf16.msra.mxu0 %v1495
        %2147 = vmatprep.subr.bf16.mxu0 %v1500
        %2148 = vmatpush1.bf16.msra.mxu0 %v1499
        %2149 = vmatprep.subr.bf16.mxu0 %v1504
        %2150 = vmatpush1.bf16.msra.mxu0 %v1503
        %2151 = vmatprep.subr.bf16.mxu0 %v1508
        %2152 = vmatpush1.bf16.msra.mxu0 %v1507
        %2153 = vmatprep.mubr.bf16.mxu0 %v662
        %2154 = vmatmul.mubr.bf16.gmra.mrb[0].mxu0 %v661
        %v2155 = vpop.f32.mrb[0].mxu0
        %v2156 = vadd.f32 0.0, %v2155
        %v2157 = vpop.f32.mrb[0].mxu0
        %v2158 = vadd.f32 0.0, %v2157
        %v2159 = vpop.f32.mrb[0].mxu0
        %v2160 = vpop.f32.mrb[0].mxu0
        %2161 = vdwg.mxu0
        %2162 = vmatprep.subr.bf16.mxu0 %v1512
        %2163 = vmatpush1.bf16.msra.mxu0 %v1511
        %2164 = vmatprep.subr.bf16.mxu0 %v1516
        %2165 = vmatpush1.bf16.msra.mxu0 %v1515
        %2166 = vmatprep.subr.bf16.mxu0 %v1520
        %2167 = vmatpush1.bf16.msra.mxu0 %v1519
        %2168 = vmatprep.subr.bf16.mxu0 %v1524
        %2169 = vmatpush1.bf16.msra.mxu0 %v1523
        %2170 = vmatprep.subr.bf16.mxu0 %v1528
        %2171 = vmatpush1.bf16.msra.mxu0 %v1527
        %2172 = vmatprep.subr.bf16.mxu0 %v1532
        %2173 = vmatpush1.bf16.msra.mxu0 %v1531
        %2174 = vmatprep.subr.bf16.mxu0 %v1536
        %2175 = vmatpush1.bf16.msra.mxu0 %v1535
        %2176 = vmatprep.subr.bf16.mxu0 %v1540
        %2177 = vmatpush1.bf16.msra.mxu0 %v1539
        %2178 = vmatprep.subr.bf16.mxu0 %v1544
        %2179 = vmatpush1.bf16.msra.mxu0 %v1543
        %2180 = vmatprep.subr.bf16.mxu0 %v1548
        %2181 = vmatpush1.bf16.msra.mxu0 %v1547
        %2182 = vmatprep.subr.bf16.mxu0 %v1552
        %2183 = vmatpush1.bf16.msra.mxu0 %v1551
        %2184 = vmatprep.subr.bf16.mxu0 %v1556
        %2185 = vmatpush1.bf16.msra.mxu0 %v1555
        %2186 = vmatprep.subr.bf16.mxu0 %v1560
        %2187 = vmatpush1.bf16.msra.mxu0 %v1559
        %2188 = vmatprep.subr.bf16.mxu0 %v1564
        %2189 = vmatpush1.bf16.msra.mxu0 %v1563
        %2190 = vmatprep.subr.bf16.mxu0 %v1568
        %2191 = vmatpush1.bf16.msra.mxu0 %v1567
        %2192 = vmatprep.subr.bf16.mxu0 %v1572
        %2193 = vmatpush1.bf16.msra.mxu0 %v1571
        %2194 = vmatprep.mubr.bf16.mxu0 %v664
        %2195 = vmatmul.mubr.bf16.gmra.mrb[0].mxu0 %v663
        %v2196 = vpop.f32.mrb[0].mxu0
        %v2197 = vadd.f32 %v2156, %v2196
        %v2198 = vpop.f32.mrb[0].mxu0
        %v2199 = vadd.f32 %v2158, %v2198
        %v2200 = vpop.f32.mrb[0].mxu0
        %v2201 = vpop.f32.mrb[0].mxu0
        %2202 = vdwg.mxu0
        %2203 = vmatprep.subr.bf16.mxu0 %v1576
        %2204 = vmatpush1.bf16.msra.mxu0 %v1575
        %2205 = vmatprep.subr.bf16.mxu0 %v1580
        %2206 = vmatpush1.bf16.msra.mxu0 %v1579
        %2207 = vmatprep.subr.bf16.mxu0 %v1584
        %2208 = vmatpush1.bf16.msra.mxu0 %v1583
        %2209 = vmatprep.subr.bf16.mxu0 %v1588
        %2210 = vmatpush1.bf16.msra.mxu0 %v1587
        %2211 = vmatprep.subr.bf16.mxu0 %v1592
        %2212 = vmatpush1.bf16.msra.mxu0 %v1591
        %2213 = vmatprep.subr.bf16.mxu0 %v1596
        %2214 = vmatpush1.bf16.msra.mxu0 %v1595
        %2215 = vmatprep.subr.bf16.mxu0 %v1600
        %2216 = vmatpush1.bf16.msra.mxu0 %v1599
        %2217 = vmatprep.subr.bf16.mxu0 %v1604
        %2218 = vmatpush1.bf16.msra.mxu0 %v1603
        %2219 = vmatprep.subr.bf16.mxu0 %v1608
        %2220 = vmatpush1.bf16.msra.mxu0 %v1607
        %2221 = vmatprep.subr.bf16.mxu0 %v1612
        %2222 = vmatpush1.bf16.msra.mxu0 %v1611
        %2223 = vmatprep.subr.bf16.mxu0 %v1616
        %2224 = vmatpush1.bf16.msra.mxu0 %v1615
        %2225 = vmatprep.subr.bf16.mxu0 %v1620
        %2226 = vmatpush1.bf16.msra.mxu0 %v1619
        %2227 = vmatprep.subr.bf16.mxu0 %v1624
        %2228 = vmatpush1.bf16.msra.mxu0 %v1623
        %2229 = vmatprep.subr.bf16.mxu0 %v1628
        %2230 = vmatpush1.bf16.msra.mxu0 %v1627
        %2231 = vmatprep.subr.bf16.mxu0 %v1632
        %2232 = vmatpush1.bf16.msra.mxu0 %v1631
        %2233 = vmatprep.subr.bf16.mxu0 %v1636
        %2234 = vmatpush1.bf16.msra.mxu0 %v1635
        %2235 = vmatprep.mubr.bf16.mxu0 %v666
        %2236 = vmatmul.mubr.bf16.gmra.mrb[0].mxu0 %v665
        %v2237 = vpop.f32.mrb[0].mxu0
        %v2238 = vadd.f32 %v2197, %v2237
        %v2239 = vpop.f32.mrb[0].mxu0
        %v2240 = vadd.f32 %v2199, %v2239
        %v2241 = vpop.f32.mrb[0].mxu0
        %v2242 = vpop.f32.mrb[0].mxu0
        %2243 = vdwg.mxu0
        %2244 = vmatprep.subr.bf16.mxu0 %v1640
        %2245 = vmatpush1.bf16.msra.mxu0 %v1639
        %2246 = vmatprep.subr.bf16.mxu0 %v1644
        %2247 = vmatpush1.bf16.msra.mxu0 %v1643
        %2248 = vmatprep.subr.bf16.mxu0 %v1648
        %2249 = vmatpush1.bf16.msra.mxu0 %v1647
        %2250 = vmatprep.subr.bf16.mxu0 %v1652
        %2251 = vmatpush1.bf16.msra.mxu0 %v1651
        %2252 = vmatprep.subr.bf16.mxu0 %v1656
        %2253 = vmatpush1.bf16.msra.mxu0 %v1655
        %2254 = vmatprep.subr.bf16.mxu0 %v1660
        %2255 = vmatpush1.bf16.msra.mxu0 %v1659
        %2256 = vmatprep.subr.bf16.mxu0 %v1664
        %2257 = vmatpush1.bf16.msra.mxu0 %v1663
        %2258 = vmatprep.subr.bf16.mxu0 %v1668
        %2259 = vmatpush1.bf16.msra.mxu0 %v1667
        %2260 = vmatprep.subr.bf16.mxu0 %v1672
        %2261 = vmatpush1.bf16.msra.mxu0 %v1671
        %2262 = vmatprep.subr.bf16.mxu0 %v1676
        %2263 = vmatpush1.bf16.msra.mxu0 %v1675
        %2264 = vmatprep.subr.bf16.mxu0 %v1680
        %2265 = vmatpush1.bf16.msra.mxu0 %v1679
        %2266 = vmatprep.subr.bf16.mxu0 %v1684
        %2267 = vmatpush1.bf16.msra.mxu0 %v1683
        %2268 = vmatprep.subr.bf16.mxu0 %v1688
        %2269 = vmatpush1.bf16.msra.mxu0 %v1687
        %2270 = vmatprep.subr.bf16.mxu0 %v1692
        %2271 = vmatpush1.bf16.msra.mxu0 %v1691
        %2272 = vmatprep.subr.bf16.mxu0 %v1696
        %2273 = vmatpush1.bf16.msra.mxu0 %v1695
        %2274 = vmatprep.subr.bf16.mxu0 %v1700
        %2275 = vmatpush1.bf16.msra.mxu0 %v1699
        %2276 = vmatprep.mubr.bf16.mxu0 %v668
        %2277 = vmatmul.mubr.bf16.gmra.mrb[0].mxu0 %v667
        %v2278 = vpop.f32.mrb[0].mxu0
        %v2279 = vadd.f32 %v2238, %v2278
        %v2280 = vpop.f32.mrb[0].mxu0
        %v2281 = vadd.f32 %v2240, %v2280
        %v2282 = vpop.f32.mrb[0].mxu0
        %v2283 = vpop.f32.mrb[0].mxu0
        %2284 = vdwg.mxu0
        %p2285 = scmp.eq.s32.totalorder %s28, 0
        // Predicated region
        $region33: #{decoder_forward.11} parent=27 // pred_check
          %p2286 = pneg %p2285
        $region34: #{decoder_forward.11} parent=27 // pred_check_branch
          %2288 = sbr.rel (%p2286) target = $region36
        $region35: #{decoder_forward.11} parent=27 // pred_region
          %2289 = vst [vmem:[%s361] sm:$0xff] %v2115
          %2290 = vst [vmem:[%s361 + $0x8] sm:$0xff] %v2117
          %2291 = vst [vmem:[%s361 + $0x10] sm:$0xff] %v2279
          %2292 = vst [vmem:[%s361 + $0x18] sm:$0xff] %v2281
        $region36: #{decoder_forward.11} parent=27 // pred_fallthru
          _
        %p2293 = scmp.gt.s32.totalorder %s28, 0
        %p2294 = scmp.lt.s32.totalorder %s28, 1
        %p2295 = pnand %p2293, %p2294
        %p2296 = pneg %p2295
        // Predicated region
        $region37: #{decoder_forward.11} parent=27 // pred_check
          _
        $region38: #{decoder_forward.11} parent=27 // pred_check_branch
          %2298 = sbr.rel (%p2295) target = $region40
        $region39: #{decoder_forward.11} parent=27 // pred_region
          %v2299 = vld [vmem:[%s361] sm:$0xff]
          %v2300 = vld [vmem:[%s361 + $0x8] sm:$0xff]
          %v2301 = vld [vmem:[%s361 + $0x10] sm:$0xff]
          %v2302 = vld [vmem:[%s361 + $0x18] sm:$0xff]
          %v2303 = vadd.f32 %v2299, %v2115
          %v2304 = vadd.f32 %v2300, %v2117
          %v2305 = vadd.f32 %v2301, %v2279
          %v2306 = vadd.f32 %v2302, %v2281
          %2307 = vst [vmem:[%s361] sm:$0xff] %v2303
          %2308 = vst [vmem:[%s361 + $0x8] sm:$0xff] %v2304
          %2309 = vst [vmem:[%s361 + $0x10] sm:$0xff] %v2305
          %2310 = vst [vmem:[%s361 + $0x18] sm:$0xff] %v2306
        $region40: #{decoder_forward.11} parent=27 // pred_fallthru
          _
        %p2311 = scmp.eq.s32.totalorder %s28, 1
        // Predicated region
        $region41: #{decoder_forward.11} parent=27 // pred_check
          %p2312 = pneg %p2311
        $region42: #{decoder_forward.11} parent=27 // pred_check_branch
          %2314 = sbr.rel (%p2312) target = $region44
        $region43: #{decoder_forward.11} parent=27 // pred_region
          %v2315 = vld [vmem:[%s361] sm:$0xff]
          %v2316 = vld [vmem:[%s361 + $0x8] sm:$0xff]
          %v2317 = vld [vmem:[%s361 + $0x10] sm:$0xff]
          %v2318 = vld [vmem:[%s361 + $0x18] sm:$0xff]
          %v2319 = vadd.f32 %v2315, %v2115
          %v2320 = vadd.f32 %v2316, %v2117
          %v2321 = vadd.f32 %v2317, %v2279
          %v2322 = vadd.f32 %v2318, %v2281
          %2323 = vst [vmem:[%s361] sm:$0xff] %v2319
          %2324 = vst [vmem:[%s361 + $0x8] sm:$0xff] %v2320
          %2325 = vst [vmem:[%s361 + $0x10] sm:$0xff] %v2321
          %2326 = vst [vmem:[%s361 + $0x18] sm:$0xff] %v2322
          %v2327 = vrot.slane %v2319, 4
          %v2328 = vadd.f32 %v2319, %v2327
          %v2329 = vrot.slane %v2328, 2
          %v2330 = vadd.f32 %v2328, %v2329
          %v2331 = vrot.slane %v2330, 1
          %v2332 = vadd.f32 %v2330, %v2331
          %v2333 = vrot.slane %v2320, 4
          %v2334 = vadd.f32 %v2320, %v2333
          %v2335 = vrot.slane %v2334, 2
          %v2336 = vadd.f32 %v2334, %v2335
          %v2337 = vrot.slane %v2336, 1
          %v2338 = vadd.f32 %v2336, %v2337
          %v2339 = vrot.slane %v2321, 4
          %v2340 = vadd.f32 %v2321, %v2339
          %v2341 = vrot.slane %v2340, 2
          %v2342 = vadd.f32 %v2340, %v2341
          %v2343 = vrot.slane %v2342, 1
          %v2344 = vadd.f32 %v2342, %v2343
          %v2345 = vrot.slane %v2322, 4
          %v2346 = vadd.f32 %v2322, %v2345
          %v2347 = vrot.slane %v2346, 2
          %v2348 = vadd.f32 %v2346, %v2347
          %v2349 = vrot.slane %v2348, 1
          %v2350 = vadd.f32 %v2348, %v2349
          %v2355 = vcombine.low %v2332, %v2338
          %v2356 = vcombine.low %v2344, %v2350
          %v2358 = vunpack.c.l.s4 1966171168
          %v2359 = vunpack.c.0.s8 %v2358
          %v2360 = vlaneseq
          %v2361 = vshrl.u32 %v2360, 7
          %v2362 = vsub.s32 %v2359, %v2361
          %v2363 = vrot.slane %v2355, %v2362
          %v2365 = vunpack.c.l.s4 1966171168
          %v2366 = vunpack.c.0.s8 %v2365
          %v2367 = vlaneseq
          %v2368 = vshrl.u32 %v2367, 7
          %v2369 = vsub.s32 %v2366, %v2368
          %v2370 = vrot.slane %v2356, %v2369
          %v2371 = vcombine.low %v2363, %v2370
          %v2373 = vunpack.c.l.s4 1966171168
          %v2374 = vunpack.c.0.s8 %v2373
          %v2375 = vlaneseq
          %v2376 = vshrl.u32 %v2375, 7
          %v2377 = vsub.s32 %v2374, %v2376
          %v2378 = vrot.slane %v2371, %v2377
          %v2380 = vlaneseq
          %vm2381 = vcmp.ge.s32.totalorder %v2380, 0
          %vm2382 = vcmp.lt.s32.totalorder %v2380, 512
          %vm2383 = vmand %vm2381, %vm2382
          %2384 = vst.msk [vmem:[%s374] sm:$0xf] %vm2383, %v2378
          %v2385 = vmul.f32 %v2319, %v2319
          %v2386 = vmul.f32 %v2320, %v2320
          %v2387 = vmul.f32 %v2321, %v2321
          %v2388 = vmul.f32 %v2322, %v2322
          %v2389 = vrot.slane %v2385, 4
          %v2390 = vadd.f32 %v2385, %v2389
          %v2391 = vrot.slane %v2390, 2
          %v2392 = vadd.f32 %v2390, %v2391
          %v2393 = vrot.slane %v2392, 1
          %v2394 = vadd.f32 %v2392, %v2393
          %v2395 = vrot.slane %v2386, 4
          %v2396 = vadd.f32 %v2386, %v2395
          %v2397 = vrot.slane %v2396, 2
          %v2398 = vadd.f32 %v2396, %v2397
          %v2399 = vrot.slane %v2398, 1
          %v2400 = vadd.f32 %v2398, %v2399
          %v2401 = vrot.slane %v2387, 4
          %v2402 = vadd.f32 %v2387, %v2401
          %v2403 = vrot.slane %v2402, 2
          %v2404 = vadd.f32 %v2402, %v2403
          %v2405 = vrot.slane %v2404, 1
          %v2406 = vadd.f32 %v2404, %v2405
          %v2407 = vrot.slane %v2388, 4
          %v2408 = vadd.f32 %v2388, %v2407
          %v2409 = vrot.slane %v2408, 2
          %v2410 = vadd.f32 %v2408, %v2409
          %v2411 = vrot.slane %v2410, 1
          %v2412 = vadd.f32 %v2410, %v2411
          %v2417 = vcombine.low %v2394, %v2400
          %v2418 = vcombine.low %v2406, %v2412
          %v2420 = vunpack.c.l.s4 1966171168
          %v2421 = vunpack.c.0.s8 %v2420
          %v2422 = vlaneseq
          %v2423 = vshrl.u32 %v2422, 7
          %v2424 = vsub.s32 %v2421, %v2423
          %v2425 = vrot.slane %v2417, %v2424
          %v2427 = vunpack.c.l.s4 1966171168
          %v2428 = vunpack.c.0.s8 %v2427
          %v2429 = vlaneseq
          %v2430 = vshrl.u32 %v2429, 7
          %v2431 = vsub.s32 %v2428, %v2430
          %v2432 = vrot.slane %v2418, %v2431
          %v2433 = vcombine.low %v2425, %v2432
          %v2435 = vunpack.c.l.s4 1966171168
          %v2436 = vunpack.c.0.s8 %v2435
          %v2437 = vlaneseq
          %v2438 = vshrl.u32 %v2437, 7
          %v2439 = vsub.s32 %v2436, %v2438
          %v2440 = vrot.slane %v2433, %v2439
          %2442 = vst.msk [vmem:[%s387] sm:$0xf] %vm2383, %v2440
        $region44: #{decoder_forward.11} parent=27 // pred_fallthru
          _
        %s2443 = smul.u32 4, %s27
        %p2444 = scmp.lt.s32.totalorder %s25, 3
        %s2445 = scalar_select %p2444, %s25, 3
        %p2446 = scmp.lt.s32.totalorder %s26, 0
        %s2447 = scalar_select %p2446, %s26, 0
        %p2448 = scmp.lt.s32.totalorder %s2443, 3
        %s2449 = scalar_select %p2448, %s2443, 3
        %s2450 = smul.addr %s2447, 4
        %s2451 = sadd.s32 %s2449, %s2450
        %s2452 = smul.addr %s2445, 4
        %s2453 = sadd.s32 %s2451, %s2452
        %s2454 = smul.addr %s2453, 8
        %s2455 = scalar_lea.vmem %s2, %s2454
        %s2456 = smul.u32 4, %s27
        %p2457 = scmp.lt.s32.totalorder %s25, 3
        %s2458 = scalar_select %p2457, %s25, 3
        %p2459 = scmp.lt.s32.totalorder %s26, 0
        %s2460 = scalar_select %p2459, %s26, 0
        %p2461 = scmp.lt.s32.totalorder %s2456, 3
        %s2462 = scalar_select %p2461, %s2456, 3
        %s2463 = smul.addr %s2460, 4
        %s2464 = sadd.s32 %s2462, %s2463
        %s2465 = smul.addr %s2458, 4
        %s2466 = sadd.s32 %s2464, %s2465
        %s2467 = scalar_lea.vmem %s3, %s2466
        %s2468 = smul.u32 4, %s27
        %p2469 = scmp.lt.s32.totalorder %s25, 3
        %s2470 = scalar_select %p2469, %s25, 3
        %p2471 = scmp.lt.s32.totalorder %s26, 0
        %s2472 = scalar_select %p2471, %s26, 0
        %p2473 = scmp.lt.s32.totalorder %s2468, 3
        %s2474 = scalar_select %p2473, %s2468, 3
        %s2475 = smul.addr %s2472, 4
        %s2476 = sadd.s32 %s2474, %s2475
        %s2477 = smul.addr %s2470, 4
        %s2478 = sadd.s32 %s2476, %s2477
        %s2479 = scalar_lea.vmem %s4, %s2478
        // Predicated region
        $region45: #{decoder_forward.11} parent=27 // pred_check
          %p2480 = pneg %p127
        $region46: #{decoder_forward.11} parent=27 // pred_check_branch
          %2482 = sbr.rel (%p2480) target = $region48
        $region47: #{decoder_forward.11} parent=27 // pred_region
          %s2483 = smul.u32 4, %s27
        $region48: #{decoder_forward.11} parent=27 // pred_fallthru
          _
        // Predicated region
        $region49: #{decoder_forward.11} parent=27 // pred_check
          %p2484 = pneg %p157
        $region50: #{decoder_forward.11} parent=27 // pred_check_branch
          %2486 = sbr.rel (%p2484) target = $region52
        $region51: #{decoder_forward.11} parent=27 // pred_region
          %s2487 = smul.u32 4, %s27
        $region52: #{decoder_forward.11} parent=27 // pred_fallthru
          _
        // Predicated region
        $region53: #{decoder_forward.11} parent=27 // pred_check
          %p2488 = pneg %p187
        $region54: #{decoder_forward.11} parent=27 // pred_check_branch
          %2490 = sbr.rel (%p2488) target = $region56
        $region55: #{decoder_forward.11} parent=27 // pred_region
          %s2491 = smul.u32 4, %s27
        $region56: #{decoder_forward.11} parent=27 // pred_fallthru
          _
      $region28: #{decoder_forward.11} parent=5 // pred_fallthru
        _
      %p2492 = scmp.le.s32.totalorder 2, %s14
      // Predicated region
      $region57: #{decoder_forward.11} parent=5 // pred_check
        %p2493 = pneg %p2492
      $region58: #{decoder_forward.11} parent=5 // pred_check_branch
        %2495 = sbr.rel (%p2493) target = $region60
      $region59: #{decoder_forward.11} parent=5 // pred_region
        %s2496 = ssub.s32 %s14, 2
        // Predicated region
        $region61: #{decoder_forward.11} parent=59 // pred_check
          %p2497 = pneg %p133
        $region62: #{decoder_forward.11} parent=59 // pred_check_branch
          %2499 = sbr.rel (%p2497) target = $region64
        $region63: #{decoder_forward.11} parent=59 // pred_region
          %s2500 = smul.u32 4, %s31
          %p2501 = scmp.lt.s32.totalorder %s29, 3
          %s2502 = scalar_select %p2501, %s29, 3
          %p2503 = scmp.lt.s32.totalorder %s30, 0
          %s2504 = scalar_select %p2503, %s30, 0
          %p2505 = scmp.lt.s32.totalorder %s2500, 3
          %s2506 = scalar_select %p2505, %s2500, 3
          %s2507 = smul.addr %s2504, 4
          %s2508 = sadd.s32 %s2506, %s2507
          %s2509 = smul.addr %s2502, 4
          %s2510 = sadd.s32 %s2508, %s2509
          %s2511 = smul.addr %s2510, 8
          %s2512 = scalar_lea.vmem %s2, %s2511
        $region64: #{decoder_forward.11} parent=59 // pred_fallthru
          _
        // Predicated region
        $region65: #{decoder_forward.11} parent=59 // pred_check
          %p2513 = pneg %p163
        $region66: #{decoder_forward.11} parent=59 // pred_check_branch
          %2515 = sbr.rel (%p2513) target = $region68
        $region67: #{decoder_forward.11} parent=59 // pred_region
          %s2516 = smul.u32 4, %s31
          %p2517 = scmp.lt.s32.totalorder %s29, 3
          %s2518 = scalar_select %p2517, %s29, 3
          %p2519 = scmp.lt.s32.totalorder %s30, 0
          %s2520 = scalar_select %p2519, %s30, 0
          %p2521 = scmp.lt.s32.totalorder %s2516, 3
          %s2522 = scalar_select %p2521, %s2516, 3
          %s2523 = smul.addr %s2520, 4
          %s2524 = sadd.s32 %s2522, %s2523
          %s2525 = smul.addr %s2518, 4
          %s2526 = sadd.s32 %s2524, %s2525
          %s2527 = scalar_lea.vmem %s3, %s2526
        $region68: #{decoder_forward.11} parent=59 // pred_fallthru
          _
        // Predicated region
        $region69: #{decoder_forward.11} parent=59 // pred_check
          %p2528 = pneg %p193
        $region70: #{decoder_forward.11} parent=59 // pred_check_branch
          %2530 = sbr.rel (%p2528) target = $region72
        $region71: #{decoder_forward.11} parent=59 // pred_region
          %s2531 = smul.u32 4, %s31
          %p2532 = scmp.lt.s32.totalorder %s29, 3
          %s2533 = scalar_select %p2532, %s29, 3
          %p2534 = scmp.lt.s32.totalorder %s30, 0
          %s2535 = scalar_select %p2534, %s30, 0
          %p2536 = scmp.lt.s32.totalorder %s2531, 3
          %s2537 = scalar_select %p2536, %s2531, 3
          %s2538 = smul.addr %s2535, 4
          %s2539 = sadd.s32 %s2537, %s2538
          %s2540 = smul.addr %s2533, 4
          %s2541 = sadd.s32 %s2539, %s2540
          %s2542 = scalar_lea.vmem %s4, %s2541
        $region72: #{decoder_forward.11} parent=59 // pred_fallthru
          _
      $region60: #{decoder_forward.11} parent=5 // pred_fallthru
        _
    $region6: #{decoder_forward.11} parent=1 // loop_footer
      %s18 = sadd.s32 1, %s14
    $region7: #{decoder_forward.11} parent=1 // loop_footer_branch
      %13 = sbr.rel target = $region3
    $region8: #{decoder_forward.11} parent=1 // loop_exit
      _
    %2543 = vsyncpa [#allocation3], 1
    %s2544 = scalar_lea.sflag [#allocation3], 1
    %2545 = vsyncpa %s2544, 1

// kernel: decoder_forward.14
$region0: #{decoder_forward.14}
  #allocation0 [shape = 'u32[]', space=smem, size = 0x4, offset = 0x4, fixed_abs, tag = 'smem constant byte address 0x4 - core index']
  #allocation1 [shape = 'u32[144,128]{1,0:T(1,128)}', space=vmem, size = 0x12000, scoped, tag = 'internal scratch']
  %s0 = inlined_call_operand.vmem [shape: f32[128,256], index: 0, kind: input, shape index: {}]
  %s1 = inlined_call_operand.vmem [shape: f32[4,256], index: 1, kind: input, shape index: {}]
  %s2 = inlined_call_operand.vmem [shape: f32[4,256], index: 2, kind: input, shape index: {}]
  %s3 = inlined_call_operand.vmem [shape: f32[1,256], index: 3, kind: input, shape index: {}]
  %s4 = inlined_call_operand.vmem [shape: f32[1,256], index: 4, kind: input, shape index: {}]
  %s5 = inlined_call_operand.vmem [shape: bf16[128,256], index: 5, kind: output, shape index: {}]
  %s6 = sld [smem:[#allocation0]]
  $region30: #{decoder_forward.14} parent=0
    _
  %s8 = ssub.s32 1, %s6
  %s9 = scalar_select 0, %s8, %s6
  // Predicated region
  $region2: #{decoder_forward.14} parent=0 // pred_check
    _
  $region3: #{decoder_forward.14} parent=0 // pred_check_branch
    %11 = sbr.rel (0) target = $region5
  $region4: #{decoder_forward.14} parent=0 // pred_region
    _
  $region5: #{decoder_forward.14} parent=0 // pred_fallthru
    _
  // Predicated region
  $region6: #{decoder_forward.14} parent=0 // pred_check
    _
  $region7: #{decoder_forward.14} parent=0 // pred_check_branch
    %13 = sbr.rel (0) target = $region9
  $region8: #{decoder_forward.14} parent=0 // pred_region
    _
  $region9: #{decoder_forward.14} parent=0 // pred_fallthru
    _
  // Predicated region
  $region10: #{decoder_forward.14} parent=0 // pred_check
    _
  $region11: #{decoder_forward.14} parent=0 // pred_check_branch
    %15 = sbr.rel (0) target = $region13
  $region12: #{decoder_forward.14} parent=0 // pred_region
    _
  $region13: #{decoder_forward.14} parent=0 // pred_fallthru
    _
  // Predicated region
  $region14: #{decoder_forward.14} parent=0 // pred_check
    _
  $region15: #{decoder_forward.14} parent=0 // pred_check_branch
    %17 = sbr.rel (0) target = $region17
  $region16: #{decoder_forward.14} parent=0 // pred_region
    _
  $region17: #{decoder_forward.14} parent=0 // pred_fallthru
    _
  // Predicated region
  $region18: #{decoder_forward.14} parent=0 // pred_check
    _
  $region19: #{decoder_forward.14} parent=0 // pred_check_branch
    %19 = sbr.rel (0) target = $region21
  $region20: #{decoder_forward.14} parent=0 // pred_region
    _
  $region21: #{decoder_forward.14} parent=0 // pred_fallthru
    _
  %v20 = vld [vmem:[%s1] sm:$0xff]
  %v22 = vcombine.high %v20, %v20
  %vm24 = vcmask 1043456
  %v25 = vsel %vm24, %v20, 0.0
  %v26 = vrot.slane %v25, 4
  %v27 = vadd.f32 %v25, %v26
  %v28 = vrot.slane %v27, 2
  %v29 = vadd.f32 %v27, %v28
  %v30 = vrot.slane %v29, 1
  %v31 = vadd.f32 %v29, %v30
  %v32 = vsel %vm24, %v22, 0.0
  %v33 = vrot.slane %v32, 4
  %v34 = vadd.f32 %v32, %v33
  %v35 = vrot.slane %v34, 2
  %v36 = vadd.f32 %v34, %v35
  %v37 = vrot.slane %v36, 1
  %v38 = vadd.f32 %v36, %v37
  %v39 = vmul.f32 %v31, 0.0078125
  %v40 = vmul.f32 %v38, 0.0078125
  %v41 = vld [vmem:[%s2] sm:$0xff]
  %v43 = vcombine.high %v41, %v41
  %v45 = vsel %vm24, %v41, 0.0
  %v46 = vrot.slane %v45, 4
  %v47 = vadd.f32 %v45, %v46
  %v48 = vrot.slane %v47, 2
  %v49 = vadd.f32 %v47, %v48
  %v50 = vrot.slane %v49, 1
  %v51 = vadd.f32 %v49, %v50
  %v52 = vsel %vm24, %v43, 0.0
  %v53 = vrot.slane %v52, 4
  %v54 = vadd.f32 %v52, %v53
  %v55 = vrot.slane %v54, 2
  %v56 = vadd.f32 %v54, %v55
  %v57 = vrot.slane %v56, 1
  %v58 = vadd.f32 %v56, %v57
  %v59 = vmul.f32 %v51, 0.0078125
  %v60 = vmul.f32 %v58, 0.0078125
  %v61 = vmul.f32 %v39, %v39
  %v62 = vmul.f32 %v40, %v40
  %v63 = vsub.f32 %v59, %v61
  %v64 = vsub.f32 %v60, %v62
  %v65 = vadd.f32 %v63, 1e-05
  %v66 = vadd.f32 %v64, 1e-05
  %v67 = vrsqrt.pop %v65
  %v68 = vrsqrt.pop %v66
  %v69 = vld [vmem:[%s3] sm:$0x3]
  %v72 = vcombine.low %v67, %v68
  %v74 = vunpack.c.l.s4 1966171168
  %v75 = vunpack.c.0.s8 %v74
  %v76 = vlaneseq
  %v77 = vshrl.u32 %v76, 7
  %v78 = vsub.s32 %v75, %v77
  %v79 = vrot.slane %v72, %v78
  %v81 = vunpack.c.l.s4 1966171168
  %v82 = vunpack.c.0.s8 %v81
  %v83 = vlaneseq
  %v84 = vshrl.u32 %v83, 7
  %v85 = vsub.s32 %v82, %v84
  %v86 = vrot.slane %v79, %v85
  %v88 = vmul.f32 %v69, %v86
  %v89 = vld [vmem:[%s4] sm:$0x3]
  %v91 = vlaneseq
  %v92 = vshrl.u32 %v91, 7
  %v93 = vsub.s32 0, %v92
  %v94 = vrot.slane %v88, %v93
  %v95 = vlaneseq
  %v96 = vshrl.u32 %v95, 7
  %v97 = vsub.s32 1, %v96
  %v98 = vrot.slane %v88, %v97
  %v101 = vmul.f32 %v39, %v94
  %v102 = vmul.f32 %v40, %v98
  %v105 = vcombine.low %v101, %v102
  %v107 = vunpack.c.l.s4 1966171168
  %v108 = vunpack.c.0.s8 %v107
  %v109 = vlaneseq
  %v110 = vshrl.u32 %v109, 7
  %v111 = vsub.s32 %v108, %v110
  %v112 = vrot.slane %v105, %v111
  %v114 = vunpack.c.l.s4 1966171168
  %v115 = vunpack.c.0.s8 %v114
  %v116 = vlaneseq
  %v117 = vshrl.u32 %v116, 7
  %v118 = vsub.s32 %v115, %v117
  %v119 = vrot.slane %v112, %v118
  %v121 = vsub.f32 %v89, %v119
  %v122 = vld [vmem:[%s0] sm:$0xff]
  %v123 = vld [vmem:[%s0 + $0x8] sm:$0xff]
  %v124 = vld [vmem:[%s0 + $0x10] sm:$0xff]
  %v125 = vld [vmem:[%s0 + $0x18] sm:$0xff]
  %v126 = vld [vmem:[%s0 + $0x20] sm:$0xff]
  %v127 = vld [vmem:[%s0 + $0x28] sm:$0xff]
  %v128 = vld [vmem:[%s0 + $0x30] sm:$0xff]
  %v129 = vld [vmem:[%s0 + $0x38] sm:$0xff]
  %v130 = vld [vmem:[%s0 + $0x40] sm:$0xff]
  %v131 = vld [vmem:[%s0 + $0x48] sm:$0xff]
  %v132 = vld [vmem:[%s0 + $0x50] sm:$0xff]
  %v133 = vld [vmem:[%s0 + $0x58] sm:$0xff]
  %v134 = vld [vmem:[%s0 + $0x60] sm:$0xff]
  %v135 = vld [vmem:[%s0 + $0x68] sm:$0xff]
  %v136 = vld [vmem:[%s0 + $0x70] sm:$0xff]
  %v137 = vld [vmem:[%s0 + $0x78] sm:$0xff]
  %v138 = vld [vmem:[%s0 + $0x80] sm:$0xff]
  %v139 = vld [vmem:[%s0 + $0x88] sm:$0xff]
  %v140 = vld [vmem:[%s0 + $0x90] sm:$0xff]
  %v141 = vld [vmem:[%s0 + $0x98] sm:$0xff]
  %v142 = vld [vmem:[%s0 + $0xa0] sm:$0xff]
  %v143 = vld [vmem:[%s0 + $0xa8] sm:$0xff]
  %v144 = vld [vmem:[%s0 + $0xb0] sm:$0xff]
  %v145 = vld [vmem:[%s0 + $0xb8] sm:$0xff]
  %v146 = vld [vmem:[%s0 + $0xc0] sm:$0xff]
  %v147 = vld [vmem:[%s0 + $0xc8] sm:$0xff]
  %v148 = vld [vmem:[%s0 + $0xd0] sm:$0xff]
  %v149 = vld [vmem:[%s0 + $0xd8] sm:$0xff]
  %v150 = vld [vmem:[%s0 + $0xe0] sm:$0xff]
  %v151 = vld [vmem:[%s0 + $0xe8] sm:$0xff]
  %v152 = vld [vmem:[%s0 + $0xf0] sm:$0xff]
  %v153 = vld [vmem:[%s0 + $0xf8] sm:$0xff]
  %v154 = vmul.f32 %v122, %v94
  %v155 = vmul.f32 %v123, %v98
  %v156 = vmul.f32 %v124, %v94
  %v157 = vmul.f32 %v125, %v98
  %v158 = vmul.f32 %v126, %v94
  %v159 = vmul.f32 %v127, %v98
  %v160 = vmul.f32 %v128, %v94
  %v161 = vmul.f32 %v129, %v98
  %v162 = vmul.f32 %v130, %v94
  %v163 = vmul.f32 %v131, %v98
  %v164 = vmul.f32 %v132, %v94
  %v165 = vmul.f32 %v133, %v98
  %v166 = vmul.f32 %v134, %v94
  %v167 = vmul.f32 %v135, %v98
  %v168 = vmul.f32 %v136, %v94
  %v169 = vmul.f32 %v137, %v98
  %v170 = vmul.f32 %v138, %v94
  %v171 = vmul.f32 %v139, %v98
  %v172 = vmul.f32 %v140, %v94
  %v173 = vmul.f32 %v141, %v98
  %v174 = vmul.f32 %v142, %v94
  %v175 = vmul.f32 %v143, %v98
  %v176 = vmul.f32 %v144, %v94
  %v177 = vmul.f32 %v145, %v98
  %v178 = vmul.f32 %v146, %v94
  %v179 = vmul.f32 %v147, %v98
  %v180 = vmul.f32 %v148, %v94
  %v181 = vmul.f32 %v149, %v98
  %v182 = vmul.f32 %v150, %v94
  %v183 = vmul.f32 %v151, %v98
  %v184 = vmul.f32 %v152, %v94
  %v185 = vmul.f32 %v153, %v98
  %v187 = vlaneseq
  %v188 = vshrl.u32 %v187, 7
  %v189 = vsub.s32 0, %v188
  %v190 = vrot.slane %v121, %v189
  %v191 = vlaneseq
  %v192 = vshrl.u32 %v191, 7
  %v193 = vsub.s32 1, %v192
  %v194 = vrot.slane %v121, %v193
  %v197 = vadd.f32 %v154, %v190
  %v198 = vadd.f32 %v155, %v194
  %v199 = vadd.f32 %v156, %v190
  %v200 = vadd.f32 %v157, %v194
  %v201 = vadd.f32 %v158, %v190
  %v202 = vadd.f32 %v159, %v194
  %v203 = vadd.f32 %v160, %v190
  %v204 = vadd.f32 %v161, %v194
  %v205 = vadd.f32 %v162, %v190
  %v206 = vadd.f32 %v163, %v194
  %v207 = vadd.f32 %v164, %v190
  %v208 = vadd.f32 %v165, %v194
  %v209 = vadd.f32 %v166, %v190
  %v210 = vadd.f32 %v167, %v194
  %v211 = vadd.f32 %v168, %v190
  %v212 = vadd.f32 %v169, %v194
  %v213 = vadd.f32 %v170, %v190
  %v214 = vadd.f32 %v171, %v194
  %v215 = vadd.f32 %v172, %v190
  %v216 = vadd.f32 %v173, %v194
  %v217 = vadd.f32 %v174, %v190
  %v218 = vadd.f32 %v175, %v194
  %v219 = vadd.f32 %v176, %v190
  %v220 = vadd.f32 %v177, %v194
  %v221 = vadd.f32 %v178, %v190
  %v222 = vadd.f32 %v179, %v194
  %v223 = vadd.f32 %v180, %v190
  %v224 = vadd.f32 %v181, %v194
  %v225 = vadd.f32 %v182, %v190
  %v226 = vadd.f32 %v183, %v194
  %v227 = vadd.f32 %v184, %v190
  %v228 = vadd.f32 %v185, %v194
  %v229 = vmax.f32 %v197, 0.0
  %v230 = vmax.f32 %v198, 0.0
  %v231 = vmax.f32 %v199, 0.0
  %v232 = vmax.f32 %v200, 0.0
  %v233 = vmax.f32 %v201, 0.0
  %v234 = vmax.f32 %v202, 0.0
  %v235 = vmax.f32 %v203, 0.0
  %v236 = vmax.f32 %v204, 0.0
  %v237 = vmax.f32 %v205, 0.0
  %v238 = vmax.f32 %v206, 0.0
  %v239 = vmax.f32 %v207, 0.0
  %v240 = vmax.f32 %v208, 0.0
  %v241 = vmax.f32 %v209, 0.0
  %v242 = vmax.f32 %v210, 0.0
  %v243 = vmax.f32 %v211, 0.0
  %v244 = vmax.f32 %v212, 0.0
  %v245 = vmax.f32 %v213, 0.0
  %v246 = vmax.f32 %v214, 0.0
  %v247 = vmax.f32 %v215, 0.0
  %v248 = vmax.f32 %v216, 0.0
  %v249 = vmax.f32 %v217, 0.0
  %v250 = vmax.f32 %v218, 0.0
  %v251 = vmax.f32 %v219, 0.0
  %v252 = vmax.f32 %v220, 0.0
  %v253 = vmax.f32 %v221, 0.0
  %v254 = vmax.f32 %v222, 0.0
  %v255 = vmax.f32 %v223, 0.0
  %v256 = vmax.f32 %v224, 0.0
  %v257 = vmax.f32 %v225, 0.0
  %v258 = vmax.f32 %v226, 0.0
  %v259 = vmax.f32 %v227, 0.0
  %v260 = vmax.f32 %v228, 0.0
  %v261 = vpack.c.bf16 %v231, %v229
  %v262 = vpack.c.bf16 %v232, %v230
  %v263 = vpack.c.bf16 %v235, %v233
  %v264 = vpack.c.bf16 %v236, %v234
  %v265 = vpack.c.bf16 %v239, %v237
  %v266 = vpack.c.bf16 %v240, %v238
  %v267 = vpack.c.bf16 %v243, %v241
  %v268 = vpack.c.bf16 %v244, %v242
  %v269 = vpack.c.bf16 %v247, %v245
  %v270 = vpack.c.bf16 %v248, %v246
  %v271 = vpack.c.bf16 %v251, %v249
  %v272 = vpack.c.bf16 %v252, %v250
  %v273 = vpack.c.bf16 %v255, %v253
  %v274 = vpack.c.bf16 %v256, %v254
  %v275 = vpack.c.bf16 %v259, %v257
  %v276 = vpack.c.bf16 %v260, %v258
  %v293 = vunpack.c.l.b16 %v261
  %v294 = vunpack.c.l.b16 %v262
  %v295 = vunpack.c.h.b16 %v261
  %v296 = vunpack.c.h.b16 %v262
  %v297 = vunpack.c.l.b16 %v263
  %v298 = vunpack.c.l.b16 %v264
  %v299 = vunpack.c.h.b16 %v263
  %v300 = vunpack.c.h.b16 %v264
  %v301 = vunpack.c.l.b16 %v265
  %v302 = vunpack.c.l.b16 %v266
  %v303 = vunpack.c.h.b16 %v265
  %v304 = vunpack.c.h.b16 %v266
  %v305 = vunpack.c.l.b16 %v267
  %v306 = vunpack.c.l.b16 %v268
  %v307 = vunpack.c.h.b16 %v267
  %v308 = vunpack.c.h.b16 %v268
  %v309 = vunpack.c.l.b16 %v269
  %v310 = vunpack.c.l.b16 %v270
  %v311 = vunpack.c.h.b16 %v269
  %v312 = vunpack.c.h.b16 %v270
  %v313 = vunpack.c.l.b16 %v271
  %v314 = vunpack.c.l.b16 %v272
  %v315 = vunpack.c.h.b16 %v271
  %v316 = vunpack.c.h.b16 %v272
  %v317 = vunpack.c.l.b16 %v273
  %v318 = vunpack.c.l.b16 %v274
  %v319 = vunpack.c.h.b16 %v273
  %v320 = vunpack.c.h.b16 %v274
  %v321 = vunpack.c.l.b16 %v275
  %v322 = vunpack.c.l.b16 %v276
  %v323 = vunpack.c.h.b16 %v275
  %v324 = vunpack.c.h.b16 %v276
  %v325 = vpack.c.b16 %v294, %v293
  %v326 = vpack.c.b16 %v296, %v295
  %v327 = vpack.c.b16 %v298, %v297
  %v328 = vpack.c.b16 %v300, %v299
  %v329 = vpack.c.b16 %v302, %v301
  %v330 = vpack.c.b16 %v304, %v303
  %v331 = vpack.c.b16 %v306, %v305
  %v332 = vpack.c.b16 %v308, %v307
  %v333 = vpack.c.b16 %v310, %v309
  %v334 = vpack.c.b16 %v312, %v311
  %v335 = vpack.c.b16 %v314, %v313
  %v336 = vpack.c.b16 %v316, %v315
  %v337 = vpack.c.b16 %v318, %v317
  %v338 = vpack.c.b16 %v320, %v319
  %v339 = vpack.c.b16 %v322, %v321
  %v340 = vpack.c.b16 %v324, %v323
  %357 = vst [vmem:[%s5] sm:$0xff] %v325
  %358 = vst [vmem:[%s5 + $0x8] sm:$0xff] %v326
  %359 = vst [vmem:[%s5 + $0x10] sm:$0xff] %v327
  %360 = vst [vmem:[%s5 + $0x18] sm:$0xff] %v328
  %361 = vst [vmem:[%s5 + $0x20] sm:$0xff] %v329
  %362 = vst [vmem:[%s5 + $0x28] sm:$0xff] %v330
  %363 = vst [vmem:[%s5 + $0x30] sm:$0xff] %v331
  %364 = vst [vmem:[%s5 + $0x38] sm:$0xff] %v332
  %365 = vst [vmem:[%s5 + $0x40] sm:$0xff] %v333
  %366 = vst [vmem:[%s5 + $0x48] sm:$0xff] %v334
  %367 = vst [vmem:[%s5 + $0x50] sm:$0xff] %v335
  %368 = vst [vmem:[%s5 + $0x58] sm:$0xff] %v336
  %369 = vst [vmem:[%s5 + $0x60] sm:$0xff] %v337
  %370 = vst [vmem:[%s5 + $0x68] sm:$0xff] %v338
  %371 = vst [vmem:[%s5 + $0x70] sm:$0xff] %v339
  %372 = vst [vmem:[%s5 + $0x78] sm:$0xff] %v340
  // Predicated region
  $region22: #{decoder_forward.14} parent=0 // pred_check
    _
  $region23: #{decoder_forward.14} parent=0 // pred_check_branch
    %374 = sbr.rel (0) target = $region25
  $region24: #{decoder_forward.14} parent=0 // pred_region
    _
  $region25: #{decoder_forward.14} parent=0 // pred_fallthru
    _
  // Predicated region
  $region26: #{decoder_forward.14} parent=0 // pred_check
    _
  $region27: #{decoder_forward.14} parent=0 // pred_check_branch
    %376 = sbr.rel (0) target = $region29
  $region28: #{decoder_forward.14} parent=0 // pred_region
    _
  $region29: #{decoder_forward.14} parent=0 // pred_fallthru
    _

// kernel: decoder_forward.13
$region0: #{decoder_forward.13}
  #allocation0 [shape = 'u32[]', space=smem, size = 0x4, offset = 0x4, fixed_abs, tag = 'smem constant byte address 0x4 - core index']
  #allocation1 [shape = 'u32[144,128]{1,0:T(1,128)}', space=vmem, size = 0x12000, scoped, tag = 'internal scratch']
  %s0 = inlined_call_operand.vmem [shape: bf16[4,32,2048], index: 0, kind: input, shape index: {}]
  %s1 = inlined_call_operand.vmem [shape: bf16[4,2048,256], index: 1, kind: input, shape index: {}]
  %s2 = inlined_call_operand.vmem [shape: f32[4,32,256], index: 2, kind: output, shape index: {0}]
  %s3 = inlined_call_operand.vmem [shape: f32[4,1,1,256], index: 3, kind: output, shape index: {1}]
  %s4 = inlined_call_operand.vmem [shape: f32[4,1,1,256], index: 4, kind: output, shape index: {2}]
  %5 = xla_tuple %s2, %s3, %s4
  %s6 = sld [smem:[#allocation0]]
  $region92: #{decoder_forward.13} parent=0
    _
  %s8 = ssub.s32 1, %s6
  %s9 = scalar_select 0, %s8, %s6
  $region1: #{decoder_forward.13} parent=0
    #allocation2 [shape = 'u8[131072]{0}', space=vmem, size = 0x20000, scoped, tag = 'input window, operand 0']
    loop: start=0, step=1, limit=10
    $region2: #{decoder_forward.13} parent=1 // loop_pre_header
      _
    $region3: #{decoder_forward.13} parent=1 // loop_header
      %s11 = sphi 0, %s15
      %p12 = scmp.ge.s32.totalorder %s11, 10
      %s18 = sphi 0, %s44
      %s19 = sphi 0, %s40
      %s20 = sphi 0, %s36
      %s21 = sphi 0, %s32
      %s22 = sphi 0, %s18
      %s23 = sphi 0, %s19
      %s24 = sphi 0, %s20
      %s25 = sphi 0, %s21
      %s26 = sphi 0, %s22
      %s27 = sphi 0, %s23
      %s28 = sphi 0, %s24
      %s29 = sphi 0, %s25
      %s51 = sphi 0, %s53
      %s54 = sphi 0, %s51
      %s55 = sphi 0, %s54
      %s71 = sphi 0, %s55
      %s81 = sphi 0, %s83
      %s84 = sphi 0, %s81
      %s85 = sphi 0, %s84
      %s101 = sphi 0, %s85
      %s111 = sphi 0, %s113
      %s114 = sphi 0, %s111
      %s115 = sphi 0, %s114
      %s131 = sphi 0, %s115
      %s141 = sphi 0, %s143
      %s144 = sphi 0, %s141
      %s145 = sphi 0, %s144
      %s161 = sphi 0, %s145
      %s171 = sphi 0, %s173
      %s174 = sphi 0, %s171
      %s175 = sphi 0, %s174
      %s191 = sphi 0, %s175
    $region4: #{decoder_forward.13} parent=1 // loop_header_branch
      %14 = sbr.rel (%p12) target = $region8
    $region5: #{decoder_forward.13} parent=1 // loop_body
      %s16 = ssub.s32 %s11, 1
      %s17 = ssub.s32 %s11, 2
      %s30 = sadd.s32 1, %s21
      %p31 = scmp.ge.s32.totalorder %s30, 2
      %s32 = scalar_select %p31, 0, %s30
      %s33 = sadd.s32 1, %s20
      %s34 = scalar_select %p31, %s33, %s20
      %p35 = scmp.ge.s32.totalorder %s34, 1
      %s36 = scalar_select %p35, 0, %s34
      %s37 = sadd.s32 1, %s19
      %s38 = scalar_select %p35, %s37, %s19
      %p39 = scmp.ge.s32.totalorder %s38, 1
      %s40 = scalar_select %p39, 0, %s38
      %s41 = sadd.s32 1, %s18
      %s42 = scalar_select %p39, %s41, %s18
      %p43 = scmp.ge.s32.totalorder %s42, 4
      %s44 = scalar_select %p43, 0, %s42
      %s45 = ssub.s32 %s18, %s44
      %s46 = ssub.s32 %s19, %s40
      %s47 = sor.u32 %s45, %s46
      %s48 = ssub.s32 %s21, %s32
      %s49 = sor.u32 %s47, %s48
      %p50 = scmp.eq.s32.totalorder %s49, 0
      %s52 = sadd.s32 %s51, 1
      %s53 = scalar_select %p50, %s51, %s52
      %p56 = pneg %p50
      %p57 = scmp.eq.s32.totalorder %s11, 7
      %p58 = por %p56, %p57
      %p59 = scmp.ne.s32.totalorder %s51, %s54
      %p60 = scmp.eq.s32.totalorder %s11, 0
      %p61 = por %p59, %p60
      %p62 = scmp.ne.s32.totalorder %s51, %s54
      %p63 = scmp.eq.s32.totalorder %s16, 7
      %p64 = por %p62, %p63
      %p65 = scmp.ne.s32.totalorder %s54, %s55
      %p66 = scmp.eq.s32.totalorder %s16, 0
      %p67 = por %p65, %p66
      %p68 = scmp.ne.s32.totalorder %s54, %s55
      %p69 = scmp.eq.s32.totalorder %s17, 7
      %p70 = por %p68, %p69
      %p72 = scmp.ne.s32.totalorder %s55, %s71
      %p73 = scmp.eq.s32.totalorder %s17, 0
      %p74 = por %p72, %p73
      %s75 = ssub.s32 %s18, %s44
      %s76 = ssub.s32 %s21, %s32
      %s77 = sor.u32 %s75, %s76
      %s78 = ssub.s32 %s20, %s36
      %s79 = sor.u32 %s77, %s78
      %p80 = scmp.eq.s32.totalorder %s79, 0
      %s82 = sadd.s32 %s81, 1
      %s83 = scalar_select %p80, %s81, %s82
      %p86 = pneg %p80
      %p87 = scmp.eq.s32.totalorder %s11, 7
      %p88 = por %p86, %p87
      %p89 = scmp.ne.s32.totalorder %s81, %s84
      %p90 = scmp.eq.s32.totalorder %s11, 0
      %p91 = por %p89, %p90
      %p92 = scmp.ne.s32.totalorder %s81, %s84
      %p93 = scmp.eq.s32.totalorder %s16, 7
      %p94 = por %p92, %p93
      %p95 = scmp.ne.s32.totalorder %s84, %s85
      %p96 = scmp.eq.s32.totalorder %s16, 0
      %p97 = por %p95, %p96
      %p98 = scmp.ne.s32.totalorder %s84, %s85
      %p99 = scmp.eq.s32.totalorder %s17, 7
      %p100 = por %p98, %p99
      %p102 = scmp.ne.s32.totalorder %s85, %s101
      %p103 = scmp.eq.s32.totalorder %s17, 0
      %p104 = por %p102, %p103
      %s105 = ssub.s32 %s18, %s44
      %s106 = ssub.s32 %s19, %s40
      %s107 = sor.u32 %s105, %s106
      %s108 = ssub.s32 %s20, %s36
      %s109 = sor.u32 %s107, %s108
      %p110 = scmp.eq.s32.totalorder %s109, 0
      %s112 = sadd.s32 %s111, 1
      %s113 = scalar_select %p110, %s111, %s112
      %p116 = pneg %p110
      %p117 = scmp.eq.s32.totalorder %s11, 7
      %p118 = por %p116, %p117
      %p119 = scmp.ne.s32.totalorder %s111, %s114
      %p120 = scmp.eq.s32.totalorder %s11, 0
      %p121 = por %p119, %p120
      %p122 = scmp.ne.s32.totalorder %s111, %s114
      %p123 = scmp.eq.s32.totalorder %s16, 7
      %p124 = por %p122, %p123
      %p125 = scmp.ne.s32.totalorder %s114, %s115
      %p126 = scmp.eq.s32.totalorder %s16, 0
      %p127 = por %p125, %p126
      %p128 = scmp.ne.s32.totalorder %s114, %s115
      %p129 = scmp.eq.s32.totalorder %s17, 7
      %p130 = por %p128, %p129
      %p132 = scmp.ne.s32.totalorder %s115, %s131
      %p133 = scmp.eq.s32.totalorder %s17, 0
      %p134 = por %p132, %p133
      %s135 = ssub.s32 %s18, %s44
      %s136 = ssub.s32 %s19, %s40
      %s137 = sor.u32 %s135, %s136
      %s138 = ssub.s32 %s20, %s36
      %s139 = sor.u32 %s137, %s138
      %p140 = scmp.eq.s32.totalorder %s139, 0
      %s142 = sadd.s32 %s141, 1
      %s143 = scalar_select %p140, %s141, %s142
      %p146 = pneg %p140
      %p147 = scmp.eq.s32.totalorder %s11, 7
      %p148 = por %p146, %p147
      %p149 = scmp.ne.s32.totalorder %s141, %s144
      %p150 = scmp.eq.s32.totalorder %s11, 0
      %p151 = por %p149, %p150
      %p152 = scmp.ne.s32.totalorder %s141, %s144
      %p153 = scmp.eq.s32.totalorder %s16, 7
      %p154 = por %p152, %p153
      %p155 = scmp.ne.s32.totalorder %s144, %s145
      %p156 = scmp.eq.s32.totalorder %s16, 0
      %p157 = por %p155, %p156
      %p158 = scmp.ne.s32.totalorder %s144, %s145
      %p159 = scmp.eq.s32.totalorder %s17, 7
      %p160 = por %p158, %p159
      %p162 = scmp.ne.s32.totalorder %s145, %s161
      %p163 = scmp.eq.s32.totalorder %s17, 0
      %p164 = por %p162, %p163
      %s165 = ssub.s32 %s18, %s44
      %s166 = ssub.s32 %s19, %s40
      %s167 = sor.u32 %s165, %s166
      %s168 = ssub.s32 %s20, %s36
      %s169 = sor.u32 %s167, %s168
      %p170 = scmp.eq.s32.totalorder %s169, 0
      %s172 = sadd.s32 %s171, 1
      %s173 = scalar_select %p170, %s171, %s172
      %p176 = pneg %p170
      %p177 = scmp.eq.s32.totalorder %s11, 7
      %p178 = por %p176, %p177
      %p179 = scmp.ne.s32.totalorder %s171, %s174
      %p180 = scmp.eq.s32.totalorder %s11, 0
      %p181 = por %p179, %p180
      %p182 = scmp.ne.s32.totalorder %s171, %s174
      %p183 = scmp.eq.s32.totalorder %s16, 7
      %p184 = por %p182, %p183
      %p185 = scmp.ne.s32.totalorder %s174, %s175
      %p186 = scmp.eq.s32.totalorder %s16, 0
      %p187 = por %p185, %p186
      %p188 = scmp.ne.s32.totalorder %s174, %s175
      %p189 = scmp.eq.s32.totalorder %s17, 7
      %p190 = por %p188, %p189
      %p192 = scmp.ne.s32.totalorder %s175, %s191
      %p193 = scmp.eq.s32.totalorder %s17, 0
      %p194 = por %p192, %p193
      %p195 = scmp.le.s32.totalorder 1, %s11
      %p196 = scmp.lt.s32.totalorder %s11, 9
      %p197 = pnand %p195, %p196
      %p198 = pneg %p197
      // Predicated region
      $region9: #{decoder_forward.13} parent=5 // pred_check
        _
      $region10: #{decoder_forward.13} parent=5 // pred_check_branch
        %200 = sbr.rel (%p197) target = $region12
      $region11: #{decoder_forward.13} parent=5 // pred_region
        %s201 = ssub.s32 %s11, 1
      $region12: #{decoder_forward.13} parent=5 // pred_fallthru
        _
      %p202 = scmp.lt.s32.totalorder %s11, 8
      // Predicated region
      $region13: #{decoder_forward.13} parent=5 // pred_check
        %p203 = pneg %p202
      $region14: #{decoder_forward.13} parent=5 // pred_check_branch
        %205 = sbr.rel (%p203) target = $region16
      $region15: #{decoder_forward.13} parent=5 // pred_region
        // Predicated region
        $region17: #{decoder_forward.13} parent=15 // pred_check
          %p206 = pneg %p61
        $region18: #{decoder_forward.13} parent=15 // pred_check_branch
          %208 = sbr.rel (%p206) target = $region20
        $region19: #{decoder_forward.13} parent=15 // pred_region
          %s209 = sand.u32 %s51, 1
          %s210 = sand.u32 %s51, 1
          %s211 = smul.addr %s210, 128
          %s212 = scalar_lea.vmem [#allocation2], %s211
          %s213 = smul.u32 4, %s19
          %s214 = smul.u32 8, %s21
          %s215 = smul.addr %s213, 16
          %s216 = sadd.s32 %s214, %s215
          %s217 = smul.addr %s18, 64
          %s218 = sadd.s32 %s216, %s217
          %s219 = smul.addr %s218, 4
          %s220 = scalar_lea.vmem %s0, %s219
          // Predicated region
          $region21: #{decoder_forward.13} parent=19 // pred_check
            _
          $region22: #{decoder_forward.13} parent=19 // pred_check_branch
            %222 = sbr.rel (0) target = $region24
          $region23: #{decoder_forward.13} parent=19 // pred_region
            // Predicated region
            $region25: #{decoder_forward.13} parent=23 // pred_check
              _
            $region26: #{decoder_forward.13} parent=23 // pred_check_branch
              %224 = sbr.rel (0) target = $region28
            $region27: #{decoder_forward.13} parent=23 // pred_region
              loop: start=0, step=1, limit=1
              $region29: #{decoder_forward.13} parent=27 // loop_pre_header
                _
              $region30: #{decoder_forward.13} parent=27 // loop_header
                %s226 = sphi 0, %s230
                %p227 = scmp.ge.s32.totalorder %s226, 1
                %s231 = sphi %s220, %s220
                %s232 = sphi %s212, %s212
              $region31: #{decoder_forward.13} parent=27 // loop_header_branch
                %229 = sbr.rel (%p227) target = $region35
              $region32: #{decoder_forward.13} parent=27 // loop_body
                %v233 = vld [vmem:[%s231] sm:$0xff]
                %234 = vst [vmem:[%s232] sm:$0xff] %v233
                %v235 = vld [vmem:[%s231 + $0x8] sm:$0xff]
                %236 = vst [vmem:[%s232 + $0x8] sm:$0xff] %v235
                %v237 = vld [vmem:[%s231 + $0x10] sm:$0xff]
                %238 = vst [vmem:[%s232 + $0x10] sm:$0xff] %v237
                %v239 = vld [vmem:[%s231 + $0x18] sm:$0xff]
                %240 = vst [vmem:[%s232 + $0x18] sm:$0xff] %v239
                %v241 = vld [vmem:[%s231 + $0x40] sm:$0xff]
                %242 = vst [vmem:[%s232 + $0x20] sm:$0xff] %v241
                %v243 = vld [vmem:[%s231 + $0x48] sm:$0xff]
                %244 = vst [vmem:[%s232 + $0x28] sm:$0xff] %v243
                %v245 = vld [vmem:[%s231 + $0x50] sm:$0xff]
                %246 = vst [vmem:[%s232 + $0x30] sm:$0xff] %v245
                %v247 = vld [vmem:[%s231 + $0x58] sm:$0xff]
                %248 = vst [vmem:[%s232 + $0x38] sm:$0xff] %v247
                %v249 = vld [vmem:[%s231 + $0x80] sm:$0xff]
                %250 = vst [vmem:[%s232 + $0x40] sm:$0xff] %v249
                %v251 = vld [vmem:[%s231 + $0x88] sm:$0xff]
                %252 = vst [vmem:[%s232 + $0x48] sm:$0xff] %v251
                %v253 = vld [vmem:[%s231 + $0x90] sm:$0xff]
                %254 = vst [vmem:[%s232 + $0x50] sm:$0xff] %v253
                %v255 = vld [vmem:[%s231 + $0x98] sm:$0xff]
                %256 = vst [vmem:[%s232 + $0x58] sm:$0xff] %v255
                %v257 = vld [vmem:[%s231 + $0xc0] sm:$0xff]
                %258 = vst [vmem:[%s232 + $0x60] sm:$0xff] %v257
                %v259 = vld [vmem:[%s231 + $0xc8] sm:$0xff]
                %260 = vst [vmem:[%s232 + $0x68] sm:$0xff] %v259
                %v261 = vld [vmem:[%s231 + $0xd0] sm:$0xff]
                %262 = vst [vmem:[%s232 + $0x70] sm:$0xff] %v261
                %v263 = vld [vmem:[%s231 + $0xd8] sm:$0xff]
                %264 = vst [vmem:[%s232 + $0x78] sm:$0xff] %v263
              $region33: #{decoder_forward.13} parent=27 // loop_footer
                %s230 = sadd.s32 1, %s226
              $region34: #{decoder_forward.13} parent=27 // loop_footer_branch
                %225 = sbr.rel target = $region30
              $region35: #{decoder_forward.13} parent=27 // loop_exit
                _
            $region28: #{decoder_forward.13} parent=23 // pred_fallthru
              _
            // Predicated region
            $region36: #{decoder_forward.13} parent=23 // pred_check
              _
            $region37: #{decoder_forward.13} parent=23 // pred_check_branch
              %266 = sbr.rel target = $region39
            $region38: #{decoder_forward.13} parent=23 // pred_region
              _
            $region39: #{decoder_forward.13} parent=23 // pred_fallthru
              _
          $region24: #{decoder_forward.13} parent=19 // pred_fallthru
            _
          %267 = vnop
        $region20: #{decoder_forward.13} parent=15 // pred_fallthru
          _
        // Predicated region
        $region40: #{decoder_forward.13} parent=15 // pred_check
          %p268 = pneg %p91
        $region41: #{decoder_forward.13} parent=15 // pred_check_branch
          %270 = sbr.rel (%p268) target = $region43
        $region42: #{decoder_forward.13} parent=15 // pred_region
          %s271 = smul.u32 128, %s21
          %s272 = smul.u32 2, %s20
          %p273 = scmp.lt.s32.totalorder %s18, 3
          %s274 = scalar_select %p273, %s18, 3
          %p275 = scmp.lt.s32.totalorder %s271, 255
          %s276 = scalar_select %p275, %s271, 255
          %p277 = scmp.lt.s32.totalorder %s272, 1
          %s278 = scalar_select %p277, %s272, 1
          %s279 = smul.addr %s276, 2
          %s280 = sadd.s32 %s278, %s279
          %s281 = smul.addr %s274, 512
          %s282 = sadd.s32 %s280, %s281
          %s283 = smul.addr %s282, 4
          %s284 = scalar_lea.vmem %s1, %s283
          %s285 = smul.u32 128, %s21
          %s286 = smul.u32 2, %s20
        $region43: #{decoder_forward.13} parent=15 // pred_fallthru
          _
      $region16: #{decoder_forward.13} parent=5 // pred_fallthru
        _
      %p287 = scmp.le.s32.totalorder 1, %s11
      %p288 = scmp.lt.s32.totalorder %s11, 9
      %p289 = pnand %p287, %p288
      %p290 = pneg %p289
      // Predicated region
      $region44: #{decoder_forward.13} parent=5 // pred_check
        _
      $region45: #{decoder_forward.13} parent=5 // pred_check_branch
        %292 = sbr.rel (%p289) target = $region47
      $region46: #{decoder_forward.13} parent=5 // pred_region
        %s293 = ssub.s32 %s11, 1
        %s294 = sand.u32 %s54, 1
        %s295 = sand.u32 %s54, 1
        %s296 = smul.addr %s295, 128
        %s297 = scalar_lea.vmem [#allocation2], %s296
        // Predicated region
        $region48: #{decoder_forward.13} parent=46 // pred_check
          %p298 = pneg %p67
        $region49: #{decoder_forward.13} parent=46 // pred_check_branch
          %300 = sbr.rel (%p298) target = $region51
        $region50: #{decoder_forward.13} parent=46 // pred_region
          _
        $region51: #{decoder_forward.13} parent=46 // pred_fallthru
          _
        %s301 = sand.u32 %s54, 1
        %s302 = sand.u32 %s54, 1
        %s303 = smul.addr %s302, 128
        %s304 = scalar_lea.vmem [#allocation2], %s303
        %p305 = pneg %p67
        %p306 = pneg %p64
        %s307 = smul.u32 128, %s25
        %s308 = smul.u32 2, %s24
        %p309 = scmp.lt.s32.totalorder %s22, 3
        %s310 = scalar_select %p309, %s22, 3
        %p311 = scmp.lt.s32.totalorder %s307, 255
        %s312 = scalar_select %p311, %s307, 255
        %p313 = scmp.lt.s32.totalorder %s308, 1
        %s314 = scalar_select %p313, %s308, 1
        %s315 = smul.addr %s312, 2
        %s316 = sadd.s32 %s314, %s315
        %s317 = smul.addr %s310, 512
        %s318 = sadd.s32 %s316, %s317
        %s319 = smul.addr %s318, 4
        %s320 = scalar_lea.vmem %s1, %s319
        %p321 = pneg %p97
        %p322 = pneg %p94
        %p323 = pneg %p127
        %p324 = pneg %p124
        %s325 = smul.u32 4, %s23
        %s326 = smul.u32 2, %s24
        %p327 = scmp.lt.s32.totalorder %s22, 3
        %s328 = scalar_select %p327, %s22, 3
        %p329 = scmp.lt.s32.totalorder %s325, 3
        %s330 = scalar_select %p329, %s325, 3
        %p331 = scmp.lt.s32.totalorder %s326, 1
        %s332 = scalar_select %p331, %s326, 1
        %s333 = smul.addr %s330, 2
        %s334 = sadd.s32 %s332, %s333
        %s335 = smul.addr %s328, 8
        %s336 = sadd.s32 %s334, %s335
        %s337 = smul.addr %s336, 8
        %s338 = scalar_lea.vmem %s2, %s337
        %p339 = pneg %p157
        %p340 = pneg %p154
        %s341 = smul.u32 2, %s24
        %p342 = scmp.lt.s32.totalorder %s22, 3
        %s343 = scalar_select %p342, %s22, 3
        %p344 = scmp.lt.s32.totalorder %s23, 0
        %s345 = scalar_select %p344, %s23, 0
        %p346 = scmp.lt.s32.totalorder %s341, 1
        %s347 = scalar_select %p346, %s341, 1
        %s348 = smul.addr %s345, 2
        %s349 = sadd.s32 %s347, %s348
        %s350 = smul.addr %s343, 2
        %s351 = sadd.s32 %s349, %s350
        %s352 = scalar_lea.vmem %s3, %s351
        %p353 = pneg %p187
        %p354 = pneg %p184
        %s355 = smul.u32 2, %s24
        %p356 = scmp.lt.s32.totalorder %s22, 3
        %s357 = scalar_select %p356, %s22, 3
        %p358 = scmp.lt.s32.totalorder %s23, 0
        %s359 = scalar_select %p358, %s23, 0
        %p360 = scmp.lt.s32.totalorder %s355, 1
        %s361 = scalar_select %p360, %s355, 1
        %s362 = smul.addr %s359, 2
        %s363 = sadd.s32 %s361, %s362
        %s364 = smul.addr %s357, 2
        %s365 = sadd.s32 %s363, %s364
        %s366 = scalar_lea.vmem %s4, %s365
        %s367 = smul.u32 4, %s23
        %s368 = smul.u32 8, %s25
        %s369 = smul.u32 128, %s25
        %s370 = smul.u32 2, %s24
        %p371 = scmp.lt.s32.totalorder %s22, 3
        %s372 = scalar_select %p371, %s22, 3
        %p373 = scmp.lt.s32.totalorder %s369, 255
        %s374 = scalar_select %p373, %s369, 255
        %p375 = scmp.lt.s32.totalorder %s370, 1
        %s376 = scalar_select %p375, %s370, 1
        %s377 = smul.addr %s374, 2
        %s378 = sadd.s32 %s376, %s377
        %s379 = smul.addr %s372, 512
        %s380 = sadd.s32 %s378, %s379
        %s381 = smul.addr %s380, 4
        %s382 = scalar_lea.vmem %s1, %s381
        %s383 = smul.u32 128, %s25
        %s384 = smul.u32 2, %s24
        %s385 = smul.u32 4, %s23
        %s386 = smul.u32 2, %s24
        %p387 = scmp.lt.s32.totalorder %s22, 3
        %s388 = scalar_select %p387, %s22, 3
        %p389 = scmp.lt.s32.totalorder %s385, 3
        %s390 = scalar_select %p389, %s385, 3
        %p391 = scmp.lt.s32.totalorder %s386, 1
        %s392 = scalar_select %p391, %s386, 1
        %s393 = smul.addr %s390, 2
        %s394 = sadd.s32 %s392, %s393
        %s395 = smul.addr %s388, 8
        %s396 = sadd.s32 %s394, %s395
        %s397 = smul.addr %s396, 8
        %s398 = scalar_lea.vmem %s2, %s397
        %s399 = smul.u32 4, %s23
        %s400 = smul.u32 2, %s24
        %s401 = smul.u32 2, %s24
        %p402 = scmp.lt.s32.totalorder %s22, 3
        %s403 = scalar_select %p402, %s22, 3
        %p404 = scmp.lt.s32.totalorder %s23, 0
        %s405 = scalar_select %p404, %s23, 0
        %p406 = scmp.lt.s32.totalorder %s401, 1
        %s407 = scalar_select %p406, %s401, 1
        %s408 = smul.addr %s405, 2
        %s409 = sadd.s32 %s407, %s408
        %s410 = smul.addr %s403, 2
        %s411 = sadd.s32 %s409, %s410
        %s412 = scalar_lea.vmem %s3, %s411
        %s413 = smul.u32 2, %s24
        %s414 = smul.u32 2, %s24
        %p415 = scmp.lt.s32.totalorder %s22, 3
        %s416 = scalar_select %p415, %s22, 3
        %p417 = scmp.lt.s32.totalorder %s23, 0
        %s418 = scalar_select %p417, %s23, 0
        %p419 = scmp.lt.s32.totalorder %s414, 1
        %s420 = scalar_select %p419, %s414, 1
        %s421 = smul.addr %s418, 2
        %s422 = sadd.s32 %s420, %s421
        %s423 = smul.addr %s416, 2
        %s424 = sadd.s32 %s422, %s423
        %s425 = scalar_lea.vmem %s4, %s424
        %s426 = smul.u32 2, %s24
        %v427 = vld [vmem:[%s297] sm:$0xff]
        %v428 = vld [vmem:[%s297 + $0x8] sm:$0xff]
        %v429 = vld [vmem:[%s297 + $0x10] sm:$0xff]
        %v430 = vld [vmem:[%s297 + $0x18] sm:$0xff]
        %v431 = vld [vmem:[%s297 + $0x20] sm:$0xff]
        %v432 = vld [vmem:[%s297 + $0x28] sm:$0xff]
        %v433 = vld [vmem:[%s297 + $0x30] sm:$0xff]
        %v434 = vld [vmem:[%s297 + $0x38] sm:$0xff]
        %v435 = vld [vmem:[%s297 + $0x40] sm:$0xff]
        %v436 = vld [vmem:[%s297 + $0x48] sm:$0xff]
        %v437 = vld [vmem:[%s297 + $0x50] sm:$0xff]
        %v438 = vld [vmem:[%s297 + $0x58] sm:$0xff]
        %v439 = vld [vmem:[%s297 + $0x60] sm:$0xff]
        %v440 = vld [vmem:[%s297 + $0x68] sm:$0xff]
        %v441 = vld [vmem:[%s297 + $0x70] sm:$0xff]
        %v442 = vld [vmem:[%s297 + $0x78] sm:$0xff]
        %v443 = vld [vmem:[%s382] sm:$0xff]
        %v444 = vld [vmem:[%s382 + $0x8] sm:$0xff]
        %v445 = vld [vmem:[%s382 + $0x10] sm:$0xff]
        %v446 = vld [vmem:[%s382 + $0x18] sm:$0xff]
        %v447 = vld [vmem:[%s382 + $0x20] sm:$0xff]
        %v448 = vld [vmem:[%s382 + $0x28] sm:$0xff]
        %v449 = vld [vmem:[%s382 + $0x30] sm:$0xff]
        %v450 = vld [vmem:[%s382 + $0x38] sm:$0xff]
        %v451 = vld [vmem:[%s382 + $0x40] sm:$0xff]
        %v452 = vld [vmem:[%s382 + $0x48] sm:$0xff]
        %v453 = vld [vmem:[%s382 + $0x50] sm:$0xff]
        %v454 = vld [vmem:[%s382 + $0x58] sm:$0xff]
        %v455 = vld [vmem:[%s382 + $0x60] sm:$0xff]
        %v456 = vld [vmem:[%s382 + $0x68] sm:$0xff]
        %v457 = vld [vmem:[%s382 + $0x70] sm:$0xff]
        %v458 = vld [vmem:[%s382 + $0x78] sm:$0xff]
        %v459 = vld [vmem:[%s382 + $0x80] sm:$0xff]
        %v460 = vld [vmem:[%s382 + $0x88] sm:$0xff]
        %v461 = vld [vmem:[%s382 + $0x90] sm:$0xff]
        %v462 = vld [vmem:[%s382 + $0x98] sm:$0xff]
        %v463 = vld [vmem:[%s382 + $0xa0] sm:$0xff]
        %v464 = vld [vmem:[%s382 + $0xa8] sm:$0xff]
        %v465 = vld [vmem:[%s382 + $0xb0] sm:$0xff]
        %v466 = vld [vmem:[%s382 + $0xb8] sm:$0xff]
        %v467 = vld [vmem:[%s382 + $0xc0] sm:$0xff]
        %v468 = vld [vmem:[%s382 + $0xc8] sm:$0xff]
        %v469 = vld [vmem:[%s382 + $0xd0] sm:$0xff]
        %v470 = vld [vmem:[%s382 + $0xd8] sm:$0xff]
        %v471 = vld [vmem:[%s382 + $0xe0] sm:$0xff]
        %v472 = vld [vmem:[%s382 + $0xe8] sm:$0xff]
        %v473 = vld [vmem:[%s382 + $0xf0] sm:$0xff]
        %v474 = vld [vmem:[%s382 + $0xf8] sm:$0xff]
        %v475 = vld [vmem:[%s382 + $0x100] sm:$0xff]
        %v476 = vld [vmem:[%s382 + $0x108] sm:$0xff]
        %v477 = vld [vmem:[%s382 + $0x110] sm:$0xff]
        %v478 = vld [vmem:[%s382 + $0x118] sm:$0xff]
        %v479 = vld [vmem:[%s382 + $0x120] sm:$0xff]
        %v480 = vld [vmem:[%s382 + $0x128] sm:$0xff]
        %v481 = vld [vmem:[%s382 + $0x130] sm:$0xff]
        %v482 = vld [vmem:[%s382 + $0x138] sm:$0xff]
        %v483 = vld [vmem:[%s382 + $0x140] sm:$0xff]
        %v484 = vld [vmem:[%s382 + $0x148] sm:$0xff]
        %v485 = vld [vmem:[%s382 + $0x150] sm:$0xff]
        %v486 = vld [vmem:[%s382 + $0x158] sm:$0xff]
        %v487 = vld [vmem:[%s382 + $0x160] sm:$0xff]
        %v488 = vld [vmem:[%s382 + $0x168] sm:$0xff]
        %v489 = vld [vmem:[%s382 + $0x170] sm:$0xff]
        %v490 = vld [vmem:[%s382 + $0x178] sm:$0xff]
        %v491 = vld [vmem:[%s382 + $0x180] sm:$0xff]
        %v492 = vld [vmem:[%s382 + $0x188] sm:$0xff]
        %v493 = vld [vmem:[%s382 + $0x190] sm:$0xff]
        %v494 = vld [vmem:[%s382 + $0x198] sm:$0xff]
        %v495 = vld [vmem:[%s382 + $0x1a0] sm:$0xff]
        %v496 = vld [vmem:[%s382 + $0x1a8] sm:$0xff]
        %v497 = vld [vmem:[%s382 + $0x1b0] sm:$0xff]
        %v498 = vld [vmem:[%s382 + $0x1b8] sm:$0xff]
        %v499 = vld [vmem:[%s382 + $0x1c0] sm:$0xff]
        %v500 = vld [vmem:[%s382 + $0x1c8] sm:$0xff]
        %v501 = vld [vmem:[%s382 + $0x1d0] sm:$0xff]
        %v502 = vld [vmem:[%s382 + $0x1d8] sm:$0xff]
        %v503 = vld [vmem:[%s382 + $0x1e0] sm:$0xff]
        %v504 = vld [vmem:[%s382 + $0x1e8] sm:$0xff]
        %v505 = vld [vmem:[%s382 + $0x1f0] sm:$0xff]
        %v506 = vld [vmem:[%s382 + $0x1f8] sm:$0xff]
        %v507 = vld [vmem:[%s382 + $0x200] sm:$0xff]
        %v508 = vld [vmem:[%s382 + $0x208] sm:$0xff]
        %v509 = vld [vmem:[%s382 + $0x210] sm:$0xff]
        %v510 = vld [vmem:[%s382 + $0x218] sm:$0xff]
        %v511 = vld [vmem:[%s382 + $0x220] sm:$0xff]
        %v512 = vld [vmem:[%s382 + $0x228] sm:$0xff]
        %v513 = vld [vmem:[%s382 + $0x230] sm:$0xff]
        %v514 = vld [vmem:[%s382 + $0x238] sm:$0xff]
        %v515 = vld [vmem:[%s382 + $0x240] sm:$0xff]
        %v516 = vld [vmem:[%s382 + $0x248] sm:$0xff]
        %v517 = vld [vmem:[%s382 + $0x250] sm:$0xff]
        %v518 = vld [vmem:[%s382 + $0x258] sm:$0xff]
        %v519 = vld [vmem:[%s382 + $0x260] sm:$0xff]
        %v520 = vld [vmem:[%s382 + $0x268] sm:$0xff]
        %v521 = vld [vmem:[%s382 + $0x270] sm:$0xff]
        %v522 = vld [vmem:[%s382 + $0x278] sm:$0xff]
        %v523 = vld [vmem:[%s382 + $0x280] sm:$0xff]
        %v524 = vld [vmem:[%s382 + $0x288] sm:$0xff]
        %v525 = vld [vmem:[%s382 + $0x290] sm:$0xff]
        %v526 = vld [vmem:[%s382 + $0x298] sm:$0xff]
        %v527 = vld [vmem:[%s382 + $0x2a0] sm:$0xff]
        %v528 = vld [vmem:[%s382 + $0x2a8] sm:$0xff]
        %v529 = vld [vmem:[%s382 + $0x2b0] sm:$0xff]
        %v530 = vld [vmem:[%s382 + $0x2b8] sm:$0xff]
        %v531 = vld [vmem:[%s382 + $0x2c0] sm:$0xff]
        %v532 = vld [vmem:[%s382 + $0x2c8] sm:$0xff]
        %v533 = vld [vmem:[%s382 + $0x2d0] sm:$0xff]
        %v534 = vld [vmem:[%s382 + $0x2d8] sm:$0xff]
        %v535 = vld [vmem:[%s382 + $0x2e0] sm:$0xff]
        %v536 = vld [vmem:[%s382 + $0x2e8] sm:$0xff]
        %v537 = vld [vmem:[%s382 + $0x2f0] sm:$0xff]
        %v538 = vld [vmem:[%s382 + $0x2f8] sm:$0xff]
        %v539 = vld [vmem:[%s382 + $0x300] sm:$0xff]
        %v540 = vld [vmem:[%s382 + $0x308] sm:$0xff]
        %v541 = vld [vmem:[%s382 + $0x310] sm:$0xff]
        %v542 = vld [vmem:[%s382 + $0x318] sm:$0xff]
        %v543 = vld [vmem:[%s382 + $0x320] sm:$0xff]
        %v544 = vld [vmem:[%s382 + $0x328] sm:$0xff]
        %v545 = vld [vmem:[%s382 + $0x330] sm:$0xff]
        %v546 = vld [vmem:[%s382 + $0x338] sm:$0xff]
        %v547 = vld [vmem:[%s382 + $0x340] sm:$0xff]
        %v548 = vld [vmem:[%s382 + $0x348] sm:$0xff]
        %v549 = vld [vmem:[%s382 + $0x350] sm:$0xff]
        %v550 = vld [vmem:[%s382 + $0x358] sm:$0xff]
        %v551 = vld [vmem:[%s382 + $0x360] sm:$0xff]
        %v552 = vld [vmem:[%s382 + $0x368] sm:$0xff]
        %v553 = vld [vmem:[%s382 + $0x370] sm:$0xff]
        %v554 = vld [vmem:[%s382 + $0x378] sm:$0xff]
        %v555 = vld [vmem:[%s382 + $0x380] sm:$0xff]
        %v556 = vld [vmem:[%s382 + $0x388] sm:$0xff]
        %v557 = vld [vmem:[%s382 + $0x390] sm:$0xff]
        %v558 = vld [vmem:[%s382 + $0x398] sm:$0xff]
        %v559 = vld [vmem:[%s382 + $0x3a0] sm:$0xff]
        %v560 = vld [vmem:[%s382 + $0x3a8] sm:$0xff]
        %v561 = vld [vmem:[%s382 + $0x3b0] sm:$0xff]
        %v562 = vld [vmem:[%s382 + $0x3b8] sm:$0xff]
        %v563 = vld [vmem:[%s382 + $0x3c0] sm:$0xff]
        %v564 = vld [vmem:[%s382 + $0x3c8] sm:$0xff]
        %v565 = vld [vmem:[%s382 + $0x3d0] sm:$0xff]
        %v566 = vld [vmem:[%s382 + $0x3d8] sm:$0xff]
        %v567 = vld [vmem:[%s382 + $0x3e0] sm:$0xff]
        %v568 = vld [vmem:[%s382 + $0x3e8] sm:$0xff]
        %v569 = vld [vmem:[%s382 + $0x3f0] sm:$0xff]
        %v570 = vld [vmem:[%s382 + $0x3f8] sm:$0xff]
        %v587 = vunpack.c.l.b16 %v427
        %v588 = vunpack.c.h.b16 %v427
        %v589 = vunpack.c.l.b16 %v428
        %v590 = vunpack.c.h.b16 %v428
        %v591 = vunpack.c.l.b16 %v429
        %v592 = vunpack.c.h.b16 %v429
        %v593 = vunpack.c.l.b16 %v430
        %v594 = vunpack.c.h.b16 %v430
        %v595 = vunpack.c.l.b16 %v431
        %v596 = vunpack.c.h.b16 %v431
        %v597 = vunpack.c.l.b16 %v432
        %v598 = vunpack.c.h.b16 %v432
        %v599 = vunpack.c.l.b16 %v433
        %v600 = vunpack.c.h.b16 %v433
        %v601 = vunpack.c.l.b16 %v434
        %v602 = vunpack.c.h.b16 %v434
        %v603 = vunpack.c.l.b16 %v435
        %v604 = vunpack.c.h.b16 %v435
        %v605 = vunpack.c.l.b16 %v436
        %v606 = vunpack.c.h.b16 %v436
        %v607 = vunpack.c.l.b16 %v437
        %v608 = vunpack.c.h.b16 %v437
        %v609 = vunpack.c.l.b16 %v438
        %v610 = vunpack.c.h.b16 %v438
        %v611 = vunpack.c.l.b16 %v439
        %v612 = vunpack.c.h.b16 %v439
        %v613 = vunpack.c.l.b16 %v440
        %v614 = vunpack.c.h.b16 %v440
        %v615 = vunpack.c.l.b16 %v441
        %v616 = vunpack.c.h.b16 %v441
        %v617 = vunpack.c.l.b16 %v442
        %v618 = vunpack.c.h.b16 %v442
        %v619 = vpack.c.b16 %v595, %v587
        %v620 = vpack.c.b16 %v596, %v588
        %v621 = vpack.c.b16 %v597, %v589
        %v622 = vpack.c.b16 %v598, %v590
        %v623 = vpack.c.b16 %v599, %v591
        %v624 = vpack.c.b16 %v600, %v592
        %v625 = vpack.c.b16 %v601, %v593
        %v626 = vpack.c.b16 %v602, %v594
        %v627 = vpack.c.b16 %v611, %v603
        %v628 = vpack.c.b16 %v612, %v604
        %v629 = vpack.c.b16 %v613, %v605
        %v630 = vpack.c.b16 %v614, %v606
        %v631 = vpack.c.b16 %v615, %v607
        %v632 = vpack.c.b16 %v616, %v608
        %v633 = vpack.c.b16 %v617, %v609
        %v634 = vpack.c.b16 %v618, %v610
        %v779 = vunpack.c.l.b16 %v443
        %v780 = vunpack.c.h.b16 %v443
        %v781 = vunpack.c.l.b16 %v444
        %v782 = vunpack.c.h.b16 %v444
        %v783 = vunpack.c.l.b16 %v445
        %v784 = vunpack.c.h.b16 %v445
        %v785 = vunpack.c.l.b16 %v446
        %v786 = vunpack.c.h.b16 %v446
        %v787 = vunpack.c.l.b16 %v447
        %v788 = vunpack.c.h.b16 %v447
        %v789 = vunpack.c.l.b16 %v448
        %v790 = vunpack.c.h.b16 %v448
        %v791 = vunpack.c.l.b16 %v449
        %v792 = vunpack.c.h.b16 %v449
        %v793 = vunpack.c.l.b16 %v450
        %v794 = vunpack.c.h.b16 %v450
        %v795 = vunpack.c.l.b16 %v451
        %v796 = vunpack.c.h.b16 %v451
        %v797 = vunpack.c.l.b16 %v452
        %v798 = vunpack.c.h.b16 %v452
        %v799 = vunpack.c.l.b16 %v453
        %v800 = vunpack.c.h.b16 %v453
        %v801 = vunpack.c.l.b16 %v454
        %v802 = vunpack.c.h.b16 %v454
        %v803 = vunpack.c.l.b16 %v455
        %v804 = vunpack.c.h.b16 %v455
        %v805 = vunpack.c.l.b16 %v456
        %v806 = vunpack.c.h.b16 %v456
        %v807 = vunpack.c.l.b16 %v457
        %v808 = vunpack.c.h.b16 %v457
        %v809 = vunpack.c.l.b16 %v458
        %v810 = vunpack.c.h.b16 %v458
        %v811 = vunpack.c.l.b16 %v459
        %v812 = vunpack.c.h.b16 %v459
        %v813 = vunpack.c.l.b16 %v460
        %v814 = vunpack.c.h.b16 %v460
        %v815 = vunpack.c.l.b16 %v461
        %v816 = vunpack.c.h.b16 %v461
        %v817 = vunpack.c.l.b16 %v462
        %v818 = vunpack.c.h.b16 %v462
        %v819 = vunpack.c.l.b16 %v463
        %v820 = vunpack.c.h.b16 %v463
        %v821 = vunpack.c.l.b16 %v464
        %v822 = vunpack.c.h.b16 %v464
        %v823 = vunpack.c.l.b16 %v465
        %v824 = vunpack.c.h.b16 %v465
        %v825 = vunpack.c.l.b16 %v466
        %v826 = vunpack.c.h.b16 %v466
        %v827 = vunpack.c.l.b16 %v467
        %v828 = vunpack.c.h.b16 %v467
        %v829 = vunpack.c.l.b16 %v468
        %v830 = vunpack.c.h.b16 %v468
        %v831 = vunpack.c.l.b16 %v469
        %v832 = vunpack.c.h.b16 %v469
        %v833 = vunpack.c.l.b16 %v470
        %v834 = vunpack.c.h.b16 %v470
        %v835 = vunpack.c.l.b16 %v471
        %v836 = vunpack.c.h.b16 %v471
        %v837 = vunpack.c.l.b16 %v472
        %v838 = vunpack.c.h.b16 %v472
        %v839 = vunpack.c.l.b16 %v473
        %v840 = vunpack.c.h.b16 %v473
        %v841 = vunpack.c.l.b16 %v474
        %v842 = vunpack.c.h.b16 %v474
        %v843 = vunpack.c.l.b16 %v475
        %v844 = vunpack.c.h.b16 %v475
        %v845 = vunpack.c.l.b16 %v476
        %v846 = vunpack.c.h.b16 %v476
        %v847 = vunpack.c.l.b16 %v477
        %v848 = vunpack.c.h.b16 %v477
        %v849 = vunpack.c.l.b16 %v478
        %v850 = vunpack.c.h.b16 %v478
        %v851 = vunpack.c.l.b16 %v479
        %v852 = vunpack.c.h.b16 %v479
        %v853 = vunpack.c.l.b16 %v480
        %v854 = vunpack.c.h.b16 %v480
        %v855 = vunpack.c.l.b16 %v481
        %v856 = vunpack.c.h.b16 %v481
        %v857 = vunpack.c.l.b16 %v482
        %v858 = vunpack.c.h.b16 %v482
        %v859 = vunpack.c.l.b16 %v483
        %v860 = vunpack.c.h.b16 %v483
        %v861 = vunpack.c.l.b16 %v484
        %v862 = vunpack.c.h.b16 %v484
        %v863 = vunpack.c.l.b16 %v485
        %v864 = vunpack.c.h.b16 %v485
        %v865 = vunpack.c.l.b16 %v486
        %v866 = vunpack.c.h.b16 %v486
        %v867 = vunpack.c.l.b16 %v487
        %v868 = vunpack.c.h.b16 %v487
        %v869 = vunpack.c.l.b16 %v488
        %v870 = vunpack.c.h.b16 %v488
        %v871 = vunpack.c.l.b16 %v489
        %v872 = vunpack.c.h.b16 %v489
        %v873 = vunpack.c.l.b16 %v490
        %v874 = vunpack.c.h.b16 %v490
        %v875 = vunpack.c.l.b16 %v491
        %v876 = vunpack.c.h.b16 %v491
        %v877 = vunpack.c.l.b16 %v492
        %v878 = vunpack.c.h.b16 %v492
        %v879 = vunpack.c.l.b16 %v493
        %v880 = vunpack.c.h.b16 %v493
        %v881 = vunpack.c.l.b16 %v494
        %v882 = vunpack.c.h.b16 %v494
        %v883 = vunpack.c.l.b16 %v495
        %v884 = vunpack.c.h.b16 %v495
        %v885 = vunpack.c.l.b16 %v496
        %v886 = vunpack.c.h.b16 %v496
        %v887 = vunpack.c.l.b16 %v497
        %v888 = vunpack.c.h.b16 %v497
        %v889 = vunpack.c.l.b16 %v498
        %v890 = vunpack.c.h.b16 %v498
        %v891 = vunpack.c.l.b16 %v499
        %v892 = vunpack.c.h.b16 %v499
        %v893 = vunpack.c.l.b16 %v500
        %v894 = vunpack.c.h.b16 %v500
        %v895 = vunpack.c.l.b16 %v501
        %v896 = vunpack.c.h.b16 %v501
        %v897 = vunpack.c.l.b16 %v502
        %v898 = vunpack.c.h.b16 %v502
        %v899 = vunpack.c.l.b16 %v503
        %v900 = vunpack.c.h.b16 %v503
        %v901 = vunpack.c.l.b16 %v504
        %v902 = vunpack.c.h.b16 %v504
        %v903 = vunpack.c.l.b16 %v505
        %v904 = vunpack.c.h.b16 %v505
        %v905 = vunpack.c.l.b16 %v506
        %v906 = vunpack.c.h.b16 %v506
        %v907 = vunpack.c.l.b16 %v507
        %v908 = vunpack.c.h.b16 %v507
        %v909 = vunpack.c.l.b16 %v508
        %v910 = vunpack.c.h.b16 %v508
        %v911 = vunpack.c.l.b16 %v509
        %v912 = vunpack.c.h.b16 %v509
        %v913 = vunpack.c.l.b16 %v510
        %v914 = vunpack.c.h.b16 %v510
        %v915 = vunpack.c.l.b16 %v511
        %v916 = vunpack.c.h.b16 %v511
        %v917 = vunpack.c.l.b16 %v512
        %v918 = vunpack.c.h.b16 %v512
        %v919 = vunpack.c.l.b16 %v513
        %v920 = vunpack.c.h.b16 %v513
        %v921 = vunpack.c.l.b16 %v514
        %v922 = vunpack.c.h.b16 %v514
        %v923 = vunpack.c.l.b16 %v515
        %v924 = vunpack.c.h.b16 %v515
        %v925 = vunpack.c.l.b16 %v516
        %v926 = vunpack.c.h.b16 %v516
        %v927 = vunpack.c.l.b16 %v517
        %v928 = vunpack.c.h.b16 %v517
        %v929 = vunpack.c.l.b16 %v518
        %v930 = vunpack.c.h.b16 %v518
        %v931 = vunpack.c.l.b16 %v519
        %v932 = vunpack.c.h.b16 %v519
        %v933 = vunpack.c.l.b16 %v520
        %v934 = vunpack.c.h.b16 %v520
        %v935 = vunpack.c.l.b16 %v521
        %v936 = vunpack.c.h.b16 %v521
        %v937 = vunpack.c.l.b16 %v522
        %v938 = vunpack.c.h.b16 %v522
        %v939 = vunpack.c.l.b16 %v523
        %v940 = vunpack.c.h.b16 %v523
        %v941 = vunpack.c.l.b16 %v524
        %v942 = vunpack.c.h.b16 %v524
        %v943 = vunpack.c.l.b16 %v525
        %v944 = vunpack.c.h.b16 %v525
        %v945 = vunpack.c.l.b16 %v526
        %v946 = vunpack.c.h.b16 %v526
        %v947 = vunpack.c.l.b16 %v527
        %v948 = vunpack.c.h.b16 %v527
        %v949 = vunpack.c.l.b16 %v528
        %v950 = vunpack.c.h.b16 %v528
        %v951 = vunpack.c.l.b16 %v529
        %v952 = vunpack.c.h.b16 %v529
        %v953 = vunpack.c.l.b16 %v530
        %v954 = vunpack.c.h.b16 %v530
        %v955 = vunpack.c.l.b16 %v531
        %v956 = vunpack.c.h.b16 %v531
        %v957 = vunpack.c.l.b16 %v532
        %v958 = vunpack.c.h.b16 %v532
        %v959 = vunpack.c.l.b16 %v533
        %v960 = vunpack.c.h.b16 %v533
        %v961 = vunpack.c.l.b16 %v534
        %v962 = vunpack.c.h.b16 %v534
        %v963 = vunpack.c.l.b16 %v535
        %v964 = vunpack.c.h.b16 %v535
        %v965 = vunpack.c.l.b16 %v536
        %v966 = vunpack.c.h.b16 %v536
        %v967 = vunpack.c.l.b16 %v537
        %v968 = vunpack.c.h.b16 %v537
        %v969 = vunpack.c.l.b16 %v538
        %v970 = vunpack.c.h.b16 %v538
        %v971 = vunpack.c.l.b16 %v539
        %v972 = vunpack.c.h.b16 %v539
        %v973 = vunpack.c.l.b16 %v540
        %v974 = vunpack.c.h.b16 %v540
        %v975 = vunpack.c.l.b16 %v541
        %v976 = vunpack.c.h.b16 %v541
        %v977 = vunpack.c.l.b16 %v542
        %v978 = vunpack.c.h.b16 %v542
        %v979 = vunpack.c.l.b16 %v543
        %v980 = vunpack.c.h.b16 %v543
        %v981 = vunpack.c.l.b16 %v544
        %v982 = vunpack.c.h.b16 %v544
        %v983 = vunpack.c.l.b16 %v545
        %v984 = vunpack.c.h.b16 %v545
        %v985 = vunpack.c.l.b16 %v546
        %v986 = vunpack.c.h.b16 %v546
        %v987 = vunpack.c.l.b16 %v547
        %v988 = vunpack.c.h.b16 %v547
        %v989 = vunpack.c.l.b16 %v548
        %v990 = vunpack.c.h.b16 %v548
        %v991 = vunpack.c.l.b16 %v549
        %v992 = vunpack.c.h.b16 %v549
        %v993 = vunpack.c.l.b16 %v550
        %v994 = vunpack.c.h.b16 %v550
        %v995 = vunpack.c.l.b16 %v551
        %v996 = vunpack.c.h.b16 %v551
        %v997 = vunpack.c.l.b16 %v552
        %v998 = vunpack.c.h.b16 %v552
        %v999 = vunpack.c.l.b16 %v553
        %v1000 = vunpack.c.h.b16 %v553
        %v1001 = vunpack.c.l.b16 %v554
        %v1002 = vunpack.c.h.b16 %v554
        %v1003 = vunpack.c.l.b16 %v555
        %v1004 = vunpack.c.h.b16 %v555
        %v1005 = vunpack.c.l.b16 %v556
        %v1006 = vunpack.c.h.b16 %v556
        %v1007 = vunpack.c.l.b16 %v557
        %v1008 = vunpack.c.h.b16 %v557
        %v1009 = vunpack.c.l.b16 %v558
        %v1010 = vunpack.c.h.b16 %v558
        %v1011 = vunpack.c.l.b16 %v559
        %v1012 = vunpack.c.h.b16 %v559
        %v1013 = vunpack.c.l.b16 %v560
        %v1014 = vunpack.c.h.b16 %v560
        %v1015 = vunpack.c.l.b16 %v561
        %v1016 = vunpack.c.h.b16 %v561
        %v1017 = vunpack.c.l.b16 %v562
        %v1018 = vunpack.c.h.b16 %v562
        %v1019 = vunpack.c.l.b16 %v563
        %v1020 = vunpack.c.h.b16 %v563
        %v1021 = vunpack.c.l.b16 %v564
        %v1022 = vunpack.c.h.b16 %v564
        %v1023 = vunpack.c.l.b16 %v565
        %v1024 = vunpack.c.h.b16 %v565
        %v1025 = vunpack.c.l.b16 %v566
        %v1026 = vunpack.c.h.b16 %v566
        %v1027 = vunpack.c.l.b16 %v567
        %v1028 = vunpack.c.h.b16 %v567
        %v1029 = vunpack.c.l.b16 %v568
        %v1030 = vunpack.c.h.b16 %v568
        %v1031 = vunpack.c.l.b16 %v569
        %v1032 = vunpack.c.h.b16 %v569
        %v1033 = vunpack.c.l.b16 %v570
        %v1034 = vunpack.c.h.b16 %v570
        %v1035 = vpack.c.b16 %v781, %v779
        %v1036 = vpack.c.b16 %v782, %v780
        %v1037 = vpack.c.b16 %v785, %v783
        %v1038 = vpack.c.b16 %v786, %v784
        %v1039 = vpack.c.b16 %v789, %v787
        %v1040 = vpack.c.b16 %v790, %v788
        %v1041 = vpack.c.b16 %v793, %v791
        %v1042 = vpack.c.b16 %v794, %v792
        %v1043 = vpack.c.b16 %v797, %v795
        %v1044 = vpack.c.b16 %v798, %v796
        %v1045 = vpack.c.b16 %v801, %v799
        %v1046 = vpack.c.b16 %v802, %v800
        %v1047 = vpack.c.b16 %v805, %v803
        %v1048 = vpack.c.b16 %v806, %v804
        %v1049 = vpack.c.b16 %v809, %v807
        %v1050 = vpack.c.b16 %v810, %v808
        %v1051 = vpack.c.b16 %v813, %v811
        %v1052 = vpack.c.b16 %v814, %v812
        %v1053 = vpack.c.b16 %v817, %v815
        %v1054 = vpack.c.b16 %v818, %v816
        %v1055 = vpack.c.b16 %v821, %v819
        %v1056 = vpack.c.b16 %v822, %v820
        %v1057 = vpack.c.b16 %v825, %v823
        %v1058 = vpack.c.b16 %v826, %v824
        %v1059 = vpack.c.b16 %v829, %v827
        %v1060 = vpack.c.b16 %v830, %v828
        %v1061 = vpack.c.b16 %v833, %v831
        %v1062 = vpack.c.b16 %v834, %v832
        %v1063 = vpack.c.b16 %v837, %v835
        %v1064 = vpack.c.b16 %v838, %v836
        %v1065 = vpack.c.b16 %v841, %v839
        %v1066 = vpack.c.b16 %v842, %v840
        %v1067 = vpack.c.b16 %v845, %v843
        %v1068 = vpack.c.b16 %v846, %v844
        %v1069 = vpack.c.b16 %v849, %v847
        %v1070 = vpack.c.b16 %v850, %v848
        %v1071 = vpack.c.b16 %v853, %v851
        %v1072 = vpack.c.b16 %v854, %v852
        %v1073 = vpack.c.b16 %v857, %v855
        %v1074 = vpack.c.b16 %v858, %v856
        %v1075 = vpack.c.b16 %v861, %v859
        %v1076 = vpack.c.b16 %v862, %v860
        %v1077 = vpack.c.b16 %v865, %v863
        %v1078 = vpack.c.b16 %v866, %v864
        %v1079 = vpack.c.b16 %v869, %v867
        %v1080 = vpack.c.b16 %v870, %v868
        %v1081 = vpack.c.b16 %v873, %v871
        %v1082 = vpack.c.b16 %v874, %v872
        %v1083 = vpack.c.b16 %v877, %v875
        %v1084 = vpack.c.b16 %v878, %v876
        %v1085 = vpack.c.b16 %v881, %v879
        %v1086 = vpack.c.b16 %v882, %v880
        %v1087 = vpack.c.b16 %v885, %v883
        %v1088 = vpack.c.b16 %v886, %v884
        %v1089 = vpack.c.b16 %v889, %v887
        %v1090 = vpack.c.b16 %v890, %v888
        %v1091 = vpack.c.b16 %v893, %v891
        %v1092 = vpack.c.b16 %v894, %v892
        %v1093 = vpack.c.b16 %v897, %v895
        %v1094 = vpack.c.b16 %v898, %v896
        %v1095 = vpack.c.b16 %v901, %v899
        %v1096 = vpack.c.b16 %v902, %v900
        %v1097 = vpack.c.b16 %v905, %v903
        %v1098 = vpack.c.b16 %v906, %v904
        %v1099 = vpack.c.b16 %v909, %v907
        %v1100 = vpack.c.b16 %v910, %v908
        %v1101 = vpack.c.b16 %v913, %v911
        %v1102 = vpack.c.b16 %v914, %v912
        %v1103 = vpack.c.b16 %v917, %v915
        %v1104 = vpack.c.b16 %v918, %v916
        %v1105 = vpack.c.b16 %v921, %v919
        %v1106 = vpack.c.b16 %v922, %v920
        %v1107 = vpack.c.b16 %v925, %v923
        %v1108 = vpack.c.b16 %v926, %v924
        %v1109 = vpack.c.b16 %v929, %v927
        %v1110 = vpack.c.b16 %v930, %v928
        %v1111 = vpack.c.b16 %v933, %v931
        %v1112 = vpack.c.b16 %v934, %v932
        %v1113 = vpack.c.b16 %v937, %v935
        %v1114 = vpack.c.b16 %v938, %v936
        %v1115 = vpack.c.b16 %v941, %v939
        %v1116 = vpack.c.b16 %v942, %v940
        %v1117 = vpack.c.b16 %v945, %v943
        %v1118 = vpack.c.b16 %v946, %v944
        %v1119 = vpack.c.b16 %v949, %v947
        %v1120 = vpack.c.b16 %v950, %v948
        %v1121 = vpack.c.b16 %v953, %v951
        %v1122 = vpack.c.b16 %v954, %v952
        %v1123 = vpack.c.b16 %v957, %v955
        %v1124 = vpack.c.b16 %v958, %v956
        %v1125 = vpack.c.b16 %v961, %v959
        %v1126 = vpack.c.b16 %v962, %v960
        %v1127 = vpack.c.b16 %v965, %v963
        %v1128 = vpack.c.b16 %v966, %v964
        %v1129 = vpack.c.b16 %v969, %v967
        %v1130 = vpack.c.b16 %v970, %v968
        %v1131 = vpack.c.b16 %v973, %v971
        %v1132 = vpack.c.b16 %v974, %v972
        %v1133 = vpack.c.b16 %v977, %v975
        %v1134 = vpack.c.b16 %v978, %v976
        %v1135 = vpack.c.b16 %v981, %v979
        %v1136 = vpack.c.b16 %v982, %v980
        %v1137 = vpack.c.b16 %v985, %v983
        %v1138 = vpack.c.b16 %v986, %v984
        %v1139 = vpack.c.b16 %v989, %v987
        %v1140 = vpack.c.b16 %v990, %v988
        %v1141 = vpack.c.b16 %v993, %v991
        %v1142 = vpack.c.b16 %v994, %v992
        %v1143 = vpack.c.b16 %v997, %v995
        %v1144 = vpack.c.b16 %v998, %v996
        %v1145 = vpack.c.b16 %v1001, %v999
        %v1146 = vpack.c.b16 %v1002, %v1000
        %v1147 = vpack.c.b16 %v1005, %v1003
        %v1148 = vpack.c.b16 %v1006, %v1004
        %v1149 = vpack.c.b16 %v1009, %v1007
        %v1150 = vpack.c.b16 %v1010, %v1008
        %v1151 = vpack.c.b16 %v1013, %v1011
        %v1152 = vpack.c.b16 %v1014, %v1012
        %v1153 = vpack.c.b16 %v1017, %v1015
        %v1154 = vpack.c.b16 %v1018, %v1016
        %v1155 = vpack.c.b16 %v1021, %v1019
        %v1156 = vpack.c.b16 %v1022, %v1020
        %v1157 = vpack.c.b16 %v1025, %v1023
        %v1158 = vpack.c.b16 %v1026, %v1024
        %v1159 = vpack.c.b16 %v1029, %v1027
        %v1160 = vpack.c.b16 %v1030, %v1028
        %v1161 = vpack.c.b16 %v1033, %v1031
        %v1162 = vpack.c.b16 %v1034, %v1032
        %1291 = vmatprep.subr.bf16.mxu0 %v1036
        %1292 = vmatpush1.bf16.msra.mxu0 %v1035
        %1293 = vmatprep.subr.bf16.mxu0 %v1038
        %1294 = vmatpush1.bf16.msra.mxu0 %v1037
        %1295 = vmatprep.subr.bf16.mxu0 %v1040
        %1296 = vmatpush1.bf16.msra.mxu0 %v1039
        %1297 = vmatprep.subr.bf16.mxu0 %v1042
        %1298 = vmatpush1.bf16.msra.mxu0 %v1041
        %1299 = vmatprep.subr.bf16.mxu0 %v1044
        %1300 = vmatpush1.bf16.msra.mxu0 %v1043
        %1301 = vmatprep.subr.bf16.mxu0 %v1046
        %1302 = vmatpush1.bf16.msra.mxu0 %v1045
        %1303 = vmatprep.subr.bf16.mxu0 %v1048
        %1304 = vmatpush1.bf16.msra.mxu0 %v1047
        %1305 = vmatprep.subr.bf16.mxu0 %v1050
        %1306 = vmatpush1.bf16.msra.mxu0 %v1049
        %1307 = vmatprep.subr.bf16.mxu0 %v1052
        %1308 = vmatpush1.bf16.msra.mxu0 %v1051
        %1309 = vmatprep.subr.bf16.mxu0 %v1054
        %1310 = vmatpush1.bf16.msra.mxu0 %v1053
        %1311 = vmatprep.subr.bf16.mxu0 %v1056
        %1312 = vmatpush1.bf16.msra.mxu0 %v1055
        %1313 = vmatprep.subr.bf16.mxu0 %v1058
        %1314 = vmatpush1.bf16.msra.mxu0 %v1057
        %1315 = vmatprep.subr.bf16.mxu0 %v1060
        %1316 = vmatpush1.bf16.msra.mxu0 %v1059
        %1317 = vmatprep.subr.bf16.mxu0 %v1062
        %1318 = vmatpush1.bf16.msra.mxu0 %v1061
        %1319 = vmatprep.subr.bf16.mxu0 %v1064
        %1320 = vmatpush1.bf16.msra.mxu0 %v1063
        %1321 = vmatprep.subr.bf16.mxu0 %v1066
        %1322 = vmatpush1.bf16.msra.mxu0 %v1065
        %1323 = vmatprep.mubr.bf16.mxu0 %v620
        %1324 = vmatmul.mubr.bf16.gmra.mrb[0].mxu0 %v619
        %v1325 = vpop.f32.mrb[0].mxu0
        %v1326 = vadd.f32 0.0, %v1325
        %v1327 = vpop.f32.mrb[0].mxu0
        %v1328 = vadd.f32 0.0, %v1327
        %v1329 = vpop.f32.mrb[0].mxu0
        %v1330 = vadd.f32 0.0, %v1329
        %v1331 = vpop.f32.mrb[0].mxu0
        %v1332 = vadd.f32 0.0, %v1331
        %1333 = vmatprep.mubr.bf16.mxu0 %v628
        %1334 = vmatmul.mubr.bf16.gmra.mrb[0].mxu0 %v627
        %v1335 = vpop.f32.mrb[0].mxu0
        %v1336 = vadd.f32 0.0, %v1335
        %v1337 = vpop.f32.mrb[0].mxu0
        %v1338 = vadd.f32 0.0, %v1337
        %v1339 = vpop.f32.mrb[0].mxu0
        %v1340 = vadd.f32 0.0, %v1339
        %v1341 = vpop.f32.mrb[0].mxu0
        %v1342 = vadd.f32 0.0, %v1341
        %1343 = vdwg.mxu0
        %1344 = vmatprep.subr.bf16.mxu0 %v1068
        %1345 = vmatpush1.bf16.msra.mxu0 %v1067
        %1346 = vmatprep.subr.bf16.mxu0 %v1070
        %1347 = vmatpush1.bf16.msra.mxu0 %v1069
        %1348 = vmatprep.subr.bf16.mxu0 %v1072
        %1349 = vmatpush1.bf16.msra.mxu0 %v1071
        %1350 = vmatprep.subr.bf16.mxu0 %v1074
        %1351 = vmatpush1.bf16.msra.mxu0 %v1073
        %1352 = vmatprep.subr.bf16.mxu0 %v1076
        %1353 = vmatpush1.bf16.msra.mxu0 %v1075
        %1354 = vmatprep.subr.bf16.mxu0 %v1078
        %1355 = vmatpush1.bf16.msra.mxu0 %v1077
        %1356 = vmatprep.subr.bf16.mxu0 %v1080
        %1357 = vmatpush1.bf16.msra.mxu0 %v1079
        %1358 = vmatprep.subr.bf16.mxu0 %v1082
        %1359 = vmatpush1.bf16.msra.mxu0 %v1081
        %1360 = vmatprep.subr.bf16.mxu0 %v1084
        %1361 = vmatpush1.bf16.msra.mxu0 %v1083
        %1362 = vmatprep.subr.bf16.mxu0 %v1086
        %1363 = vmatpush1.bf16.msra.mxu0 %v1085
        %1364 = vmatprep.subr.bf16.mxu0 %v1088
        %1365 = vmatpush1.bf16.msra.mxu0 %v1087
        %1366 = vmatprep.subr.bf16.mxu0 %v1090
        %1367 = vmatpush1.bf16.msra.mxu0 %v1089
        %1368 = vmatprep.subr.bf16.mxu0 %v1092
        %1369 = vmatpush1.bf16.msra.mxu0 %v1091
        %1370 = vmatprep.subr.bf16.mxu0 %v1094
        %1371 = vmatpush1.bf16.msra.mxu0 %v1093
        %1372 = vmatprep.subr.bf16.mxu0 %v1096
        %1373 = vmatpush1.bf16.msra.mxu0 %v1095
        %1374 = vmatprep.subr.bf16.mxu0 %v1098
        %1375 = vmatpush1.bf16.msra.mxu0 %v1097
        %1376 = vmatprep.mubr.bf16.mxu0 %v622
        %1377 = vmatmul.mubr.bf16.gmra.mrb[0].mxu0 %v621
        %v1378 = vpop.f32.mrb[0].mxu0
        %v1379 = vadd.f32 %v1326, %v1378
        %v1380 = vpop.f32.mrb[0].mxu0
        %v1381 = vadd.f32 %v1328, %v1380
        %v1382 = vpop.f32.mrb[0].mxu0
        %v1383 = vadd.f32 %v1330, %v1382
        %v1384 = vpop.f32.mrb[0].mxu0
        %v1385 = vadd.f32 %v1332, %v1384
        %1386 = vmatprep.mubr.bf16.mxu0 %v630
        %1387 = vmatmul.mubr.bf16.gmra.mrb[0].mxu0 %v629
        %v1388 = vpop.f32.mrb[0].mxu0
        %v1389 = vadd.f32 %v1336, %v1388
        %v1390 = vpop.f32.mrb[0].mxu0
        %v1391 = vadd.f32 %v1338, %v1390
        %v1392 = vpop.f32.mrb[0].mxu0
        %v1393 = vadd.f32 %v1340, %v1392
        %v1394 = vpop.f32.mrb[0].mxu0
        %v1395 = vadd.f32 %v1342, %v1394
        %1396 = vdwg.mxu0
        %1397 = vmatprep.subr.bf16.mxu0 %v1100
        %1398 = vmatpush1.bf16.msra.mxu0 %v1099
        %1399 = vmatprep.subr.bf16.mxu0 %v1102
        %1400 = vmatpush1.bf16.msra.mxu0 %v1101
        %1401 = vmatprep.subr.bf16.mxu0 %v1104
        %1402 = vmatpush1.bf16.msra.mxu0 %v1103
        %1403 = vmatprep.subr.bf16.mxu0 %v1106
        %1404 = vmatpush1.bf16.msra.mxu0 %v1105
        %1405 = vmatprep.subr.bf16.mxu0 %v1108
        %1406 = vmatpush1.bf16.msra.mxu0 %v1107
        %1407 = vmatprep.subr.bf16.mxu0 %v1110
        %1408 = vmatpush1.bf16.msra.mxu0 %v1109
        %1409 = vmatprep.subr.bf16.mxu0 %v1112
        %1410 = vmatpush1.bf16.msra.mxu0 %v1111
        %1411 = vmatprep.subr.bf16.mxu0 %v1114
        %1412 = vmatpush1.bf16.msra.mxu0 %v1113
        %1413 = vmatprep.subr.bf16.mxu0 %v1116
        %1414 = vmatpush1.bf16.msra.mxu0 %v1115
        %1415 = vmatprep.subr.bf16.mxu0 %v1118
        %1416 = vmatpush1.bf16.msra.mxu0 %v1117
        %1417 = vmatprep.subr.bf16.mxu0 %v1120
        %1418 = vmatpush1.bf16.msra.mxu0 %v1119
        %1419 = vmatprep.subr.bf16.mxu0 %v1122
        %1420 = vmatpush1.bf16.msra.mxu0 %v1121
        %1421 = vmatprep.subr.bf16.mxu0 %v1124
        %1422 = vmatpush1.bf16.msra.mxu0 %v1123
        %1423 = vmatprep.subr.bf16.mxu0 %v1126
        %1424 = vmatpush1.bf16.msra.mxu0 %v1125
        %1425 = vmatprep.subr.bf16.mxu0 %v1128
        %1426 = vmatpush1.bf16.msra.mxu0 %v1127
        %1427 = vmatprep.subr.bf16.mxu0 %v1130
        %1428 = vmatpush1.bf16.msra.mxu0 %v1129
        %1429 = vmatprep.mubr.bf16.mxu0 %v624
        %1430 = vmatmul.mubr.bf16.gmra.mrb[0].mxu0 %v623
        %v1431 = vpop.f32.mrb[0].mxu0
        %v1432 = vadd.f32 %v1379, %v1431
        %v1433 = vpop.f32.mrb[0].mxu0
        %v1434 = vadd.f32 %v1381, %v1433
        %v1435 = vpop.f32.mrb[0].mxu0
        %v1436 = vadd.f32 %v1383, %v1435
        %v1437 = vpop.f32.mrb[0].mxu0
        %v1438 = vadd.f32 %v1385, %v1437
        %1439 = vmatprep.mubr.bf16.mxu0 %v632
        %1440 = vmatmul.mubr.bf16.gmra.mrb[0].mxu0 %v631
        %v1441 = vpop.f32.mrb[0].mxu0
        %v1442 = vadd.f32 %v1389, %v1441
        %v1443 = vpop.f32.mrb[0].mxu0
        %v1444 = vadd.f32 %v1391, %v1443
        %v1445 = vpop.f32.mrb[0].mxu0
        %v1446 = vadd.f32 %v1393, %v1445
        %v1447 = vpop.f32.mrb[0].mxu0
        %v1448 = vadd.f32 %v1395, %v1447
        %1449 = vdwg.mxu0
        %1450 = vmatprep.subr.bf16.mxu0 %v1132
        %1451 = vmatpush1.bf16.msra.mxu0 %v1131
        %1452 = vmatprep.subr.bf16.mxu0 %v1134
        %1453 = vmatpush1.bf16.msra.mxu0 %v1133
        %1454 = vmatprep.subr.bf16.mxu0 %v1136
        %1455 = vmatpush1.bf16.msra.mxu0 %v1135
        %1456 = vmatprep.subr.bf16.mxu0 %v1138
        %1457 = vmatpush1.bf16.msra.mxu0 %v1137
        %1458 = vmatprep.subr.bf16.mxu0 %v1140
        %1459 = vmatpush1.bf16.msra.mxu0 %v1139
        %1460 = vmatprep.subr.bf16.mxu0 %v1142
        %1461 = vmatpush1.bf16.msra.mxu0 %v1141
        %1462 = vmatprep.subr.bf16.mxu0 %v1144
        %1463 = vmatpush1.bf16.msra.mxu0 %v1143
        %1464 = vmatprep.subr.bf16.mxu0 %v1146
        %1465 = vmatpush1.bf16.msra.mxu0 %v1145
        %1466 = vmatprep.subr.bf16.mxu0 %v1148
        %1467 = vmatpush1.bf16.msra.mxu0 %v1147
        %1468 = vmatprep.subr.bf16.mxu0 %v1150
        %1469 = vmatpush1.bf16.msra.mxu0 %v1149
        %1470 = vmatprep.subr.bf16.mxu0 %v1152
        %1471 = vmatpush1.bf16.msra.mxu0 %v1151
        %1472 = vmatprep.subr.bf16.mxu0 %v1154
        %1473 = vmatpush1.bf16.msra.mxu0 %v1153
        %1474 = vmatprep.subr.bf16.mxu0 %v1156
        %1475 = vmatpush1.bf16.msra.mxu0 %v1155
        %1476 = vmatprep.subr.bf16.mxu0 %v1158
        %1477 = vmatpush1.bf16.msra.mxu0 %v1157
        %1478 = vmatprep.subr.bf16.mxu0 %v1160
        %1479 = vmatpush1.bf16.msra.mxu0 %v1159
        %1480 = vmatprep.subr.bf16.mxu0 %v1162
        %1481 = vmatpush1.bf16.msra.mxu0 %v1161
        %1482 = vmatprep.mubr.bf16.mxu0 %v626
        %1483 = vmatmul.mubr.bf16.gmra.mrb[0].mxu0 %v625
        %v1484 = vpop.f32.mrb[0].mxu0
        %v1485 = vadd.f32 %v1432, %v1484
        %v1486 = vpop.f32.mrb[0].mxu0
        %v1487 = vadd.f32 %v1434, %v1486
        %v1488 = vpop.f32.mrb[0].mxu0
        %v1489 = vadd.f32 %v1436, %v1488
        %v1490 = vpop.f32.mrb[0].mxu0
        %v1491 = vadd.f32 %v1438, %v1490
        %1492 = vmatprep.mubr.bf16.mxu0 %v634
        %1493 = vmatmul.mubr.bf16.gmra.mrb[0].mxu0 %v633
        %v1494 = vpop.f32.mrb[0].mxu0
        %v1495 = vadd.f32 %v1442, %v1494
        %v1496 = vpop.f32.mrb[0].mxu0
        %v1497 = vadd.f32 %v1444, %v1496
        %v1498 = vpop.f32.mrb[0].mxu0
        %v1499 = vadd.f32 %v1446, %v1498
        %v1500 = vpop.f32.mrb[0].mxu0
        %v1501 = vadd.f32 %v1448, %v1500
        %1502 = vdwg.mxu0
        %p1503 = scmp.eq.s32.totalorder %s25, 0
        // Predicated region
        $region52: #{decoder_forward.13} parent=46 // pred_check
          %p1504 = pneg %p1503
        $region53: #{decoder_forward.13} parent=46 // pred_check_branch
          %1506 = sbr.rel (%p1504) target = $region55
        $region54: #{decoder_forward.13} parent=46 // pred_region
          %1507 = vst [vmem:[%s398] sm:$0xff] %v1485
          %1508 = vst [vmem:[%s398 + $0x8] sm:$0xff] %v1487
          %1509 = vst [vmem:[%s398 + $0x10] sm:$0xff] %v1489
          %1510 = vst [vmem:[%s398 + $0x18] sm:$0xff] %v1491
          %1511 = vst [vmem:[%s398 + $0x20] sm:$0xff] %v1495
          %1512 = vst [vmem:[%s398 + $0x28] sm:$0xff] %v1497
          %1513 = vst [vmem:[%s398 + $0x30] sm:$0xff] %v1499
          %1514 = vst [vmem:[%s398 + $0x38] sm:$0xff] %v1501
        $region55: #{decoder_forward.13} parent=46 // pred_fallthru
          _
        %p1515 = scmp.gt.s32.totalorder %s25, 0
        %p1516 = scmp.lt.s32.totalorder %s25, 1
        %p1517 = pnand %p1515, %p1516
        %p1518 = pneg %p1517
        // Predicated region
        $region56: #{decoder_forward.13} parent=46 // pred_check
          _
        $region57: #{decoder_forward.13} parent=46 // pred_check_branch
          %1520 = sbr.rel (%p1517) target = $region59
        $region58: #{decoder_forward.13} parent=46 // pred_region
          %v1521 = vld [vmem:[%s398] sm:$0xff]
          %v1522 = vld [vmem:[%s398 + $0x8] sm:$0xff]
          %v1523 = vld [vmem:[%s398 + $0x10] sm:$0xff]
          %v1524 = vld [vmem:[%s398 + $0x18] sm:$0xff]
          %v1525 = vld [vmem:[%s398 + $0x20] sm:$0xff]
          %v1526 = vld [vmem:[%s398 + $0x28] sm:$0xff]
          %v1527 = vld [vmem:[%s398 + $0x30] sm:$0xff]
          %v1528 = vld [vmem:[%s398 + $0x38] sm:$0xff]
          %v1529 = vadd.f32 %v1521, %v1485
          %v1530 = vadd.f32 %v1522, %v1487
          %v1531 = vadd.f32 %v1523, %v1489
          %v1532 = vadd.f32 %v1524, %v1491
          %v1533 = vadd.f32 %v1525, %v1495
          %v1534 = vadd.f32 %v1526, %v1497
          %v1535 = vadd.f32 %v1527, %v1499
          %v1536 = vadd.f32 %v1528, %v1501
          %1537 = vst [vmem:[%s398] sm:$0xff] %v1529
          %1538 = vst [vmem:[%s398 + $0x8] sm:$0xff] %v1530
          %1539 = vst [vmem:[%s398 + $0x10] sm:$0xff] %v1531
          %1540 = vst [vmem:[%s398 + $0x18] sm:$0xff] %v1532
          %1541 = vst [vmem:[%s398 + $0x20] sm:$0xff] %v1533
          %1542 = vst [vmem:[%s398 + $0x28] sm:$0xff] %v1534
          %1543 = vst [vmem:[%s398 + $0x30] sm:$0xff] %v1535
          %1544 = vst [vmem:[%s398 + $0x38] sm:$0xff] %v1536
        $region59: #{decoder_forward.13} parent=46 // pred_fallthru
          _
        %p1545 = scmp.eq.s32.totalorder %s25, 1
        // Predicated region
        $region60: #{decoder_forward.13} parent=46 // pred_check
          %p1546 = pneg %p1545
        $region61: #{decoder_forward.13} parent=46 // pred_check_branch
          %1548 = sbr.rel (%p1546) target = $region63
        $region62: #{decoder_forward.13} parent=46 // pred_region
          %v1549 = vld [vmem:[%s398] sm:$0xff]
          %v1550 = vld [vmem:[%s398 + $0x8] sm:$0xff]
          %v1551 = vld [vmem:[%s398 + $0x10] sm:$0xff]
          %v1552 = vld [vmem:[%s398 + $0x18] sm:$0xff]
          %v1553 = vld [vmem:[%s398 + $0x20] sm:$0xff]
          %v1554 = vld [vmem:[%s398 + $0x28] sm:$0xff]
          %v1555 = vld [vmem:[%s398 + $0x30] sm:$0xff]
          %v1556 = vld [vmem:[%s398 + $0x38] sm:$0xff]
          %v1557 = vadd.f32 %v1549, %v1485
          %v1558 = vadd.f32 %v1550, %v1487
          %v1559 = vadd.f32 %v1551, %v1489
          %v1560 = vadd.f32 %v1552, %v1491
          %v1561 = vadd.f32 %v1553, %v1495
          %v1562 = vadd.f32 %v1554, %v1497
          %v1563 = vadd.f32 %v1555, %v1499
          %v1564 = vadd.f32 %v1556, %v1501
          %1565 = vst [vmem:[%s398] sm:$0xff] %v1557
          %1566 = vst [vmem:[%s398 + $0x8] sm:$0xff] %v1558
          %1567 = vst [vmem:[%s398 + $0x10] sm:$0xff] %v1559
          %1568 = vst [vmem:[%s398 + $0x18] sm:$0xff] %v1560
          %1569 = vst [vmem:[%s398 + $0x20] sm:$0xff] %v1561
          %1570 = vst [vmem:[%s398 + $0x28] sm:$0xff] %v1562
          %1571 = vst [vmem:[%s398 + $0x30] sm:$0xff] %v1563
          %1572 = vst [vmem:[%s398 + $0x38] sm:$0xff] %v1564
          %v1573 = vadd.f32 %v1557, %v1559
          %v1574 = vadd.f32 %v1573, %v1561
          %v1575 = vadd.f32 %v1574, %v1563
          %v1576 = vrot.slane %v1575, 4
          %v1577 = vadd.f32 %v1575, %v1576
          %v1578 = vrot.slane %v1577, 2
          %v1579 = vadd.f32 %v1577, %v1578
          %v1580 = vrot.slane %v1579, 1
          %v1581 = vadd.f32 %v1579, %v1580
          %v1582 = vadd.f32 %v1558, %v1560
          %v1583 = vadd.f32 %v1582, %v1562
          %v1584 = vadd.f32 %v1583, %v1564
          %v1585 = vrot.slane %v1584, 4
          %v1586 = vadd.f32 %v1584, %v1585
          %v1587 = vrot.slane %v1586, 2
          %v1588 = vadd.f32 %v1586, %v1587
          %v1589 = vrot.slane %v1588, 1
          %v1590 = vadd.f32 %v1588, %v1589
          %v1593 = vcombine.low %v1581, %v1590
          %v1595 = vunpack.c.l.s4 1966171168
          %v1596 = vunpack.c.0.s8 %v1595
          %v1597 = vlaneseq
          %v1598 = vshrl.u32 %v1597, 7
          %v1599 = vsub.s32 %v1596, %v1598
          %v1600 = vrot.slane %v1593, %v1599
          %v1602 = vunpack.c.l.s4 1966171168
          %v1603 = vunpack.c.0.s8 %v1602
          %v1604 = vlaneseq
          %v1605 = vshrl.u32 %v1604, 7
          %v1606 = vsub.s32 %v1603, %v1605
          %v1607 = vrot.slane %v1600, %v1606
          %v1609 = vlaneseq
          %vm1610 = vcmp.ge.s32.totalorder %v1609, 0
          %vm1611 = vcmp.lt.s32.totalorder %v1609, 256
          %vm1612 = vmand %vm1610, %vm1611
          %1613 = vst.msk [vmem:[%s412] sm:$0x3] %vm1612, %v1607
          %v1614 = vmul.f32 %v1557, %v1557
          %v1615 = vmul.f32 %v1558, %v1558
          %v1616 = vmul.f32 %v1559, %v1559
          %v1617 = vmul.f32 %v1560, %v1560
          %v1618 = vmul.f32 %v1561, %v1561
          %v1619 = vmul.f32 %v1562, %v1562
          %v1620 = vmul.f32 %v1563, %v1563
          %v1621 = vmul.f32 %v1564, %v1564
          %v1622 = vadd.f32 %v1614, %v1616
          %v1623 = vadd.f32 %v1622, %v1618
          %v1624 = vadd.f32 %v1623, %v1620
          %v1625 = vrot.slane %v1624, 4
          %v1626 = vadd.f32 %v1624, %v1625
          %v1627 = vrot.slane %v1626, 2
          %v1628 = vadd.f32 %v1626, %v1627
          %v1629 = vrot.slane %v1628, 1
          %v1630 = vadd.f32 %v1628, %v1629
          %v1631 = vadd.f32 %v1615, %v1617
          %v1632 = vadd.f32 %v1631, %v1619
          %v1633 = vadd.f32 %v1632, %v1621
          %v1634 = vrot.slane %v1633, 4
          %v1635 = vadd.f32 %v1633, %v1634
          %v1636 = vrot.slane %v1635, 2
          %v1637 = vadd.f32 %v1635, %v1636
          %v1638 = vrot.slane %v1637, 1
          %v1639 = vadd.f32 %v1637, %v1638
          %v1642 = vcombine.low %v1630, %v1639
          %v1644 = vunpack.c.l.s4 1966171168
          %v1645 = vunpack.c.0.s8 %v1644
          %v1646 = vlaneseq
          %v1647 = vshrl.u32 %v1646, 7
          %v1648 = vsub.s32 %v1645, %v1647
          %v1649 = vrot.slane %v1642, %v1648
          %v1651 = vunpack.c.l.s4 1966171168
          %v1652 = vunpack.c.0.s8 %v1651
          %v1653 = vlaneseq
          %v1654 = vshrl.u32 %v1653, 7
          %v1655 = vsub.s32 %v1652, %v1654
          %v1656 = vrot.slane %v1649, %v1655
          %1658 = vst.msk [vmem:[%s425] sm:$0x3] %vm1612, %v1656
        $region63: #{decoder_forward.13} parent=46 // pred_fallthru
          _
        %s1659 = smul.u32 4, %s23
        %s1660 = smul.u32 2, %s24
        %p1661 = scmp.lt.s32.totalorder %s22, 3
        %s1662 = scalar_select %p1661, %s22, 3
        %p1663 = scmp.lt.s32.totalorder %s1659, 3
        %s1664 = scalar_select %p1663, %s1659, 3
        %p1665 = scmp.lt.s32.totalorder %s1660, 1
        %s1666 = scalar_select %p1665, %s1660, 1
        %s1667 = smul.addr %s1664, 2
        %s1668 = sadd.s32 %s1666, %s1667
        %s1669 = smul.addr %s1662, 8
        %s1670 = sadd.s32 %s1668, %s1669
        %s1671 = smul.addr %s1670, 8
        %s1672 = scalar_lea.vmem %s2, %s1671
        %s1673 = smul.u32 2, %s24
        %p1674 = scmp.lt.s32.totalorder %s22, 3
        %s1675 = scalar_select %p1674, %s22, 3
        %p1676 = scmp.lt.s32.totalorder %s23, 0
        %s1677 = scalar_select %p1676, %s23, 0
        %p1678 = scmp.lt.s32.totalorder %s1673, 1
        %s1679 = scalar_select %p1678, %s1673, 1
        %s1680 = smul.addr %s1677, 2
        %s1681 = sadd.s32 %s1679, %s1680
        %s1682 = smul.addr %s1675, 2
        %s1683 = sadd.s32 %s1681, %s1682
        %s1684 = scalar_lea.vmem %s3, %s1683
        %s1685 = smul.u32 2, %s24
        %p1686 = scmp.lt.s32.totalorder %s22, 3
        %s1687 = scalar_select %p1686, %s22, 3
        %p1688 = scmp.lt.s32.totalorder %s23, 0
        %s1689 = scalar_select %p1688, %s23, 0
        %p1690 = scmp.lt.s32.totalorder %s1685, 1
        %s1691 = scalar_select %p1690, %s1685, 1
        %s1692 = smul.addr %s1689, 2
        %s1693 = sadd.s32 %s1691, %s1692
        %s1694 = smul.addr %s1687, 2
        %s1695 = sadd.s32 %s1693, %s1694
        %s1696 = scalar_lea.vmem %s4, %s1695
        // Predicated region
        $region64: #{decoder_forward.13} parent=46 // pred_check
          %p1697 = pneg %p124
        $region65: #{decoder_forward.13} parent=46 // pred_check_branch
          %1699 = sbr.rel (%p1697) target = $region67
        $region66: #{decoder_forward.13} parent=46 // pred_region
          %s1700 = smul.u32 4, %s23
          %s1701 = smul.u32 2, %s24
        $region67: #{decoder_forward.13} parent=46 // pred_fallthru
          _
        // Predicated region
        $region68: #{decoder_forward.13} parent=46 // pred_check
          %p1702 = pneg %p154
        $region69: #{decoder_forward.13} parent=46 // pred_check_branch
          %1704 = sbr.rel (%p1702) target = $region71
        $region70: #{decoder_forward.13} parent=46 // pred_region
          %s1705 = smul.u32 2, %s24
        $region71: #{decoder_forward.13} parent=46 // pred_fallthru
          _
        // Predicated region
        $region72: #{decoder_forward.13} parent=46 // pred_check
          %p1706 = pneg %p184
        $region73: #{decoder_forward.13} parent=46 // pred_check_branch
          %1708 = sbr.rel (%p1706) target = $region75
        $region74: #{decoder_forward.13} parent=46 // pred_region
          %s1709 = smul.u32 2, %s24
        $region75: #{decoder_forward.13} parent=46 // pred_fallthru
          _
      $region47: #{decoder_forward.13} parent=5 // pred_fallthru
        _
      %p1710 = scmp.le.s32.totalorder 2, %s11
      // Predicated region
      $region76: #{decoder_forward.13} parent=5 // pred_check
        %p1711 = pneg %p1710
      $region77: #{decoder_forward.13} parent=5 // pred_check_branch
        %1713 = sbr.rel (%p1711) target = $region79
      $region78: #{decoder_forward.13} parent=5 // pred_region
        %s1714 = ssub.s32 %s11, 2
        // Predicated region
        $region80: #{decoder_forward.13} parent=78 // pred_check
          %p1715 = pneg %p130
        $region81: #{decoder_forward.13} parent=78 // pred_check_branch
          %1717 = sbr.rel (%p1715) target = $region83
        $region82: #{decoder_forward.13} parent=78 // pred_region
          %s1718 = smul.u32 4, %s27
          %s1719 = smul.u32 2, %s28
          %p1720 = scmp.lt.s32.totalorder %s26, 3
          %s1721 = scalar_select %p1720, %s26, 3
          %p1722 = scmp.lt.s32.totalorder %s1718, 3
          %s1723 = scalar_select %p1722, %s1718, 3
          %p1724 = scmp.lt.s32.totalorder %s1719, 1
          %s1725 = scalar_select %p1724, %s1719, 1
          %s1726 = smul.addr %s1723, 2
          %s1727 = sadd.s32 %s1725, %s1726
          %s1728 = smul.addr %s1721, 8
          %s1729 = sadd.s32 %s1727, %s1728
          %s1730 = smul.addr %s1729, 8
          %s1731 = scalar_lea.vmem %s2, %s1730
        $region83: #{decoder_forward.13} parent=78 // pred_fallthru
          _
        // Predicated region
        $region84: #{decoder_forward.13} parent=78 // pred_check
          %p1732 = pneg %p160
        $region85: #{decoder_forward.13} parent=78 // pred_check_branch
          %1734 = sbr.rel (%p1732) target = $region87
        $region86: #{decoder_forward.13} parent=78 // pred_region
          %s1735 = smul.u32 2, %s28
          %p1736 = scmp.lt.s32.totalorder %s26, 3
          %s1737 = scalar_select %p1736, %s26, 3
          %p1738 = scmp.lt.s32.totalorder %s27, 0
          %s1739 = scalar_select %p1738, %s27, 0
          %p1740 = scmp.lt.s32.totalorder %s1735, 1
          %s1741 = scalar_select %p1740, %s1735, 1
          %s1742 = smul.addr %s1739, 2
          %s1743 = sadd.s32 %s1741, %s1742
          %s1744 = smul.addr %s1737, 2
          %s1745 = sadd.s32 %s1743, %s1744
          %s1746 = scalar_lea.vmem %s3, %s1745
        $region87: #{decoder_forward.13} parent=78 // pred_fallthru
          _
        // Predicated region
        $region88: #{decoder_forward.13} parent=78 // pred_check
          %p1747 = pneg %p190
        $region89: #{decoder_forward.13} parent=78 // pred_check_branch
          %1749 = sbr.rel (%p1747) target = $region91
        $region90: #{decoder_forward.13} parent=78 // pred_region
          %s1750 = smul.u32 2, %s28
          %p1751 = scmp.lt.s32.totalorder %s26, 3
          %s1752 = scalar_select %p1751, %s26, 3
          %p1753 = scmp.lt.s32.totalorder %s27, 0
          %s1754 = scalar_select %p1753, %s27, 0
          %p1755 = scmp.lt.s32.totalorder %s1750, 1
          %s1756 = scalar_select %p1755, %s1750, 1
          %s1757 = smul.addr %s1754, 2
          %s1758 = sadd.s32 %s1756, %s1757
          %s1759 = smul.addr %s1752, 2
          %s1760 = sadd.s32 %s1758, %s1759
          %s1761 = scalar_lea.vmem %s4, %s1760
        $region91: #{decoder_forward.13} parent=78 // pred_fallthru
          _
      $region79: #{decoder_forward.13} parent=5 // pred_fallthru
        _
    $region6: #{decoder_forward.13} parent=1 // loop_footer
      %s15 = sadd.s32 1, %s11
    $region7: #{decoder_forward.13} parent=1 // loop_footer_branch
      %10 = sbr.rel target = $region3
    $region8: #{decoder_forward.13} parent=1 // loop_exit
      _

// kernel: decoder_forward.15
$region0: #{decoder_forward.15}
  #allocation0 [shape = 'u32[]', space=smem, size = 0x4, offset = 0x4, fixed_abs, tag = 'smem constant byte address 0x4 - core index']
  #allocation1 [shape = 'u32[144,128]{1,0:T(1,128)}', space=vmem, size = 0x12000, scoped, tag = 'internal scratch']
  %s0 = inlined_call_operand.vmem [shape: bf16[4,128,1024], index: 0, kind: input, shape index: {}]
  %s1 = inlined_call_operand.vmem [shape: bf16[4,1024,128], index: 1, kind: input, shape index: {}]
  %s2 = inlined_call_operand.vmem [shape: f32[4,128,128], index: 2, kind: output, shape index: {0}]
  %s3 = inlined_call_operand.vmem [shape: f32[4,1,1,128], index: 3, kind: output, shape index: {1}]
  %s4 = inlined_call_operand.vmem [shape: f32[4,1,1,128], index: 4, kind: output, shape index: {2}]
  %5 = xla_tuple %s2, %s3, %s4
  %s6 = sld [smem:[#allocation0]]
  $region57: #{decoder_forward.15} parent=0
    _
  %s8 = ssub.s32 1, %s6
  %s9 = scalar_select 0, %s8, %s6
  loop: start=0, step=1, limit=6
  $region2: #{decoder_forward.15} parent=0 // loop_pre_header
    _
  $region3: #{decoder_forward.15} parent=0 // loop_header
    %s11 = sphi 0, %s15
    %p12 = scmp.ge.s32.totalorder %s11, 6
    %s18 = sphi 0, %s44
    %s19 = sphi 0, %s40
    %s20 = sphi 0, %s36
    %s21 = sphi 0, %s32
    %s22 = sphi 0, %s18
    %s23 = sphi 0, %s19
    %s24 = sphi 0, %s20
    %s25 = sphi 0, %s21
    %s26 = sphi 0, %s22
    %s27 = sphi 0, %s23
    %s28 = sphi 0, %s24
    %s29 = sphi 0, %s25
    %s51 = sphi 0, %s53
    %s54 = sphi 0, %s51
    %s55 = sphi 0, %s54
    %s71 = sphi 0, %s55
    %s81 = sphi 0, %s83
    %s84 = sphi 0, %s81
    %s85 = sphi 0, %s84
    %s101 = sphi 0, %s85
    %s111 = sphi 0, %s113
    %s114 = sphi 0, %s111
    %s115 = sphi 0, %s114
    %s131 = sphi 0, %s115
    %s141 = sphi 0, %s143
    %s144 = sphi 0, %s141
    %s145 = sphi 0, %s144
    %s161 = sphi 0, %s145
    %s171 = sphi 0, %s173
    %s174 = sphi 0, %s171
    %s175 = sphi 0, %s174
    %s191 = sphi 0, %s175
  $region4: #{decoder_forward.15} parent=0 // loop_header_branch
    %14 = sbr.rel (%p12) target = $region8
  $region5: #{decoder_forward.15} parent=0 // loop_body
    %s16 = ssub.s32 %s11, 1
    %s17 = ssub.s32 %s11, 2
    %s30 = sadd.s32 1, %s21
    %p31 = scmp.ge.s32.totalorder %s30, 1
    %s32 = scalar_select %p31, 0, %s30
    %s33 = sadd.s32 1, %s20
    %s34 = scalar_select %p31, %s33, %s20
    %p35 = scmp.ge.s32.totalorder %s34, 1
    %s36 = scalar_select %p35, 0, %s34
    %s37 = sadd.s32 1, %s19
    %s38 = scalar_select %p35, %s37, %s19
    %p39 = scmp.ge.s32.totalorder %s38, 1
    %s40 = scalar_select %p39, 0, %s38
    %s41 = sadd.s32 1, %s18
    %s42 = scalar_select %p39, %s41, %s18
    %p43 = scmp.ge.s32.totalorder %s42, 4
    %s44 = scalar_select %p43, 0, %s42
    %s45 = ssub.s32 %s18, %s44
    %s46 = ssub.s32 %s19, %s40
    %s47 = sor.u32 %s45, %s46
    %s48 = ssub.s32 %s21, %s32
    %s49 = sor.u32 %s47, %s48
    %p50 = scmp.eq.s32.totalorder %s49, 0
    %s52 = sadd.s32 %s51, 1
    %s53 = scalar_select %p50, %s51, %s52
    %p56 = pneg %p50
    %p57 = scmp.eq.s32.totalorder %s11, 3
    %p58 = por %p56, %p57
    %p59 = scmp.ne.s32.totalorder %s51, %s54
    %p60 = scmp.eq.s32.totalorder %s11, 0
    %p61 = por %p59, %p60
    %p62 = scmp.ne.s32.totalorder %s51, %s54
    %p63 = scmp.eq.s32.totalorder %s16, 3
    %p64 = por %p62, %p63
    %p65 = scmp.ne.s32.totalorder %s54, %s55
    %p66 = scmp.eq.s32.totalorder %s16, 0
    %p67 = por %p65, %p66
    %p68 = scmp.ne.s32.totalorder %s54, %s55
    %p69 = scmp.eq.s32.totalorder %s17, 3
    %p70 = por %p68, %p69
    %p72 = scmp.ne.s32.totalorder %s55, %s71
    %p73 = scmp.eq.s32.totalorder %s17, 0
    %p74 = por %p72, %p73
    %s75 = ssub.s32 %s18, %s44
    %s76 = ssub.s32 %s21, %s32
    %s77 = sor.u32 %s75, %s76
    %s78 = ssub.s32 %s20, %s36
    %s79 = sor.u32 %s77, %s78
    %p80 = scmp.eq.s32.totalorder %s79, 0
    %s82 = sadd.s32 %s81, 1
    %s83 = scalar_select %p80, %s81, %s82
    %p86 = pneg %p80
    %p87 = scmp.eq.s32.totalorder %s11, 3
    %p88 = por %p86, %p87
    %p89 = scmp.ne.s32.totalorder %s81, %s84
    %p90 = scmp.eq.s32.totalorder %s11, 0
    %p91 = por %p89, %p90
    %p92 = scmp.ne.s32.totalorder %s81, %s84
    %p93 = scmp.eq.s32.totalorder %s16, 3
    %p94 = por %p92, %p93
    %p95 = scmp.ne.s32.totalorder %s84, %s85
    %p96 = scmp.eq.s32.totalorder %s16, 0
    %p97 = por %p95, %p96
    %p98 = scmp.ne.s32.totalorder %s84, %s85
    %p99 = scmp.eq.s32.totalorder %s17, 3
    %p100 = por %p98, %p99
    %p102 = scmp.ne.s32.totalorder %s85, %s101
    %p103 = scmp.eq.s32.totalorder %s17, 0
    %p104 = por %p102, %p103
    %s105 = ssub.s32 %s18, %s44
    %s106 = ssub.s32 %s19, %s40
    %s107 = sor.u32 %s105, %s106
    %s108 = ssub.s32 %s20, %s36
    %s109 = sor.u32 %s107, %s108
    %p110 = scmp.eq.s32.totalorder %s109, 0
    %s112 = sadd.s32 %s111, 1
    %s113 = scalar_select %p110, %s111, %s112
    %p116 = pneg %p110
    %p117 = scmp.eq.s32.totalorder %s11, 3
    %p118 = por %p116, %p117
    %p119 = scmp.ne.s32.totalorder %s111, %s114
    %p120 = scmp.eq.s32.totalorder %s11, 0
    %p121 = por %p119, %p120
    %p122 = scmp.ne.s32.totalorder %s111, %s114
    %p123 = scmp.eq.s32.totalorder %s16, 3
    %p124 = por %p122, %p123
    %p125 = scmp.ne.s32.totalorder %s114, %s115
    %p126 = scmp.eq.s32.totalorder %s16, 0
    %p127 = por %p125, %p126
    %p128 = scmp.ne.s32.totalorder %s114, %s115
    %p129 = scmp.eq.s32.totalorder %s17, 3
    %p130 = por %p128, %p129
    %p132 = scmp.ne.s32.totalorder %s115, %s131
    %p133 = scmp.eq.s32.totalorder %s17, 0
    %p134 = por %p132, %p133
    %s135 = ssub.s32 %s18, %s44
    %s136 = ssub.s32 %s19, %s40
    %s137 = sor.u32 %s135, %s136
    %s138 = ssub.s32 %s20, %s36
    %s139 = sor.u32 %s137, %s138
    %p140 = scmp.eq.s32.totalorder %s139, 0
    %s142 = sadd.s32 %s141, 1
    %s143 = scalar_select %p140, %s141, %s142
    %p146 = pneg %p140
    %p147 = scmp.eq.s32.totalorder %s11, 3
    %p148 = por %p146, %p147
    %p149 = scmp.ne.s32.totalorder %s141, %s144
    %p150 = scmp.eq.s32.totalorder %s11, 0
    %p151 = por %p149, %p150
    %p152 = scmp.ne.s32.totalorder %s141, %s144
    %p153 = scmp.eq.s32.totalorder %s16, 3
    %p154 = por %p152, %p153
    %p155 = scmp.ne.s32.totalorder %s144, %s145
    %p156 = scmp.eq.s32.totalorder %s16, 0
    %p157 = por %p155, %p156
    %p158 = scmp.ne.s32.totalorder %s144, %s145
    %p159 = scmp.eq.s32.totalorder %s17, 3
    %p160 = por %p158, %p159
    %p162 = scmp.ne.s32.totalorder %s145, %s161
    %p163 = scmp.eq.s32.totalorder %s17, 0
    %p164 = por %p162, %p163
    %s165 = ssub.s32 %s18, %s44
    %s166 = ssub.s32 %s19, %s40
    %s167 = sor.u32 %s165, %s166
    %s168 = ssub.s32 %s20, %s36
    %s169 = sor.u32 %s167, %s168
    %p170 = scmp.eq.s32.totalorder %s169, 0
    %s172 = sadd.s32 %s171, 1
    %s173 = scalar_select %p170, %s171, %s172
    %p176 = pneg %p170
    %p177 = scmp.eq.s32.totalorder %s11, 3
    %p178 = por %p176, %p177
    %p179 = scmp.ne.s32.totalorder %s171, %s174
    %p180 = scmp.eq.s32.totalorder %s11, 0
    %p181 = por %p179, %p180
    %p182 = scmp.ne.s32.totalorder %s171, %s174
    %p183 = scmp.eq.s32.totalorder %s16, 3
    %p184 = por %p182, %p183
    %p185 = scmp.ne.s32.totalorder %s174, %s175
    %p186 = scmp.eq.s32.totalorder %s16, 0
    %p187 = por %p185, %p186
    %p188 = scmp.ne.s32.totalorder %s174, %s175
    %p189 = scmp.eq.s32.totalorder %s17, 3
    %p190 = por %p188, %p189
    %p192 = scmp.ne.s32.totalorder %s175, %s191
    %p193 = scmp.eq.s32.totalorder %s17, 0
    %p194 = por %p192, %p193
    %p195 = scmp.le.s32.totalorder 1, %s11
    %p196 = scmp.lt.s32.totalorder %s11, 5
    %p197 = pnand %p195, %p196
    %p198 = pneg %p197
    // Predicated region
    $region9: #{decoder_forward.15} parent=5 // pred_check
      _
    $region10: #{decoder_forward.15} parent=5 // pred_check_branch
      %200 = sbr.rel (%p197) target = $region12
    $region11: #{decoder_forward.15} parent=5 // pred_region
      %s201 = ssub.s32 %s11, 1
    $region12: #{decoder_forward.15} parent=5 // pred_fallthru
      _
    %p202 = scmp.lt.s32.totalorder %s11, 4
    // Predicated region
    $region13: #{decoder_forward.15} parent=5 // pred_check
      %p203 = pneg %p202
    $region14: #{decoder_forward.15} parent=5 // pred_check_branch
      %205 = sbr.rel (%p203) target = $region16
    $region15: #{decoder_forward.15} parent=5 // pred_region
      // Predicated region
      $region17: #{decoder_forward.15} parent=15 // pred_check
        %p206 = pneg %p61
      $region18: #{decoder_forward.15} parent=15 // pred_check_branch
        %208 = sbr.rel (%p206) target = $region20
      $region19: #{decoder_forward.15} parent=15 // pred_region
        %s209 = smul.u32 16, %s19
        %s210 = smul.u32 8, %s21
        %p211 = scmp.lt.s32.totalorder %s18, 3
        %s212 = scalar_select %p211, %s18, 3
        %p213 = scmp.lt.s32.totalorder %s209, 15
        %s214 = scalar_select %p213, %s209, 15
        %p215 = scmp.lt.s32.totalorder %s210, 7
        %s216 = scalar_select %p215, %s210, 7
        %s217 = smul.addr %s214, 8
        %s218 = sadd.s32 %s216, %s217
        %s219 = smul.addr %s212, 128
        %s220 = sadd.s32 %s218, %s219
        %s221 = smul.addr %s220, 4
        %s222 = scalar_lea.vmem %s0, %s221
        %s223 = smul.u32 16, %s19
        %s224 = smul.u32 8, %s21
      $region20: #{decoder_forward.15} parent=15 // pred_fallthru
        _
      // Predicated region
      $region21: #{decoder_forward.15} parent=15 // pred_check
        %p225 = pneg %p91
      $region22: #{decoder_forward.15} parent=15 // pred_check_branch
        %227 = sbr.rel (%p225) target = $region24
      $region23: #{decoder_forward.15} parent=15 // pred_region
        %s228 = smul.u32 128, %s21
        %p229 = scmp.lt.s32.totalorder %s18, 3
        %s230 = scalar_select %p229, %s18, 3
        %p231 = scmp.lt.s32.totalorder %s228, 127
        %s232 = scalar_select %p231, %s228, 127
        %p233 = scmp.lt.s32.totalorder %s20, 0
        %s234 = scalar_select %p233, %s20, 0
        %s235 = sadd.s32 %s234, %s232
        %s236 = smul.addr %s230, 128
        %s237 = sadd.s32 %s235, %s236
        %s238 = smul.addr %s237, 4
        %s239 = scalar_lea.vmem %s1, %s238
        %s240 = smul.u32 128, %s21
      $region24: #{decoder_forward.15} parent=15 // pred_fallthru
        _
    $region16: #{decoder_forward.15} parent=5 // pred_fallthru
      _
    %p241 = scmp.le.s32.totalorder 1, %s11
    %p242 = scmp.lt.s32.totalorder %s11, 5
    %p243 = pnand %p241, %p242
    %p244 = pneg %p243
    // Predicated region
    $region25: #{decoder_forward.15} parent=5 // pred_check
      _
    $region26: #{decoder_forward.15} parent=5 // pred_check_branch
      %246 = sbr.rel (%p243) target = $region28
    $region27: #{decoder_forward.15} parent=5 // pred_region
      %s247 = ssub.s32 %s11, 1
      %s248 = smul.u32 16, %s23
      %s249 = smul.u32 8, %s25
      %p250 = scmp.lt.s32.totalorder %s22, 3
      %s251 = scalar_select %p250, %s22, 3
      %p252 = scmp.lt.s32.totalorder %s248, 15
      %s253 = scalar_select %p252, %s248, 15
      %p254 = scmp.lt.s32.totalorder %s249, 7
      %s255 = scalar_select %p254, %s249, 7
      %s256 = smul.addr %s253, 8
      %s257 = sadd.s32 %s255, %s256
      %s258 = smul.addr %s251, 128
      %s259 = sadd.s32 %s257, %s258
      %s260 = smul.addr %s259, 4
      %s261 = scalar_lea.vmem %s0, %s260
      %p262 = pneg %p67
      %p263 = pneg %p64
      %s264 = smul.u32 128, %s25
      %p265 = scmp.lt.s32.totalorder %s22, 3
      %s266 = scalar_select %p265, %s22, 3
      %p267 = scmp.lt.s32.totalorder %s264, 127
      %s268 = scalar_select %p267, %s264, 127
      %p269 = scmp.lt.s32.totalorder %s24, 0
      %s270 = scalar_select %p269, %s24, 0
      %s271 = sadd.s32 %s270, %s268
      %s272 = smul.addr %s266, 128
      %s273 = sadd.s32 %s271, %s272
      %s274 = smul.addr %s273, 4
      %s275 = scalar_lea.vmem %s1, %s274
      %p276 = pneg %p97
      %p277 = pneg %p94
      %p278 = pneg %p127
      %p279 = pneg %p124
      %s280 = smul.u32 16, %s23
      %p281 = scmp.lt.s32.totalorder %s22, 3
      %s282 = scalar_select %p281, %s22, 3
      %p283 = scmp.lt.s32.totalorder %s280, 15
      %s284 = scalar_select %p283, %s280, 15
      %p285 = scmp.lt.s32.totalorder %s24, 0
      %s286 = scalar_select %p285, %s24, 0
      %s287 = sadd.s32 %s286, %s284
      %s288 = smul.addr %s282, 16
      %s289 = sadd.s32 %s287, %s288
      %s290 = smul.addr %s289, 8
      %s291 = scalar_lea.vmem %s2, %s290
      %p292 = pneg %p157
      %p293 = pneg %p154
      %p294 = scmp.lt.s32.totalorder %s22, 3
      %s295 = scalar_select %p294, %s22, 3
      %p296 = scmp.lt.s32.totalorder %s23, 0
      %s297 = scalar_select %p296, %s23, 0
      %p298 = scmp.lt.s32.totalorder %s24, 0
      %s299 = scalar_select %p298, %s24, 0
      %s300 = sadd.s32 %s299, %s297
      %s301 = sadd.s32 %s300, %s295
      %s302 = scalar_lea.vmem %s3, %s301
      %p303 = pneg %p187
      %p304 = pneg %p184
      %p305 = scmp.lt.s32.totalorder %s22, 3
      %s306 = scalar_select %p305, %s22, 3
      %p307 = scmp.lt.s32.totalorder %s23, 0
      %s308 = scalar_select %p307, %s23, 0
      %p309 = scmp.lt.s32.totalorder %s24, 0
      %s310 = scalar_select %p309, %s24, 0
      %s311 = sadd.s32 %s310, %s308
      %s312 = sadd.s32 %s311, %s306
      %s313 = scalar_lea.vmem %s4, %s312
      %s314 = smul.u32 16, %s23
      %s315 = smul.u32 8, %s25
      %p316 = scmp.lt.s32.totalorder %s22, 3
      %s317 = scalar_select %p316, %s22, 3
      %p318 = scmp.lt.s32.totalorder %s314, 15
      %s319 = scalar_select %p318, %s314, 15
      %p320 = scmp.lt.s32.totalorder %s315, 7
      %s321 = scalar_select %p320, %s315, 7
      %s322 = smul.addr %s319, 8
      %s323 = sadd.s32 %s321, %s322
      %s324 = smul.addr %s317, 128
      %s325 = sadd.s32 %s323, %s324
      %s326 = smul.addr %s325, 4
      %s327 = scalar_lea.vmem %s0, %s326
      %s328 = smul.u32 16, %s23
      %s329 = smul.u32 8, %s25
      %s330 = smul.u32 128, %s25
      %p331 = scmp.lt.s32.totalorder %s22, 3
      %s332 = scalar_select %p331, %s22, 3
      %p333 = scmp.lt.s32.totalorder %s330, 127
      %s334 = scalar_select %p333, %s330, 127
      %p335 = scmp.lt.s32.totalorder %s24, 0
      %s336 = scalar_select %p335, %s24, 0
      %s337 = sadd.s32 %s336, %s334
      %s338 = smul.addr %s332, 128
      %s339 = sadd.s32 %s337, %s338
      %s340 = smul.addr %s339, 4
      %s341 = scalar_lea.vmem %s1, %s340
      %s342 = smul.u32 128, %s25
      %s343 = smul.u32 16, %s23
      %p344 = scmp.lt.s32.totalorder %s22, 3
      %s345 = scalar_select %p344, %s22, 3
      %p346 = scmp.lt.s32.totalorder %s343, 15
      %s347 = scalar_select %p346, %s343, 15
      %p348 = scmp.lt.s32.totalorder %s24, 0
      %s349 = scalar_select %p348, %s24, 0
      %s350 = sadd.s32 %s349, %s347
      %s351 = smul.addr %s345, 16
      %s352 = sadd.s32 %s350, %s351
      %s353 = smul.addr %s352, 8
      %s354 = scalar_lea.vmem %s2, %s353
      %s355 = smul.u32 16, %s23
      %p356 = scmp.lt.s32.totalorder %s22, 3
      %s357 = scalar_select %p356, %s22, 3
      %p358 = scmp.lt.s32.totalorder %s23, 0
      %s359 = scalar_select %p358, %s23, 0
      %p360 = scmp.lt.s32.totalorder %s24, 0
      %s361 = scalar_select %p360, %s24, 0
      %s362 = sadd.s32 %s361, %s359
      %s363 = sadd.s32 %s362, %s357
      %s364 = scalar_lea.vmem %s3, %s363
      %p365 = scmp.lt.s32.totalorder %s22, 3
      %s366 = scalar_select %p365, %s22, 3
      %p367 = scmp.lt.s32.totalorder %s23, 0
      %s368 = scalar_select %p367, %s23, 0
      %p369 = scmp.lt.s32.totalorder %s24, 0
      %s370 = scalar_select %p369, %s24, 0
      %s371 = sadd.s32 %s370, %s368
      %s372 = sadd.s32 %s371, %s366
      %s373 = scalar_lea.vmem %s4, %s372
      %v375 = vld [vmem:[%s327] sm:$0xff]
      %v376 = vld [vmem:[%s327 + $0x8] sm:$0xff]
      %v377 = vld [vmem:[%s327 + $0x10] sm:$0xff]
      %v378 = vld [vmem:[%s327 + $0x18] sm:$0xff]
      %v379 = vld [vmem:[%s327 + $0x20] sm:$0xff]
      %v380 = vld [vmem:[%s327 + $0x28] sm:$0xff]
      %v381 = vld [vmem:[%s327 + $0x30] sm:$0xff]
      %v382 = vld [vmem:[%s327 + $0x38] sm:$0xff]
      %v383 = vld [vmem:[%s327 + $0x40] sm:$0xff]
      %v384 = vld [vmem:[%s327 + $0x48] sm:$0xff]
      %v385 = vld [vmem:[%s327 + $0x50] sm:$0xff]
      %v386 = vld [vmem:[%s327 + $0x58] sm:$0xff]
      %v387 = vld [vmem:[%s327 + $0x60] sm:$0xff]
      %v388 = vld [vmem:[%s327 + $0x68] sm:$0xff]
      %v389 = vld [vmem:[%s327 + $0x70] sm:$0xff]
      %v390 = vld [vmem:[%s327 + $0x78] sm:$0xff]
      %v391 = vld [vmem:[%s327 + $0x80] sm:$0xff]
      %v392 = vld [vmem:[%s327 + $0x88] sm:$0xff]
      %v393 = vld [vmem:[%s327 + $0x90] sm:$0xff]
      %v394 = vld [vmem:[%s327 + $0x98] sm:$0xff]
      %v395 = vld [vmem:[%s327 + $0xa0] sm:$0xff]
      %v396 = vld [vmem:[%s327 + $0xa8] sm:$0xff]
      %v397 = vld [vmem:[%s327 + $0xb0] sm:$0xff]
      %v398 = vld [vmem:[%s327 + $0xb8] sm:$0xff]
      %v399 = vld [vmem:[%s327 + $0xc0] sm:$0xff]
      %v400 = vld [vmem:[%s327 + $0xc8] sm:$0xff]
      %v401 = vld [vmem:[%s327 + $0xd0] sm:$0xff]
      %v402 = vld [vmem:[%s327 + $0xd8] sm:$0xff]
      %v403 = vld [vmem:[%s327 + $0xe0] sm:$0xff]
      %v404 = vld [vmem:[%s327 + $0xe8] sm:$0xff]
      %v405 = vld [vmem:[%s327 + $0xf0] sm:$0xff]
      %v406 = vld [vmem:[%s327 + $0xf8] sm:$0xff]
      %v407 = vld [vmem:[%s327 + $0x100] sm:$0xff]
      %v408 = vld [vmem:[%s327 + $0x108] sm:$0xff]
      %v409 = vld [vmem:[%s327 + $0x110] sm:$0xff]
      %v410 = vld [vmem:[%s327 + $0x118] sm:$0xff]
      %v411 = vld [vmem:[%s327 + $0x120] sm:$0xff]
      %v412 = vld [vmem:[%s327 + $0x128] sm:$0xff]
      %v413 = vld [vmem:[%s327 + $0x130] sm:$0xff]
      %v414 = vld [vmem:[%s327 + $0x138] sm:$0xff]
      %v415 = vld [vmem:[%s327 + $0x140] sm:$0xff]
      %v416 = vld [vmem:[%s327 + $0x148] sm:$0xff]
      %v417 = vld [vmem:[%s327 + $0x150] sm:$0xff]
      %v418 = vld [vmem:[%s327 + $0x158] sm:$0xff]
      %v419 = vld [vmem:[%s327 + $0x160] sm:$0xff]
      %v420 = vld [vmem:[%s327 + $0x168] sm:$0xff]
      %v421 = vld [vmem:[%s327 + $0x170] sm:$0xff]
      %v422 = vld [vmem:[%s327 + $0x178] sm:$0xff]
      %v423 = vld [vmem:[%s327 + $0x180] sm:$0xff]
      %v424 = vld [vmem:[%s327 + $0x188] sm:$0xff]
      %v425 = vld [vmem:[%s327 + $0x190] sm:$0xff]
      %v426 = vld [vmem:[%s327 + $0x198] sm:$0xff]
      %v427 = vld [vmem:[%s327 + $0x1a0] sm:$0xff]
      %v428 = vld [vmem:[%s327 + $0x1a8] sm:$0xff]
      %v429 = vld [vmem:[%s327 + $0x1b0] sm:$0xff]
      %v430 = vld [vmem:[%s327 + $0x1b8] sm:$0xff]
      %v431 = vld [vmem:[%s327 + $0x1c0] sm:$0xff]
      %v432 = vld [vmem:[%s327 + $0x1c8] sm:$0xff]
      %v433 = vld [vmem:[%s327 + $0x1d0] sm:$0xff]
      %v434 = vld [vmem:[%s327 + $0x1d8] sm:$0xff]
      %v435 = vld [vmem:[%s327 + $0x1e0] sm:$0xff]
      %v436 = vld [vmem:[%s327 + $0x1e8] sm:$0xff]
      %v437 = vld [vmem:[%s327 + $0x1f0] sm:$0xff]
      %v438 = vld [vmem:[%s327 + $0x1f8] sm:$0xff]
      %v439 = vld [vmem:[%s341] sm:$0xf]
      %v440 = vld [vmem:[%s341 + $0x4] sm:$0xf]
      %v441 = vld [vmem:[%s341 + $0x8] sm:$0xf]
      %v442 = vld [vmem:[%s341 + $0xc] sm:$0xf]
      %v443 = vld [vmem:[%s341 + $0x10] sm:$0xf]
      %v444 = vld [vmem:[%s341 + $0x14] sm:$0xf]
      %v445 = vld [vmem:[%s341 + $0x18] sm:$0xf]
      %v446 = vld [vmem:[%s341 + $0x1c] sm:$0xf]
      %v447 = vld [vmem:[%s341 + $0x20] sm:$0xf]
      %v448 = vld [vmem:[%s341 + $0x24] sm:$0xf]
      %v449 = vld [vmem:[%s341 + $0x28] sm:$0xf]
      %v450 = vld [vmem:[%s341 + $0x2c] sm:$0xf]
      %v451 = vld [vmem:[%s341 + $0x30] sm:$0xf]
      %v452 = vld [vmem:[%s341 + $0x34] sm:$0xf]
      %v453 = vld [vmem:[%s341 + $0x38] sm:$0xf]
      %v454 = vld [vmem:[%s341 + $0x3c] sm:$0xf]
      %v455 = vld [vmem:[%s341 + $0x40] sm:$0xf]
      %v456 = vld [vmem:[%s341 + $0x44] sm:$0xf]
      %v457 = vld [vmem:[%s341 + $0x48] sm:$0xf]
      %v458 = vld [vmem:[%s341 + $0x4c] sm:$0xf]
      %v459 = vld [vmem:[%s341 + $0x50] sm:$0xf]
      %v460 = vld [vmem:[%s341 + $0x54] sm:$0xf]
      %v461 = vld [vmem:[%s341 + $0x58] sm:$0xf]
      %v462 = vld [vmem:[%s341 + $0x5c] sm:$0xf]
      %v463 = vld [vmem:[%s341 + $0x60] sm:$0xf]
      %v464 = vld [vmem:[%s341 + $0x64] sm:$0xf]
      %v465 = vld [vmem:[%s341 + $0x68] sm:$0xf]
      %v466 = vld [vmem:[%s341 + $0x6c] sm:$0xf]
      %v467 = vld [vmem:[%s341 + $0x70] sm:$0xf]
      %v468 = vld [vmem:[%s341 + $0x74] sm:$0xf]
      %v469 = vld [vmem:[%s341 + $0x78] sm:$0xf]
      %v470 = vld [vmem:[%s341 + $0x7c] sm:$0xf]
      %v471 = vld [vmem:[%s341 + $0x80] sm:$0xf]
      %v472 = vld [vmem:[%s341 + $0x84] sm:$0xf]
      %v473 = vld [vmem:[%s341 + $0x88] sm:$0xf]
      %v474 = vld [vmem:[%s341 + $0x8c] sm:$0xf]
      %v475 = vld [vmem:[%s341 + $0x90] sm:$0xf]
      %v476 = vld [vmem:[%s341 + $0x94] sm:$0xf]
      %v477 = vld [vmem:[%s341 + $0x98] sm:$0xf]
      %v478 = vld [vmem:[%s341 + $0x9c] sm:$0xf]
      %v479 = vld [vmem:[%s341 + $0xa0] sm:$0xf]
      %v480 = vld [vmem:[%s341 + $0xa4] sm:$0xf]
      %v481 = vld [vmem:[%s341 + $0xa8] sm:$0xf]
      %v482 = vld [vmem:[%s341 + $0xac] sm:$0xf]
      %v483 = vld [vmem:[%s341 + $0xb0] sm:$0xf]
      %v484 = vld [vmem:[%s341 + $0xb4] sm:$0xf]
      %v485 = vld [vmem:[%s341 + $0xb8] sm:$0xf]
      %v486 = vld [vmem:[%s341 + $0xbc] sm:$0xf]
      %v487 = vld [vmem:[%s341 + $0xc0] sm:$0xf]
      %v488 = vld [vmem:[%s341 + $0xc4] sm:$0xf]
      %v489 = vld [vmem:[%s341 + $0xc8] sm:$0xf]
      %v490 = vld [vmem:[%s341 + $0xcc] sm:$0xf]
      %v491 = vld [vmem:[%s341 + $0xd0] sm:$0xf]
      %v492 = vld [vmem:[%s341 + $0xd4] sm:$0xf]
      %v493 = vld [vmem:[%s341 + $0xd8] sm:$0xf]
      %v494 = vld [vmem:[%s341 + $0xdc] sm:$0xf]
      %v495 = vld [vmem:[%s341 + $0xe0] sm:$0xf]
      %v496 = vld [vmem:[%s341 + $0xe4] sm:$0xf]
      %v497 = vld [vmem:[%s341 + $0xe8] sm:$0xf]
      %v498 = vld [vmem:[%s341 + $0xec] sm:$0xf]
      %v499 = vld [vmem:[%s341 + $0xf0] sm:$0xf]
      %v500 = vld [vmem:[%s341 + $0xf4] sm:$0xf]
      %v501 = vld [vmem:[%s341 + $0xf8] sm:$0xf]
      %v502 = vld [vmem:[%s341 + $0xfc] sm:$0xf]
      %v503 = vld [vmem:[%s341 + $0x100] sm:$0xf]
      %v504 = vld [vmem:[%s341 + $0x104] sm:$0xf]
      %v505 = vld [vmem:[%s341 + $0x108] sm:$0xf]
      %v506 = vld [vmem:[%s341 + $0x10c] sm:$0xf]
      %v507 = vld [vmem:[%s341 + $0x110] sm:$0xf]
      %v508 = vld [vmem:[%s341 + $0x114] sm:$0xf]
      %v509 = vld [vmem:[%s341 + $0x118] sm:$0xf]
      %v510 = vld [vmem:[%s341 + $0x11c] sm:$0xf]
      %v511 = vld [vmem:[%s341 + $0x120] sm:$0xf]
      %v512 = vld [vmem:[%s341 + $0x124] sm:$0xf]
      %v513 = vld [vmem:[%s341 + $0x128] sm:$0xf]
      %v514 = vld [vmem:[%s341 + $0x12c] sm:$0xf]
      %v515 = vld [vmem:[%s341 + $0x130] sm:$0xf]
      %v516 = vld [vmem:[%s341 + $0x134] sm:$0xf]
      %v517 = vld [vmem:[%s341 + $0x138] sm:$0xf]
      %v518 = vld [vmem:[%s341 + $0x13c] sm:$0xf]
      %v519 = vld [vmem:[%s341 + $0x140] sm:$0xf]
      %v520 = vld [vmem:[%s341 + $0x144] sm:$0xf]
      %v521 = vld [vmem:[%s341 + $0x148] sm:$0xf]
      %v522 = vld [vmem:[%s341 + $0x14c] sm:$0xf]
      %v523 = vld [vmem:[%s341 + $0x150] sm:$0xf]
      %v524 = vld [vmem:[%s341 + $0x154] sm:$0xf]
      %v525 = vld [vmem:[%s341 + $0x158] sm:$0xf]
      %v526 = vld [vmem:[%s341 + $0x15c] sm:$0xf]
      %v527 = vld [vmem:[%s341 + $0x160] sm:$0xf]
      %v528 = vld [vmem:[%s341 + $0x164] sm:$0xf]
      %v529 = vld [vmem:[%s341 + $0x168] sm:$0xf]
      %v530 = vld [vmem:[%s341 + $0x16c] sm:$0xf]
      %v531 = vld [vmem:[%s341 + $0x170] sm:$0xf]
      %v532 = vld [vmem:[%s341 + $0x174] sm:$0xf]
      %v533 = vld [vmem:[%s341 + $0x178] sm:$0xf]
      %v534 = vld [vmem:[%s341 + $0x17c] sm:$0xf]
      %v535 = vld [vmem:[%s341 + $0x180] sm:$0xf]
      %v536 = vld [vmem:[%s341 + $0x184] sm:$0xf]
      %v537 = vld [vmem:[%s341 + $0x188] sm:$0xf]
      %v538 = vld [vmem:[%s341 + $0x18c] sm:$0xf]
      %v539 = vld [vmem:[%s341 + $0x190] sm:$0xf]
      %v540 = vld [vmem:[%s341 + $0x194] sm:$0xf]
      %v541 = vld [vmem:[%s341 + $0x198] sm:$0xf]
      %v542 = vld [vmem:[%s341 + $0x19c] sm:$0xf]
      %v543 = vld [vmem:[%s341 + $0x1a0] sm:$0xf]
      %v544 = vld [vmem:[%s341 + $0x1a4] sm:$0xf]
      %v545 = vld [vmem:[%s341 + $0x1a8] sm:$0xf]
      %v546 = vld [vmem:[%s341 + $0x1ac] sm:$0xf]
      %v547 = vld [vmem:[%s341 + $0x1b0] sm:$0xf]
      %v548 = vld [vmem:[%s341 + $0x1b4] sm:$0xf]
      %v549 = vld [vmem:[%s341 + $0x1b8] sm:$0xf]
      %v550 = vld [vmem:[%s341 + $0x1bc] sm:$0xf]
      %v551 = vld [vmem:[%s341 + $0x1c0] sm:$0xf]
      %v552 = vld [vmem:[%s341 + $0x1c4] sm:$0xf]
      %v553 = vld [vmem:[%s341 + $0x1c8] sm:$0xf]
      %v554 = vld [vmem:[%s341 + $0x1cc] sm:$0xf]
      %v555 = vld [vmem:[%s341 + $0x1d0] sm:$0xf]
      %v556 = vld [vmem:[%s341 + $0x1d4] sm:$0xf]
      %v557 = vld [vmem:[%s341 + $0x1d8] sm:$0xf]
      %v558 = vld [vmem:[%s341 + $0x1dc] sm:$0xf]
      %v559 = vld [vmem:[%s341 + $0x1e0] sm:$0xf]
      %v560 = vld [vmem:[%s341 + $0x1e4] sm:$0xf]
      %v561 = vld [vmem:[%s341 + $0x1e8] sm:$0xf]
      %v562 = vld [vmem:[%s341 + $0x1ec] sm:$0xf]
      %v563 = vld [vmem:[%s341 + $0x1f0] sm:$0xf]
      %v564 = vld [vmem:[%s341 + $0x1f4] sm:$0xf]
      %v565 = vld [vmem:[%s341 + $0x1f8] sm:$0xf]
      %v566 = vld [vmem:[%s341 + $0x1fc] sm:$0xf]
      %v631 = vunpack.c.l.b16 %v375
      %v632 = vunpack.c.h.b16 %v375
      %v633 = vunpack.c.l.b16 %v376
      %v634 = vunpack.c.h.b16 %v376
      %v635 = vunpack.c.l.b16 %v377
      %v636 = vunpack.c.h.b16 %v377
      %v637 = vunpack.c.l.b16 %v378
      %v638 = vunpack.c.h.b16 %v378
      %v639 = vunpack.c.l.b16 %v379
      %v640 = vunpack.c.h.b16 %v379
      %v641 = vunpack.c.l.b16 %v380
      %v642 = vunpack.c.h.b16 %v380
      %v643 = vunpack.c.l.b16 %v381
      %v644 = vunpack.c.h.b16 %v381
      %v645 = vunpack.c.l.b16 %v382
      %v646 = vunpack.c.h.b16 %v382
      %v647 = vunpack.c.l.b16 %v383
      %v648 = vunpack.c.h.b16 %v383
      %v649 = vunpack.c.l.b16 %v384
      %v650 = vunpack.c.h.b16 %v384
      %v651 = vunpack.c.l.b16 %v385
      %v652 = vunpack.c.h.b16 %v385
      %v653 = vunpack.c.l.b16 %v386
      %v654 = vunpack.c.h.b16 %v386
      %v655 = vunpack.c.l.b16 %v387
      %v656 = vunpack.c.h.b16 %v387
      %v657 = vunpack.c.l.b16 %v388
      %v658 = vunpack.c.h.b16 %v388
      %v659 = vunpack.c.l.b16 %v389
      %v660 = vunpack.c.h.b16 %v389
      %v661 = vunpack.c.l.b16 %v390
      %v662 = vunpack.c.h.b16 %v390
      %v663 = vunpack.c.l.b16 %v391
      %v664 = vunpack.c.h.b16 %v391
      %v665 = vunpack.c.l.b16 %v392
      %v666 = vunpack.c.h.b16 %v392
      %v667 = vunpack.c.l.b16 %v393
      %v668 = vunpack.c.h.b16 %v393
      %v669 = vunpack.c.l.b16 %v394
      %v670 = vunpack.c.h.b16 %v394
      %v671 = vunpack.c.l.b16 %v395
      %v672 = vunpack.c.h.b16 %v395
      %v673 = vunpack.c.l.b16 %v396
      %v674 = vunpack.c.h.b16 %v396
      %v675 = vunpack.c.l.b16 %v397
      %v676 = vunpack.c.h.b16 %v397
      %v677 = vunpack.c.l.b16 %v398
      %v678 = vunpack.c.h.b16 %v398
      %v679 = vunpack.c.l.b16 %v399
      %v680 = vunpack.c.h.b16 %v399
      %v681 = vunpack.c.l.b16 %v400
      %v682 = vunpack.c.h.b16 %v400
      %v683 = vunpack.c.l.b16 %v401
      %v684 = vunpack.c.h.b16 %v401
      %v685 = vunpack.c.l.b16 %v402
      %v686 = vunpack.c.h.b16 %v402
      %v687 = vunpack.c.l.b16 %v403
      %v688 = vunpack.c.h.b16 %v403
      %v689 = vunpack.c.l.b16 %v404
      %v690 = vunpack.c.h.b16 %v404
      %v691 = vunpack.c.l.b16 %v405
      %v692 = vunpack.c.h.b16 %v405
      %v693 = vunpack.c.l.b16 %v406
      %v694 = vunpack.c.h.b16 %v406
      %v695 = vunpack.c.l.b16 %v407
      %v696 = vunpack.c.h.b16 %v407
      %v697 = vunpack.c.l.b16 %v408
      %v698 = vunpack.c.h.b16 %v408
      %v699 = vunpack.c.l.b16 %v409
      %v700 = vunpack.c.h.b16 %v409
      %v701 = vunpack.c.l.b16 %v410
      %v702 = vunpack.c.h.b16 %v410
      %v703 = vunpack.c.l.b16 %v411
      %v704 = vunpack.c.h.b16 %v411
      %v705 = vunpack.c.l.b16 %v412
      %v706 = vunpack.c.h.b16 %v412
      %v707 = vunpack.c.l.b16 %v413
      %v708 = vunpack.c.h.b16 %v413
      %v709 = vunpack.c.l.b16 %v414
      %v710 = vunpack.c.h.b16 %v414
      %v711 = vunpack.c.l.b16 %v415
      %v712 = vunpack.c.h.b16 %v415
      %v713 = vunpack.c.l.b16 %v416
      %v714 = vunpack.c.h.b16 %v416
      %v715 = vunpack.c.l.b16 %v417
      %v716 = vunpack.c.h.b16 %v417
      %v717 = vunpack.c.l.b16 %v418
      %v718 = vunpack.c.h.b16 %v418
      %v719 = vunpack.c.l.b16 %v419
      %v720 = vunpack.c.h.b16 %v419
      %v721 = vunpack.c.l.b16 %v420
      %v722 = vunpack.c.h.b16 %v420
      %v723 = vunpack.c.l.b16 %v421
      %v724 = vunpack.c.h.b16 %v421
      %v725 = vunpack.c.l.b16 %v422
      %v726 = vunpack.c.h.b16 %v422
      %v727 = vunpack.c.l.b16 %v423
      %v728 = vunpack.c.h.b16 %v423
      %v729 = vunpack.c.l.b16 %v424
      %v730 = vunpack.c.h.b16 %v424
      %v731 = vunpack.c.l.b16 %v425
      %v732 = vunpack.c.h.b16 %v425
      %v733 = vunpack.c.l.b16 %v426
      %v734 = vunpack.c.h.b16 %v426
      %v735 = vunpack.c.l.b16 %v427
      %v736 = vunpack.c.h.b16 %v427
      %v737 = vunpack.c.l.b16 %v428
      %v738 = vunpack.c.h.b16 %v428
      %v739 = vunpack.c.l.b16 %v429
      %v740 = vunpack.c.h.b16 %v429
      %v741 = vunpack.c.l.b16 %v430
      %v742 = vunpack.c.h.b16 %v430
      %v743 = vunpack.c.l.b16 %v431
      %v744 = vunpack.c.h.b16 %v431
      %v745 = vunpack.c.l.b16 %v432
      %v746 = vunpack.c.h.b16 %v432
      %v747 = vunpack.c.l.b16 %v433
      %v748 = vunpack.c.h.b16 %v433
      %v749 = vunpack.c.l.b16 %v434
      %v750 = vunpack.c.h.b16 %v434
      %v751 = vunpack.c.l.b16 %v435
      %v752 = vunpack.c.h.b16 %v435
      %v753 = vunpack.c.l.b16 %v436
      %v754 = vunpack.c.h.b16 %v436
      %v755 = vunpack.c.l.b16 %v437
      %v756 = vunpack.c.h.b16 %v437
      %v757 = vunpack.c.l.b16 %v438
      %v758 = vunpack.c.h.b16 %v438
      %v759 = vpack.c.b16 %v639, %v631
      %v760 = vpack.c.b16 %v640, %v632
      %v761 = vpack.c.b16 %v641, %v633
      %v762 = vpack.c.b16 %v642, %v634
      %v763 = vpack.c.b16 %v643, %v635
      %v764 = vpack.c.b16 %v644, %v636
      %v765 = vpack.c.b16 %v645, %v637
      %v766 = vpack.c.b16 %v646, %v638
      %v767 = vpack.c.b16 %v655, %v647
      %v768 = vpack.c.b16 %v656, %v648
      %v769 = vpack.c.b16 %v657, %v649
      %v770 = vpack.c.b16 %v658, %v650
      %v771 = vpack.c.b16 %v659, %v651
      %v772 = vpack.c.b16 %v660, %v652
      %v773 = vpack.c.b16 %v661, %v653
      %v774 = vpack.c.b16 %v662, %v654
      %v775 = vpack.c.b16 %v671, %v663
      %v776 = vpack.c.b16 %v672, %v664
      %v777 = vpack.c.b16 %v673, %v665
      %v778 = vpack.c.b16 %v674, %v666
      %v779 = vpack.c.b16 %v675, %v667
      %v780 = vpack.c.b16 %v676, %v668
      %v781 = vpack.c.b16 %v677, %v669
      %v782 = vpack.c.b16 %v678, %v670
      %v783 = vpack.c.b16 %v687, %v679
      %v784 = vpack.c.b16 %v688, %v680
      %v785 = vpack.c.b16 %v689, %v681
      %v786 = vpack.c.b16 %v690, %v682
      %v787 = vpack.c.b16 %v691, %v683
      %v788 = vpack.c.b16 %v692, %v684
      %v789 = vpack.c.b16 %v693, %v685
      %v790 = vpack.c.b16 %v694, %v686
      %v791 = vpack.c.b16 %v703, %v695
      %v792 = vpack.c.b16 %v704, %v696
      %v793 = vpack.c.b16 %v705, %v697
      %v794 = vpack.c.b16 %v706, %v698
      %v795 = vpack.c.b16 %v707, %v699
      %v796 = vpack.c.b16 %v708, %v700
      %v797 = vpack.c.b16 %v709, %v701
      %v798 = vpack.c.b16 %v710, %v702
      %v799 = vpack.c.b16 %v719, %v711
      %v800 = vpack.c.b16 %v720, %v712
      %v801 = vpack.c.b16 %v721, %v713
      %v802 = vpack.c.b16 %v722, %v714
      %v803 = vpack.c.b16 %v723, %v715
      %v804 = vpack.c.b16 %v724, %v716
      %v805 = vpack.c.b16 %v725, %v717
      %v806 = vpack.c.b16 %v726, %v718
      %v807 = vpack.c.b16 %v735, %v727
      %v808 = vpack.c.b16 %v736, %v728
      %v809 = vpack.c.b16 %v737, %v729
      %v810 = vpack.c.b16 %v738, %v730
      %v811 = vpack.c.b16 %v739, %v731
      %v812 = vpack.c.b16 %v740, %v732
      %v813 = vpack.c.b16 %v741, %v733
      %v814 = vpack.c.b16 %v742, %v734
      %v815 = vpack.c.b16 %v751, %v743
      %v816 = vpack.c.b16 %v752, %v744
      %v817 = vpack.c.b16 %v753, %v745
      %v818 = vpack.c.b16 %v754, %v746
      %v819 = vpack.c.b16 %v755, %v747
      %v820 = vpack.c.b16 %v756, %v748
      %v821 = vpack.c.b16 %v757, %v749
      %v822 = vpack.c.b16 %v758, %v750
      %v1015 = vunpack.c.l.b16 %v439
      %v1016 = vunpack.c.l.b16 %v440
      %v1017 = vunpack.c.l.b16 %v441
      %v1018 = vunpack.c.l.b16 %v442
      %v1019 = vunpack.c.l.b16 %v443
      %v1020 = vunpack.c.l.b16 %v444
      %v1021 = vunpack.c.l.b16 %v445
      %v1022 = vunpack.c.l.b16 %v446
      %v1023 = vunpack.c.l.b16 %v447
      %v1024 = vunpack.c.l.b16 %v448
      %v1025 = vunpack.c.l.b16 %v449
      %v1026 = vunpack.c.l.b16 %v450
      %v1027 = vunpack.c.l.b16 %v451
      %v1028 = vunpack.c.l.b16 %v452
      %v1029 = vunpack.c.l.b16 %v453
      %v1030 = vunpack.c.l.b16 %v454
      %v1031 = vunpack.c.l.b16 %v455
      %v1032 = vunpack.c.l.b16 %v456
      %v1033 = vunpack.c.l.b16 %v457
      %v1034 = vunpack.c.l.b16 %v458
      %v1035 = vunpack.c.l.b16 %v459
      %v1036 = vunpack.c.l.b16 %v460
      %v1037 = vunpack.c.l.b16 %v461
      %v1038 = vunpack.c.l.b16 %v462
      %v1039 = vunpack.c.l.b16 %v463
      %v1040 = vunpack.c.l.b16 %v464
      %v1041 = vunpack.c.l.b16 %v465
      %v1042 = vunpack.c.l.b16 %v466
      %v1043 = vunpack.c.l.b16 %v467
      %v1044 = vunpack.c.l.b16 %v468
      %v1045 = vunpack.c.l.b16 %v469
      %v1046 = vunpack.c.l.b16 %v470
      %v1047 = vunpack.c.l.b16 %v471
      %v1048 = vunpack.c.l.b16 %v472
      %v1049 = vunpack.c.l.b16 %v473
      %v1050 = vunpack.c.l.b16 %v474
      %v1051 = vunpack.c.l.b16 %v475
      %v1052 = vunpack.c.l.b16 %v476
      %v1053 = vunpack.c.l.b16 %v477
      %v1054 = vunpack.c.l.b16 %v478
      %v1055 = vunpack.c.l.b16 %v479
      %v1056 = vunpack.c.l.b16 %v480
      %v1057 = vunpack.c.l.b16 %v481
      %v1058 = vunpack.c.l.b16 %v482
      %v1059 = vunpack.c.l.b16 %v483
      %v1060 = vunpack.c.l.b16 %v484
      %v1061 = vunpack.c.l.b16 %v485
      %v1062 = vunpack.c.l.b16 %v486
      %v1063 = vunpack.c.l.b16 %v487
      %v1064 = vunpack.c.l.b16 %v488
      %v1065 = vunpack.c.l.b16 %v489
      %v1066 = vunpack.c.l.b16 %v490
      %v1067 = vunpack.c.l.b16 %v491
      %v1068 = vunpack.c.l.b16 %v492
      %v1069 = vunpack.c.l.b16 %v493
      %v1070 = vunpack.c.l.b16 %v494
      %v1071 = vunpack.c.l.b16 %v495
      %v1072 = vunpack.c.l.b16 %v496
      %v1073 = vunpack.c.l.b16 %v497
      %v1074 = vunpack.c.l.b16 %v498
      %v1075 = vunpack.c.l.b16 %v499
      %v1076 = vunpack.c.l.b16 %v500
      %v1077 = vunpack.c.l.b16 %v501
      %v1078 = vunpack.c.l.b16 %v502
      %v1079 = vunpack.c.l.b16 %v503
      %v1080 = vunpack.c.l.b16 %v504
      %v1081 = vunpack.c.l.b16 %v505
      %v1082 = vunpack.c.l.b16 %v506
      %v1083 = vunpack.c.l.b16 %v507
      %v1084 = vunpack.c.l.b16 %v508
      %v1085 = vunpack.c.l.b16 %v509
      %v1086 = vunpack.c.l.b16 %v510
      %v1087 = vunpack.c.l.b16 %v511
      %v1088 = vunpack.c.l.b16 %v512
      %v1089 = vunpack.c.l.b16 %v513
      %v1090 = vunpack.c.l.b16 %v514
      %v1091 = vunpack.c.l.b16 %v515
      %v1092 = vunpack.c.l.b16 %v516
      %v1093 = vunpack.c.l.b16 %v517
      %v1094 = vunpack.c.l.b16 %v518
      %v1095 = vunpack.c.l.b16 %v519
      %v1096 = vunpack.c.l.b16 %v520
      %v1097 = vunpack.c.l.b16 %v521
      %v1098 = vunpack.c.l.b16 %v522
      %v1099 = vunpack.c.l.b16 %v523
      %v1100 = vunpack.c.l.b16 %v524
      %v1101 = vunpack.c.l.b16 %v525
      %v1102 = vunpack.c.l.b16 %v526
      %v1103 = vunpack.c.l.b16 %v527
      %v1104 = vunpack.c.l.b16 %v528
      %v1105 = vunpack.c.l.b16 %v529
      %v1106 = vunpack.c.l.b16 %v530
      %v1107 = vunpack.c.l.b16 %v531
      %v1108 = vunpack.c.l.b16 %v532
      %v1109 = vunpack.c.l.b16 %v533
      %v1110 = vunpack.c.l.b16 %v534
      %v1111 = vunpack.c.l.b16 %v535
      %v1112 = vunpack.c.l.b16 %v536
      %v1113 = vunpack.c.l.b16 %v537
      %v1114 = vunpack.c.l.b16 %v538
      %v1115 = vunpack.c.l.b16 %v539
      %v1116 = vunpack.c.l.b16 %v540
      %v1117 = vunpack.c.l.b16 %v541
      %v1118 = vunpack.c.l.b16 %v542
      %v1119 = vunpack.c.l.b16 %v543
      %v1120 = vunpack.c.l.b16 %v544
      %v1121 = vunpack.c.l.b16 %v545
      %v1122 = vunpack.c.l.b16 %v546
      %v1123 = vunpack.c.l.b16 %v547
      %v1124 = vunpack.c.l.b16 %v548
      %v1125 = vunpack.c.l.b16 %v549
      %v1126 = vunpack.c.l.b16 %v550
      %v1127 = vunpack.c.l.b16 %v551
      %v1128 = vunpack.c.l.b16 %v552
      %v1129 = vunpack.c.l.b16 %v553
      %v1130 = vunpack.c.l.b16 %v554
      %v1131 = vunpack.c.l.b16 %v555
      %v1132 = vunpack.c.l.b16 %v556
      %v1133 = vunpack.c.l.b16 %v557
      %v1134 = vunpack.c.l.b16 %v558
      %v1135 = vunpack.c.l.b16 %v559
      %v1136 = vunpack.c.l.b16 %v560
      %v1137 = vunpack.c.l.b16 %v561
      %v1138 = vunpack.c.l.b16 %v562
      %v1139 = vunpack.c.l.b16 %v563
      %v1140 = vunpack.c.l.b16 %v564
      %v1141 = vunpack.c.l.b16 %v565
      %v1142 = vunpack.c.l.b16 %v566
      %v1143 = vpack.c.b16 %v1016, %v1015
      %v1144 = vpack.c.b16 %v1018, %v1017
      %v1145 = vpack.c.b16 %v1020, %v1019
      %v1146 = vpack.c.b16 %v1022, %v1021
      %v1147 = vpack.c.b16 %v1024, %v1023
      %v1148 = vpack.c.b16 %v1026, %v1025
      %v1149 = vpack.c.b16 %v1028, %v1027
      %v1150 = vpack.c.b16 %v1030, %v1029
      %v1151 = vpack.c.b16 %v1032, %v1031
      %v1152 = vpack.c.b16 %v1034, %v1033
      %v1153 = vpack.c.b16 %v1036, %v1035
      %v1154 = vpack.c.b16 %v1038, %v1037
      %v1155 = vpack.c.b16 %v1040, %v1039
      %v1156 = vpack.c.b16 %v1042, %v1041
      %v1157 = vpack.c.b16 %v1044, %v1043
      %v1158 = vpack.c.b16 %v1046, %v1045
      %v1159 = vpack.c.b16 %v1048, %v1047
      %v1160 = vpack.c.b16 %v1050, %v1049
      %v1161 = vpack.c.b16 %v1052, %v1051
      %v1162 = vpack.c.b16 %v1054, %v1053
      %v1163 = vpack.c.b16 %v1056, %v1055
      %v1164 = vpack.c.b16 %v1058, %v1057
      %v1165 = vpack.c.b16 %v1060, %v1059
      %v1166 = vpack.c.b16 %v1062, %v1061
      %v1167 = vpack.c.b16 %v1064, %v1063
      %v1168 = vpack.c.b16 %v1066, %v1065
      %v1169 = vpack.c.b16 %v1068, %v1067
      %v1170 = vpack.c.b16 %v1070, %v1069
      %v1171 = vpack.c.b16 %v1072, %v1071
      %v1172 = vpack.c.b16 %v1074, %v1073
      %v1173 = vpack.c.b16 %v1076, %v1075
      %v1174 = vpack.c.b16 %v1078, %v1077
      %v1175 = vpack.c.b16 %v1080, %v1079
      %v1176 = vpack.c.b16 %v1082, %v1081
      %v1177 = vpack.c.b16 %v1084, %v1083
      %v1178 = vpack.c.b16 %v1086, %v1085
      %v1179 = vpack.c.b16 %v1088, %v1087
      %v1180 = vpack.c.b16 %v1090, %v1089
      %v1181 = vpack.c.b16 %v1092, %v1091
      %v1182 = vpack.c.b16 %v1094, %v1093
      %v1183 = vpack.c.b16 %v1096, %v1095
      %v1184 = vpack.c.b16 %v1098, %v1097
      %v1185 = vpack.c.b16 %v1100, %v1099
      %v1186 = vpack.c.b16 %v1102, %v1101
      %v1187 = vpack.c.b16 %v1104, %v1103
      %v1188 = vpack.c.b16 %v1106, %v1105
      %v1189 = vpack.c.b16 %v1108, %v1107
      %v1190 = vpack.c.b16 %v1110, %v1109
      %v1191 = vpack.c.b16 %v1112, %v1111
      %v1192 = vpack.c.b16 %v1114, %v1113
      %v1193 = vpack.c.b16 %v1116, %v1115
      %v1194 = vpack.c.b16 %v1118, %v1117
      %v1195 = vpack.c.b16 %v1120, %v1119
      %v1196 = vpack.c.b16 %v1122, %v1121
      %v1197 = vpack.c.b16 %v1124, %v1123
      %v1198 = vpack.c.b16 %v1126, %v1125
      %v1199 = vpack.c.b16 %v1128, %v1127
      %v1200 = vpack.c.b16 %v1130, %v1129
      %v1201 = vpack.c.b16 %v1132, %v1131
      %v1202 = vpack.c.b16 %v1134, %v1133
      %v1203 = vpack.c.b16 %v1136, %v1135
      %v1204 = vpack.c.b16 %v1138, %v1137
      %v1205 = vpack.c.b16 %v1140, %v1139
      %v1206 = vpack.c.b16 %v1142, %v1141
      %1271 = vmatprep.subr.bf16.mxu0 0
      %1272 = vmatpush1.bf16.msra.mxu0 %v1143
      %1273 = vmatprep.subr.bf16.mxu0 0
      %1274 = vmatpush1.bf16.msra.mxu0 %v1144
      %1275 = vmatprep.subr.bf16.mxu0 0
      %1276 = vmatpush1.bf16.msra.mxu0 %v1145
      %1277 = vmatprep.subr.bf16.mxu0 0
      %1278 = vmatpush1.bf16.msra.mxu0 %v1146
      %1279 = vmatprep.subr.bf16.mxu0 0
      %1280 = vmatpush1.bf16.msra.mxu0 %v1147
      %1281 = vmatprep.subr.bf16.mxu0 0
      %1282 = vmatpush1.bf16.msra.mxu0 %v1148
      %1283 = vmatprep.subr.bf16.mxu0 0
      %1284 = vmatpush1.bf16.msra.mxu0 %v1149
      %1285 = vmatprep.subr.bf16.mxu0 0
      %1286 = vmatpush1.bf16.msra.mxu0 %v1150
      %1287 = vmatprep.subr.bf16.mxu0 0
      %1288 = vmatpush1.bf16.msra.mxu0 %v1151
      %1289 = vmatprep.subr.bf16.mxu0 0
      %1290 = vmatpush1.bf16.msra.mxu0 %v1152
      %1291 = vmatprep.subr.bf16.mxu0 0
      %1292 = vmatpush1.bf16.msra.mxu0 %v1153
      %1293 = vmatprep.subr.bf16.mxu0 0
      %1294 = vmatpush1.bf16.msra.mxu0 %v1154
      %1295 = vmatprep.subr.bf16.mxu0 0
      %1296 = vmatpush1.bf16.msra.mxu0 %v1155
      %1297 = vmatprep.subr.bf16.mxu0 0
      %1298 = vmatpush1.bf16.msra.mxu0 %v1156
      %1299 = vmatprep.subr.bf16.mxu0 0
      %1300 = vmatpush1.bf16.msra.mxu0 %v1157
      %1301 = vmatprep.subr.bf16.mxu0 0
      %1302 = vmatpush1.bf16.msra.mxu0 %v1158
      %1303 = vmatprep.mubr.bf16.mxu0 %v760
      %1304 = vmatmul.mubr.bf16.gmra.mrb[0].mxu0 %v759
      %v1305 = vpop.f32.mrb[0].mxu0
      %v1306 = vadd.f32 0.0, %v1305
      %v1307 = vpop.f32.mrb[0].mxu0
      %v1308 = vpop.f32.mrb[0].mxu0
      %v1309 = vadd.f32 0.0, %v1308
      %v1310 = vpop.f32.mrb[0].mxu0
      %1311 = vmatprep.mubr.bf16.mxu0 %v768
      %1312 = vmatmul.mubr.bf16.gmra.mrb[0].mxu0 %v767
      %v1313 = vpop.f32.mrb[0].mxu0
      %v1314 = vadd.f32 0.0, %v1313
      %v1315 = vpop.f32.mrb[0].mxu0
      %v1316 = vpop.f32.mrb[0].mxu0
      %v1317 = vadd.f32 0.0, %v1316
      %v1318 = vpop.f32.mrb[0].mxu0
      %1319 = vmatprep.mubr.bf16.mxu0 %v776
      %1320 = vmatmul.mubr.bf16.gmra.mrb[0].mxu0 %v775
      %v1321 = vpop.f32.mrb[0].mxu0
      %v1322 = vadd.f32 0.0, %v1321
      %v1323 = vpop.f32.mrb[0].mxu0
      %v1324 = vpop.f32.mrb[0].mxu0
      %v1325 = vadd.f32 0.0, %v1324
      %v1326 = vpop.f32.mrb[0].mxu0
      %1327 = vmatprep.mubr.bf16.mxu0 %v784
      %1328 = vmatmul.mubr.bf16.gmra.mrb[0].mxu0 %v783
      %v1329 = vpop.f32.mrb[0].mxu0
      %v1330 = vadd.f32 0.0, %v1329
      %v1331 = vpop.f32.mrb[0].mxu0
      %v1332 = vpop.f32.mrb[0].mxu0
      %v1333 = vadd.f32 0.0, %v1332
      %v1334 = vpop.f32.mrb[0].mxu0
      %1335 = vmatprep.mubr.bf16.mxu0 %v792
      %1336 = vmatmul.mubr.bf16.gmra.mrb[0].mxu0 %v791
      %v1337 = vpop.f32.mrb[0].mxu0
      %v1338 = vadd.f32 0.0, %v1337
      %v1339 = vpop.f32.mrb[0].mxu0
      %v1340 = vpop.f32.mrb[0].mxu0
      %v1341 = vadd.f32 0.0, %v1340
      %v1342 = vpop.f32.mrb[0].mxu0
      %1343 = vmatprep.mubr.bf16.mxu0 %v800
      %1344 = vmatmul.mubr.bf16.gmra.mrb[0].mxu0 %v799
      %v1345 = vpop.f32.mrb[0].mxu0
      %v1346 = vadd.f32 0.0, %v1345
      %v1347 = vpop.f32.mrb[0].mxu0
      %v1348 = vpop.f32.mrb[0].mxu0
      %v1349 = vadd.f32 0.0, %v1348
      %v1350 = vpop.f32.mrb[0].mxu0
      %1351 = vmatprep.mubr.bf16.mxu0 %v808
      %1352 = vmatmul.mubr.bf16.gmra.mrb[0].mxu0 %v807
      %v1353 = vpop.f32.mrb[0].mxu0
      %v1354 = vadd.f32 0.0, %v1353
      %v1355 = vpop.f32.mrb[0].mxu0
      %v1356 = vpop.f32.mrb[0].mxu0
      %v1357 = vadd.f32 0.0, %v1356
      %v1358 = vpop.f32.mrb[0].mxu0
      %1359 = vmatprep.mubr.bf16.mxu0 %v816
      %1360 = vmatmul.mubr.bf16.gmra.mrb[0].mxu0 %v815
      %v1361 = vpop.f32.mrb[0].mxu0
      %v1362 = vadd.f32 0.0, %v1361
      %v1363 = vpop.f32.mrb[0].mxu0
      %v1364 = vpop.f32.mrb[0].mxu0
      %v1365 = vadd.f32 0.0, %v1364
      %v1366 = vpop.f32.mrb[0].mxu0
      %1367 = vdwg.mxu0
      %1368 = vmatprep.subr.bf16.mxu0 0
      %1369 = vmatpush1.bf16.msra.mxu0 %v1159
      %1370 = vmatprep.subr.bf16.mxu0 0
      %1371 = vmatpush1.bf16.msra.mxu0 %v1160
      %1372 = vmatprep.subr.bf16.mxu0 0
      %1373 = vmatpush1.bf16.msra.mxu0 %v1161
      %1374 = vmatprep.subr.bf16.mxu0 0
      %1375 = vmatpush1.bf16.msra.mxu0 %v1162
      %1376 = vmatprep.subr.bf16.mxu0 0
      %1377 = vmatpush1.bf16.msra.mxu0 %v1163
      %1378 = vmatprep.subr.bf16.mxu0 0
      %1379 = vmatpush1.bf16.msra.mxu0 %v1164
      %1380 = vmatprep.subr.bf16.mxu0 0
      %1381 = vmatpush1.bf16.msra.mxu0 %v1165
      %1382 = vmatprep.subr.bf16.mxu0 0
      %1383 = vmatpush1.bf16.msra.mxu0 %v1166
      %1384 = vmatprep.subr.bf16.mxu0 0
      %1385 = vmatpush1.bf16.msra.mxu0 %v1167
      %1386 = vmatprep.subr.bf16.mxu0 0
      %1387 = vmatpush1.bf16.msra.mxu0 %v1168
      %1388 = vmatprep.subr.bf16.mxu0 0
      %1389 = vmatpush1.bf16.msra.mxu0 %v1169
      %1390 = vmatprep.subr.bf16.mxu0 0
      %1391 = vmatpush1.bf16.msra.mxu0 %v1170
      %1392 = vmatprep.subr.bf16.mxu0 0
      %1393 = vmatpush1.bf16.msra.mxu0 %v1171
      %1394 = vmatprep.subr.bf16.mxu0 0
      %1395 = vmatpush1.bf16.msra.mxu0 %v1172
      %1396 = vmatprep.subr.bf16.mxu0 0
      %1397 = vmatpush1.bf16.msra.mxu0 %v1173
      %1398 = vmatprep.subr.bf16.mxu0 0
      %1399 = vmatpush1.bf16.msra.mxu0 %v1174
      %1400 = vmatprep.mubr.bf16.mxu0 %v762
      %1401 = vmatmul.mubr.bf16.gmra.mrb[0].mxu0 %v761
      %v1402 = vpop.f32.mrb[0].mxu0
      %v1403 = vadd.f32 %v1306, %v1402
      %v1404 = vpop.f32.mrb[0].mxu0
      %v1405 = vpop.f32.mrb[0].mxu0
      %v1406 = vadd.f32 %v1309, %v1405
      %v1407 = vpop.f32.mrb[0].mxu0
      %1408 = vmatprep.mubr.bf16.mxu0 %v770
      %1409 = vmatmul.mubr.bf16.gmra.mrb[0].mxu0 %v769
      %v1410 = vpop.f32.mrb[0].mxu0
      %v1411 = vadd.f32 %v1314, %v1410
      %v1412 = vpop.f32.mrb[0].mxu0
      %v1413 = vpop.f32.mrb[0].mxu0
      %v1414 = vadd.f32 %v1317, %v1413
      %v1415 = vpop.f32.mrb[0].mxu0
      %1416 = vmatprep.mubr.bf16.mxu0 %v778
      %1417 = vmatmul.mubr.bf16.gmra.mrb[0].mxu0 %v777
      %v1418 = vpop.f32.mrb[0].mxu0
      %v1419 = vadd.f32 %v1322, %v1418
      %v1420 = vpop.f32.mrb[0].mxu0
      %v1421 = vpop.f32.mrb[0].mxu0
      %v1422 = vadd.f32 %v1325, %v1421
      %v1423 = vpop.f32.mrb[0].mxu0
      %1424 = vmatprep.mubr.bf16.mxu0 %v786
      %1425 = vmatmul.mubr.bf16.gmra.mrb[0].mxu0 %v785
      %v1426 = vpop.f32.mrb[0].mxu0
      %v1427 = vadd.f32 %v1330, %v1426
      %v1428 = vpop.f32.mrb[0].mxu0
      %v1429 = vpop.f32.mrb[0].mxu0
      %v1430 = vadd.f32 %v1333, %v1429
      %v1431 = vpop.f32.mrb[0].mxu0
      %1432 = vmatprep.mubr.bf16.mxu0 %v794
      %1433 = vmatmul.mubr.bf16.gmra.mrb[0].mxu0 %v793
      %v1434 = vpop.f32.mrb[0].mxu0
      %v1435 = vadd.f32 %v1338, %v1434
      %v1436 = vpop.f32.mrb[0].mxu0
      %v1437 = vpop.f32.mrb[0].mxu0
      %v1438 = vadd.f32 %v1341, %v1437
      %v1439 = vpop.f32.mrb[0].mxu0
      %1440 = vmatprep.mubr.bf16.mxu0 %v802
      %1441 = vmatmul.mubr.bf16.gmra.mrb[0].mxu0 %v801
      %v1442 = vpop.f32.mrb[0].mxu0
      %v1443 = vadd.f32 %v1346, %v1442
      %v1444 = vpop.f32.mrb[0].mxu0
      %v1445 = vpop.f32.mrb[0].mxu0
      %v1446 = vadd.f32 %v1349, %v1445
      %v1447 = vpop.f32.mrb[0].mxu0
      %1448 = vmatprep.mubr.bf16.mxu0 %v810
      %1449 = vmatmul.mubr.bf16.gmra.mrb[0].mxu0 %v809
      %v1450 = vpop.f32.mrb[0].mxu0
      %v1451 = vadd.f32 %v1354, %v1450
      %v1452 = vpop.f32.mrb[0].mxu0
      %v1453 = vpop.f32.mrb[0].mxu0
      %v1454 = vadd.f32 %v1357, %v1453
      %v1455 = vpop.f32.mrb[0].mxu0
      %1456 = vmatprep.mubr.bf16.mxu0 %v818
      %1457 = vmatmul.mubr.bf16.gmra.mrb[0].mxu0 %v817
      %v1458 = vpop.f32.mrb[0].mxu0
      %v1459 = vadd.f32 %v1362, %v1458
      %v1460 = vpop.f32.mrb[0].mxu0
      %v1461 = vpop.f32.mrb[0].mxu0
      %v1462 = vadd.f32 %v1365, %v1461
      %v1463 = vpop.f32.mrb[0].mxu0
      %1464 = vdwg.mxu0
      %1465 = vmatprep.subr.bf16.mxu0 0
      %1466 = vmatpush1.bf16.msra.mxu0 %v1175
      %1467 = vmatprep.subr.bf16.mxu0 0
      %1468 = vmatpush1.bf16.msra.mxu0 %v1176
      %1469 = vmatprep.subr.bf16.mxu0 0
      %1470 = vmatpush1.bf16.msra.mxu0 %v1177
      %1471 = vmatprep.subr.bf16.mxu0 0
      %1472 = vmatpush1.bf16.msra.mxu0 %v1178
      %1473 = vmatprep.subr.bf16.mxu0 0
      %1474 = vmatpush1.bf16.msra.mxu0 %v1179
      %1475 = vmatprep.subr.bf16.mxu0 0
      %1476 = vmatpush1.bf16.msra.mxu0 %v1180
      %1477 = vmatprep.subr.bf16.mxu0 0
      %1478 = vmatpush1.bf16.msra.mxu0 %v1181
      %1479 = vmatprep.subr.bf16.mxu0 0
      %1480 = vmatpush1.bf16.msra.mxu0 %v1182
      %1481 = vmatprep.subr.bf16.mxu0 0
      %1482 = vmatpush1.bf16.msra.mxu0 %v1183
      %1483 = vmatprep.subr.bf16.mxu0 0
      %1484 = vmatpush1.bf16.msra.mxu0 %v1184
      %1485 = vmatprep.subr.bf16.mxu0 0
      %1486 = vmatpush1.bf16.msra.mxu0 %v1185
      %1487 = vmatprep.subr.bf16.mxu0 0
      %1488 = vmatpush1.bf16.msra.mxu0 %v1186
      %1489 = vmatprep.subr.bf16.mxu0 0
      %1490 = vmatpush1.bf16.msra.mxu0 %v1187
      %1491 = vmatprep.subr.bf16.mxu0 0
      %1492 = vmatpush1.bf16.msra.mxu0 %v1188
      %1493 = vmatprep.subr.bf16.mxu0 0
      %1494 = vmatpush1.bf16.msra.mxu0 %v1189
      %1495 = vmatprep.subr.bf16.mxu0 0
      %1496 = vmatpush1.bf16.msra.mxu0 %v1190
      %1497 = vmatprep.mubr.bf16.mxu0 %v764
      %1498 = vmatmul.mubr.bf16.gmra.mrb[0].mxu0 %v763
      %v1499 = vpop.f32.mrb[0].mxu0
      %v1500 = vadd.f32 %v1403, %v1499
      %v1501 = vpop.f32.mrb[0].mxu0
      %v1502 = vpop.f32.mrb[0].mxu0
      %v1503 = vadd.f32 %v1406, %v1502
      %v1504 = vpop.f32.mrb[0].mxu0
      %1505 = vmatprep.mubr.bf16.mxu0 %v772
      %1506 = vmatmul.mubr.bf16.gmra.mrb[0].mxu0 %v771
      %v1507 = vpop.f32.mrb[0].mxu0
      %v1508 = vadd.f32 %v1411, %v1507
      %v1509 = vpop.f32.mrb[0].mxu0
      %v1510 = vpop.f32.mrb[0].mxu0
      %v1511 = vadd.f32 %v1414, %v1510
      %v1512 = vpop.f32.mrb[0].mxu0
      %1513 = vmatprep.mubr.bf16.mxu0 %v780
      %1514 = vmatmul.mubr.bf16.gmra.mrb[0].mxu0 %v779
      %v1515 = vpop.f32.mrb[0].mxu0
      %v1516 = vadd.f32 %v1419, %v1515
      %v1517 = vpop.f32.mrb[0].mxu0
      %v1518 = vpop.f32.mrb[0].mxu0
      %v1519 = vadd.f32 %v1422, %v1518
      %v1520 = vpop.f32.mrb[0].mxu0
      %1521 = vmatprep.mubr.bf16.mxu0 %v788
      %1522 = vmatmul.mubr.bf16.gmra.mrb[0].mxu0 %v787
      %v1523 = vpop.f32.mrb[0].mxu0
      %v1524 = vadd.f32 %v1427, %v1523
      %v1525 = vpop.f32.mrb[0].mxu0
      %v1526 = vpop.f32.mrb[0].mxu0
      %v1527 = vadd.f32 %v1430, %v1526
      %v1528 = vpop.f32.mrb[0].mxu0
      %1529 = vmatprep.mubr.bf16.mxu0 %v796
      %1530 = vmatmul.mubr.bf16.gmra.mrb[0].mxu0 %v795
      %v1531 = vpop.f32.mrb[0].mxu0
      %v1532 = vadd.f32 %v1435, %v1531
      %v1533 = vpop.f32.mrb[0].mxu0
      %v1534 = vpop.f32.mrb[0].mxu0
      %v1535 = vadd.f32 %v1438, %v1534
      %v1536 = vpop.f32.mrb[0].mxu0
      %1537 = vmatprep.mubr.bf16.mxu0 %v804
      %1538 = vmatmul.mubr.bf16.gmra.mrb[0].mxu0 %v803
      %v1539 = vpop.f32.mrb[0].mxu0
      %v1540 = vadd.f32 %v1443, %v1539
      %v1541 = vpop.f32.mrb[0].mxu0
      %v1542 = vpop.f32.mrb[0].mxu0
      %v1543 = vadd.f32 %v1446, %v1542
      %v1544 = vpop.f32.mrb[0].mxu0
      %1545 = vmatprep.mubr.bf16.mxu0 %v812
      %1546 = vmatmul.mubr.bf16.gmra.mrb[0].mxu0 %v811
      %v1547 = vpop.f32.mrb[0].mxu0
      %v1548 = vadd.f32 %v1451, %v1547
      %v1549 = vpop.f32.mrb[0].mxu0
      %v1550 = vpop.f32.mrb[0].mxu0
      %v1551 = vadd.f32 %v1454, %v1550
      %v1552 = vpop.f32.mrb[0].mxu0
      %1553 = vmatprep.mubr.bf16.mxu0 %v820
      %1554 = vmatmul.mubr.bf16.gmra.mrb[0].mxu0 %v819
      %v1555 = vpop.f32.mrb[0].mxu0
      %v1556 = vadd.f32 %v1459, %v1555
      %v1557 = vpop.f32.mrb[0].mxu0
      %v1558 = vpop.f32.mrb[0].mxu0
      %v1559 = vadd.f32 %v1462, %v1558
      %v1560 = vpop.f32.mrb[0].mxu0
      %1561 = vdwg.mxu0
      %1562 = vmatprep.subr.bf16.mxu0 0
      %1563 = vmatpush1.bf16.msra.mxu0 %v1191
      %1564 = vmatprep.subr.bf16.mxu0 0
      %1565 = vmatpush1.bf16.msra.mxu0 %v1192
      %1566 = vmatprep.subr.bf16.mxu0 0
      %1567 = vmatpush1.bf16.msra.mxu0 %v1193
      %1568 = vmatprep.subr.bf16.mxu0 0
      %1569 = vmatpush1.bf16.msra.mxu0 %v1194
      %1570 = vmatprep.subr.bf16.mxu0 0
      %1571 = vmatpush1.bf16.msra.mxu0 %v1195
      %1572 = vmatprep.subr.bf16.mxu0 0
      %1573 = vmatpush1.bf16.msra.mxu0 %v1196
      %1574 = vmatprep.subr.bf16.mxu0 0
      %1575 = vmatpush1.bf16.msra.mxu0 %v1197
      %1576 = vmatprep.subr.bf16.mxu0 0
      %1577 = vmatpush1.bf16.msra.mxu0 %v1198
      %1578 = vmatprep.subr.bf16.mxu0 0
      %1579 = vmatpush1.bf16.msra.mxu0 %v1199
      %1580 = vmatprep.subr.bf16.mxu0 0
      %1581 = vmatpush1.bf16.msra.mxu0 %v1200
      %1582 = vmatprep.subr.bf16.mxu0 0
      %1583 = vmatpush1.bf16.msra.mxu0 %v1201
      %1584 = vmatprep.subr.bf16.mxu0 0
      %1585 = vmatpush1.bf16.msra.mxu0 %v1202
      %1586 = vmatprep.subr.bf16.mxu0 0
      %1587 = vmatpush1.bf16.msra.mxu0 %v1203
      %1588 = vmatprep.subr.bf16.mxu0 0
      %1589 = vmatpush1.bf16.msra.mxu0 %v1204
      %1590 = vmatprep.subr.bf16.mxu0 0
      %1591 = vmatpush1.bf16.msra.mxu0 %v1205
      %1592 = vmatprep.subr.bf16.mxu0 0
      %1593 = vmatpush1.bf16.msra.mxu0 %v1206
      %1594 = vmatprep.mubr.bf16.mxu0 %v766
      %1595 = vmatmul.mubr.bf16.gmra.mrb[0].mxu0 %v765
      %v1596 = vpop.f32.mrb[0].mxu0
      %v1597 = vadd.f32 %v1500, %v1596
      %v1598 = vpop.f32.mrb[0].mxu0
      %v1599 = vpop.f32.mrb[0].mxu0
      %v1600 = vadd.f32 %v1503, %v1599
      %v1601 = vpop.f32.mrb[0].mxu0
      %1602 = vmatprep.mubr.bf16.mxu0 %v774
      %1603 = vmatmul.mubr.bf16.gmra.mrb[0].mxu0 %v773
      %v1604 = vpop.f32.mrb[0].mxu0
      %v1605 = vadd.f32 %v1508, %v1604
      %v1606 = vpop.f32.mrb[0].mxu0
      %v1607 = vpop.f32.mrb[0].mxu0
      %v1608 = vadd.f32 %v1511, %v1607
      %v1609 = vpop.f32.mrb[0].mxu0
      %1610 = vmatprep.mubr.bf16.mxu0 %v782
      %1611 = vmatmul.mubr.bf16.gmra.mrb[0].mxu0 %v781
      %v1612 = vpop.f32.mrb[0].mxu0
      %v1613 = vadd.f32 %v1516, %v1612
      %v1614 = vpop.f32.mrb[0].mxu0
      %v1615 = vpop.f32.mrb[0].mxu0
      %v1616 = vadd.f32 %v1519, %v1615
      %v1617 = vpop.f32.mrb[0].mxu0
      %1618 = vmatprep.mubr.bf16.mxu0 %v790
      %1619 = vmatmul.mubr.bf16.gmra.mrb[0].mxu0 %v789
      %v1620 = vpop.f32.mrb[0].mxu0
      %v1621 = vadd.f32 %v1524, %v1620
      %v1622 = vpop.f32.mrb[0].mxu0
      %v1623 = vpop.f32.mrb[0].mxu0
      %v1624 = vadd.f32 %v1527, %v1623
      %v1625 = vpop.f32.mrb[0].mxu0
      %1626 = vmatprep.mubr.bf16.mxu0 %v798
      %1627 = vmatmul.mubr.bf16.gmra.mrb[0].mxu0 %v797
      %v1628 = vpop.f32.mrb[0].mxu0
      %v1629 = vadd.f32 %v1532, %v1628
      %v1630 = vpop.f32.mrb[0].mxu0
      %v1631 = vpop.f32.mrb[0].mxu0
      %v1632 = vadd.f32 %v1535, %v1631
      %v1633 = vpop.f32.mrb[0].mxu0
      %1634 = vmatprep.mubr.bf16.mxu0 %v806
      %1635 = vmatmul.mubr.bf16.gmra.mrb[0].mxu0 %v805
      %v1636 = vpop.f32.mrb[0].mxu0
      %v1637 = vadd.f32 %v1540, %v1636
      %v1638 = vpop.f32.mrb[0].mxu0
      %v1639 = vpop.f32.mrb[0].mxu0
      %v1640 = vadd.f32 %v1543, %v1639
      %v1641 = vpop.f32.mrb[0].mxu0
      %1642 = vmatprep.mubr.bf16.mxu0 %v814
      %1643 = vmatmul.mubr.bf16.gmra.mrb[0].mxu0 %v813
      %v1644 = vpop.f32.mrb[0].mxu0
      %v1645 = vadd.f32 %v1548, %v1644
      %v1646 = vpop.f32.mrb[0].mxu0
      %v1647 = vpop.f32.mrb[0].mxu0
      %v1648 = vadd.f32 %v1551, %v1647
      %v1649 = vpop.f32.mrb[0].mxu0
      %1650 = vmatprep.mubr.bf16.mxu0 %v822
      %1651 = vmatmul.mubr.bf16.gmra.mrb[0].mxu0 %v821
      %v1652 = vpop.f32.mrb[0].mxu0
      %v1653 = vadd.f32 %v1556, %v1652
      %v1654 = vpop.f32.mrb[0].mxu0
      %v1655 = vpop.f32.mrb[0].mxu0
      %v1656 = vadd.f32 %v1559, %v1655
      %v1657 = vpop.f32.mrb[0].mxu0
      %1658 = vdwg.mxu0
      %1659 = vst [vmem:[%s354] sm:$0xff] %v1597
      %1660 = vst [vmem:[%s354 + $0x8] sm:$0xff] %v1600
      %1661 = vst [vmem:[%s354 + $0x10] sm:$0xff] %v1605
      %1662 = vst [vmem:[%s354 + $0x18] sm:$0xff] %v1608
      %1663 = vst [vmem:[%s354 + $0x20] sm:$0xff] %v1613
      %1664 = vst [vmem:[%s354 + $0x28] sm:$0xff] %v1616
      %1665 = vst [vmem:[%s354 + $0x30] sm:$0xff] %v1621
      %1666 = vst [vmem:[%s354 + $0x38] sm:$0xff] %v1624
      %1667 = vst [vmem:[%s354 + $0x40] sm:$0xff] %v1629
      %1668 = vst [vmem:[%s354 + $0x48] sm:$0xff] %v1632
      %1669 = vst [vmem:[%s354 + $0x50] sm:$0xff] %v1637
      %1670 = vst [vmem:[%s354 + $0x58] sm:$0xff] %v1640
      %1671 = vst [vmem:[%s354 + $0x60] sm:$0xff] %v1645
      %1672 = vst [vmem:[%s354 + $0x68] sm:$0xff] %v1648
      %1673 = vst [vmem:[%s354 + $0x70] sm:$0xff] %v1653
      %1674 = vst [vmem:[%s354 + $0x78] sm:$0xff] %v1656
      %v1675 = vadd.f32 %v1597, %v1600
      %v1676 = vadd.f32 %v1675, %v1605
      %v1677 = vadd.f32 %v1676, %v1608
      %v1678 = vadd.f32 %v1677, %v1613
      %v1679 = vadd.f32 %v1678, %v1616
      %v1680 = vadd.f32 %v1679, %v1621
      %v1681 = vadd.f32 %v1680, %v1624
      %v1682 = vadd.f32 %v1681, %v1629
      %v1683 = vadd.f32 %v1682, %v1632
      %v1684 = vadd.f32 %v1683, %v1637
      %v1685 = vadd.f32 %v1684, %v1640
      %v1686 = vadd.f32 %v1685, %v1645
      %v1687 = vadd.f32 %v1686, %v1648
      %v1688 = vadd.f32 %v1687, %v1653
      %v1689 = vadd.f32 %v1688, %v1656
      %v1690 = vrot.slane %v1689, 4
      %v1691 = vadd.f32 %v1689, %v1690
      %v1692 = vrot.slane %v1691, 2
      %v1693 = vadd.f32 %v1691, %v1692
      %v1694 = vrot.slane %v1693, 1
      %v1695 = vadd.f32 %v1693, %v1694
      %1696 = vst [vmem:[%s364] sm:$0x1] %v1695
      %v1697 = vmul.f32 %v1597, %v1597
      %v1698 = vmul.f32 %v1600, %v1600
      %v1699 = vmul.f32 %v1605, %v1605
      %v1700 = vmul.f32 %v1608, %v1608
      %v1701 = vmul.f32 %v1613, %v1613
      %v1702 = vmul.f32 %v1616, %v1616
      %v1703 = vmul.f32 %v1621, %v1621
      %v1704 = vmul.f32 %v1624, %v1624
      %v1705 = vmul.f32 %v1629, %v1629
      %v1706 = vmul.f32 %v1632, %v1632
      %v1707 = vmul.f32 %v1637, %v1637
      %v1708 = vmul.f32 %v1640, %v1640
      %v1709 = vmul.f32 %v1645, %v1645
      %v1710 = vmul.f32 %v1648, %v1648
      %v1711 = vmul.f32 %v1653, %v1653
      %v1712 = vmul.f32 %v1656, %v1656
      %v1713 = vadd.f32 %v1697, %v1698
      %v1714 = vadd.f32 %v1713, %v1699
      %v1715 = vadd.f32 %v1714, %v1700
      %v1716 = vadd.f32 %v1715, %v1701
      %v1717 = vadd.f32 %v1716, %v1702
      %v1718 = vadd.f32 %v1717, %v1703
      %v1719 = vadd.f32 %v1718, %v1704
      %v1720 = vadd.f32 %v1719, %v1705
      %v1721 = vadd.f32 %v1720, %v1706
      %v1722 = vadd.f32 %v1721, %v1707
      %v1723 = vadd.f32 %v1722, %v1708
      %v1724 = vadd.f32 %v1723, %v1709
      %v1725 = vadd.f32 %v1724, %v1710
      %v1726 = vadd.f32 %v1725, %v1711
      %v1727 = vadd.f32 %v1726, %v1712
      %v1728 = vrot.slane %v1727, 4
      %v1729 = vadd.f32 %v1727, %v1728
      %v1730 = vrot.slane %v1729, 2
      %v1731 = vadd.f32 %v1729, %v1730
      %v1732 = vrot.slane %v1731, 1
      %v1733 = vadd.f32 %v1731, %v1732
      %1734 = vst [vmem:[%s373] sm:$0x1] %v1733
      %s1735 = smul.u32 16, %s23
      %p1736 = scmp.lt.s32.totalorder %s22, 3
      %s1737 = scalar_select %p1736, %s22, 3
      %p1738 = scmp.lt.s32.totalorder %s1735, 15
      %s1739 = scalar_select %p1738, %s1735, 15
      %p1740 = scmp.lt.s32.totalorder %s24, 0
      %s1741 = scalar_select %p1740, %s24, 0
      %s1742 = sadd.s32 %s1741, %s1739
      %s1743 = smul.addr %s1737, 16
      %s1744 = sadd.s32 %s1742, %s1743
      %s1745 = smul.addr %s1744, 8
      %s1746 = scalar_lea.vmem %s2, %s1745
      %p1747 = scmp.lt.s32.totalorder %s22, 3
      %s1748 = scalar_select %p1747, %s22, 3
      %p1749 = scmp.lt.s32.totalorder %s23, 0
      %s1750 = scalar_select %p1749, %s23, 0
      %p1751 = scmp.lt.s32.totalorder %s24, 0
      %s1752 = scalar_select %p1751, %s24, 0
      %s1753 = sadd.s32 %s1752, %s1750
      %s1754 = sadd.s32 %s1753, %s1748
      %s1755 = scalar_lea.vmem %s3, %s1754
      %p1756 = scmp.lt.s32.totalorder %s22, 3
      %s1757 = scalar_select %p1756, %s22, 3
      %p1758 = scmp.lt.s32.totalorder %s23, 0
      %s1759 = scalar_select %p1758, %s23, 0
      %p1760 = scmp.lt.s32.totalorder %s24, 0
      %s1761 = scalar_select %p1760, %s24, 0
      %s1762 = sadd.s32 %s1761, %s1759
      %s1763 = sadd.s32 %s1762, %s1757
      %s1764 = scalar_lea.vmem %s4, %s1763
      // Predicated region
      $region29: #{decoder_forward.15} parent=27 // pred_check
        %p1765 = pneg %p124
      $region30: #{decoder_forward.15} parent=27 // pred_check_branch
        %1767 = sbr.rel (%p1765) target = $region32
      $region31: #{decoder_forward.15} parent=27 // pred_region
        %s1768 = smul.u32 16, %s23
      $region32: #{decoder_forward.15} parent=27 // pred_fallthru
        _
      // Predicated region
      $region33: #{decoder_forward.15} parent=27 // pred_check
        %p1769 = pneg %p154
      $region34: #{decoder_forward.15} parent=27 // pred_check_branch
        %1771 = sbr.rel (%p1769) target = $region36
      $region35: #{decoder_forward.15} parent=27 // pred_region
        _
      $region36: #{decoder_forward.15} parent=27 // pred_fallthru
        _
      // Predicated region
      $region37: #{decoder_forward.15} parent=27 // pred_check
        %p1772 = pneg %p184
      $region38: #{decoder_forward.15} parent=27 // pred_check_branch
        %1774 = sbr.rel (%p1772) target = $region40
      $region39: #{decoder_forward.15} parent=27 // pred_region
        _
      $region40: #{decoder_forward.15} parent=27 // pred_fallthru
        _
    $region28: #{decoder_forward.15} parent=5 // pred_fallthru
      _
    %p1775 = scmp.le.s32.totalorder 2, %s11
    // Predicated region
    $region41: #{decoder_forward.15} parent=5 // pred_check
      %p1776 = pneg %p1775
    $region42: #{decoder_forward.15} parent=5 // pred_check_branch
      %1778 = sbr.rel (%p1776) target = $region44
    $region43: #{decoder_forward.15} parent=5 // pred_region
      %s1779 = ssub.s32 %s11, 2
      // Predicated region
      $region45: #{decoder_forward.15} parent=43 // pred_check
        %p1780 = pneg %p130
      $region46: #{decoder_forward.15} parent=43 // pred_check_branch
        %1782 = sbr.rel (%p1780) target = $region48
      $region47: #{decoder_forward.15} parent=43 // pred_region
        %s1783 = smul.u32 16, %s27
        %p1784 = scmp.lt.s32.totalorder %s26, 3
        %s1785 = scalar_select %p1784, %s26, 3
        %p1786 = scmp.lt.s32.totalorder %s1783, 15
        %s1787 = scalar_select %p1786, %s1783, 15
        %p1788 = scmp.lt.s32.totalorder %s28, 0
        %s1789 = scalar_select %p1788, %s28, 0
        %s1790 = sadd.s32 %s1789, %s1787
        %s1791 = smul.addr %s1785, 16
        %s1792 = sadd.s32 %s1790, %s1791
        %s1793 = smul.addr %s1792, 8
        %s1794 = scalar_lea.vmem %s2, %s1793
      $region48: #{decoder_forward.15} parent=43 // pred_fallthru
        _
      // Predicated region
      $region49: #{decoder_forward.15} parent=43 // pred_check
        %p1795 = pneg %p160
      $region50: #{decoder_forward.15} parent=43 // pred_check_branch
        %1797 = sbr.rel (%p1795) target = $region52
      $region51: #{decoder_forward.15} parent=43 // pred_region
        %p1798 = scmp.lt.s32.totalorder %s26, 3
        %s1799 = scalar_select %p1798, %s26, 3
        %p1800 = scmp.lt.s32.totalorder %s27, 0
        %s1801 = scalar_select %p1800, %s27, 0
        %p1802 = scmp.lt.s32.totalorder %s28, 0
        %s1803 = scalar_select %p1802, %s28, 0
        %s1804 = sadd.s32 %s1803, %s1801
        %s1805 = sadd.s32 %s1804, %s1799
        %s1806 = scalar_lea.vmem %s3, %s1805
      $region52: #{decoder_forward.15} parent=43 // pred_fallthru
        _
      // Predicated region
      $region53: #{decoder_forward.15} parent=43 // pred_check
        %p1807 = pneg %p190
      $region54: #{decoder_forward.15} parent=43 // pred_check_branch
        %1809 = sbr.rel (%p1807) target = $region56
      $region55: #{decoder_forward.15} parent=43 // pred_region
        %p1810 = scmp.lt.s32.totalorder %s26, 3
        %s1811 = scalar_select %p1810, %s26, 3
        %p1812 = scmp.lt.s32.totalorder %s27, 0
        %s1813 = scalar_select %p1812, %s27, 0
        %p1814 = scmp.lt.s32.totalorder %s28, 0
        %s1815 = scalar_select %p1814, %s28, 0
        %s1816 = sadd.s32 %s1815, %s1813
        %s1817 = sadd.s32 %s1816, %s1811
        %s1818 = scalar_lea.vmem %s4, %s1817
      $region56: #{decoder_forward.15} parent=43 // pred_fallthru
        _
    $region44: #{decoder_forward.15} parent=5 // pred_fallthru
      _
  $region6: #{decoder_forward.15} parent=0 // loop_footer
    %s15 = sadd.s32 1, %s11
  $region7: #{decoder_forward.15} parent=0 // loop_footer_branch
    %10 = sbr.rel target = $region3
  $region8: #{decoder_forward.15} parent=0 // loop_exit
    _

// kernel: decoder_forward.16
$region0: #{decoder_forward.16}
  #allocation0 [shape = 'u32[]', space=smem, size = 0x4, offset = 0x4, fixed_abs, tag = 'smem constant byte address 0x4 - core index']
  #allocation1 [shape = 'u32[144,128]{1,0:T(1,128)}', space=vmem, size = 0x12000, scoped, tag = 'internal scratch']
  %s0 = inlined_call_operand.vmem [shape: f32[512,128], index: 0, kind: input, shape index: {}]
  %s1 = inlined_call_operand.vmem [shape: f32[4,128], index: 1, kind: input, shape index: {}]
  %s2 = inlined_call_operand.vmem [shape: f32[4,128], index: 2, kind: input, shape index: {}]
  %s3 = inlined_call_operand.vmem [shape: f32[1,128], index: 3, kind: input, shape index: {}]
  %s4 = inlined_call_operand.vmem [shape: f32[1,128], index: 4, kind: input, shape index: {}]
  %s5 = inlined_call_operand.vmem [shape: bf16[512,128], index: 5, kind: output, shape index: {}]
  %s6 = sld [smem:[#allocation0]]
  $region30: #{decoder_forward.16} parent=0
    _
  %s8 = ssub.s32 1, %s6
  %s9 = scalar_select 0, %s8, %s6
  // Predicated region
  $region2: #{decoder_forward.16} parent=0 // pred_check
    _
  $region3: #{decoder_forward.16} parent=0 // pred_check_branch
    %11 = sbr.rel (0) target = $region5
  $region4: #{decoder_forward.16} parent=0 // pred_region
    _
  $region5: #{decoder_forward.16} parent=0 // pred_fallthru
    _
  // Predicated region
  $region6: #{decoder_forward.16} parent=0 // pred_check
    _
  $region7: #{decoder_forward.16} parent=0 // pred_check_branch
    %13 = sbr.rel (0) target = $region9
  $region8: #{decoder_forward.16} parent=0 // pred_region
    _
  $region9: #{decoder_forward.16} parent=0 // pred_fallthru
    _
  // Predicated region
  $region10: #{decoder_forward.16} parent=0 // pred_check
    _
  $region11: #{decoder_forward.16} parent=0 // pred_check_branch
    %15 = sbr.rel (0) target = $region13
  $region12: #{decoder_forward.16} parent=0 // pred_region
    _
  $region13: #{decoder_forward.16} parent=0 // pred_fallthru
    _
  // Predicated region
  $region14: #{decoder_forward.16} parent=0 // pred_check
    _
  $region15: #{decoder_forward.16} parent=0 // pred_check_branch
    %17 = sbr.rel (0) target = $region17
  $region16: #{decoder_forward.16} parent=0 // pred_region
    _
  $region17: #{decoder_forward.16} parent=0 // pred_fallthru
    _
  // Predicated region
  $region18: #{decoder_forward.16} parent=0 // pred_check
    _
  $region19: #{decoder_forward.16} parent=0 // pred_check_branch
    %19 = sbr.rel (0) target = $region21
  $region20: #{decoder_forward.16} parent=0 // pred_region
    _
  $region21: #{decoder_forward.16} parent=0 // pred_fallthru
    _
  %v20 = vld [vmem:[%s1] sm:$0xf]
  %vm21 = vcmask 1043456
  %v22 = vsel %vm21, %v20, 0.0
  %v23 = vrot.slane %v22, 4
  %v24 = vadd.f32 %v22, %v23
  %v25 = vrot.slane %v24, 2
  %v26 = vadd.f32 %v24, %v25
  %v27 = vrot.slane %v26, 1
  %v28 = vadd.f32 %v26, %v27
  %v29 = vmul.f32 %v28, 0.001953125
  %v30 = vld [vmem:[%s2] sm:$0xf]
  %v31 = vsel %vm21, %v30, 0.0
  %v32 = vrot.slane %v31, 4
  %v33 = vadd.f32 %v31, %v32
  %v34 = vrot.slane %v33, 2
  %v35 = vadd.f32 %v33, %v34
  %v36 = vrot.slane %v35, 1
  %v37 = vadd.f32 %v35, %v36
  %v38 = vmul.f32 %v37, 0.001953125
  %v39 = vmul.f32 %v29, %v29
  %v40 = vsub.f32 %v38, %v39
  %v41 = vadd.f32 %v40, 1e-05
  %v42 = vrsqrt.pop %v41
  %v43 = vld [vmem:[%s3] sm:$0x1]
  %v44 = vmul.f32 %v43, %v42
  %v45 = vld [vmem:[%s4] sm:$0x1]
  %v46 = vmul.f32 %v29, %v44
  %v47 = vsub.f32 %v45, %v46
  %v48 = vld [vmem:[%s0] sm:$0xff]
  %v49 = vld [vmem:[%s0 + $0x8] sm:$0xff]
  %v50 = vld [vmem:[%s0 + $0x10] sm:$0xff]
  %v51 = vld [vmem:[%s0 + $0x18] sm:$0xff]
  %v52 = vld [vmem:[%s0 + $0x20] sm:$0xff]
  %v53 = vld [vmem:[%s0 + $0x28] sm:$0xff]
  %v54 = vld [vmem:[%s0 + $0x30] sm:$0xff]
  %v55 = vld [vmem:[%s0 + $0x38] sm:$0xff]
  %v56 = vld [vmem:[%s0 + $0x40] sm:$0xff]
  %v57 = vld [vmem:[%s0 + $0x48] sm:$0xff]
  %v58 = vld [vmem:[%s0 + $0x50] sm:$0xff]
  %v59 = vld [vmem:[%s0 + $0x58] sm:$0xff]
  %v60 = vld [vmem:[%s0 + $0x60] sm:$0xff]
  %v61 = vld [vmem:[%s0 + $0x68] sm:$0xff]
  %v62 = vld [vmem:[%s0 + $0x70] sm:$0xff]
  %v63 = vld [vmem:[%s0 + $0x78] sm:$0xff]
  %v64 = vld [vmem:[%s0 + $0x80] sm:$0xff]
  %v65 = vld [vmem:[%s0 + $0x88] sm:$0xff]
  %v66 = vld [vmem:[%s0 + $0x90] sm:$0xff]
  %v67 = vld [vmem:[%s0 + $0x98] sm:$0xff]
  %v68 = vld [vmem:[%s0 + $0xa0] sm:$0xff]
  %v69 = vld [vmem:[%s0 + $0xa8] sm:$0xff]
  %v70 = vld [vmem:[%s0 + $0xb0] sm:$0xff]
  %v71 = vld [vmem:[%s0 + $0xb8] sm:$0xff]
  %v72 = vld [vmem:[%s0 + $0xc0] sm:$0xff]
  %v73 = vld [vmem:[%s0 + $0xc8] sm:$0xff]
  %v74 = vld [vmem:[%s0 + $0xd0] sm:$0xff]
  %v75 = vld [vmem:[%s0 + $0xd8] sm:$0xff]
  %v76 = vld [vmem:[%s0 + $0xe0] sm:$0xff]
  %v77 = vld [vmem:[%s0 + $0xe8] sm:$0xff]
  %v78 = vld [vmem:[%s0 + $0xf0] sm:$0xff]
  %v79 = vld [vmem:[%s0 + $0xf8] sm:$0xff]
  %v80 = vld [vmem:[%s0 + $0x100] sm:$0xff]
  %v81 = vld [vmem:[%s0 + $0x108] sm:$0xff]
  %v82 = vld [vmem:[%s0 + $0x110] sm:$0xff]
  %v83 = vld [vmem:[%s0 + $0x118] sm:$0xff]
  %v84 = vld [vmem:[%s0 + $0x120] sm:$0xff]
  %v85 = vld [vmem:[%s0 + $0x128] sm:$0xff]
  %v86 = vld [vmem:[%s0 + $0x130] sm:$0xff]
  %v87 = vld [vmem:[%s0 + $0x138] sm:$0xff]
  %v88 = vld [vmem:[%s0 + $0x140] sm:$0xff]
  %v89 = vld [vmem:[%s0 + $0x148] sm:$0xff]
  %v90 = vld [vmem:[%s0 + $0x150] sm:$0xff]
  %v91 = vld [vmem:[%s0 + $0x158] sm:$0xff]
  %v92 = vld [vmem:[%s0 + $0x160] sm:$0xff]
  %v93 = vld [vmem:[%s0 + $0x168] sm:$0xff]
  %v94 = vld [vmem:[%s0 + $0x170] sm:$0xff]
  %v95 = vld [vmem:[%s0 + $0x178] sm:$0xff]
  %v96 = vld [vmem:[%s0 + $0x180] sm:$0xff]
  %v97 = vld [vmem:[%s0 + $0x188] sm:$0xff]
  %v98 = vld [vmem:[%s0 + $0x190] sm:$0xff]
  %v99 = vld [vmem:[%s0 + $0x198] sm:$0xff]
  %v100 = vld [vmem:[%s0 + $0x1a0] sm:$0xff]
  %v101 = vld [vmem:[%s0 + $0x1a8] sm:$0xff]
  %v102 = vld [vmem:[%s0 + $0x1b0] sm:$0xff]
  %v103 = vld [vmem:[%s0 + $0x1b8] sm:$0xff]
  %v104 = vld [vmem:[%s0 + $0x1c0] sm:$0xff]
  %v105 = vld [vmem:[%s0 + $0x1c8] sm:$0xff]
  %v106 = vld [vmem:[%s0 + $0x1d0] sm:$0xff]
  %v107 = vld [vmem:[%s0 + $0x1d8] sm:$0xff]
  %v108 = vld [vmem:[%s0 + $0x1e0] sm:$0xff]
  %v109 = vld [vmem:[%s0 + $0x1e8] sm:$0xff]
  %v110 = vld [vmem:[%s0 + $0x1f0] sm:$0xff]
  %v111 = vld [vmem:[%s0 + $0x1f8] sm:$0xff]
  %v113 = vlaneseq
  %v114 = vshrl.u32 %v113, 7
  %v115 = vsub.s32 0, %v114
  %v116 = vrot.slane %v44, %v115
  %v118 = vmul.f32 %v48, %v116
  %v119 = vmul.f32 %v49, %v116
  %v120 = vmul.f32 %v50, %v116
  %v121 = vmul.f32 %v51, %v116
  %v122 = vmul.f32 %v52, %v116
  %v123 = vmul.f32 %v53, %v116
  %v124 = vmul.f32 %v54, %v116
  %v125 = vmul.f32 %v55, %v116
  %v126 = vmul.f32 %v56, %v116
  %v127 = vmul.f32 %v57, %v116
  %v128 = vmul.f32 %v58, %v116
  %v129 = vmul.f32 %v59, %v116
  %v130 = vmul.f32 %v60, %v116
  %v131 = vmul.f32 %v61, %v116
  %v132 = vmul.f32 %v62, %v116
  %v133 = vmul.f32 %v63, %v116
  %v134 = vmul.f32 %v64, %v116
  %v135 = vmul.f32 %v65, %v116
  %v136 = vmul.f32 %v66, %v116
  %v137 = vmul.f32 %v67, %v116
  %v138 = vmul.f32 %v68, %v116
  %v139 = vmul.f32 %v69, %v116
  %v140 = vmul.f32 %v70, %v116
  %v141 = vmul.f32 %v71, %v116
  %v142 = vmul.f32 %v72, %v116
  %v143 = vmul.f32 %v73, %v116
  %v144 = vmul.f32 %v74, %v116
  %v145 = vmul.f32 %v75, %v116
  %v146 = vmul.f32 %v76, %v116
  %v147 = vmul.f32 %v77, %v116
  %v148 = vmul.f32 %v78, %v116
  %v149 = vmul.f32 %v79, %v116
  %v150 = vmul.f32 %v80, %v116
  %v151 = vmul.f32 %v81, %v116
  %v152 = vmul.f32 %v82, %v116
  %v153 = vmul.f32 %v83, %v116
  %v154 = vmul.f32 %v84, %v116
  %v155 = vmul.f32 %v85, %v116
  %v156 = vmul.f32 %v86, %v116
  %v157 = vmul.f32 %v87, %v116
  %v158 = vmul.f32 %v88, %v116
  %v159 = vmul.f32 %v89, %v116
  %v160 = vmul.f32 %v90, %v116
  %v161 = vmul.f32 %v91, %v116
  %v162 = vmul.f32 %v92, %v116
  %v163 = vmul.f32 %v93, %v116
  %v164 = vmul.f32 %v94, %v116
  %v165 = vmul.f32 %v95, %v116
  %v166 = vmul.f32 %v96, %v116
  %v167 = vmul.f32 %v97, %v116
  %v168 = vmul.f32 %v98, %v116
  %v169 = vmul.f32 %v99, %v116
  %v170 = vmul.f32 %v100, %v116
  %v171 = vmul.f32 %v101, %v116
  %v172 = vmul.f32 %v102, %v116
  %v173 = vmul.f32 %v103, %v116
  %v174 = vmul.f32 %v104, %v116
  %v175 = vmul.f32 %v105, %v116
  %v176 = vmul.f32 %v106, %v116
  %v177 = vmul.f32 %v107, %v116
  %v178 = vmul.f32 %v108, %v116
  %v179 = vmul.f32 %v109, %v116
  %v180 = vmul.f32 %v110, %v116
  %v181 = vmul.f32 %v111, %v116
  %v183 = vlaneseq
  %v184 = vshrl.u32 %v183, 7
  %v185 = vsub.s32 0, %v184
  %v186 = vrot.slane %v47, %v185
  %v188 = vadd.f32 %v118, %v186
  %v189 = vadd.f32 %v119, %v186
  %v190 = vadd.f32 %v120, %v186
  %v191 = vadd.f32 %v121, %v186
  %v192 = vadd.f32 %v122, %v186
  %v193 = vadd.f32 %v123, %v186
  %v194 = vadd.f32 %v124, %v186
  %v195 = vadd.f32 %v125, %v186
  %v196 = vadd.f32 %v126, %v186
  %v197 = vadd.f32 %v127, %v186
  %v198 = vadd.f32 %v128, %v186
  %v199 = vadd.f32 %v129, %v186
  %v200 = vadd.f32 %v130, %v186
  %v201 = vadd.f32 %v131, %v186
  %v202 = vadd.f32 %v132, %v186
  %v203 = vadd.f32 %v133, %v186
  %v204 = vadd.f32 %v134, %v186
  %v205 = vadd.f32 %v135, %v186
  %v206 = vadd.f32 %v136, %v186
  %v207 = vadd.f32 %v137, %v186
  %v208 = vadd.f32 %v138, %v186
  %v209 = vadd.f32 %v139, %v186
  %v210 = vadd.f32 %v140, %v186
  %v211 = vadd.f32 %v141, %v186
  %v212 = vadd.f32 %v142, %v186
  %v213 = vadd.f32 %v143, %v186
  %v214 = vadd.f32 %v144, %v186
  %v215 = vadd.f32 %v145, %v186
  %v216 = vadd.f32 %v146, %v186
  %v217 = vadd.f32 %v147, %v186
  %v218 = vadd.f32 %v148, %v186
  %v219 = vadd.f32 %v149, %v186
  %v220 = vadd.f32 %v150, %v186
  %v221 = vadd.f32 %v151, %v186
  %v222 = vadd.f32 %v152, %v186
  %v223 = vadd.f32 %v153, %v186
  %v224 = vadd.f32 %v154, %v186
  %v225 = vadd.f32 %v155, %v186
  %v226 = vadd.f32 %v156, %v186
  %v227 = vadd.f32 %v157, %v186
  %v228 = vadd.f32 %v158, %v186
  %v229 = vadd.f32 %v159, %v186
  %v230 = vadd.f32 %v160, %v186
  %v231 = vadd.f32 %v161, %v186
  %v232 = vadd.f32 %v162, %v186
  %v233 = vadd.f32 %v163, %v186
  %v234 = vadd.f32 %v164, %v186
  %v235 = vadd.f32 %v165, %v186
  %v236 = vadd.f32 %v166, %v186
  %v237 = vadd.f32 %v167, %v186
  %v238 = vadd.f32 %v168, %v186
  %v239 = vadd.f32 %v169, %v186
  %v240 = vadd.f32 %v170, %v186
  %v241 = vadd.f32 %v171, %v186
  %v242 = vadd.f32 %v172, %v186
  %v243 = vadd.f32 %v173, %v186
  %v244 = vadd.f32 %v174, %v186
  %v245 = vadd.f32 %v175, %v186
  %v246 = vadd.f32 %v176, %v186
  %v247 = vadd.f32 %v177, %v186
  %v248 = vadd.f32 %v178, %v186
  %v249 = vadd.f32 %v179, %v186
  %v250 = vadd.f32 %v180, %v186
  %v251 = vadd.f32 %v181, %v186
  %v252 = vmax.f32 %v188, 0.0
  %v253 = vmax.f32 %v189, 0.0
  %v254 = vmax.f32 %v190, 0.0
  %v255 = vmax.f32 %v191, 0.0
  %v256 = vmax.f32 %v192, 0.0
  %v257 = vmax.f32 %v193, 0.0
  %v258 = vmax.f32 %v194, 0.0
  %v259 = vmax.f32 %v195, 0.0
  %v260 = vmax.f32 %v196, 0.0
  %v261 = vmax.f32 %v197, 0.0
  %v262 = vmax.f32 %v198, 0.0
  %v263 = vmax.f32 %v199, 0.0
  %v264 = vmax.f32 %v200, 0.0
  %v265 = vmax.f32 %v201, 0.0
  %v266 = vmax.f32 %v202, 0.0
  %v267 = vmax.f32 %v203, 0.0
  %v268 = vmax.f32 %v204, 0.0
  %v269 = vmax.f32 %v205, 0.0
  %v270 = vmax.f32 %v206, 0.0
  %v271 = vmax.f32 %v207, 0.0
  %v272 = vmax.f32 %v208, 0.0
  %v273 = vmax.f32 %v209, 0.0
  %v274 = vmax.f32 %v210, 0.0
  %v275 = vmax.f32 %v211, 0.0
  %v276 = vmax.f32 %v212, 0.0
  %v277 = vmax.f32 %v213, 0.0
  %v278 = vmax.f32 %v214, 0.0
  %v279 = vmax.f32 %v215, 0.0
  %v280 = vmax.f32 %v216, 0.0
  %v281 = vmax.f32 %v217, 0.0
  %v282 = vmax.f32 %v218, 0.0
  %v283 = vmax.f32 %v219, 0.0
  %v284 = vmax.f32 %v220, 0.0
  %v285 = vmax.f32 %v221, 0.0
  %v286 = vmax.f32 %v222, 0.0
  %v287 = vmax.f32 %v223, 0.0
  %v288 = vmax.f32 %v224, 0.0
  %v289 = vmax.f32 %v225, 0.0
  %v290 = vmax.f32 %v226, 0.0
  %v291 = vmax.f32 %v227, 0.0
  %v292 = vmax.f32 %v228, 0.0
  %v293 = vmax.f32 %v229, 0.0
  %v294 = vmax.f32 %v230, 0.0
  %v295 = vmax.f32 %v231, 0.0
  %v296 = vmax.f32 %v232, 0.0
  %v297 = vmax.f32 %v233, 0.0
  %v298 = vmax.f32 %v234, 0.0
  %v299 = vmax.f32 %v235, 0.0
  %v300 = vmax.f32 %v236, 0.0
  %v301 = vmax.f32 %v237, 0.0
  %v302 = vmax.f32 %v238, 0.0
  %v303 = vmax.f32 %v239, 0.0
  %v304 = vmax.f32 %v240, 0.0
  %v305 = vmax.f32 %v241, 0.0
  %v306 = vmax.f32 %v242, 0.0
  %v307 = vmax.f32 %v243, 0.0
  %v308 = vmax.f32 %v244, 0.0
  %v309 = vmax.f32 %v245, 0.0
  %v310 = vmax.f32 %v246, 0.0
  %v311 = vmax.f32 %v247, 0.0
  %v312 = vmax.f32 %v248, 0.0
  %v313 = vmax.f32 %v249, 0.0
  %v314 = vmax.f32 %v250, 0.0
  %v315 = vmax.f32 %v251, 0.0
  %v316 = vpack.c.bf16 %v253, %v252
  %v317 = vpack.c.bf16 %v255, %v254
  %v318 = vpack.c.bf16 %v257, %v256
  %v319 = vpack.c.bf16 %v259, %v258
  %v320 = vpack.c.bf16 %v261, %v260
  %v321 = vpack.c.bf16 %v263, %v262
  %v322 = vpack.c.bf16 %v265, %v264
  %v323 = vpack.c.bf16 %v267, %v266
  %v324 = vpack.c.bf16 %v269, %v268
  %v325 = vpack.c.bf16 %v271, %v270
  %v326 = vpack.c.bf16 %v273, %v272
  %v327 = vpack.c.bf16 %v275, %v274
  %v328 = vpack.c.bf16 %v277, %v276
  %v329 = vpack.c.bf16 %v279, %v278
  %v330 = vpack.c.bf16 %v281, %v280
  %v331 = vpack.c.bf16 %v283, %v282
  %v332 = vpack.c.bf16 %v285, %v284
  %v333 = vpack.c.bf16 %v287, %v286
  %v334 = vpack.c.bf16 %v289, %v288
  %v335 = vpack.c.bf16 %v291, %v290
  %v336 = vpack.c.bf16 %v293, %v292
  %v337 = vpack.c.bf16 %v295, %v294
  %v338 = vpack.c.bf16 %v297, %v296
  %v339 = vpack.c.bf16 %v299, %v298
  %v340 = vpack.c.bf16 %v301, %v300
  %v341 = vpack.c.bf16 %v303, %v302
  %v342 = vpack.c.bf16 %v305, %v304
  %v343 = vpack.c.bf16 %v307, %v306
  %v344 = vpack.c.bf16 %v309, %v308
  %v345 = vpack.c.bf16 %v311, %v310
  %v346 = vpack.c.bf16 %v313, %v312
  %v347 = vpack.c.bf16 %v315, %v314
  %v380 = vunpack.c.l.b16 %v316
  %v381 = vunpack.c.h.b16 %v316
  %v382 = vunpack.c.l.b16 %v317
  %v383 = vunpack.c.h.b16 %v317
  %v384 = vunpack.c.l.b16 %v318
  %v385 = vunpack.c.h.b16 %v318
  %v386 = vunpack.c.l.b16 %v319
  %v387 = vunpack.c.h.b16 %v319
  %v388 = vunpack.c.l.b16 %v320
  %v389 = vunpack.c.h.b16 %v320
  %v390 = vunpack.c.l.b16 %v321
  %v391 = vunpack.c.h.b16 %v321
  %v392 = vunpack.c.l.b16 %v322
  %v393 = vunpack.c.h.b16 %v322
  %v394 = vunpack.c.l.b16 %v323
  %v395 = vunpack.c.h.b16 %v323
  %v396 = vunpack.c.l.b16 %v324
  %v397 = vunpack.c.h.b16 %v324
  %v398 = vunpack.c.l.b16 %v325
  %v399 = vunpack.c.h.b16 %v325
  %v400 = vunpack.c.l.b16 %v326
  %v401 = vunpack.c.h.b16 %v326
  %v402 = vunpack.c.l.b16 %v327
  %v403 = vunpack.c.h.b16 %v327
  %v404 = vunpack.c.l.b16 %v328
  %v405 = vunpack.c.h.b16 %v328
  %v406 = vunpack.c.l.b16 %v329
  %v407 = vunpack.c.h.b16 %v329
  %v408 = vunpack.c.l.b16 %v330
  %v409 = vunpack.c.h.b16 %v330
  %v410 = vunpack.c.l.b16 %v331
  %v411 = vunpack.c.h.b16 %v331
  %v412 = vunpack.c.l.b16 %v332
  %v413 = vunpack.c.h.b16 %v332
  %v414 = vunpack.c.l.b16 %v333
  %v415 = vunpack.c.h.b16 %v333
  %v416 = vunpack.c.l.b16 %v334
  %v417 = vunpack.c.h.b16 %v334
  %v418 = vunpack.c.l.b16 %v335
  %v419 = vunpack.c.h.b16 %v335
  %v420 = vunpack.c.l.b16 %v336
  %v421 = vunpack.c.h.b16 %v336
  %v422 = vunpack.c.l.b16 %v337
  %v423 = vunpack.c.h.b16 %v337
  %v424 = vunpack.c.l.b16 %v338
  %v425 = vunpack.c.h.b16 %v338
  %v426 = vunpack.c.l.b16 %v339
  %v427 = vunpack.c.h.b16 %v339
  %v428 = vunpack.c.l.b16 %v340
  %v429 = vunpack.c.h.b16 %v340
  %v430 = vunpack.c.l.b16 %v341
  %v431 = vunpack.c.h.b16 %v341
  %v432 = vunpack.c.l.b16 %v342
  %v433 = vunpack.c.h.b16 %v342
  %v434 = vunpack.c.l.b16 %v343
  %v435 = vunpack.c.h.b16 %v343
  %v436 = vunpack.c.l.b16 %v344
  %v437 = vunpack.c.h.b16 %v344
  %v438 = vunpack.c.l.b16 %v345
  %v439 = vunpack.c.h.b16 %v345
  %v440 = vunpack.c.l.b16 %v346
  %v441 = vunpack.c.h.b16 %v346
  %v442 = vunpack.c.l.b16 %v347
  %v443 = vunpack.c.h.b16 %v347
  %v444 = vpack.c.b16 %v380, %v380
  %v445 = vpack.c.b16 %v381, %v381
  %v446 = vpack.c.b16 %v382, %v382
  %v447 = vpack.c.b16 %v383, %v383
  %v448 = vpack.c.b16 %v384, %v384
  %v449 = vpack.c.b16 %v385, %v385
  %v450 = vpack.c.b16 %v386, %v386
  %v451 = vpack.c.b16 %v387, %v387
  %v452 = vpack.c.b16 %v388, %v388
  %v453 = vpack.c.b16 %v389, %v389
  %v454 = vpack.c.b16 %v390, %v390
  %v455 = vpack.c.b16 %v391, %v391
  %v456 = vpack.c.b16 %v392, %v392
  %v457 = vpack.c.b16 %v393, %v393
  %v458 = vpack.c.b16 %v394, %v394
  %v459 = vpack.c.b16 %v395, %v395
  %v460 = vpack.c.b16 %v396, %v396
  %v461 = vpack.c.b16 %v397, %v397
  %v462 = vpack.c.b16 %v398, %v398
  %v463 = vpack.c.b16 %v399, %v399
  %v464 = vpack.c.b16 %v400, %v400
  %v465 = vpack.c.b16 %v401, %v401
  %v466 = vpack.c.b16 %v402, %v402
  %v467 = vpack.c.b16 %v403, %v403
  %v468 = vpack.c.b16 %v404, %v404
  %v469 = vpack.c.b16 %v405, %v405
  %v470 = vpack.c.b16 %v406, %v406
  %v471 = vpack.c.b16 %v407, %v407
  %v472 = vpack.c.b16 %v408, %v408
  %v473 = vpack.c.b16 %v409, %v409
  %v474 = vpack.c.b16 %v410, %v410
  %v475 = vpack.c.b16 %v411, %v411
  %v476 = vpack.c.b16 %v412, %v412
  %v477 = vpack.c.b16 %v413, %v413
  %v478 = vpack.c.b16 %v414, %v414
  %v479 = vpack.c.b16 %v415, %v415
  %v480 = vpack.c.b16 %v416, %v416
  %v481 = vpack.c.b16 %v417, %v417
  %v482 = vpack.c.b16 %v418, %v418
  %v483 = vpack.c.b16 %v419, %v419
  %v484 = vpack.c.b16 %v420, %v420
  %v485 = vpack.c.b16 %v421, %v421
  %v486 = vpack.c.b16 %v422, %v422
  %v487 = vpack.c.b16 %v423, %v423
  %v488 = vpack.c.b16 %v424, %v424
  %v489 = vpack.c.b16 %v425, %v425
  %v490 = vpack.c.b16 %v426, %v426
  %v491 = vpack.c.b16 %v427, %v427
  %v492 = vpack.c.b16 %v428, %v428
  %v493 = vpack.c.b16 %v429, %v429
  %v494 = vpack.c.b16 %v430, %v430
  %v495 = vpack.c.b16 %v431, %v431
  %v496 = vpack.c.b16 %v432, %v432
  %v497 = vpack.c.b16 %v433, %v433
  %v498 = vpack.c.b16 %v434, %v434
  %v499 = vpack.c.b16 %v435, %v435
  %v500 = vpack.c.b16 %v436, %v436
  %v501 = vpack.c.b16 %v437, %v437
  %v502 = vpack.c.b16 %v438, %v438
  %v503 = vpack.c.b16 %v439, %v439
  %v504 = vpack.c.b16 %v440, %v440
  %v505 = vpack.c.b16 %v441, %v441
  %v506 = vpack.c.b16 %v442, %v442
  %v507 = vpack.c.b16 %v443, %v443
  %572 = vst [vmem:[%s5] sm:$0xf] %v444
  %573 = vst [vmem:[%s5 + $0x4] sm:$0xf] %v445
  %574 = vst [vmem:[%s5 + $0x8] sm:$0xf] %v446
  %575 = vst [vmem:[%s5 + $0xc] sm:$0xf] %v447
  %576 = vst [vmem:[%s5 + $0x10] sm:$0xf] %v448
  %577 = vst [vmem:[%s5 + $0x14] sm:$0xf] %v449
  %578 = vst [vmem:[%s5 + $0x18] sm:$0xf] %v450
  %579 = vst [vmem:[%s5 + $0x1c] sm:$0xf] %v451
  %580 = vst [vmem:[%s5 + $0x20] sm:$0xf] %v452
  %581 = vst [vmem:[%s5 + $0x24] sm:$0xf] %v453
  %582 = vst [vmem:[%s5 + $0x28] sm:$0xf] %v454
  %583 = vst [vmem:[%s5 + $0x2c] sm:$0xf] %v455
  %584 = vst [vmem:[%s5 + $0x30] sm:$0xf] %v456
  %585 = vst [vmem:[%s5 + $0x34] sm:$0xf] %v457
  %586 = vst [vmem:[%s5 + $0x38] sm:$0xf] %v458
  %587 = vst [vmem:[%s5 + $0x3c] sm:$0xf] %v459
  %588 = vst [vmem:[%s5 + $0x40] sm:$0xf] %v460
  %589 = vst [vmem:[%s5 + $0x44] sm:$0xf] %v461
  %590 = vst [vmem:[%s5 + $0x48] sm:$0xf] %v462
  %591 = vst [vmem:[%s5 + $0x4c] sm:$0xf] %v463
  %592 = vst [vmem:[%s5 + $0x50] sm:$0xf] %v464
  %593 = vst [vmem:[%s5 + $0x54] sm:$0xf] %v465
  %594 = vst [vmem:[%s5 + $0x58] sm:$0xf] %v466
  %595 = vst [vmem:[%s5 + $0x5c] sm:$0xf] %v467
  %596 = vst [vmem:[%s5 + $0x60] sm:$0xf] %v468
  %597 = vst [vmem:[%s5 + $0x64] sm:$0xf] %v469
  %598 = vst [vmem:[%s5 + $0x68] sm:$0xf] %v470
  %599 = vst [vmem:[%s5 + $0x6c] sm:$0xf] %v471
  %600 = vst [vmem:[%s5 + $0x70] sm:$0xf] %v472
  %601 = vst [vmem:[%s5 + $0x74] sm:$0xf] %v473
  %602 = vst [vmem:[%s5 + $0x78] sm:$0xf] %v474
  %603 = vst [vmem:[%s5 + $0x7c] sm:$0xf] %v475
  %604 = vst [vmem:[%s5 + $0x80] sm:$0xf] %v476
  %605 = vst [vmem:[%s5 + $0x84] sm:$0xf] %v477
  %606 = vst [vmem:[%s5 + $0x88] sm:$0xf] %v478
  %607 = vst [vmem:[%s5 + $0x8c] sm:$0xf] %v479
  %608 = vst [vmem:[%s5 + $0x90] sm:$0xf] %v480
  %609 = vst [vmem:[%s5 + $0x94] sm:$0xf] %v481
  %610 = vst [vmem:[%s5 + $0x98] sm:$0xf] %v482
  %611 = vst [vmem:[%s5 + $0x9c] sm:$0xf] %v483
  %612 = vst [vmem:[%s5 + $0xa0] sm:$0xf] %v484
  %613 = vst [vmem:[%s5 + $0xa4] sm:$0xf] %v485
  %614 = vst [vmem:[%s5 + $0xa8] sm:$0xf] %v486
  %615 = vst [vmem:[%s5 + $0xac] sm:$0xf] %v487
  %616 = vst [vmem:[%s5 + $0xb0] sm:$0xf] %v488
  %617 = vst [vmem:[%s5 + $0xb4] sm:$0xf] %v489
  %618 = vst [vmem:[%s5 + $0xb8] sm:$0xf] %v490
  %619 = vst [vmem:[%s5 + $0xbc] sm:$0xf] %v491
  %620 = vst [vmem:[%s5 + $0xc0] sm:$0xf] %v492
  %621 = vst [vmem:[%s5 + $0xc4] sm:$0xf] %v493
  %622 = vst [vmem:[%s5 + $0xc8] sm:$0xf] %v494
  %623 = vst [vmem:[%s5 + $0xcc] sm:$0xf] %v495
  %624 = vst [vmem:[%s5 + $0xd0] sm:$0xf] %v496
  %625 = vst [vmem:[%s5 + $0xd4] sm:$0xf] %v497
  %626 = vst [vmem:[%s5 + $0xd8] sm:$0xf] %v498
  %627 = vst [vmem:[%s5 + $0xdc] sm:$0xf] %v499
  %628 = vst [vmem:[%s5 + $0xe0] sm:$0xf] %v500
  %629 = vst [vmem:[%s5 + $0xe4] sm:$0xf] %v501
  %630 = vst [vmem:[%s5 + $0xe8] sm:$0xf] %v502
  %631 = vst [vmem:[%s5 + $0xec] sm:$0xf] %v503
  %632 = vst [vmem:[%s5 + $0xf0] sm:$0xf] %v504
  %633 = vst [vmem:[%s5 + $0xf4] sm:$0xf] %v505
  %634 = vst [vmem:[%s5 + $0xf8] sm:$0xf] %v506
  %635 = vst [vmem:[%s5 + $0xfc] sm:$0xf] %v507
  // Predicated region
  $region22: #{decoder_forward.16} parent=0 // pred_check
    _
  $region23: #{decoder_forward.16} parent=0 // pred_check_branch
    %637 = sbr.rel (0) target = $region25
  $region24: #{decoder_forward.16} parent=0 // pred_region
    _
  $region25: #{decoder_forward.16} parent=0 // pred_fallthru
    _
  // Predicated region
  $region26: #{decoder_forward.16} parent=0 // pred_check
    _
  $region27: #{decoder_forward.16} parent=0 // pred_check_branch
    %639 = sbr.rel (0) target = $region29
  $region28: #{decoder_forward.16} parent=0 // pred_region
    _
  $region29: #{decoder_forward.16} parent=0 // pred_fallthru
    _

// kernel: decoder_forward.17
$region0: #{decoder_forward.17}
  #allocation0 [shape = 'u32[]', space=smem, size = 0x4, offset = 0x4, fixed_abs, tag = 'smem constant byte address 0x4 - core index']
  #allocation1 [shape = 'u32[144,128]{1,0:T(1,128)}', space=vmem, size = 0x12000, scoped, tag = 'internal scratch']
  %s0 = inlined_call_operand.vmem [shape: bf16[4,512,512], index: 0, kind: input, shape index: {}]
  %s1 = inlined_call_operand.vmem [shape: bf16[4,512,128], index: 1, kind: input, shape index: {}]
  %s2 = inlined_call_operand.vmem [shape: f32[1,128], index: 2, kind: input, shape index: {}]
  %s3 = inlined_call_operand.vmem [shape: f32[4,512,128], index: 3, kind: output, shape index: {}]
  %s4 = sld [smem:[#allocation0]]
  $region45: #{decoder_forward.17} parent=0
    _
  %s6 = ssub.s32 1, %s4
  %s7 = scalar_select 0, %s6, %s4
  loop: start=0, step=1, limit=10
  $region2: #{decoder_forward.17} parent=0 // loop_pre_header
    _
  $region3: #{decoder_forward.17} parent=0 // loop_header
    %s9 = sphi 0, %s13
    %p10 = scmp.ge.s32.totalorder %s9, 10
    %s16 = sphi 0, %s42
    %s17 = sphi 0, %s38
    %s18 = sphi 0, %s34
    %s19 = sphi 0, %s30
    %s20 = sphi 0, %s16
    %s21 = sphi 0, %s17
    %s22 = sphi 0, %s18
    %s23 = sphi 0, %s19
    %s24 = sphi 0, %s20
    %s25 = sphi 0, %s21
    %s26 = sphi 0, %s22
    %s27 = sphi 0, %s23
    %s49 = sphi 0, %s51
    %s52 = sphi 0, %s49
    %s53 = sphi 0, %s52
    %s69 = sphi 0, %s53
    %s79 = sphi 0, %s81
    %s82 = sphi 0, %s79
    %s83 = sphi 0, %s82
    %s99 = sphi 0, %s83
    %s105 = sphi 0, %s107
    %s108 = sphi 0, %s105
    %s109 = sphi 0, %s108
    %s125 = sphi 0, %s109
    %s135 = sphi 0, %s137
    %s138 = sphi 0, %s135
    %s139 = sphi 0, %s138
    %s155 = sphi 0, %s139
  $region4: #{decoder_forward.17} parent=0 // loop_header_branch
    %12 = sbr.rel (%p10) target = $region8
  $region5: #{decoder_forward.17} parent=0 // loop_body
    %s14 = ssub.s32 %s9, 1
    %s15 = ssub.s32 %s9, 2
    %s28 = sadd.s32 1, %s19
    %p29 = scmp.ge.s32.totalorder %s28, 1
    %s30 = scalar_select %p29, 0, %s28
    %s31 = sadd.s32 1, %s18
    %s32 = scalar_select %p29, %s31, %s18
    %p33 = scmp.ge.s32.totalorder %s32, 1
    %s34 = scalar_select %p33, 0, %s32
    %s35 = sadd.s32 1, %s17
    %s36 = scalar_select %p33, %s35, %s17
    %p37 = scmp.ge.s32.totalorder %s36, 2
    %s38 = scalar_select %p37, 0, %s36
    %s39 = sadd.s32 1, %s16
    %s40 = scalar_select %p37, %s39, %s16
    %p41 = scmp.ge.s32.totalorder %s40, 4
    %s42 = scalar_select %p41, 0, %s40
    %s43 = ssub.s32 %s16, %s42
    %s44 = ssub.s32 %s17, %s38
    %s45 = sor.u32 %s43, %s44
    %s46 = ssub.s32 %s19, %s30
    %s47 = sor.u32 %s45, %s46
    %p48 = scmp.eq.s32.totalorder %s47, 0
    %s50 = sadd.s32 %s49, 1
    %s51 = scalar_select %p48, %s49, %s50
    %p54 = pneg %p48
    %p55 = scmp.eq.s32.totalorder %s9, 7
    %p56 = por %p54, %p55
    %p57 = scmp.ne.s32.totalorder %s49, %s52
    %p58 = scmp.eq.s32.totalorder %s9, 0
    %p59 = por %p57, %p58
    %p60 = scmp.ne.s32.totalorder %s49, %s52
    %p61 = scmp.eq.s32.totalorder %s14, 7
    %p62 = por %p60, %p61
    %p63 = scmp.ne.s32.totalorder %s52, %s53
    %p64 = scmp.eq.s32.totalorder %s14, 0
    %p65 = por %p63, %p64
    %p66 = scmp.ne.s32.totalorder %s52, %s53
    %p67 = scmp.eq.s32.totalorder %s15, 7
    %p68 = por %p66, %p67
    %p70 = scmp.ne.s32.totalorder %s53, %s69
    %p71 = scmp.eq.s32.totalorder %s15, 0
    %p72 = por %p70, %p71
    %s73 = ssub.s32 %s16, %s42
    %s74 = ssub.s32 %s19, %s30
    %s75 = sor.u32 %s73, %s74
    %s76 = ssub.s32 %s18, %s34
    %s77 = sor.u32 %s75, %s76
    %p78 = scmp.eq.s32.totalorder %s77, 0
    %s80 = sadd.s32 %s79, 1
    %s81 = scalar_select %p78, %s79, %s80
    %p84 = pneg %p78
    %p85 = scmp.eq.s32.totalorder %s9, 7
    %p86 = por %p84, %p85
    %p87 = scmp.ne.s32.totalorder %s79, %s82
    %p88 = scmp.eq.s32.totalorder %s9, 0
    %p89 = por %p87, %p88
    %p90 = scmp.ne.s32.totalorder %s79, %s82
    %p91 = scmp.eq.s32.totalorder %s14, 7
    %p92 = por %p90, %p91
    %p93 = scmp.ne.s32.totalorder %s82, %s83
    %p94 = scmp.eq.s32.totalorder %s14, 0
    %p95 = por %p93, %p94
    %p96 = scmp.ne.s32.totalorder %s82, %s83
    %p97 = scmp.eq.s32.totalorder %s15, 7
    %p98 = por %p96, %p97
    %p100 = scmp.ne.s32.totalorder %s83, %s99
    %p101 = scmp.eq.s32.totalorder %s15, 0
    %p102 = por %p100, %p101
    %s103 = ssub.s32 %s18, %s34
    %p104 = scmp.eq.s32.totalorder %s103, 0
    %s106 = sadd.s32 %s105, 1
    %s107 = scalar_select %p104, %s105, %s106
    %p110 = pneg %p104
    %p111 = scmp.eq.s32.totalorder %s9, 7
    %p112 = por %p110, %p111
    %p113 = scmp.ne.s32.totalorder %s105, %s108
    %p114 = scmp.eq.s32.totalorder %s9, 0
    %p115 = por %p113, %p114
    %p116 = scmp.ne.s32.totalorder %s105, %s108
    %p117 = scmp.eq.s32.totalorder %s14, 7
    %p118 = por %p116, %p117
    %p119 = scmp.ne.s32.totalorder %s108, %s109
    %p120 = scmp.eq.s32.totalorder %s14, 0
    %p121 = por %p119, %p120
    %p122 = scmp.ne.s32.totalorder %s108, %s109
    %p123 = scmp.eq.s32.totalorder %s15, 7
    %p124 = por %p122, %p123
    %p126 = scmp.ne.s32.totalorder %s109, %s125
    %p127 = scmp.eq.s32.totalorder %s15, 0
    %p128 = por %p126, %p127
    %s129 = ssub.s32 %s16, %s42
    %s130 = ssub.s32 %s17, %s38
    %s131 = sor.u32 %s129, %s130
    %s132 = ssub.s32 %s18, %s34
    %s133 = sor.u32 %s131, %s132
    %p134 = scmp.eq.s32.totalorder %s133, 0
    %s136 = sadd.s32 %s135, 1
    %s137 = scalar_select %p134, %s135, %s136
    %p140 = pneg %p134
    %p141 = scmp.eq.s32.totalorder %s9, 7
    %p142 = por %p140, %p141
    %p143 = scmp.ne.s32.totalorder %s135, %s138
    %p144 = scmp.eq.s32.totalorder %s9, 0
    %p145 = por %p143, %p144
    %p146 = scmp.ne.s32.totalorder %s135, %s138
    %p147 = scmp.eq.s32.totalorder %s14, 7
    %p148 = por %p146, %p147
    %p149 = scmp.ne.s32.totalorder %s138, %s139
    %p150 = scmp.eq.s32.totalorder %s14, 0
    %p151 = por %p149, %p150
    %p152 = scmp.ne.s32.totalorder %s138, %s139
    %p153 = scmp.eq.s32.totalorder %s15, 7
    %p154 = por %p152, %p153
    %p156 = scmp.ne.s32.totalorder %s139, %s155
    %p157 = scmp.eq.s32.totalorder %s15, 0
    %p158 = por %p156, %p157
    %p159 = scmp.le.s32.totalorder 1, %s9
    %p160 = scmp.lt.s32.totalorder %s9, 9
    %p161 = pnand %p159, %p160
    %p162 = pneg %p161
    // Predicated region
    $region9: #{decoder_forward.17} parent=5 // pred_check
      _
    $region10: #{decoder_forward.17} parent=5 // pred_check_branch
      %164 = sbr.rel (%p161) target = $region12
    $region11: #{decoder_forward.17} parent=5 // pred_region
      %s165 = ssub.s32 %s9, 1
      // Predicated region
      $region13: #{decoder_forward.17} parent=11 // pred_check
        %p166 = pneg %p121
      $region14: #{decoder_forward.17} parent=11 // pred_check_branch
        %168 = sbr.rel (%p166) target = $region16
      $region15: #{decoder_forward.17} parent=11 // pred_region
        %p169 = scmp.lt.s32.totalorder %s22, 0
        %s170 = scalar_select %p169, %s22, 0
        %s171 = scalar_lea.vmem %s2, %s170
      $region16: #{decoder_forward.17} parent=11 // pred_fallthru
        _
    $region12: #{decoder_forward.17} parent=5 // pred_fallthru
      _
    %p172 = scmp.lt.s32.totalorder %s9, 8
    // Predicated region
    $region17: #{decoder_forward.17} parent=5 // pred_check
      %p173 = pneg %p172
    $region18: #{decoder_forward.17} parent=5 // pred_check_branch
      %175 = sbr.rel (%p173) target = $region20
    $region19: #{decoder_forward.17} parent=5 // pred_region
      // Predicated region
      $region21: #{decoder_forward.17} parent=19 // pred_check
        %p176 = pneg %p59
      $region22: #{decoder_forward.17} parent=19 // pred_check_branch
        %178 = sbr.rel (%p176) target = $region24
      $region23: #{decoder_forward.17} parent=19 // pred_region
        %s179 = smul.u32 32, %s17
        %s180 = smul.u32 4, %s19
        %p181 = scmp.lt.s32.totalorder %s16, 3
        %s182 = scalar_select %p181, %s16, 3
        %p183 = scmp.lt.s32.totalorder %s179, 63
        %s184 = scalar_select %p183, %s179, 63
        %p185 = scmp.lt.s32.totalorder %s180, 3
        %s186 = scalar_select %p185, %s180, 3
        %s187 = smul.addr %s184, 4
        %s188 = sadd.s32 %s186, %s187
        %s189 = smul.addr %s182, 256
        %s190 = sadd.s32 %s188, %s189
        %s191 = smul.addr %s190, 4
        %s192 = scalar_lea.vmem %s0, %s191
        %s193 = smul.u32 32, %s17
        %s194 = smul.u32 4, %s19
      $region24: #{decoder_forward.17} parent=19 // pred_fallthru
        _
      // Predicated region
      $region25: #{decoder_forward.17} parent=19 // pred_check
        %p195 = pneg %p89
      $region26: #{decoder_forward.17} parent=19 // pred_check_branch
        %197 = sbr.rel (%p195) target = $region28
      $region27: #{decoder_forward.17} parent=19 // pred_region
        %s198 = smul.u32 64, %s19
        %p199 = scmp.lt.s32.totalorder %s16, 3
        %s200 = scalar_select %p199, %s16, 3
        %p201 = scmp.lt.s32.totalorder %s198, 63
        %s202 = scalar_select %p201, %s198, 63
        %p203 = scmp.lt.s32.totalorder %s18, 0
        %s204 = scalar_select %p203, %s18, 0
        %s205 = sadd.s32 %s204, %s202
        %s206 = smul.addr %s200, 64
        %s207 = sadd.s32 %s205, %s206
        %s208 = smul.addr %s207, 4
        %s209 = scalar_lea.vmem %s1, %s208
        %s210 = smul.u32 64, %s19
      $region28: #{decoder_forward.17} parent=19 // pred_fallthru
        _
    $region20: #{decoder_forward.17} parent=5 // pred_fallthru
      _
    %p211 = scmp.le.s32.totalorder 1, %s9
    %p212 = scmp.lt.s32.totalorder %s9, 9
    %p213 = pnand %p211, %p212
    %p214 = pneg %p213
    // Predicated region
    $region29: #{decoder_forward.17} parent=5 // pred_check
      _
    $region30: #{decoder_forward.17} parent=5 // pred_check_branch
      %216 = sbr.rel (%p213) target = $region32
    $region31: #{decoder_forward.17} parent=5 // pred_region
      %s217 = ssub.s32 %s9, 1
      %s218 = smul.u32 32, %s21
      %s219 = smul.u32 4, %s23
      %p220 = scmp.lt.s32.totalorder %s20, 3
      %s221 = scalar_select %p220, %s20, 3
      %p222 = scmp.lt.s32.totalorder %s218, 63
      %s223 = scalar_select %p222, %s218, 63
      %p224 = scmp.lt.s32.totalorder %s219, 3
      %s225 = scalar_select %p224, %s219, 3
      %s226 = smul.addr %s223, 4
      %s227 = sadd.s32 %s225, %s226
      %s228 = smul.addr %s221, 256
      %s229 = sadd.s32 %s227, %s228
      %s230 = smul.addr %s229, 4
      %s231 = scalar_lea.vmem %s0, %s230
      %p232 = pneg %p65
      %p233 = pneg %p62
      %s234 = smul.u32 64, %s23
      %p235 = scmp.lt.s32.totalorder %s20, 3
      %s236 = scalar_select %p235, %s20, 3
      %p237 = scmp.lt.s32.totalorder %s234, 63
      %s238 = scalar_select %p237, %s234, 63
      %p239 = scmp.lt.s32.totalorder %s22, 0
      %s240 = scalar_select %p239, %s22, 0
      %s241 = sadd.s32 %s240, %s238
      %s242 = smul.addr %s236, 64
      %s243 = sadd.s32 %s241, %s242
      %s244 = smul.addr %s243, 4
      %s245 = scalar_lea.vmem %s1, %s244
      %p246 = pneg %p95
      %p247 = pneg %p92
      %p248 = scmp.lt.s32.totalorder %s22, 0
      %s249 = scalar_select %p248, %s22, 0
      %s250 = scalar_lea.vmem %s2, %s249
      %p251 = pneg %p121
      %p252 = pneg %p118
      %p253 = pneg %p151
      %p254 = pneg %p148
      %s255 = smul.u32 32, %s21
      %p256 = scmp.lt.s32.totalorder %s20, 3
      %s257 = scalar_select %p256, %s20, 3
      %p258 = scmp.lt.s32.totalorder %s255, 63
      %s259 = scalar_select %p258, %s255, 63
      %p260 = scmp.lt.s32.totalorder %s22, 0
      %s261 = scalar_select %p260, %s22, 0
      %s262 = sadd.s32 %s261, %s259
      %s263 = smul.addr %s257, 64
      %s264 = sadd.s32 %s262, %s263
      %s265 = smul.addr %s264, 8
      %s266 = scalar_lea.vmem %s3, %s265
      %s267 = smul.u32 32, %s21
      %s268 = smul.u32 4, %s23
      %p269 = scmp.lt.s32.totalorder %s20, 3
      %s270 = scalar_select %p269, %s20, 3
      %p271 = scmp.lt.s32.totalorder %s267, 63
      %s272 = scalar_select %p271, %s267, 63
      %p273 = scmp.lt.s32.totalorder %s268, 3
      %s274 = scalar_select %p273, %s268, 3
      %s275 = smul.addr %s272, 4
      %s276 = sadd.s32 %s274, %s275
      %s277 = smul.addr %s270, 256
      %s278 = sadd.s32 %s276, %s277
      %s279 = smul.addr %s278, 4
      %s280 = scalar_lea.vmem %s0, %s279
      %s281 = smul.u32 32, %s21
      %s282 = smul.u32 4, %s23
      %s283 = smul.u32 64, %s23
      %p284 = scmp.lt.s32.totalorder %s20, 3
      %s285 = scalar_select %p284, %s20, 3
      %p286 = scmp.lt.s32.totalorder %s283, 63
      %s287 = scalar_select %p286, %s283, 63
      %p288 = scmp.lt.s32.totalorder %s22, 0
      %s289 = scalar_select %p288, %s22, 0
      %s290 = sadd.s32 %s289, %s287
      %s291 = smul.addr %s285, 64
      %s292 = sadd.s32 %s290, %s291
      %s293 = smul.addr %s292, 4
      %s294 = scalar_lea.vmem %s1, %s293
      %s295 = smul.u32 64, %s23
      %p296 = scmp.lt.s32.totalorder %s22, 0
      %s297 = scalar_select %p296, %s22, 0
      %s298 = scalar_lea.vmem %s2, %s297
      %s299 = smul.u32 32, %s21
      %p300 = scmp.lt.s32.totalorder %s20, 3
      %s301 = scalar_select %p300, %s20, 3
      %p302 = scmp.lt.s32.totalorder %s299, 63
      %s303 = scalar_select %p302, %s299, 63
      %p304 = scmp.lt.s32.totalorder %s22, 0
      %s305 = scalar_select %p304, %s22, 0
      %s306 = sadd.s32 %s305, %s303
      %s307 = smul.addr %s301, 64
      %s308 = sadd.s32 %s306, %s307
      %s309 = smul.addr %s308, 8
      %s310 = scalar_lea.vmem %s3, %s309
      %s311 = smul.u32 32, %s21
      %v313 = vld [vmem:[%s280] sm:$0xff]
      %v314 = vld [vmem:[%s280 + $0x8] sm:$0xff]
      %v315 = vld [vmem:[%s280 + $0x10] sm:$0xff]
      %v316 = vld [vmem:[%s280 + $0x18] sm:$0xff]
      %v317 = vld [vmem:[%s280 + $0x20] sm:$0xff]
      %v318 = vld [vmem:[%s280 + $0x28] sm:$0xff]
      %v319 = vld [vmem:[%s280 + $0x30] sm:$0xff]
      %v320 = vld [vmem:[%s280 + $0x38] sm:$0xff]
      %v321 = vld [vmem:[%s280 + $0x40] sm:$0xff]
      %v322 = vld [vmem:[%s280 + $0x48] sm:$0xff]
      %v323 = vld [vmem:[%s280 + $0x50] sm:$0xff]
      %v324 = vld [vmem:[%s280 + $0x58] sm:$0xff]
      %v325 = vld [vmem:[%s280 + $0x60] sm:$0xff]
      %v326 = vld [vmem:[%s280 + $0x68] sm:$0xff]
      %v327 = vld [vmem:[%s280 + $0x70] sm:$0xff]
      %v328 = vld [vmem:[%s280 + $0x78] sm:$0xff]
      %v329 = vld [vmem:[%s280 + $0x80] sm:$0xff]
      %v330 = vld [vmem:[%s280 + $0x88] sm:$0xff]
      %v331 = vld [vmem:[%s280 + $0x90] sm:$0xff]
      %v332 = vld [vmem:[%s280 + $0x98] sm:$0xff]
      %v333 = vld [vmem:[%s280 + $0xa0] sm:$0xff]
      %v334 = vld [vmem:[%s280 + $0xa8] sm:$0xff]
      %v335 = vld [vmem:[%s280 + $0xb0] sm:$0xff]
      %v336 = vld [vmem:[%s280 + $0xb8] sm:$0xff]
      %v337 = vld [vmem:[%s280 + $0xc0] sm:$0xff]
      %v338 = vld [vmem:[%s280 + $0xc8] sm:$0xff]
      %v339 = vld [vmem:[%s280 + $0xd0] sm:$0xff]
      %v340 = vld [vmem:[%s280 + $0xd8] sm:$0xff]
      %v341 = vld [vmem:[%s280 + $0xe0] sm:$0xff]
      %v342 = vld [vmem:[%s280 + $0xe8] sm:$0xff]
      %v343 = vld [vmem:[%s280 + $0xf0] sm:$0xff]
      %v344 = vld [vmem:[%s280 + $0xf8] sm:$0xff]
      %v345 = vld [vmem:[%s280 + $0x100] sm:$0xff]
      %v346 = vld [vmem:[%s280 + $0x108] sm:$0xff]
      %v347 = vld [vmem:[%s280 + $0x110] sm:$0xff]
      %v348 = vld [vmem:[%s280 + $0x118] sm:$0xff]
      %v349 = vld [vmem:[%s280 + $0x120] sm:$0xff]
      %v350 = vld [vmem:[%s280 + $0x128] sm:$0xff]
      %v351 = vld [vmem:[%s280 + $0x130] sm:$0xff]
      %v352 = vld [vmem:[%s280 + $0x138] sm:$0xff]
      %v353 = vld [vmem:[%s280 + $0x140] sm:$0xff]
      %v354 = vld [vmem:[%s280 + $0x148] sm:$0xff]
      %v355 = vld [vmem:[%s280 + $0x150] sm:$0xff]
      %v356 = vld [vmem:[%s280 + $0x158] sm:$0xff]
      %v357 = vld [vmem:[%s280 + $0x160] sm:$0xff]
      %v358 = vld [vmem:[%s280 + $0x168] sm:$0xff]
      %v359 = vld [vmem:[%s280 + $0x170] sm:$0xff]
      %v360 = vld [vmem:[%s280 + $0x178] sm:$0xff]
      %v361 = vld [vmem:[%s280 + $0x180] sm:$0xff]
      %v362 = vld [vmem:[%s280 + $0x188] sm:$0xff]
      %v363 = vld [vmem:[%s280 + $0x190] sm:$0xff]
      %v364 = vld [vmem:[%s280 + $0x198] sm:$0xff]
      %v365 = vld [vmem:[%s280 + $0x1a0] sm:$0xff]
      %v366 = vld [vmem:[%s280 + $0x1a8] sm:$0xff]
      %v367 = vld [vmem:[%s280 + $0x1b0] sm:$0xff]
      %v368 = vld [vmem:[%s280 + $0x1b8] sm:$0xff]
      %v369 = vld [vmem:[%s280 + $0x1c0] sm:$0xff]
      %v370 = vld [vmem:[%s280 + $0x1c8] sm:$0xff]
      %v371 = vld [vmem:[%s280 + $0x1d0] sm:$0xff]
      %v372 = vld [vmem:[%s280 + $0x1d8] sm:$0xff]
      %v373 = vld [vmem:[%s280 + $0x1e0] sm:$0xff]
      %v374 = vld [vmem:[%s280 + $0x1e8] sm:$0xff]
      %v375 = vld [vmem:[%s280 + $0x1f0] sm:$0xff]
      %v376 = vld [vmem:[%s280 + $0x1f8] sm:$0xff]
      %v377 = vld [vmem:[%s294] sm:$0xf]
      %v378 = vld [vmem:[%s294 + $0x4] sm:$0xf]
      %v379 = vld [vmem:[%s294 + $0x8] sm:$0xf]
      %v380 = vld [vmem:[%s294 + $0xc] sm:$0xf]
      %v381 = vld [vmem:[%s294 + $0x10] sm:$0xf]
      %v382 = vld [vmem:[%s294 + $0x14] sm:$0xf]
      %v383 = vld [vmem:[%s294 + $0x18] sm:$0xf]
      %v384 = vld [vmem:[%s294 + $0x1c] sm:$0xf]
      %v385 = vld [vmem:[%s294 + $0x20] sm:$0xf]
      %v386 = vld [vmem:[%s294 + $0x24] sm:$0xf]
      %v387 = vld [vmem:[%s294 + $0x28] sm:$0xf]
      %v388 = vld [vmem:[%s294 + $0x2c] sm:$0xf]
      %v389 = vld [vmem:[%s294 + $0x30] sm:$0xf]
      %v390 = vld [vmem:[%s294 + $0x34] sm:$0xf]
      %v391 = vld [vmem:[%s294 + $0x38] sm:$0xf]
      %v392 = vld [vmem:[%s294 + $0x3c] sm:$0xf]
      %v393 = vld [vmem:[%s294 + $0x40] sm:$0xf]
      %v394 = vld [vmem:[%s294 + $0x44] sm:$0xf]
      %v395 = vld [vmem:[%s294 + $0x48] sm:$0xf]
      %v396 = vld [vmem:[%s294 + $0x4c] sm:$0xf]
      %v397 = vld [vmem:[%s294 + $0x50] sm:$0xf]
      %v398 = vld [vmem:[%s294 + $0x54] sm:$0xf]
      %v399 = vld [vmem:[%s294 + $0x58] sm:$0xf]
      %v400 = vld [vmem:[%s294 + $0x5c] sm:$0xf]
      %v401 = vld [vmem:[%s294 + $0x60] sm:$0xf]
      %v402 = vld [vmem:[%s294 + $0x64] sm:$0xf]
      %v403 = vld [vmem:[%s294 + $0x68] sm:$0xf]
      %v404 = vld [vmem:[%s294 + $0x6c] sm:$0xf]
      %v405 = vld [vmem:[%s294 + $0x70] sm:$0xf]
      %v406 = vld [vmem:[%s294 + $0x74] sm:$0xf]
      %v407 = vld [vmem:[%s294 + $0x78] sm:$0xf]
      %v408 = vld [vmem:[%s294 + $0x7c] sm:$0xf]
      %v409 = vld [vmem:[%s294 + $0x80] sm:$0xf]
      %v410 = vld [vmem:[%s294 + $0x84] sm:$0xf]
      %v411 = vld [vmem:[%s294 + $0x88] sm:$0xf]
      %v412 = vld [vmem:[%s294 + $0x8c] sm:$0xf]
      %v413 = vld [vmem:[%s294 + $0x90] sm:$0xf]
      %v414 = vld [vmem:[%s294 + $0x94] sm:$0xf]
      %v415 = vld [vmem:[%s294 + $0x98] sm:$0xf]
      %v416 = vld [vmem:[%s294 + $0x9c] sm:$0xf]
      %v417 = vld [vmem:[%s294 + $0xa0] sm:$0xf]
      %v418 = vld [vmem:[%s294 + $0xa4] sm:$0xf]
      %v419 = vld [vmem:[%s294 + $0xa8] sm:$0xf]
      %v420 = vld [vmem:[%s294 + $0xac] sm:$0xf]
      %v421 = vld [vmem:[%s294 + $0xb0] sm:$0xf]
      %v422 = vld [vmem:[%s294 + $0xb4] sm:$0xf]
      %v423 = vld [vmem:[%s294 + $0xb8] sm:$0xf]
      %v424 = vld [vmem:[%s294 + $0xbc] sm:$0xf]
      %v425 = vld [vmem:[%s294 + $0xc0] sm:$0xf]
      %v426 = vld [vmem:[%s294 + $0xc4] sm:$0xf]
      %v427 = vld [vmem:[%s294 + $0xc8] sm:$0xf]
      %v428 = vld [vmem:[%s294 + $0xcc] sm:$0xf]
      %v429 = vld [vmem:[%s294 + $0xd0] sm:$0xf]
      %v430 = vld [vmem:[%s294 + $0xd4] sm:$0xf]
      %v431 = vld [vmem:[%s294 + $0xd8] sm:$0xf]
      %v432 = vld [vmem:[%s294 + $0xdc] sm:$0xf]
      %v433 = vld [vmem:[%s294 + $0xe0] sm:$0xf]
      %v434 = vld [vmem:[%s294 + $0xe4] sm:$0xf]
      %v435 = vld [vmem:[%s294 + $0xe8] sm:$0xf]
      %v436 = vld [vmem:[%s294 + $0xec] sm:$0xf]
      %v437 = vld [vmem:[%s294 + $0xf0] sm:$0xf]
      %v438 = vld [vmem:[%s294 + $0xf4] sm:$0xf]
      %v439 = vld [vmem:[%s294 + $0xf8] sm:$0xf]
      %v440 = vld [vmem:[%s294 + $0xfc] sm:$0xf]
      %v441 = vld [vmem:[%s298] sm:$0x1]
      %v443 = vlaneseq
      %v444 = vshrl.u32 %v443, 7
      %v445 = vsub.s32 0, %v444
      %v446 = vrot.slane %v441, %v445
      %v512 = vunpack.c.l.b16 %v313
      %v513 = vunpack.c.h.b16 %v313
      %v514 = vunpack.c.l.b16 %v314
      %v515 = vunpack.c.h.b16 %v314
      %v516 = vunpack.c.l.b16 %v315
      %v517 = vunpack.c.h.b16 %v315
      %v518 = vunpack.c.l.b16 %v316
      %v519 = vunpack.c.h.b16 %v316
      %v520 = vunpack.c.l.b16 %v317
      %v521 = vunpack.c.h.b16 %v317
      %v522 = vunpack.c.l.b16 %v318
      %v523 = vunpack.c.h.b16 %v318
      %v524 = vunpack.c.l.b16 %v319
      %v525 = vunpack.c.h.b16 %v319
      %v526 = vunpack.c.l.b16 %v320
      %v527 = vunpack.c.h.b16 %v320
      %v528 = vunpack.c.l.b16 %v321
      %v529 = vunpack.c.h.b16 %v321
      %v530 = vunpack.c.l.b16 %v322
      %v531 = vunpack.c.h.b16 %v322
      %v532 = vunpack.c.l.b16 %v323
      %v533 = vunpack.c.h.b16 %v323
      %v534 = vunpack.c.l.b16 %v324
      %v535 = vunpack.c.h.b16 %v324
      %v536 = vunpack.c.l.b16 %v325
      %v537 = vunpack.c.h.b16 %v325
      %v538 = vunpack.c.l.b16 %v326
      %v539 = vunpack.c.h.b16 %v326
      %v540 = vunpack.c.l.b16 %v327
      %v541 = vunpack.c.h.b16 %v327
      %v542 = vunpack.c.l.b16 %v328
      %v543 = vunpack.c.h.b16 %v328
      %v544 = vunpack.c.l.b16 %v329
      %v545 = vunpack.c.h.b16 %v329
      %v546 = vunpack.c.l.b16 %v330
      %v547 = vunpack.c.h.b16 %v330
      %v548 = vunpack.c.l.b16 %v331
      %v549 = vunpack.c.h.b16 %v331
      %v550 = vunpack.c.l.b16 %v332
      %v551 = vunpack.c.h.b16 %v332
      %v552 = vunpack.c.l.b16 %v333
      %v553 = vunpack.c.h.b16 %v333
      %v554 = vunpack.c.l.b16 %v334
      %v555 = vunpack.c.h.b16 %v334
      %v556 = vunpack.c.l.b16 %v335
      %v557 = vunpack.c.h.b16 %v335
      %v558 = vunpack.c.l.b16 %v336
      %v559 = vunpack.c.h.b16 %v336
      %v560 = vunpack.c.l.b16 %v337
      %v561 = vunpack.c.h.b16 %v337
      %v562 = vunpack.c.l.b16 %v338
      %v563 = vunpack.c.h.b16 %v338
      %v564 = vunpack.c.l.b16 %v339
      %v565 = vunpack.c.h.b16 %v339
      %v566 = vunpack.c.l.b16 %v340
      %v567 = vunpack.c.h.b16 %v340
      %v568 = vunpack.c.l.b16 %v341
      %v569 = vunpack.c.h.b16 %v341
      %v570 = vunpack.c.l.b16 %v342
      %v571 = vunpack.c.h.b16 %v342
      %v572 = vunpack.c.l.b16 %v343
      %v573 = vunpack.c.h.b16 %v343
      %v574 = vunpack.c.l.b16 %v344
      %v575 = vunpack.c.h.b16 %v344
      %v576 = vunpack.c.l.b16 %v345
      %v577 = vunpack.c.h.b16 %v345
      %v578 = vunpack.c.l.b16 %v346
      %v579 = vunpack.c.h.b16 %v346
      %v580 = vunpack.c.l.b16 %v347
      %v581 = vunpack.c.h.b16 %v347
      %v582 = vunpack.c.l.b16 %v348
      %v583 = vunpack.c.h.b16 %v348
      %v584 = vunpack.c.l.b16 %v349
      %v585 = vunpack.c.h.b16 %v349
      %v586 = vunpack.c.l.b16 %v350
      %v587 = vunpack.c.h.b16 %v350
      %v588 = vunpack.c.l.b16 %v351
      %v589 = vunpack.c.h.b16 %v351
      %v590 = vunpack.c.l.b16 %v352
      %v591 = vunpack.c.h.b16 %v352
      %v592 = vunpack.c.l.b16 %v353
      %v593 = vunpack.c.h.b16 %v353
      %v594 = vunpack.c.l.b16 %v354
      %v595 = vunpack.c.h.b16 %v354
      %v596 = vunpack.c.l.b16 %v355
      %v597 = vunpack.c.h.b16 %v355
      %v598 = vunpack.c.l.b16 %v356
      %v599 = vunpack.c.h.b16 %v356
      %v600 = vunpack.c.l.b16 %v357
      %v601 = vunpack.c.h.b16 %v357
      %v602 = vunpack.c.l.b16 %v358
      %v603 = vunpack.c.h.b16 %v358
      %v604 = vunpack.c.l.b16 %v359
      %v605 = vunpack.c.h.b16 %v359
      %v606 = vunpack.c.l.b16 %v360
      %v607 = vunpack.c.h.b16 %v360
      %v608 = vunpack.c.l.b16 %v361
      %v609 = vunpack.c.h.b16 %v361
      %v610 = vunpack.c.l.b16 %v362
      %v611 = vunpack.c.h.b16 %v362
      %v612 = vunpack.c.l.b16 %v363
      %v613 = vunpack.c.h.b16 %v363
      %v614 = vunpack.c.l.b16 %v364
      %v615 = vunpack.c.h.b16 %v364
      %v616 = vunpack.c.l.b16 %v365
      %v617 = vunpack.c.h.b16 %v365
      %v618 = vunpack.c.l.b16 %v366
      %v619 = vunpack.c.h.b16 %v366
      %v620 = vunpack.c.l.b16 %v367
      %v621 = vunpack.c.h.b16 %v367
      %v622 = vunpack.c.l.b16 %v368
      %v623 = vunpack.c.h.b16 %v368
      %v624 = vunpack.c.l.b16 %v369
      %v625 = vunpack.c.h.b16 %v369
      %v626 = vunpack.c.l.b16 %v370
      %v627 = vunpack.c.h.b16 %v370
      %v628 = vunpack.c.l.b16 %v371
      %v629 = vunpack.c.h.b16 %v371
      %v630 = vunpack.c.l.b16 %v372
      %v631 = vunpack.c.h.b16 %v372
      %v632 = vunpack.c.l.b16 %v373
      %v633 = vunpack.c.h.b16 %v373
      %v634 = vunpack.c.l.b16 %v374
      %v635 = vunpack.c.h.b16 %v374
      %v636 = vunpack.c.l.b16 %v375
      %v637 = vunpack.c.h.b16 %v375
      %v638 = vunpack.c.l.b16 %v376
      %v639 = vunpack.c.h.b16 %v376
      %v640 = vpack.c.b16 %v516, %v512
      %v641 = vpack.c.b16 %v517, %v513
      %v642 = vpack.c.b16 %v518, %v514
      %v643 = vpack.c.b16 %v519, %v515
      %v644 = vpack.c.b16 %v524, %v520
      %v645 = vpack.c.b16 %v525, %v521
      %v646 = vpack.c.b16 %v526, %v522
      %v647 = vpack.c.b16 %v527, %v523
      %v648 = vpack.c.b16 %v532, %v528
      %v649 = vpack.c.b16 %v533, %v529
      %v650 = vpack.c.b16 %v534, %v530
      %v651 = vpack.c.b16 %v535, %v531
      %v652 = vpack.c.b16 %v540, %v536
      %v653 = vpack.c.b16 %v541, %v537
      %v654 = vpack.c.b16 %v542, %v538
      %v655 = vpack.c.b16 %v543, %v539
      %v656 = vpack.c.b16 %v548, %v544
      %v657 = vpack.c.b16 %v549, %v545
      %v658 = vpack.c.b16 %v550, %v546
      %v659 = vpack.c.b16 %v551, %v547
      %v660 = vpack.c.b16 %v556, %v552
      %v661 = vpack.c.b16 %v557, %v553
      %v662 = vpack.c.b16 %v558, %v554
      %v663 = vpack.c.b16 %v559, %v555
      %v664 = vpack.c.b16 %v564, %v560
      %v665 = vpack.c.b16 %v565, %v561
      %v666 = vpack.c.b16 %v566, %v562
      %v667 = vpack.c.b16 %v567, %v563
      %v668 = vpack.c.b16 %v572, %v568
      %v669 = vpack.c.b16 %v573, %v569
      %v670 = vpack.c.b16 %v574, %v570
      %v671 = vpack.c.b16 %v575, %v571
      %v672 = vpack.c.b16 %v580, %v576
      %v673 = vpack.c.b16 %v581, %v577
      %v674 = vpack.c.b16 %v582, %v578
      %v675 = vpack.c.b16 %v583, %v579
      %v676 = vpack.c.b16 %v588, %v584
      %v677 = vpack.c.b16 %v589, %v585
      %v678 = vpack.c.b16 %v590, %v586
      %v679 = vpack.c.b16 %v591, %v587
      %v680 = vpack.c.b16 %v596, %v592
      %v681 = vpack.c.b16 %v597, %v593
      %v682 = vpack.c.b16 %v598, %v594
      %v683 = vpack.c.b16 %v599, %v595
      %v684 = vpack.c.b16 %v604, %v600
      %v685 = vpack.c.b16 %v605, %v601
      %v686 = vpack.c.b16 %v606, %v602
      %v687 = vpack.c.b16 %v607, %v603
      %v688 = vpack.c.b16 %v612, %v608
      %v689 = vpack.c.b16 %v613, %v609
      %v690 = vpack.c.b16 %v614, %v610
      %v691 = vpack.c.b16 %v615, %v611
      %v692 = vpack.c.b16 %v620, %v616
      %v693 = vpack.c.b16 %v621, %v617
      %v694 = vpack.c.b16 %v622, %v618
      %v695 = vpack.c.b16 %v623, %v619
      %v696 = vpack.c.b16 %v628, %v624
      %v697 = vpack.c.b16 %v629, %v625
      %v698 = vpack.c.b16 %v630, %v626
      %v699 = vpack.c.b16 %v631, %v627
      %v700 = vpack.c.b16 %v636, %v632
      %v701 = vpack.c.b16 %v637, %v633
      %v702 = vpack.c.b16 %v638, %v634
      %v703 = vpack.c.b16 %v639, %v635
      %v832 = vunpack.c.l.b16 %v377
      %v833 = vunpack.c.l.b16 %v378
      %v834 = vunpack.c.l.b16 %v379
      %v835 = vunpack.c.l.b16 %v380
      %v836 = vunpack.c.l.b16 %v381
      %v837 = vunpack.c.l.b16 %v382
      %v838 = vunpack.c.l.b16 %v383
      %v839 = vunpack.c.l.b16 %v384
      %v840 = vunpack.c.l.b16 %v385
      %v841 = vunpack.c.l.b16 %v386
      %v842 = vunpack.c.l.b16 %v387
      %v843 = vunpack.c.l.b16 %v388
      %v844 = vunpack.c.l.b16 %v389
      %v845 = vunpack.c.l.b16 %v390
      %v846 = vunpack.c.l.b16 %v391
      %v847 = vunpack.c.l.b16 %v392
      %v848 = vunpack.c.l.b16 %v393
      %v849 = vunpack.c.l.b16 %v394
      %v850 = vunpack.c.l.b16 %v395
      %v851 = vunpack.c.l.b16 %v396
      %v852 = vunpack.c.l.b16 %v397
      %v853 = vunpack.c.l.b16 %v398
      %v854 = vunpack.c.l.b16 %v399
      %v855 = vunpack.c.l.b16 %v400
      %v856 = vunpack.c.l.b16 %v401
      %v857 = vunpack.c.l.b16 %v402
      %v858 = vunpack.c.l.b16 %v403
      %v859 = vunpack.c.l.b16 %v404
      %v860 = vunpack.c.l.b16 %v405
      %v861 = vunpack.c.l.b16 %v406
      %v862 = vunpack.c.l.b16 %v407
      %v863 = vunpack.c.l.b16 %v408
      %v864 = vunpack.c.l.b16 %v409
      %v865 = vunpack.c.l.b16 %v410
      %v866 = vunpack.c.l.b16 %v411
      %v867 = vunpack.c.l.b16 %v412
      %v868 = vunpack.c.l.b16 %v413
      %v869 = vunpack.c.l.b16 %v414
      %v870 = vunpack.c.l.b16 %v415
      %v871 = vunpack.c.l.b16 %v416
      %v872 = vunpack.c.l.b16 %v417
      %v873 = vunpack.c.l.b16 %v418
      %v874 = vunpack.c.l.b16 %v419
      %v875 = vunpack.c.l.b16 %v420
      %v876 = vunpack.c.l.b16 %v421
      %v877 = vunpack.c.l.b16 %v422
      %v878 = vunpack.c.l.b16 %v423
      %v879 = vunpack.c.l.b16 %v424
      %v880 = vunpack.c.l.b16 %v425
      %v881 = vunpack.c.l.b16 %v426
      %v882 = vunpack.c.l.b16 %v427
      %v883 = vunpack.c.l.b16 %v428
      %v884 = vunpack.c.l.b16 %v429
      %v885 = vunpack.c.l.b16 %v430
      %v886 = vunpack.c.l.b16 %v431
      %v887 = vunpack.c.l.b16 %v432
      %v888 = vunpack.c.l.b16 %v433
      %v889 = vunpack.c.l.b16 %v434
      %v890 = vunpack.c.l.b16 %v435
      %v891 = vunpack.c.l.b16 %v436
      %v892 = vunpack.c.l.b16 %v437
      %v893 = vunpack.c.l.b16 %v438
      %v894 = vunpack.c.l.b16 %v439
      %v895 = vunpack.c.l.b16 %v440
      %v896 = vpack.c.b16 %v833, %v832
      %v897 = vpack.c.b16 %v835, %v834
      %v898 = vpack.c.b16 %v837, %v836
      %v899 = vpack.c.b16 %v839, %v838
      %v900 = vpack.c.b16 %v841, %v840
      %v901 = vpack.c.b16 %v843, %v842
      %v902 = vpack.c.b16 %v845, %v844
      %v903 = vpack.c.b16 %v847, %v846
      %v904 = vpack.c.b16 %v849, %v848
      %v905 = vpack.c.b16 %v851, %v850
      %v906 = vpack.c.b16 %v853, %v852
      %v907 = vpack.c.b16 %v855, %v854
      %v908 = vpack.c.b16 %v857, %v856
      %v909 = vpack.c.b16 %v859, %v858
      %v910 = vpack.c.b16 %v861, %v860
      %v911 = vpack.c.b16 %v863, %v862
      %v912 = vpack.c.b16 %v865, %v864
      %v913 = vpack.c.b16 %v867, %v866
      %v914 = vpack.c.b16 %v869, %v868
      %v915 = vpack.c.b16 %v871, %v870
      %v916 = vpack.c.b16 %v873, %v872
      %v917 = vpack.c.b16 %v875, %v874
      %v918 = vpack.c.b16 %v877, %v876
      %v919 = vpack.c.b16 %v879, %v878
      %v920 = vpack.c.b16 %v881, %v880
      %v921 = vpack.c.b16 %v883, %v882
      %v922 = vpack.c.b16 %v885, %v884
      %v923 = vpack.c.b16 %v887, %v886
      %v924 = vpack.c.b16 %v889, %v888
      %v925 = vpack.c.b16 %v891, %v890
      %v926 = vpack.c.b16 %v893, %v892
      %v927 = vpack.c.b16 %v895, %v894
      %960 = vmatprep.subr.bf16.mxu0 0
      %961 = vmatpush1.bf16.msra.mxu0 %v896
      %962 = vmatprep.subr.bf16.mxu0 0
      %963 = vmatpush1.bf16.msra.mxu0 %v897
      %964 = vmatprep.subr.bf16.mxu0 0
      %965 = vmatpush1.bf16.msra.mxu0 %v898
      %966 = vmatprep.subr.bf16.mxu0 0
      %967 = vmatpush1.bf16.msra.mxu0 %v899
      %968 = vmatprep.subr.bf16.mxu0 0
      %969 = vmatpush1.bf16.msra.mxu0 %v900
      %970 = vmatprep.subr.bf16.mxu0 0
      %971 = vmatpush1.bf16.msra.mxu0 %v901
      %972 = vmatprep.subr.bf16.mxu0 0
      %973 = vmatpush1.bf16.msra.mxu0 %v902
      %974 = vmatprep.subr.bf16.mxu0 0
      %975 = vmatpush1.bf16.msra.mxu0 %v903
      %976 = vmatprep.subr.bf16.mxu0 0
      %977 = vmatpush1.bf16.msra.mxu0 %v904
      %978 = vmatprep.subr.bf16.mxu0 0
      %979 = vmatpush1.bf16.msra.mxu0 %v905
      %980 = vmatprep.subr.bf16.mxu0 0
      %981 = vmatpush1.bf16.msra.mxu0 %v906
      %982 = vmatprep.subr.bf16.mxu0 0
      %983 = vmatpush1.bf16.msra.mxu0 %v907
      %984 = vmatprep.subr.bf16.mxu0 0
      %985 = vmatpush1.bf16.msra.mxu0 %v908
      %986 = vmatprep.subr.bf16.mxu0 0
      %987 = vmatpush1.bf16.msra.mxu0 %v909
      %988 = vmatprep.subr.bf16.mxu0 0
      %989 = vmatpush1.bf16.msra.mxu0 %v910
      %990 = vmatprep.subr.bf16.mxu0 0
      %991 = vmatpush1.bf16.msra.mxu0 %v911
      %992 = vmatprep.mubr.bf16.mxu0 %v641
      %993 = vmatmul.mubr.bf16.gmra.mrb[0].mxu0 %v640
      %v994 = vpop.f32.mrb[0].mxu0
      %v995 = vadd.f32 %v446, %v994
      %v996 = vpop.f32.mrb[0].mxu0
      %v997 = vpop.f32.mrb[0].mxu0
      %v998 = vadd.f32 %v446, %v997
      %v999 = vpop.f32.mrb[0].mxu0
      %1000 = vmatprep.mubr.bf16.mxu0 %v645
      %1001 = vmatmul.mubr.bf16.gmra.mrb[0].mxu0 %v644
      %v1002 = vpop.f32.mrb[0].mxu0
      %v1003 = vadd.f32 %v446, %v1002
      %v1004 = vpop.f32.mrb[0].mxu0
      %v1005 = vpop.f32.mrb[0].mxu0
      %v1006 = vadd.f32 %v446, %v1005
      %v1007 = vpop.f32.mrb[0].mxu0
      %1008 = vmatprep.mubr.bf16.mxu0 %v649
      %1009 = vmatmul.mubr.bf16.gmra.mrb[0].mxu0 %v648
      %v1010 = vpop.f32.mrb[0].mxu0
      %v1011 = vadd.f32 %v446, %v1010
      %v1012 = vpop.f32.mrb[0].mxu0
      %v1013 = vpop.f32.mrb[0].mxu0
      %v1014 = vadd.f32 %v446, %v1013
      %v1015 = vpop.f32.mrb[0].mxu0
      %1016 = vmatprep.mubr.bf16.mxu0 %v653
      %1017 = vmatmul.mubr.bf16.gmra.mrb[0].mxu0 %v652
      %v1018 = vpop.f32.mrb[0].mxu0
      %v1019 = vadd.f32 %v446, %v1018
      %v1020 = vpop.f32.mrb[0].mxu0
      %v1021 = vpop.f32.mrb[0].mxu0
      %v1022 = vadd.f32 %v446, %v1021
      %v1023 = vpop.f32.mrb[0].mxu0
      %1024 = vmatprep.mubr.bf16.mxu0 %v657
      %1025 = vmatmul.mubr.bf16.gmra.mrb[0].mxu0 %v656
      %v1026 = vpop.f32.mrb[0].mxu0
      %v1027 = vadd.f32 %v446, %v1026
      %v1028 = vpop.f32.mrb[0].mxu0
      %v1029 = vpop.f32.mrb[0].mxu0
      %v1030 = vadd.f32 %v446, %v1029
      %v1031 = vpop.f32.mrb[0].mxu0
      %1032 = vmatprep.mubr.bf16.mxu0 %v661
      %1033 = vmatmul.mubr.bf16.gmra.mrb[0].mxu0 %v660
      %v1034 = vpop.f32.mrb[0].mxu0
      %v1035 = vadd.f32 %v446, %v1034
      %v1036 = vpop.f32.mrb[0].mxu0
      %v1037 = vpop.f32.mrb[0].mxu0
      %v1038 = vadd.f32 %v446, %v1037
      %v1039 = vpop.f32.mrb[0].mxu0
      %1040 = vmatprep.mubr.bf16.mxu0 %v665
      %1041 = vmatmul.mubr.bf16.gmra.mrb[0].mxu0 %v664
      %v1042 = vpop.f32.mrb[0].mxu0
      %v1043 = vadd.f32 %v446, %v1042
      %v1044 = vpop.f32.mrb[0].mxu0
      %v1045 = vpop.f32.mrb[0].mxu0
      %v1046 = vadd.f32 %v446, %v1045
      %v1047 = vpop.f32.mrb[0].mxu0
      %1048 = vmatprep.mubr.bf16.mxu0 %v669
      %1049 = vmatmul.mubr.bf16.gmra.mrb[0].mxu0 %v668
      %v1050 = vpop.f32.mrb[0].mxu0
      %v1051 = vadd.f32 %v446, %v1050
      %v1052 = vpop.f32.mrb[0].mxu0
      %v1053 = vpop.f32.mrb[0].mxu0
      %v1054 = vadd.f32 %v446, %v1053
      %v1055 = vpop.f32.mrb[0].mxu0
      %1056 = vmatprep.mubr.bf16.mxu0 %v673
      %1057 = vmatmul.mubr.bf16.gmra.mrb[0].mxu0 %v672
      %v1058 = vpop.f32.mrb[0].mxu0
      %v1059 = vadd.f32 %v446, %v1058
      %v1060 = vpop.f32.mrb[0].mxu0
      %v1061 = vpop.f32.mrb[0].mxu0
      %v1062 = vadd.f32 %v446, %v1061
      %v1063 = vpop.f32.mrb[0].mxu0
      %1064 = vmatprep.mubr.bf16.mxu0 %v677
      %1065 = vmatmul.mubr.bf16.gmra.mrb[0].mxu0 %v676
      %v1066 = vpop.f32.mrb[0].mxu0
      %v1067 = vadd.f32 %v446, %v1066
      %v1068 = vpop.f32.mrb[0].mxu0
      %v1069 = vpop.f32.mrb[0].mxu0
      %v1070 = vadd.f32 %v446, %v1069
      %v1071 = vpop.f32.mrb[0].mxu0
      %1072 = vmatprep.mubr.bf16.mxu0 %v681
      %1073 = vmatmul.mubr.bf16.gmra.mrb[0].mxu0 %v680
      %v1074 = vpop.f32.mrb[0].mxu0
      %v1075 = vadd.f32 %v446, %v1074
      %v1076 = vpop.f32.mrb[0].mxu0
      %v1077 = vpop.f32.mrb[0].mxu0
      %v1078 = vadd.f32 %v446, %v1077
      %v1079 = vpop.f32.mrb[0].mxu0
      %1080 = vmatprep.mubr.bf16.mxu0 %v685
      %1081 = vmatmul.mubr.bf16.gmra.mrb[0].mxu0 %v684
      %v1082 = vpop.f32.mrb[0].mxu0
      %v1083 = vadd.f32 %v446, %v1082
      %v1084 = vpop.f32.mrb[0].mxu0
      %v1085 = vpop.f32.mrb[0].mxu0
      %v1086 = vadd.f32 %v446, %v1085
      %v1087 = vpop.f32.mrb[0].mxu0
      %1088 = vmatprep.mubr.bf16.mxu0 %v689
      %1089 = vmatmul.mubr.bf16.gmra.mrb[0].mxu0 %v688
      %v1090 = vpop.f32.mrb[0].mxu0
      %v1091 = vadd.f32 %v446, %v1090
      %v1092 = vpop.f32.mrb[0].mxu0
      %v1093 = vpop.f32.mrb[0].mxu0
      %v1094 = vadd.f32 %v446, %v1093
      %v1095 = vpop.f32.mrb[0].mxu0
      %1096 = vmatprep.mubr.bf16.mxu0 %v693
      %1097 = vmatmul.mubr.bf16.gmra.mrb[0].mxu0 %v692
      %v1098 = vpop.f32.mrb[0].mxu0
      %v1099 = vadd.f32 %v446, %v1098
      %v1100 = vpop.f32.mrb[0].mxu0
      %v1101 = vpop.f32.mrb[0].mxu0
      %v1102 = vadd.f32 %v446, %v1101
      %v1103 = vpop.f32.mrb[0].mxu0
      %1104 = vmatprep.mubr.bf16.mxu0 %v697
      %1105 = vmatmul.mubr.bf16.gmra.mrb[0].mxu0 %v696
      %v1106 = vpop.f32.mrb[0].mxu0
      %v1107 = vadd.f32 %v446, %v1106
      %v1108 = vpop.f32.mrb[0].mxu0
      %v1109 = vpop.f32.mrb[0].mxu0
      %v1110 = vadd.f32 %v446, %v1109
      %v1111 = vpop.f32.mrb[0].mxu0
      %1112 = vmatprep.mubr.bf16.mxu0 %v701
      %1113 = vmatmul.mubr.bf16.gmra.mrb[0].mxu0 %v700
      %v1114 = vpop.f32.mrb[0].mxu0
      %v1115 = vadd.f32 %v446, %v1114
      %v1116 = vpop.f32.mrb[0].mxu0
      %v1117 = vpop.f32.mrb[0].mxu0
      %v1118 = vadd.f32 %v446, %v1117
      %v1119 = vpop.f32.mrb[0].mxu0
      %1120 = vdwg.mxu0
      %1121 = vmatprep.subr.bf16.mxu0 0
      %1122 = vmatpush1.bf16.msra.mxu0 %v912
      %1123 = vmatprep.subr.bf16.mxu0 0
      %1124 = vmatpush1.bf16.msra.mxu0 %v913
      %1125 = vmatprep.subr.bf16.mxu0 0
      %1126 = vmatpush1.bf16.msra.mxu0 %v914
      %1127 = vmatprep.subr.bf16.mxu0 0
      %1128 = vmatpush1.bf16.msra.mxu0 %v915
      %1129 = vmatprep.subr.bf16.mxu0 0
      %1130 = vmatpush1.bf16.msra.mxu0 %v916
      %1131 = vmatprep.subr.bf16.mxu0 0
      %1132 = vmatpush1.bf16.msra.mxu0 %v917
      %1133 = vmatprep.subr.bf16.mxu0 0
      %1134 = vmatpush1.bf16.msra.mxu0 %v918
      %1135 = vmatprep.subr.bf16.mxu0 0
      %1136 = vmatpush1.bf16.msra.mxu0 %v919
      %1137 = vmatprep.subr.bf16.mxu0 0
      %1138 = vmatpush1.bf16.msra.mxu0 %v920
      %1139 = vmatprep.subr.bf16.mxu0 0
      %1140 = vmatpush1.bf16.msra.mxu0 %v921
      %1141 = vmatprep.subr.bf16.mxu0 0
      %1142 = vmatpush1.bf16.msra.mxu0 %v922
      %1143 = vmatprep.subr.bf16.mxu0 0
      %1144 = vmatpush1.bf16.msra.mxu0 %v923
      %1145 = vmatprep.subr.bf16.mxu0 0
      %1146 = vmatpush1.bf16.msra.mxu0 %v924
      %1147 = vmatprep.subr.bf16.mxu0 0
      %1148 = vmatpush1.bf16.msra.mxu0 %v925
      %1149 = vmatprep.subr.bf16.mxu0 0
      %1150 = vmatpush1.bf16.msra.mxu0 %v926
      %1151 = vmatprep.subr.bf16.mxu0 0
      %1152 = vmatpush1.bf16.msra.mxu0 %v927
      %1153 = vmatprep.mubr.bf16.mxu0 %v643
      %1154 = vmatmul.mubr.bf16.gmra.mrb[0].mxu0 %v642
      %v1155 = vpop.f32.mrb[0].mxu0
      %v1156 = vadd.f32 %v995, %v1155
      %v1157 = vpop.f32.mrb[0].mxu0
      %v1158 = vpop.f32.mrb[0].mxu0
      %v1159 = vadd.f32 %v998, %v1158
      %v1160 = vpop.f32.mrb[0].mxu0
      %1161 = vmatprep.mubr.bf16.mxu0 %v647
      %1162 = vmatmul.mubr.bf16.gmra.mrb[0].mxu0 %v646
      %v1163 = vpop.f32.mrb[0].mxu0
      %v1164 = vadd.f32 %v1003, %v1163
      %v1165 = vpop.f32.mrb[0].mxu0
      %v1166 = vpop.f32.mrb[0].mxu0
      %v1167 = vadd.f32 %v1006, %v1166
      %v1168 = vpop.f32.mrb[0].mxu0
      %1169 = vmatprep.mubr.bf16.mxu0 %v651
      %1170 = vmatmul.mubr.bf16.gmra.mrb[0].mxu0 %v650
      %v1171 = vpop.f32.mrb[0].mxu0
      %v1172 = vadd.f32 %v1011, %v1171
      %v1173 = vpop.f32.mrb[0].mxu0
      %v1174 = vpop.f32.mrb[0].mxu0
      %v1175 = vadd.f32 %v1014, %v1174
      %v1176 = vpop.f32.mrb[0].mxu0
      %1177 = vmatprep.mubr.bf16.mxu0 %v655
      %1178 = vmatmul.mubr.bf16.gmra.mrb[0].mxu0 %v654
      %v1179 = vpop.f32.mrb[0].mxu0
      %v1180 = vadd.f32 %v1019, %v1179
      %v1181 = vpop.f32.mrb[0].mxu0
      %v1182 = vpop.f32.mrb[0].mxu0
      %v1183 = vadd.f32 %v1022, %v1182
      %v1184 = vpop.f32.mrb[0].mxu0
      %1185 = vmatprep.mubr.bf16.mxu0 %v659
      %1186 = vmatmul.mubr.bf16.gmra.mrb[0].mxu0 %v658
      %v1187 = vpop.f32.mrb[0].mxu0
      %v1188 = vadd.f32 %v1027, %v1187
      %v1189 = vpop.f32.mrb[0].mxu0
      %v1190 = vpop.f32.mrb[0].mxu0
      %v1191 = vadd.f32 %v1030, %v1190
      %v1192 = vpop.f32.mrb[0].mxu0
      %1193 = vmatprep.mubr.bf16.mxu0 %v663
      %1194 = vmatmul.mubr.bf16.gmra.mrb[0].mxu0 %v662
      %v1195 = vpop.f32.mrb[0].mxu0
      %v1196 = vadd.f32 %v1035, %v1195
      %v1197 = vpop.f32.mrb[0].mxu0
      %v1198 = vpop.f32.mrb[0].mxu0
      %v1199 = vadd.f32 %v1038, %v1198
      %v1200 = vpop.f32.mrb[0].mxu0
      %1201 = vmatprep.mubr.bf16.mxu0 %v667
      %1202 = vmatmul.mubr.bf16.gmra.mrb[0].mxu0 %v666
      %v1203 = vpop.f32.mrb[0].mxu0
      %v1204 = vadd.f32 %v1043, %v1203
      %v1205 = vpop.f32.mrb[0].mxu0
      %v1206 = vpop.f32.mrb[0].mxu0
      %v1207 = vadd.f32 %v1046, %v1206
      %v1208 = vpop.f32.mrb[0].mxu0
      %1209 = vmatprep.mubr.bf16.mxu0 %v671
      %1210 = vmatmul.mubr.bf16.gmra.mrb[0].mxu0 %v670
      %v1211 = vpop.f32.mrb[0].mxu0
      %v1212 = vadd.f32 %v1051, %v1211
      %v1213 = vpop.f32.mrb[0].mxu0
      %v1214 = vpop.f32.mrb[0].mxu0
      %v1215 = vadd.f32 %v1054, %v1214
      %v1216 = vpop.f32.mrb[0].mxu0
      %1217 = vmatprep.mubr.bf16.mxu0 %v675
      %1218 = vmatmul.mubr.bf16.gmra.mrb[0].mxu0 %v674
      %v1219 = vpop.f32.mrb[0].mxu0
      %v1220 = vadd.f32 %v1059, %v1219
      %v1221 = vpop.f32.mrb[0].mxu0
      %v1222 = vpop.f32.mrb[0].mxu0
      %v1223 = vadd.f32 %v1062, %v1222
      %v1224 = vpop.f32.mrb[0].mxu0
      %1225 = vmatprep.mubr.bf16.mxu0 %v679
      %1226 = vmatmul.mubr.bf16.gmra.mrb[0].mxu0 %v678
      %v1227 = vpop.f32.mrb[0].mxu0
      %v1228 = vadd.f32 %v1067, %v1227
      %v1229 = vpop.f32.mrb[0].mxu0
      %v1230 = vpop.f32.mrb[0].mxu0
      %v1231 = vadd.f32 %v1070, %v1230
      %v1232 = vpop.f32.mrb[0].mxu0
      %1233 = vmatprep.mubr.bf16.mxu0 %v683
      %1234 = vmatmul.mubr.bf16.gmra.mrb[0].mxu0 %v682
      %v1235 = vpop.f32.mrb[0].mxu0
      %v1236 = vadd.f32 %v1075, %v1235
      %v1237 = vpop.f32.mrb[0].mxu0
      %v1238 = vpop.f32.mrb[0].mxu0
      %v1239 = vadd.f32 %v1078, %v1238
      %v1240 = vpop.f32.mrb[0].mxu0
      %1241 = vmatprep.mubr.bf16.mxu0 %v687
      %1242 = vmatmul.mubr.bf16.gmra.mrb[0].mxu0 %v686
      %v1243 = vpop.f32.mrb[0].mxu0
      %v1244 = vadd.f32 %v1083, %v1243
      %v1245 = vpop.f32.mrb[0].mxu0
      %v1246 = vpop.f32.mrb[0].mxu0
      %v1247 = vadd.f32 %v1086, %v1246
      %v1248 = vpop.f32.mrb[0].mxu0
      %1249 = vmatprep.mubr.bf16.mxu0 %v691
      %1250 = vmatmul.mubr.bf16.gmra.mrb[0].mxu0 %v690
      %v1251 = vpop.f32.mrb[0].mxu0
      %v1252 = vadd.f32 %v1091, %v1251
      %v1253 = vpop.f32.mrb[0].mxu0
      %v1254 = vpop.f32.mrb[0].mxu0
      %v1255 = vadd.f32 %v1094, %v1254
      %v1256 = vpop.f32.mrb[0].mxu0
      %1257 = vmatprep.mubr.bf16.mxu0 %v695
      %1258 = vmatmul.mubr.bf16.gmra.mrb[0].mxu0 %v694
      %v1259 = vpop.f32.mrb[0].mxu0
      %v1260 = vadd.f32 %v1099, %v1259
      %v1261 = vpop.f32.mrb[0].mxu0
      %v1262 = vpop.f32.mrb[0].mxu0
      %v1263 = vadd.f32 %v1102, %v1262
      %v1264 = vpop.f32.mrb[0].mxu0
      %1265 = vmatprep.mubr.bf16.mxu0 %v699
      %1266 = vmatmul.mubr.bf16.gmra.mrb[0].mxu0 %v698
      %v1267 = vpop.f32.mrb[0].mxu0
      %v1268 = vadd.f32 %v1107, %v1267
      %v1269 = vpop.f32.mrb[0].mxu0
      %v1270 = vpop.f32.mrb[0].mxu0
      %v1271 = vadd.f32 %v1110, %v1270
      %v1272 = vpop.f32.mrb[0].mxu0
      %1273 = vmatprep.mubr.bf16.mxu0 %v703
      %1274 = vmatmul.mubr.bf16.gmra.mrb[0].mxu0 %v702
      %v1275 = vpop.f32.mrb[0].mxu0
      %v1276 = vadd.f32 %v1115, %v1275
      %v1277 = vpop.f32.mrb[0].mxu0
      %v1278 = vpop.f32.mrb[0].mxu0
      %v1279 = vadd.f32 %v1118, %v1278
      %v1280 = vpop.f32.mrb[0].mxu0
      %1281 = vdwg.mxu0
      %v1282 = vtanh.pop %v1156
      %v1283 = vtanh.pop %v1159
      %v1284 = vtanh.pop %v1164
      %v1285 = vtanh.pop %v1167
      %v1286 = vtanh.pop %v1172
      %v1287 = vtanh.pop %v1175
      %v1288 = vtanh.pop %v1180
      %v1289 = vtanh.pop %v1183
      %v1290 = vtanh.pop %v1188
      %v1291 = vtanh.pop %v1191
      %v1292 = vtanh.pop %v1196
      %v1293 = vtanh.pop %v1199
      %v1294 = vtanh.pop %v1204
      %v1295 = vtanh.pop %v1207
      %v1296 = vtanh.pop %v1212
      %v1297 = vtanh.pop %v1215
      %v1298 = vtanh.pop %v1220
      %v1299 = vtanh.pop %v1223
      %v1300 = vtanh.pop %v1228
      %v1301 = vtanh.pop %v1231
      %v1302 = vtanh.pop %v1236
      %v1303 = vtanh.pop %v1239
      %v1304 = vtanh.pop %v1244
      %v1305 = vtanh.pop %v1247
      %v1306 = vtanh.pop %v1252
      %v1307 = vtanh.pop %v1255
      %v1308 = vtanh.pop %v1260
      %v1309 = vtanh.pop %v1263
      %v1310 = vtanh.pop %v1268
      %v1311 = vtanh.pop %v1271
      %v1312 = vtanh.pop %v1276
      %v1313 = vtanh.pop %v1279
      %1314 = vst [vmem:[%s310] sm:$0xff] %v1282
      %1315 = vst [vmem:[%s310 + $0x8] sm:$0xff] %v1283
      %1316 = vst [vmem:[%s310 + $0x10] sm:$0xff] %v1284
      %1317 = vst [vmem:[%s310 + $0x18] sm:$0xff] %v1285
      %1318 = vst [vmem:[%s310 + $0x20] sm:$0xff] %v1286
      %1319 = vst [vmem:[%s310 + $0x28] sm:$0xff] %v1287
      %1320 = vst [vmem:[%s310 + $0x30] sm:$0xff] %v1288
      %1321 = vst [vmem:[%s310 + $0x38] sm:$0xff] %v1289
      %1322 = vst [vmem:[%s310 + $0x40] sm:$0xff] %v1290
      %1323 = vst [vmem:[%s310 + $0x48] sm:$0xff] %v1291
      %1324 = vst [vmem:[%s310 + $0x50] sm:$0xff] %v1292
      %1325 = vst [vmem:[%s310 + $0x58] sm:$0xff] %v1293
      %1326 = vst [vmem:[%s310 + $0x60] sm:$0xff] %v1294
      %1327 = vst [vmem:[%s310 + $0x68] sm:$0xff] %v1295
      %1328 = vst [vmem:[%s310 + $0x70] sm:$0xff] %v1296
      %1329 = vst [vmem:[%s310 + $0x78] sm:$0xff] %v1297
      %1330 = vst [vmem:[%s310 + $0x80] sm:$0xff] %v1298
      %1331 = vst [vmem:[%s310 + $0x88] sm:$0xff] %v1299
      %1332 = vst [vmem:[%s310 + $0x90] sm:$0xff] %v1300
      %1333 = vst [vmem:[%s310 + $0x98] sm:$0xff] %v1301
      %1334 = vst [vmem:[%s310 + $0xa0] sm:$0xff] %v1302
      %1335 = vst [vmem:[%s310 + $0xa8] sm:$0xff] %v1303
      %1336 = vst [vmem:[%s310 + $0xb0] sm:$0xff] %v1304
      %1337 = vst [vmem:[%s310 + $0xb8] sm:$0xff] %v1305
      %1338 = vst [vmem:[%s310 + $0xc0] sm:$0xff] %v1306
      %1339 = vst [vmem:[%s310 + $0xc8] sm:$0xff] %v1307
      %1340 = vst [vmem:[%s310 + $0xd0] sm:$0xff] %v1308
      %1341 = vst [vmem:[%s310 + $0xd8] sm:$0xff] %v1309
      %1342 = vst [vmem:[%s310 + $0xe0] sm:$0xff] %v1310
      %1343 = vst [vmem:[%s310 + $0xe8] sm:$0xff] %v1311
      %1344 = vst [vmem:[%s310 + $0xf0] sm:$0xff] %v1312
      %1345 = vst [vmem:[%s310 + $0xf8] sm:$0xff] %v1313
      %s1346 = smul.u32 32, %s21
      %p1347 = scmp.lt.s32.totalorder %s20, 3
      %s1348 = scalar_select %p1347, %s20, 3
      %p1349 = scmp.lt.s32.totalorder %s1346, 63
      %s1350 = scalar_select %p1349, %s1346, 63
      %p1351 = scmp.lt.s32.totalorder %s22, 0
      %s1352 = scalar_select %p1351, %s22, 0
      %s1353 = sadd.s32 %s1352, %s1350
      %s1354 = smul.addr %s1348, 64
      %s1355 = sadd.s32 %s1353, %s1354
      %s1356 = smul.addr %s1355, 8
      %s1357 = scalar_lea.vmem %s3, %s1356
      // Predicated region
      $region33: #{decoder_forward.17} parent=31 // pred_check
        %p1358 = pneg %p148
      $region34: #{decoder_forward.17} parent=31 // pred_check_branch
        %1360 = sbr.rel (%p1358) target = $region36
      $region35: #{decoder_forward.17} parent=31 // pred_region
        %s1361 = smul.u32 32, %s21
      $region36: #{decoder_forward.17} parent=31 // pred_fallthru
        _
    $region32: #{decoder_forward.17} parent=5 // pred_fallthru
      _
    %p1362 = scmp.le.s32.totalorder 2, %s9
    // Predicated region
    $region37: #{decoder_forward.17} parent=5 // pred_check
      %p1363 = pneg %p1362
    $region38: #{decoder_forward.17} parent=5 // pred_check_branch
      %1365 = sbr.rel (%p1363) target = $region40
    $region39: #{decoder_forward.17} parent=5 // pred_region
      %s1366 = ssub.s32 %s9, 2
      // Predicated region
      $region41: #{decoder_forward.17} parent=39 // pred_check
        %p1367 = pneg %p154
      $region42: #{decoder_forward.17} parent=39 // pred_check_branch
        %1369 = sbr.rel (%p1367) target = $region44
      $region43: #{decoder_forward.17} parent=39 // pred_region
        %s1370 = smul.u32 32, %s25
        %p1371 = scmp.lt.s32.totalorder %s24, 3
        %s1372 = scalar_select %p1371, %s24, 3
        %p1373 = scmp.lt.s32.totalorder %s1370, 63
        %s1374 = scalar_select %p1373, %s1370, 63
        %p1375 = scmp.lt.s32.totalorder %s26, 0
        %s1376 = scalar_select %p1375, %s26, 0
        %s1377 = sadd.s32 %s1376, %s1374
        %s1378 = smul.addr %s1372, 64
        %s1379 = sadd.s32 %s1377, %s1378
        %s1380 = smul.addr %s1379, 8
        %s1381 = scalar_lea.vmem %s3, %s1380
      $region44: #{decoder_forward.17} parent=39 // pred_fallthru
        _
    $region40: #{decoder_forward.17} parent=5 // pred_fallthru
      _
  $region6: #{decoder_forward.17} parent=0 // loop_footer
    %s13 = sadd.s32 1, %s9
  $region7: #{decoder_forward.17} parent=0 // loop_footer_branch
    %8 = sbr.rel target = $region3
  $region8: #{decoder_forward.17} parent=0 // loop_exit
    _

</llo_original>
